<compile_context>
chip_gen: v7x
topology: tpu7x:2x2x1
jax: 0.10.0
libtpu: 0.0.40
codegen_flags: <defaults>
</compile_context>

<pallas_src>
import functools
import math

import jax
import jax.numpy as jnp
from jax import lax
from jax.experimental import pallas as pl
from jax.experimental.pallas import tpu as pltpu


def _round_up(v, m):
    return (v + m - 1) // m * m


def _elu(x):
    # ELU(alpha=1): x if x > 0 else exp(x) - 1
    return jnp.where(x > 0, x, jnp.exp(jnp.minimum(x, 0.0)) - 1.0)


def _vmem_padded_bytes(shape, dtype):
    """Rough VMEM footprint of one buffer after (sublane, lane) tiling."""
    itemsize = jnp.dtype(dtype).itemsize
    sub = 8 if itemsize >= 4 else 32 // itemsize      # 8 rows for f32, 16 for bf16
    shape = tuple(int(d) for d in shape)
    if len(shape) < 2:
        shape = (1,) * (2 - len(shape)) + shape
    lead = 1
    for d in shape[:-2]:
        lead *= d
    return lead * _round_up(shape[-2], sub) * _round_up(shape[-1], 128) * itemsize


# ----------------------------------------------------------------------------
# Fused kernel: all layers (conv + folded-BN shift + ELU + concat) for a batch tile.
# refs = (x, w_0 .. w_{L-1}, shift, mask, out, halo_scratch)
#   x     : (batch, cin_pad[0], Lp_pad)            operand dtype
#   w_l   : (k_l*k_l, hidden, cin_pad[l])          operand dtype, BN scale folded in
#   shift : (layers, hidden, 1)  f32               folded BatchNorm shift
#   mask  : (1, Lp_pad)          f32               1.0 inside the valid HxW window
#   out   : (batch, layers*hidden, Lp_pad) f32
#   halo  : VMEM (max cin_pad, Lp_pad + 2*M_pad)   operand dtype, zero-margin frame
# ----------------------------------------------------------------------------
def _stacked_core_kernel(*refs, layers, hidden, kerns, cin_act, cin_pad,
                         Wp, Lp_pad, M_pad, nonlin, batch):
    x_ref = refs[0]
    w_refs = refs[1:1 + layers]
    b_ref = refs[1 + layers]
    mask_ref = refs[2 + layers]
    o_ref = refs[3 + layers]
    halo_ref = refs[4 + layers]

    # Zero the whole halo ONCE per grid step. Every layer/image writes its frame at the
    # SAME fixed offset M_pad, so the left/right margins and unused sublane rows stay zero
    # for the rest of the step (stale rows are handled by the guard below).
    halo_ref[...] = jnp.zeros_like(halo_ref)

    # Hoist the (1, Lp) -> (hidden, Lp) mask broadcast out of the layer loop.
    mask_b = jnp.broadcast_to(mask_ref[...], (hidden, Lp_pad))

    prev_rows = 0                      # frame rows currently holding (non-zero) data
    for b in range(batch):
        cur = x_ref[b]                 # (cin_pad[0], Lp_pad) -- padded frame, flattened
        for l in range(layers):
            k = kerns[l]
            p = k // 2
            ca = cin_act[l]            # rows actually carrying data
            cp = cin_pad[l]            # sublane-aligned row count read by the conv

            # Stale-row guard: rows [ca:prev_rows] hold the previous layer/image's frame;
            # the dot below reads rows [0:cp] and requires rows [ca:cp] to be zero.
            if prev_rows > ca:
                halo_ref[ca:prev_rows, M_pad:M_pad + Lp_pad] = jnp.zeros(
                    (prev_rows - ca, Lp_pad), halo_ref.dtype)
            halo_ref[0:ca, M_pad:M_pad + Lp_pad] = cur.astype(halo_ref.dtype)
            prev_rows = ca

            # Per-tap MXU accumulation (no im2col patch buffer): each tap (dy, dx) is a
            # shifted window of the flat zero-halo frame, contracted directly on the MXU.
            w_l = w_refs[l]
            acc = None
            for dy in range(k):
                for dx in range(k):
                    t = dy * k + dx
                    s = M_pad + (dy - p) * Wp + (dx - p)        # static offset
                    contrib = jnp.dot(w_l[t], halo_ref[0:cp, s:s + Lp_pad],
                                      preferred_element_type=jnp.float32)
                    acc = contrib if acc is None else acc + contrib

            y = acc + b_ref[l]                                  # folded BatchNorm shift
            if nonlin[l]:
                y = _elu(y)
            if l < layers - 1:
                y = y * mask_b        # re-zero the padding ring for the next conv's input
            # (final layer: ring/tail are garbage but cropped by the wrapper)
            o_ref[b, l * hidden:(l + 1) * hidden, :] = y.astype(o_ref.dtype)
            cur = y                                             # stays in VMEM / vregs


# ----------------------------------------------------------------------------
# Wrapper: layout plumbing + BN folding + the single pallas_call.
# ----------------------------------------------------------------------------
def stacked2d_core_forward(x, params, *, hidden_channels, input_kern, hidden_kern,
                           layers=3, final_nonlinearity=True, bn_eps=1e-5,
                           operand_dtype=jnp.float32, batch_tile=1):
    """x: (N, C, H, W) float32 -> (N, layers*hidden_channels, H, W) float32.

    operand_dtype: dtype of the MXU operands (weights / halo / conv RHS). Use
    jnp.bfloat16 on v6e/v7x for ~2x matmul + halo-traffic savings; elementwise math
    (BN shift, ELU, mask) is always f32.
    batch_tile: images per grid step (must divide N). >1 amortizes per-step pipeline
    overhead; keep the resulting grid extent >= 2 so v7x's second TensorCore is used.
    """
    # TODO(synk): skip > 1 (dense concat of previous outputs), pad_input=False, bias=True
    # and training-mode BatchNorm are not implemented; module defaults are.
    N, C, H, W = x.shape
    assert N % batch_tile == 0, "batch_tile must divide N"
    kerns = [input_kern] + [hidden_kern] * (layers - 1)
    P = max(k // 2 for k in kerns)
    Hp, Wp = H + 2 * P, W + 2 * P
    Lp = Hp * Wp
    Lp_pad = _round_up(Lp, 128)                  # lane-dense loads/stores & full MXU N tiles
    M_max = max((k // 2) * Wp + (k // 2) for k in kerns)
    M_pad = _round_up(M_max, 128)                # lane-aligned fixed frame offset in the halo

    cin0_pad = _round_up(C, 8)
    hid_pad = _round_up(hidden_channels, 8)
    cin_act = [cin0_pad] + [hidden_channels] * (layers - 1)
    cin_pad = [cin0_pad] + [hid_pad] * (layers - 1)

    # Pad ONCE: channels to a sublane multiple, spatial by the global halo P; flatten the
    # padded spatial frame onto the lane axis and pad it to a multiple of 128.
    xp = jnp.pad(x.astype(jnp.float32), ((0, 0), (0, cin0_pad - C), (P, P), (P, P)))
    xp = xp.reshape(N, cin0_pad, Lp)
    xp = jnp.pad(xp, ((0, 0), (0, 0), (0, Lp_pad - Lp))).astype(operand_dtype)

    # Fold inference-mode BatchNorm into a weight scale + per-channel shift; lay the
    # weights out per tap: (k*k, cout, cin_pad) so each tap is a clean static slab.
    w_list, b_list = [], []
    for l in range(layers):
        k = kerns[l]
        w = params["w"][l].astype(jnp.float32)                    # (cout, cin, k, k)
        scale = params["gamma"][l] / jnp.sqrt(params["var"][l] + bn_eps)
        shift = params["beta"][l] - params["mean"][l] * scale
        w_eff = w * scale[:, None, None, None]
        w_t = jnp.transpose(w_eff, (2, 3, 0, 1))                  # (k, k, cout, cin)
        w_t = w_t.reshape(k * k, hidden_channels, w.shape[1])
        pad_c = cin_pad[l] - w.shape[1]
        if pad_c:
            w_t = jnp.pad(w_t, ((0, 0), (0, 0), (0, pad_c)))
        w_list.append(w_t.astype(operand_dtype))
        b_list.append(shift.astype(jnp.float32))
    b_stack = jnp.stack(b_list, axis=0)[:, :, None]               # (layers, hidden, 1)

    mask = jnp.zeros((Hp, Wp), jnp.float32).at[P:P + H, P:P + W].set(1.0).reshape(1, Lp)
    mask = jnp.pad(mask, ((0, 0), (0, Lp_pad - Lp)))

    nonlin = tuple([bool(layers > 1 or final_nonlinearity)] +
                   [bool(final_nonlinearity or l < layers - 1)
                    for l in range(1, layers)])

    C_total = layers * hidden_channels
    halo_rows = max(cin_pad)
    halo_cols = Lp_pad + 2 * M_pad

    # VMEM budget (explicit so v7x's 64 MiB / 32 MiB scoped default is respected).
    est = (2 * _vmem_padded_bytes((batch_tile, cin0_pad, Lp_pad), operand_dtype)
           + 2 * _vmem_padded_bytes((batch_tile, C_total, Lp_pad), jnp.float32)
           + 2 * sum(_vmem_padded_bytes(w.shape, operand_dtype) for w in w_list)
           + 2 * _vmem_padded_bytes(b_stack.shape, jnp.float32)
           + 2 * _vmem_padded_bytes(mask.shape, jnp.float32)
           + _vmem_padded_bytes((halo_rows, halo_cols), operand_dtype))
    vmem_limit = int(min(max(32 << 20, 2 * est + (8 << 20)), 100 << 20))

    kern = functools.partial(
        _stacked_core_kernel, layers=layers, hidden=hidden_channels,
        kerns=tuple(kerns), cin_act=tuple(cin_act), cin_pad=tuple(cin_pad),
        Wp=Wp, Lp_pad=Lp_pad, M_pad=M_pad, nonlin=nonlin, batch=batch_tile)

    in_specs = [pl.BlockSpec((batch_tile, cin0_pad, Lp_pad), lambda n: (n, 0, 0))]
    for w in w_list:                                              # grid-resident weights
        in_specs.append(pl.BlockSpec(w.shape, lambda n: (0, 0, 0)))
    in_specs.append(pl.BlockSpec(b_stack.shape, lambda n: (0, 0, 0)))
    in_specs.append(pl.BlockSpec(mask.shape, lambda n: (0, 0)))

    out = pl.pallas_call(
        kern,
        out_shape=jax.ShapeDtypeStruct((N, C_total, Lp_pad), jnp.float32),
        grid=(N // batch_tile,),
        in_specs=in_specs,
        out_specs=pl.BlockSpec((batch_tile, C_total, Lp_pad), lambda n: (n, 0, 0)),
        scratch_shapes=[pltpu.VMEM((halo_rows, halo_cols), operand_dtype)],
        compiler_params=pltpu.CompilerParams(
            dimension_semantics=("parallel",),
            vmem_limit_bytes=vmem_limit),
    )(xp, *w_list, b_stack, mask)

    # TODO(synk): a fused downstream consumer could take the padded (N, C_total, Lp_pad)
    # slab directly and skip this extra HBM read+write crop pass.
    out = out[:, :, :Lp].reshape(N, C_total, Hp, Wp)[:, :, P:P + H, P:P + W]
    return out


# ----------------------------------------------------------------------------
# Pure-JAX reference (PyTorch semantics) + deterministic parameter init.
# ----------------------------------------------------------------------------
def stacked2d_core_reference(x, params, *, hidden_channels, input_kern, hidden_kern,
                             layers=3, final_nonlinearity=True, bn_eps=1e-5):
    kerns = [input_kern] + [hidden_kern] * (layers - 1)
    nonlin = [layers > 1 or final_nonlinearity] + \
             [final_nonlinearity or l < layers - 1 for l in range(1, layers)]
    outs, cur = [], x
    for l in range(layers):
        k = kerns[l]
        p = k // 2
        y = lax.conv_general_dilated(cur, params["w"][l], window_strides=(1, 1),
                                     padding=[(p, p), (p, p)],
                                     dimension_numbers=("NCHW", "OIHW", "NCHW"),
                                     precision=lax.Precision.HIGHEST)
        scale = params["gamma"][l] / jnp.sqrt(params["var"][l] + bn_eps)
        shift = params["beta"][l] - params["mean"][l] * scale
        y = y * scale[None, :, None, None] + shift[None, :, None, None]
        if nonlin[l]:
            y = _elu(y)
        outs.append(y)
        cur = y
    return jnp.concatenate(outs, axis=1)


def make_params(key, input_channels, hidden_channels, kerns):
    """Xavier-normal conv weights (Core.init_conv), BatchNorm running stats."""
    params = {"w": [], "gamma": [], "beta": [], "mean": [], "var": []}
    cin = input_channels
    keys = jax.random.split(key, 5 * len(kerns))
    for l, k in enumerate(kerns):
        kw, kg, kb, km, kv = keys[5 * l:5 * l + 5]
        std = math.sqrt(2.0 / (cin * k * k + hidden_channels * k * k))
        params["w"].append(
            (std * jax.random.normal(kw, (hidden_channels, cin, k, k))).astype(jnp.float32))
        params["gamma"].append(1.0 + 0.1 * jax.random.normal(kg, (hidden_channels,)))
        params["beta"].append(0.1 * jax.random.normal(kb, (hidden_channels,)))
        params["mean"].append(0.1 * jax.random.normal(km, (hidden_channels,)))
        params["var"].append(1.0 + 0.1 * jnp.abs(jax.random.normal(kv, (hidden_channels,))))
        cin = hidden_channels
    return params


if __name__ == "__main__":
    input_channels, hidden_channels = 4, 32
    input_kern, hidden_kern, layers = 5, 3, 3
    N, H, W = 2, 16, 16

    key = jax.random.PRNGKey(0)
    kx, kp = jax.random.split(key)
    x = jax.random.normal(kx, (N, input_channels, H, W), jnp.float32)
    params = make_params(kp, input_channels, hidden_channels,
                         [input_kern] + [hidden_kern] * (layers - 1))

    ref = stacked2d_core_reference(x, params, hidden_channels=hidden_channels,
                                   input_kern=input_kern, hidden_kern=hidden_kern,
                                   layers=layers)

    common = dict(hidden_channels=hidden_channels, input_kern=input_kern,
                  hidden_kern=hidden_kern, layers=layers)

    # 1) f32 operands, one image per grid step — tight correctness gate.
    fwd = jax.jit(functools.partial(stacked2d_core_forward, **common))
    out = jax.block_until_ready(fwd(x, params))
    assert out.shape == (N, layers * hidden_channels, H, W), out.shape
    assert bool(jnp.all(jnp.isfinite(out)))
    err = float(jnp.max(jnp.abs(out - ref)))
    assert err < 5e-4, f"f32 path max abs error vs reference: {err}"

    # 2) batch-tiled variant (2 images per grid step) — identical numerics expected.
    fwd_bt = jax.jit(functools.partial(stacked2d_core_forward, batch_tile=2, **common))
    out_bt = jax.block_until_ready(fwd_bt(x, params))
    err_bt = float(jnp.max(jnp.abs(out_bt - ref)))
    assert err_bt < 5e-4, f"batch-tiled path max abs error vs reference: {err_bt}"

    # 3) bf16 MXU-operand variant (v6e/v7x fast path) — looser tolerance.
    fwd_bf = jax.jit(functools.partial(stacked2d_core_forward,
                                       operand_dtype=jnp.bfloat16, **common))
    out_bf = jax.block_until_ready(fwd_bf(x, params))
    assert bool(jnp.all(jnp.isfinite(out_bf)))
    err_bf = float(jnp.max(jnp.abs(out_bf - ref)))
    assert err_bf < 5e-2, f"bf16 path max abs error vs reference: {err_bf}"

    print("KERNEL_OK")
</pallas_src>

<mosaic_0001>
module attributes {stable_mosaic.version = 11 : i64} {
  func.func @_stacked_core_kernel(%arg0: i32, %arg1: memref<1x8x512xf32, #tpu.memory_space<vmem>>, %arg2: memref<25x32x8xf32, #tpu.memory_space<vmem>>, %arg3: memref<9x32x32xf32, #tpu.memory_space<vmem>>, %arg4: memref<9x32x32xf32, #tpu.memory_space<vmem>>, %arg5: memref<3x32x1xf32, #tpu.memory_space<vmem>>, %arg6: memref<1x512xf32, #tpu.memory_space<vmem>>, %arg7: memref<1x96x512xf32, #tpu.memory_space<vmem>>, %arg8: memref<32x768xf32, #tpu.memory_space<vmem>>) attributes {dimension_semantics = [#tpu.dimension_semantics<parallel>], iteration_bounds = array<i64: 2>, scalar_prefetch = 0 : i64, scratch_operands = 1 : i64, tpu.core_type = #tpu.core_type<tc>, window_params = [{transform_indices = @transform_0, window_bounds = array<i64: 1, 8, 512>}, {pipeline_mode = #tpu.pipeline_mode<synchronous>, transform_indices = @transform_1, window_bounds = array<i64: 25, 32, 8>}, {pipeline_mode = #tpu.pipeline_mode<synchronous>, transform_indices = @transform_2, window_bounds = array<i64: 9, 32, 32>}, {pipeline_mode = #tpu.pipeline_mode<synchronous>, transform_indices = @transform_3, window_bounds = array<i64: 9, 32, 32>}, {pipeline_mode = #tpu.pipeline_mode<synchronous>, transform_indices = @transform_4, window_bounds = array<i64: 3, 32, 1>}, {pipeline_mode = #tpu.pipeline_mode<synchronous>, transform_indices = @transform_5, window_bounds = array<i64: 1, 512>}, {transform_indices = @transform_6, window_bounds = array<i64: 1, 96, 512>}]} {
    %cst = arith.constant 0.000000e+00 : f32
    %0 = vector.broadcast %cst : f32 to vector<32x768xf32>
    %c0 = arith.constant 0 : index
    %c0_0 = arith.constant 0 : index
    %1 = vector.load %arg8[%c0, %c0_0] : memref<32x768xf32, #tpu.memory_space<vmem>>, vector<32x768xf32>
    tpu.vector_store %arg8[%c0, %c0_0], %0 {strides = array<i32>} : memref<32x768xf32, #tpu.memory_space<vmem>>, vector<32x768xf32>,
    %c0_1 = arith.constant 0 : index
    %c0_2 = arith.constant 0 : index
    %2 = vector.load %arg6[%c0_1, %c0_2] : memref<1x512xf32, #tpu.memory_space<vmem>>, vector<1x512xf32>
    %3 = vector.shape_cast %2 : vector<1x512xf32> to vector<1x512xf32>
    %4 = vector.broadcast %3 : vector<1x512xf32> to vector<32x512xf32>
    %c0_3 = arith.constant 0 : index
    %c0_4 = arith.constant 0 : index
    %c0_5 = arith.constant 0 : index
    %5 = vector.load %arg1[%c0_3, %c0_4, %c0_5] : memref<1x8x512xf32, #tpu.memory_space<vmem>>, vector<1x8x512xf32>
    %6 = vector.shape_cast %5 : vector<1x8x512xf32> to vector<8x512xf32>
    %c0_6 = arith.constant 0 : index
    %c128 = arith.constant 128 : index
    %7 = vector.load %arg8[%c0_6, %c128] : memref<32x768xf32, #tpu.memory_space<vmem>>, vector<8x512xf32>
    tpu.vector_store %arg8[%c0_6, %c128], %6 {strides = array<i32>} : memref<32x768xf32, #tpu.memory_space<vmem>>, vector<8x512xf32>,
    %c0_7 = arith.constant 0 : index
    %c0_8 = arith.constant 0 : index
    %c0_9 = arith.constant 0 : index
    %8 = vector.load %arg2[%c0_7, %c0_8, %c0_9] : memref<25x32x8xf32, #tpu.memory_space<vmem>>, vector<1x32x8xf32>
    %9 = vector.shape_cast %8 : vector<1x32x8xf32> to vector<32x8xf32>
    %c0_10 = arith.constant 0 : index
    %c86 = arith.constant 86 : index
    %10 = vector.load %arg8[%c0_10, %c86] : memref<32x768xf32, #tpu.memory_space<vmem>>, vector<8x512xf32>
    %cst_11 = arith.constant dense<0.000000e+00> : vector<32x512xf32>
    %11 = tpu.matmul %9, %10, %cst_11 {dimension_numbers = #tpu.dot_dimension_numbers<[1], [0], [0], [1], [0, 0, 1, 1], [], []>} : vector<32x8xf32>, vector<8x512xf32>, vector<32x512xf32> -> vector<32x512xf32>
    %c1 = arith.constant 1 : index
    %c0_12 = arith.constant 0 : index
    %c0_13 = arith.constant 0 : index
    %12 = vector.load %arg2[%c1, %c0_12, %c0_13] : memref<25x32x8xf32, #tpu.memory_space<vmem>>, vector<1x32x8xf32>
    %13 = vector.shape_cast %12 : vector<1x32x8xf32> to vector<32x8xf32>
    %c0_14 = arith.constant 0 : index
    %c87 = arith.constant 87 : index
    %14 = vector.load %arg8[%c0_14, %c87] : memref<32x768xf32, #tpu.memory_space<vmem>>, vector<8x512xf32>
    %cst_15 = arith.constant dense<0.000000e+00> : vector<32x512xf32>
    %15 = tpu.matmul %13, %14, %cst_15 {dimension_numbers = #tpu.dot_dimension_numbers<[1], [0], [0], [1], [0, 0, 1, 1], [], []>} : vector<32x8xf32>, vector<8x512xf32>, vector<32x512xf32> -> vector<32x512xf32>
    %16 = arith.addf %11, %15 : vector<32x512xf32>
    %c2 = arith.constant 2 : index
    %c0_16 = arith.constant 0 : index
    %c0_17 = arith.constant 0 : index
    %17 = vector.load %arg2[%c2, %c0_16, %c0_17] : memref<25x32x8xf32, #tpu.memory_space<vmem>>, vector<1x32x8xf32>
    %18 = vector.shape_cast %17 : vector<1x32x8xf32> to vector<32x8xf32>
    %c0_18 = arith.constant 0 : index
    %c88 = arith.constant 88 : index
    %19 = vector.load %arg8[%c0_18, %c88] : memref<32x768xf32, #tpu.memory_space<vmem>>, vector<8x512xf32>
    %cst_19 = arith.constant dense<0.000000e+00> : vector<32x512xf32>
    %20 = tpu.matmul %18, %19, %cst_19 {dimension_numbers = #tpu.dot_dimension_numbers<[1], [0], [0], [1], [0, 0, 1, 1], [], []>} : vector<32x8xf32>, vector<8x512xf32>, vector<32x512xf32> -> vector<32x512xf32>
    %21 = arith.addf %16, %20 : vector<32x512xf32>
    %c3 = arith.constant 3 : index
    %c0_20 = arith.constant 0 : index
    %c0_21 = arith.constant 0 : index
    %22 = vector.load %arg2[%c3, %c0_20, %c0_21] : memref<25x32x8xf32, #tpu.memory_space<vmem>>, vector<1x32x8xf32>
    %23 = vector.shape_cast %22 : vector<1x32x8xf32> to vector<32x8xf32>
    %c0_22 = arith.constant 0 : index
    %c89 = arith.constant 89 : index
    %24 = vector.load %arg8[%c0_22, %c89] : memref<32x768xf32, #tpu.memory_space<vmem>>, vector<8x512xf32>
    %cst_23 = arith.constant dense<0.000000e+00> : vector<32x512xf32>
    %25 = tpu.matmul %23, %24, %cst_23 {dimension_numbers = #tpu.dot_dimension_numbers<[1], [0], [0], [1], [0, 0, 1, 1], [], []>} : vector<32x8xf32>, vector<8x512xf32>, vector<32x512xf32> -> vector<32x512xf32>
    %26 = arith.addf %21, %25 : vector<32x512xf32>
    %c4 = arith.constant 4 : index
    %c0_24 = arith.constant 0 : index
    %c0_25 = arith.constant 0 : index
    %27 = vector.load %arg2[%c4, %c0_24, %c0_25] : memref<25x32x8xf32, #tpu.memory_space<vmem>>, vector<1x32x8xf32>
    %28 = vector.shape_cast %27 : vector<1x32x8xf32> to vector<32x8xf32>
    %c0_26 = arith.constant 0 : index
    %c90 = arith.constant 90 : index
    %29 = vector.load %arg8[%c0_26, %c90] : memref<32x768xf32, #tpu.memory_space<vmem>>, vector<8x512xf32>
    %cst_27 = arith.constant dense<0.000000e+00> : vector<32x512xf32>
    %30 = tpu.matmul %28, %29, %cst_27 {dimension_numbers = #tpu.dot_dimension_numbers<[1], [0], [0], [1], [0, 0, 1, 1], [], []>} : vector<32x8xf32>, vector<8x512xf32>, vector<32x512xf32> -> vector<32x512xf32>
    %31 = arith.addf %26, %30 : vector<32x512xf32>
    %c5 = arith.constant 5 : index
    %c0_28 = arith.constant 0 : index
    %c0_29 = arith.constant 0 : index
    %32 = vector.load %arg2[%c5, %c0_28, %c0_29] : memref<25x32x8xf32, #tpu.memory_space<vmem>>, vector<1x32x8xf32>
    %33 = vector.shape_cast %32 : vector<1x32x8xf32> to vector<32x8xf32>
    %c0_30 = arith.constant 0 : index
    %c106 = arith.constant 106 : index
    %34 = vector.load %arg8[%c0_30, %c106] : memref<32x768xf32, #tpu.memory_space<vmem>>, vector<8x512xf32>
    %cst_31 = arith.constant dense<0.000000e+00> : vector<32x512xf32>
    %35 = tpu.matmul %33, %34, %cst_31 {dimension_numbers = #tpu.dot_dimension_numbers<[1], [0], [0], [1], [0, 0, 1, 1], [], []>} : vector<32x8xf32>, vector<8x512xf32>, vector<32x512xf32> -> vector<32x512xf32>
    %36 = arith.addf %31, %35 : vector<32x512xf32>
    %c6 = arith.constant 6 : index
    %c0_32 = arith.constant 0 : index
    %c0_33 = arith.constant 0 : index
    %37 = vector.load %arg2[%c6, %c0_32, %c0_33] : memref<25x32x8xf32, #tpu.memory_space<vmem>>, vector<1x32x8xf32>
    %38 = vector.shape_cast %37 : vector<1x32x8xf32> to vector<32x8xf32>
    %c0_34 = arith.constant 0 : index
    %c107 = arith.constant 107 : index
    %39 = vector.load %arg8[%c0_34, %c107] : memref<32x768xf32, #tpu.memory_space<vmem>>, vector<8x512xf32>
    %cst_35 = arith.constant dense<0.000000e+00> : vector<32x512xf32>
    %40 = tpu.matmul %38, %39, %cst_35 {dimension_numbers = #tpu.dot_dimension_numbers<[1], [0], [0], [1], [0, 0, 1, 1], [], []>} : vector<32x8xf32>, vector<8x512xf32>, vector<32x512xf32> -> vector<32x512xf32>
    %41 = arith.addf %36, %40 : vector<32x512xf32>
    %c7 = arith.constant 7 : index
    %c0_36 = arith.constant 0 : index
    %c0_37 = arith.constant 0 : index
    %42 = vector.load %arg2[%c7, %c0_36, %c0_37] : memref<25x32x8xf32, #tpu.memory_space<vmem>>, vector<1x32x8xf32>
    %43 = vector.shape_cast %42 : vector<1x32x8xf32> to vector<32x8xf32>
    %c0_38 = arith.constant 0 : index
    %c108 = arith.constant 108 : index
    %44 = vector.load %arg8[%c0_38, %c108] : memref<32x768xf32, #tpu.memory_space<vmem>>, vector<8x512xf32>
    %cst_39 = arith.constant dense<0.000000e+00> : vector<32x512xf32>
    %45 = tpu.matmul %43, %44, %cst_39 {dimension_numbers = #tpu.dot_dimension_numbers<[1], [0], [0], [1], [0, 0, 1, 1], [], []>} : vector<32x8xf32>, vector<8x512xf32>, vector<32x512xf32> -> vector<32x512xf32>
    %46 = arith.addf %41, %45 : vector<32x512xf32>
    %c8 = arith.constant 8 : index
    %c0_40 = arith.constant 0 : index
    %c0_41 = arith.constant 0 : index
    %47 = vector.load %arg2[%c8, %c0_40, %c0_41] : memref<25x32x8xf32, #tpu.memory_space<vmem>>, vector<1x32x8xf32>
    %48 = vector.shape_cast %47 : vector<1x32x8xf32> to vector<32x8xf32>
    %c0_42 = arith.constant 0 : index
    %c109 = arith.constant 109 : index
    %49 = vector.load %arg8[%c0_42, %c109] : memref<32x768xf32, #tpu.memory_space<vmem>>, vector<8x512xf32>
    %cst_43 = arith.constant dense<0.000000e+00> : vector<32x512xf32>
    %50 = tpu.matmul %48, %49, %cst_43 {dimension_numbers = #tpu.dot_dimension_numbers<[1], [0], [0], [1], [0, 0, 1, 1], [], []>} : vector<32x8xf32>, vector<8x512xf32>, vector<32x512xf32> -> vector<32x512xf32>
    %51 = arith.addf %46, %50 : vector<32x512xf32>
    %c9 = arith.constant 9 : index
    %c0_44 = arith.constant 0 : index
    %c0_45 = arith.constant 0 : index
    %52 = vector.load %arg2[%c9, %c0_44, %c0_45] : memref<25x32x8xf32, #tpu.memory_space<vmem>>, vector<1x32x8xf32>
    %53 = vector.shape_cast %52 : vector<1x32x8xf32> to vector<32x8xf32>
    %c0_46 = arith.constant 0 : index
    %c110 = arith.constant 110 : index
    %54 = vector.load %arg8[%c0_46, %c110] : memref<32x768xf32, #tpu.memory_space<vmem>>, vector<8x512xf32>
    %cst_47 = arith.constant dense<0.000000e+00> : vector<32x512xf32>
    %55 = tpu.matmul %53, %54, %cst_47 {dimension_numbers = #tpu.dot_dimension_numbers<[1], [0], [0], [1], [0, 0, 1, 1], [], []>} : vector<32x8xf32>, vector<8x512xf32>, vector<32x512xf32> -> vector<32x512xf32>
    %56 = arith.addf %51, %55 : vector<32x512xf32>
    %c10 = arith.constant 10 : index
    %c0_48 = arith.constant 0 : index
    %c0_49 = arith.constant 0 : index
    %57 = vector.load %arg2[%c10, %c0_48, %c0_49] : memref<25x32x8xf32, #tpu.memory_space<vmem>>, vector<1x32x8xf32>
    %58 = vector.shape_cast %57 : vector<1x32x8xf32> to vector<32x8xf32>
    %c0_50 = arith.constant 0 : index
    %c126 = arith.constant 126 : index
    %59 = vector.load %arg8[%c0_50, %c126] : memref<32x768xf32, #tpu.memory_space<vmem>>, vector<8x512xf32>
    %cst_51 = arith.constant dense<0.000000e+00> : vector<32x512xf32>
    %60 = tpu.matmul %58, %59, %cst_51 {dimension_numbers = #tpu.dot_dimension_numbers<[1], [0], [0], [1], [0, 0, 1, 1], [], []>} : vector<32x8xf32>, vector<8x512xf32>, vector<32x512xf32> -> vector<32x512xf32>
    %61 = arith.addf %56, %60 : vector<32x512xf32>
    %c11 = arith.constant 11 : index
    %c0_52 = arith.constant 0 : index
    %c0_53 = arith.constant 0 : index
    %62 = vector.load %arg2[%c11, %c0_52, %c0_53] : memref<25x32x8xf32, #tpu.memory_space<vmem>>, vector<1x32x8xf32>
    %63 = vector.shape_cast %62 : vector<1x32x8xf32> to vector<32x8xf32>
    %c0_54 = arith.constant 0 : index
    %c127 = arith.constant 127 : index
    %64 = vector.load %arg8[%c0_54, %c127] : memref<32x768xf32, #tpu.memory_space<vmem>>, vector<8x512xf32>
    %cst_55 = arith.constant dense<0.000000e+00> : vector<32x512xf32>
    %65 = tpu.matmul %63, %64, %cst_55 {dimension_numbers = #tpu.dot_dimension_numbers<[1], [0], [0], [1], [0, 0, 1, 1], [], []>} : vector<32x8xf32>, vector<8x512xf32>, vector<32x512xf32> -> vector<32x512xf32>
    %66 = arith.addf %61, %65 : vector<32x512xf32>
    %c12 = arith.constant 12 : index
    %c0_56 = arith.constant 0 : index
    %c0_57 = arith.constant 0 : index
    %67 = vector.load %arg2[%c12, %c0_56, %c0_57] : memref<25x32x8xf32, #tpu.memory_space<vmem>>, vector<1x32x8xf32>
    %68 = vector.shape_cast %67 : vector<1x32x8xf32> to vector<32x8xf32>
    %c0_58 = arith.constant 0 : index
    %c128_59 = arith.constant 128 : index
    %69 = vector.load %arg8[%c0_58, %c128_59] : memref<32x768xf32, #tpu.memory_space<vmem>>, vector<8x512xf32>
    %cst_60 = arith.constant dense<0.000000e+00> : vector<32x512xf32>
    %70 = tpu.matmul %68, %69, %cst_60 {dimension_numbers = #tpu.dot_dimension_numbers<[1], [0], [0], [1], [0, 0, 1, 1], [], []>} : vector<32x8xf32>, vector<8x512xf32>, vector<32x512xf32> -> vector<32x512xf32>
    %71 = arith.addf %66, %70 : vector<32x512xf32>
    %c13 = arith.constant 13 : index
    %c0_61 = arith.constant 0 : index
    %c0_62 = arith.constant 0 : index
    %72 = vector.load %arg2[%c13, %c0_61, %c0_62] : memref<25x32x8xf32, #tpu.memory_space<vmem>>, vector<1x32x8xf32>
    %73 = vector.shape_cast %72 : vector<1x32x8xf32> to vector<32x8xf32>
    %c0_63 = arith.constant 0 : index
    %c129 = arith.constant 129 : index
    %74 = vector.load %arg8[%c0_63, %c129] : memref<32x768xf32, #tpu.memory_space<vmem>>, vector<8x512xf32>
    %cst_64 = arith.constant dense<0.000000e+00> : vector<32x512xf32>
    %75 = tpu.matmul %73, %74, %cst_64 {dimension_numbers = #tpu.dot_dimension_numbers<[1], [0], [0], [1], [0, 0, 1, 1], [], []>} : vector<32x8xf32>, vector<8x512xf32>, vector<32x512xf32> -> vector<32x512xf32>
    %76 = arith.addf %71, %75 : vector<32x512xf32>
    %c14 = arith.constant 14 : index
    %c0_65 = arith.constant 0 : index
    %c0_66 = arith.constant 0 : index
    %77 = vector.load %arg2[%c14, %c0_65, %c0_66] : memref<25x32x8xf32, #tpu.memory_space<vmem>>, vector<1x32x8xf32>
    %78 = vector.shape_cast %77 : vector<1x32x8xf32> to vector<32x8xf32>
    %c0_67 = arith.constant 0 : index
    %c130 = arith.constant 130 : index
    %79 = vector.load %arg8[%c0_67, %c130] : memref<32x768xf32, #tpu.memory_space<vmem>>, vector<8x512xf32>
    %cst_68 = arith.constant dense<0.000000e+00> : vector<32x512xf32>
    %80 = tpu.matmul %78, %79, %cst_68 {dimension_numbers = #tpu.dot_dimension_numbers<[1], [0], [0], [1], [0, 0, 1, 1], [], []>} : vector<32x8xf32>, vector<8x512xf32>, vector<32x512xf32> -> vector<32x512xf32>
    %81 = arith.addf %76, %80 : vector<32x512xf32>
    %c15 = arith.constant 15 : index
    %c0_69 = arith.constant 0 : index
    %c0_70 = arith.constant 0 : index
    %82 = vector.load %arg2[%c15, %c0_69, %c0_70] : memref<25x32x8xf32, #tpu.memory_space<vmem>>, vector<1x32x8xf32>
    %83 = vector.shape_cast %82 : vector<1x32x8xf32> to vector<32x8xf32>
    %c0_71 = arith.constant 0 : index
    %c146 = arith.constant 146 : index
    %84 = vector.load %arg8[%c0_71, %c146] : memref<32x768xf32, #tpu.memory_space<vmem>>, vector<8x512xf32>
    %cst_72 = arith.constant dense<0.000000e+00> : vector<32x512xf32>
    %85 = tpu.matmul %83, %84, %cst_72 {dimension_numbers = #tpu.dot_dimension_numbers<[1], [0], [0], [1], [0, 0, 1, 1], [], []>} : vector<32x8xf32>, vector<8x512xf32>, vector<32x512xf32> -> vector<32x512xf32>
    %86 = arith.addf %81, %85 : vector<32x512xf32>
    %c16 = arith.constant 16 : index
    %c0_73 = arith.constant 0 : index
    %c0_74 = arith.constant 0 : index
    %87 = vector.load %arg2[%c16, %c0_73, %c0_74] : memref<25x32x8xf32, #tpu.memory_space<vmem>>, vector<1x32x8xf32>
    %88 = vector.shape_cast %87 : vector<1x32x8xf32> to vector<32x8xf32>
    %c0_75 = arith.constant 0 : index
    %c147 = arith.constant 147 : index
    %89 = vector.load %arg8[%c0_75, %c147] : memref<32x768xf32, #tpu.memory_space<vmem>>, vector<8x512xf32>
    %cst_76 = arith.constant dense<0.000000e+00> : vector<32x512xf32>
    %90 = tpu.matmul %88, %89, %cst_76 {dimension_numbers = #tpu.dot_dimension_numbers<[1], [0], [0], [1], [0, 0, 1, 1], [], []>} : vector<32x8xf32>, vector<8x512xf32>, vector<32x512xf32> -> vector<32x512xf32>
    %91 = arith.addf %86, %90 : vector<32x512xf32>
    %c17 = arith.constant 17 : index
    %c0_77 = arith.constant 0 : index
    %c0_78 = arith.constant 0 : index
    %92 = vector.load %arg2[%c17, %c0_77, %c0_78] : memref<25x32x8xf32, #tpu.memory_space<vmem>>, vector<1x32x8xf32>
    %93 = vector.shape_cast %92 : vector<1x32x8xf32> to vector<32x8xf32>
    %c0_79 = arith.constant 0 : index
    %c148 = arith.constant 148 : index
    %94 = vector.load %arg8[%c0_79, %c148] : memref<32x768xf32, #tpu.memory_space<vmem>>, vector<8x512xf32>
    %cst_80 = arith.constant dense<0.000000e+00> : vector<32x512xf32>
    %95 = tpu.matmul %93, %94, %cst_80 {dimension_numbers = #tpu.dot_dimension_numbers<[1], [0], [0], [1], [0, 0, 1, 1], [], []>} : vector<32x8xf32>, vector<8x512xf32>, vector<32x512xf32> -> vector<32x512xf32>
    %96 = arith.addf %91, %95 : vector<32x512xf32>
    %c18 = arith.constant 18 : index
    %c0_81 = arith.constant 0 : index
    %c0_82 = arith.constant 0 : index
    %97 = vector.load %arg2[%c18, %c0_81, %c0_82] : memref<25x32x8xf32, #tpu.memory_space<vmem>>, vector<1x32x8xf32>
    %98 = vector.shape_cast %97 : vector<1x32x8xf32> to vector<32x8xf32>
    %c0_83 = arith.constant 0 : index
    %c149 = arith.constant 149 : index
    %99 = vector.load %arg8[%c0_83, %c149] : memref<32x768xf32, #tpu.memory_space<vmem>>, vector<8x512xf32>
    %cst_84 = arith.constant dense<0.000000e+00> : vector<32x512xf32>
    %100 = tpu.matmul %98, %99, %cst_84 {dimension_numbers = #tpu.dot_dimension_numbers<[1], [0], [0], [1], [0, 0, 1, 1], [], []>} : vector<32x8xf32>, vector<8x512xf32>, vector<32x512xf32> -> vector<32x512xf32>
    %101 = arith.addf %96, %100 : vector<32x512xf32>
    %c19 = arith.constant 19 : index
    %c0_85 = arith.constant 0 : index
    %c0_86 = arith.constant 0 : index
    %102 = vector.load %arg2[%c19, %c0_85, %c0_86] : memref<25x32x8xf32, #tpu.memory_space<vmem>>, vector<1x32x8xf32>
    %103 = vector.shape_cast %102 : vector<1x32x8xf32> to vector<32x8xf32>
    %c0_87 = arith.constant 0 : index
    %c150 = arith.constant 150 : index
    %104 = vector.load %arg8[%c0_87, %c150] : memref<32x768xf32, #tpu.memory_space<vmem>>, vector<8x512xf32>
    %cst_88 = arith.constant dense<0.000000e+00> : vector<32x512xf32>
    %105 = tpu.matmul %103, %104, %cst_88 {dimension_numbers = #tpu.dot_dimension_numbers<[1], [0], [0], [1], [0, 0, 1, 1], [], []>} : vector<32x8xf32>, vector<8x512xf32>, vector<32x512xf32> -> vector<32x512xf32>
    %106 = arith.addf %101, %105 : vector<32x512xf32>
    %c20 = arith.constant 20 : index
    %c0_89 = arith.constant 0 : index
    %c0_90 = arith.constant 0 : index
    %107 = vector.load %arg2[%c20, %c0_89, %c0_90] : memref<25x32x8xf32, #tpu.memory_space<vmem>>, vector<1x32x8xf32>
    %108 = vector.shape_cast %107 : vector<1x32x8xf32> to vector<32x8xf32>
    %c0_91 = arith.constant 0 : index
    %c166 = arith.constant 166 : index
    %109 = vector.load %arg8[%c0_91, %c166] : memref<32x768xf32, #tpu.memory_space<vmem>>, vector<8x512xf32>
    %cst_92 = arith.constant dense<0.000000e+00> : vector<32x512xf32>
    %110 = tpu.matmul %108, %109, %cst_92 {dimension_numbers = #tpu.dot_dimension_numbers<[1], [0], [0], [1], [0, 0, 1, 1], [], []>} : vector<32x8xf32>, vector<8x512xf32>, vector<32x512xf32> -> vector<32x512xf32>
    %111 = arith.addf %106, %110 : vector<32x512xf32>
    %c21 = arith.constant 21 : index
    %c0_93 = arith.constant 0 : index
    %c0_94 = arith.constant 0 : index
    %112 = vector.load %arg2[%c21, %c0_93, %c0_94] : memref<25x32x8xf32, #tpu.memory_space<vmem>>, vector<1x32x8xf32>
    %113 = vector.shape_cast %112 : vector<1x32x8xf32> to vector<32x8xf32>
    %c0_95 = arith.constant 0 : index
    %c167 = arith.constant 167 : index
    %114 = vector.load %arg8[%c0_95, %c167] : memref<32x768xf32, #tpu.memory_space<vmem>>, vector<8x512xf32>
    %cst_96 = arith.constant dense<0.000000e+00> : vector<32x512xf32>
    %115 = tpu.matmul %113, %114, %cst_96 {dimension_numbers = #tpu.dot_dimension_numbers<[1], [0], [0], [1], [0, 0, 1, 1], [], []>} : vector<32x8xf32>, vector<8x512xf32>, vector<32x512xf32> -> vector<32x512xf32>
    %116 = arith.addf %111, %115 : vector<32x512xf32>
    %c22 = arith.constant 22 : index
    %c0_97 = arith.constant 0 : index
    %c0_98 = arith.constant 0 : index
    %117 = vector.load %arg2[%c22, %c0_97, %c0_98] : memref<25x32x8xf32, #tpu.memory_space<vmem>>, vector<1x32x8xf32>
    %118 = vector.shape_cast %117 : vector<1x32x8xf32> to vector<32x8xf32>
    %c0_99 = arith.constant 0 : index
    %c168 = arith.constant 168 : index
    %119 = vector.load %arg8[%c0_99, %c168] : memref<32x768xf32, #tpu.memory_space<vmem>>, vector<8x512xf32>
    %cst_100 = arith.constant dense<0.000000e+00> : vector<32x512xf32>
    %120 = tpu.matmul %118, %119, %cst_100 {dimension_numbers = #tpu.dot_dimension_numbers<[1], [0], [0], [1], [0, 0, 1, 1], [], []>} : vector<32x8xf32>, vector<8x512xf32>, vector<32x512xf32> -> vector<32x512xf32>
    %121 = arith.addf %116, %120 : vector<32x512xf32>
    %c23 = arith.constant 23 : index
    %c0_101 = arith.constant 0 : index
    %c0_102 = arith.constant 0 : index
    %122 = vector.load %arg2[%c23, %c0_101, %c0_102] : memref<25x32x8xf32, #tpu.memory_space<vmem>>, vector<1x32x8xf32>
    %123 = vector.shape_cast %122 : vector<1x32x8xf32> to vector<32x8xf32>
    %c0_103 = arith.constant 0 : index
    %c169 = arith.constant 169 : index
    %124 = vector.load %arg8[%c0_103, %c169] : memref<32x768xf32, #tpu.memory_space<vmem>>, vector<8x512xf32>
    %cst_104 = arith.constant dense<0.000000e+00> : vector<32x512xf32>
    %125 = tpu.matmul %123, %124, %cst_104 {dimension_numbers = #tpu.dot_dimension_numbers<[1], [0], [0], [1], [0, 0, 1, 1], [], []>} : vector<32x8xf32>, vector<8x512xf32>, vector<32x512xf32> -> vector<32x512xf32>
    %126 = arith.addf %121, %125 : vector<32x512xf32>
    %c24 = arith.constant 24 : index
    %c0_105 = arith.constant 0 : index
    %c0_106 = arith.constant 0 : index
    %127 = vector.load %arg2[%c24, %c0_105, %c0_106] : memref<25x32x8xf32, #tpu.memory_space<vmem>>, vector<1x32x8xf32>
    %128 = vector.shape_cast %127 : vector<1x32x8xf32> to vector<32x8xf32>
    %c0_107 = arith.constant 0 : index
    %c170 = arith.constant 170 : index
    %129 = vector.load %arg8[%c0_107, %c170] : memref<32x768xf32, #tpu.memory_space<vmem>>, vector<8x512xf32>
    %cst_108 = arith.constant dense<0.000000e+00> : vector<32x512xf32>
    %130 = tpu.matmul %128, %129, %cst_108 {dimension_numbers = #tpu.dot_dimension_numbers<[1], [0], [0], [1], [0, 0, 1, 1], [], []>} : vector<32x8xf32>, vector<8x512xf32>, vector<32x512xf32> -> vector<32x512xf32>
    %131 = arith.addf %126, %130 : vector<32x512xf32>
    %c0_109 = arith.constant 0 : index
    %c0_110 = arith.constant 0 : index
    %c0_111 = arith.constant 0 : index
    %132 = vector.load %arg5[%c0_109, %c0_110, %c0_111] : memref<3x32x1xf32, #tpu.memory_space<vmem>>, vector<1x32x1xf32>
    %133 = vector.shape_cast %132 : vector<1x32x1xf32> to vector<32x1xf32>
    %134 = vector.broadcast %133 : vector<32x1xf32> to vector<32x512xf32>
    %135 = arith.addf %131, %134 : vector<32x512xf32>
    %cst_112 = arith.constant 0.000000e+00 : f32
    %136 = vector.broadcast %cst_112 : f32 to vector<32x512xf32>
    %137 = arith.cmpf ogt, %135, %136 : vector<32x512xf32>
    %cst_113 = arith.constant 0.000000e+00 : f32
    %138 = vector.broadcast %cst_113 : f32 to vector<32x512xf32>
    %139 = arith.minimumf %135, %138 : vector<32x512xf32>
    %140 = math.exp %139 : vector<32x512xf32>
    %cst_114 = arith.constant 1.000000e+00 : f32
    %141 = vector.broadcast %cst_114 : f32 to vector<32x512xf32>
    %142 = arith.subf %140, %141 : vector<32x512xf32>
    %143 = arith.select %137, %135, %142 : vector<32x512xi1>, vector<32x512xf32>
    %144 = arith.mulf %143, %4 : vector<32x512xf32>
    %c0_115 = arith.constant 0 : index
    %c0_116 = arith.constant 0 : index
    %c0_117 = arith.constant 0 : index
    %145 = vector.load %arg7[%c0_115, %c0_116, %c0_117] : memref<1x96x512xf32, #tpu.memory_space<vmem>>, vector<1x32x512xf32>
    %146 = vector.shape_cast %145 : vector<1x32x512xf32> to vector<32x512xf32>
    %147 = vector.shape_cast %144 : vector<32x512xf32> to vector<1x32x512xf32>
    tpu.vector_store %arg7[%c0_115, %c0_116, %c0_117], %147 {strides = array<i32>} : memref<1x96x512xf32, #tpu.memory_space<vmem>>, vector<1x32x512xf32>,
    %c0_118 = arith.constant 0 : index
    %c128_119 = arith.constant 128 : index
    %148 = vector.load %arg8[%c0_118, %c128_119] : memref<32x768xf32, #tpu.memory_space<vmem>>, vector<32x512xf32>
    tpu.vector_store %arg8[%c0_118, %c128_119], %144 {strides = array<i32>} : memref<32x768xf32, #tpu.memory_space<vmem>>, vector<32x512xf32>,
    %c0_120 = arith.constant 0 : index
    %c0_121 = arith.constant 0 : index
    %c0_122 = arith.constant 0 : index
    %149 = vector.load %arg3[%c0_120, %c0_121, %c0_122] : memref<9x32x32xf32, #tpu.memory_space<vmem>>, vector<1x32x32xf32>
    %150 = vector.shape_cast %149 : vector<1x32x32xf32> to vector<32x32xf32>
    %c0_123 = arith.constant 0 : index
    %c107_124 = arith.constant 107 : index
    %151 = vector.load %arg8[%c0_123, %c107_124] : memref<32x768xf32, #tpu.memory_space<vmem>>, vector<32x512xf32>
    %cst_125 = arith.constant dense<0.000000e+00> : vector<32x512xf32>
    %152 = tpu.matmul %150, %151, %cst_125 {dimension_numbers = #tpu.dot_dimension_numbers<[1], [0], [0], [1], [0, 0, 1, 1], [], []>} : vector<32x32xf32>, vector<32x512xf32>, vector<32x512xf32> -> vector<32x512xf32>
    %c1_126 = arith.constant 1 : index
    %c0_127 = arith.constant 0 : index
    %c0_128 = arith.constant 0 : index
    %153 = vector.load %arg3[%c1_126, %c0_127, %c0_128] : memref<9x32x32xf32, #tpu.memory_space<vmem>>, vector<1x32x32xf32>
    %154 = vector.shape_cast %153 : vector<1x32x32xf32> to vector<32x32xf32>
    %c0_129 = arith.constant 0 : index
    %c108_130 = arith.constant 108 : index
    %155 = vector.load %arg8[%c0_129, %c108_130] : memref<32x768xf32, #tpu.memory_space<vmem>>, vector<32x512xf32>
    %cst_131 = arith.constant dense<0.000000e+00> : vector<32x512xf32>
    %156 = tpu.matmul %154, %155, %cst_131 {dimension_numbers = #tpu.dot_dimension_numbers<[1], [0], [0], [1], [0, 0, 1, 1], [], []>} : vector<32x32xf32>, vector<32x512xf32>, vector<32x512xf32> -> vector<32x512xf32>
    %157 = arith.addf %152, %156 : vector<32x512xf32>
    %c2_132 = arith.constant 2 : index
    %c0_133 = arith.constant 0 : index
    %c0_134 = arith.constant 0 : index
    %158 = vector.load %arg3[%c2_132, %c0_133, %c0_134] : memref<9x32x32xf32, #tpu.memory_space<vmem>>, vector<1x32x32xf32>
    %159 = vector.shape_cast %158 : vector<1x32x32xf32> to vector<32x32xf32>
    %c0_135 = arith.constant 0 : index
    %c109_136 = arith.constant 109 : index
    %160 = vector.load %arg8[%c0_135, %c109_136] : memref<32x768xf32, #tpu.memory_space<vmem>>, vector<32x512xf32>
    %cst_137 = arith.constant dense<0.000000e+00> : vector<32x512xf32>
    %161 = tpu.matmul %159, %160, %cst_137 {dimension_numbers = #tpu.dot_dimension_numbers<[1], [0], [0], [1], [0, 0, 1, 1], [], []>} : vector<32x32xf32>, vector<32x512xf32>, vector<32x512xf32> -> vector<32x512xf32>
    %162 = arith.addf %157, %161 : vector<32x512xf32>
    %c3_138 = arith.constant 3 : index
    %c0_139 = arith.constant 0 : index
    %c0_140 = arith.constant 0 : index
    %163 = vector.load %arg3[%c3_138, %c0_139, %c0_140] : memref<9x32x32xf32, #tpu.memory_space<vmem>>, vector<1x32x32xf32>
    %164 = vector.shape_cast %163 : vector<1x32x32xf32> to vector<32x32xf32>
    %c0_141 = arith.constant 0 : index
    %c127_142 = arith.constant 127 : index
    %165 = vector.load %arg8[%c0_141, %c127_142] : memref<32x768xf32, #tpu.memory_space<vmem>>, vector<32x512xf32>
    %cst_143 = arith.constant dense<0.000000e+00> : vector<32x512xf32>
    %166 = tpu.matmul %164, %165, %cst_143 {dimension_numbers = #tpu.dot_dimension_numbers<[1], [0], [0], [1], [0, 0, 1, 1], [], []>} : vector<32x32xf32>, vector<32x512xf32>, vector<32x512xf32> -> vector<32x512xf32>
    %167 = arith.addf %162, %166 : vector<32x512xf32>
    %c4_144 = arith.constant 4 : index
    %c0_145 = arith.constant 0 : index
    %c0_146 = arith.constant 0 : index
    %168 = vector.load %arg3[%c4_144, %c0_145, %c0_146] : memref<9x32x32xf32, #tpu.memory_space<vmem>>, vector<1x32x32xf32>
    %169 = vector.shape_cast %168 : vector<1x32x32xf32> to vector<32x32xf32>
    %c0_147 = arith.constant 0 : index
    %c128_148 = arith.constant 128 : index
    %170 = vector.load %arg8[%c0_147, %c128_148] : memref<32x768xf32, #tpu.memory_space<vmem>>, vector<32x512xf32>
    %cst_149 = arith.constant dense<0.000000e+00> : vector<32x512xf32>
    %171 = tpu.matmul %169, %170, %cst_149 {dimension_numbers = #tpu.dot_dimension_numbers<[1], [0], [0], [1], [0, 0, 1, 1], [], []>} : vector<32x32xf32>, vector<32x512xf32>, vector<32x512xf32> -> vector<32x512xf32>
    %172 = arith.addf %167, %171 : vector<32x512xf32>
    %c5_150 = arith.constant 5 : index
    %c0_151 = arith.constant 0 : index
    %c0_152 = arith.constant 0 : index
    %173 = vector.load %arg3[%c5_150, %c0_151, %c0_152] : memref<9x32x32xf32, #tpu.memory_space<vmem>>, vector<1x32x32xf32>
    %174 = vector.shape_cast %173 : vector<1x32x32xf32> to vector<32x32xf32>
    %c0_153 = arith.constant 0 : index
    %c129_154 = arith.constant 129 : index
    %175 = vector.load %arg8[%c0_153, %c129_154] : memref<32x768xf32, #tpu.memory_space<vmem>>, vector<32x512xf32>
    %cst_155 = arith.constant dense<0.000000e+00> : vector<32x512xf32>
    %176 = tpu.matmul %174, %175, %cst_155 {dimension_numbers = #tpu.dot_dimension_numbers<[1], [0], [0], [1], [0, 0, 1, 1], [], []>} : vector<32x32xf32>, vector<32x512xf32>, vector<32x512xf32> -> vector<32x512xf32>
    %177 = arith.addf %172, %176 : vector<32x512xf32>
    %c6_156 = arith.constant 6 : index
    %c0_157 = arith.constant 0 : index
    %c0_158 = arith.constant 0 : index
    %178 = vector.load %arg3[%c6_156, %c0_157, %c0_158] : memref<9x32x32xf32, #tpu.memory_space<vmem>>, vector<1x32x32xf32>
    %179 = vector.shape_cast %178 : vector<1x32x32xf32> to vector<32x32xf32>
    %c0_159 = arith.constant 0 : index
    %c147_160 = arith.constant 147 : index
    %180 = vector.load %arg8[%c0_159, %c147_160] : memref<32x768xf32, #tpu.memory_space<vmem>>, vector<32x512xf32>
    %cst_161 = arith.constant dense<0.000000e+00> : vector<32x512xf32>
    %181 = tpu.matmul %179, %180, %cst_161 {dimension_numbers = #tpu.dot_dimension_numbers<[1], [0], [0], [1], [0, 0, 1, 1], [], []>} : vector<32x32xf32>, vector<32x512xf32>, vector<32x512xf32> -> vector<32x512xf32>
    %182 = arith.addf %177, %181 : vector<32x512xf32>
    %c7_162 = arith.constant 7 : index
    %c0_163 = arith.constant 0 : index
    %c0_164 = arith.constant 0 : index
    %183 = vector.load %arg3[%c7_162, %c0_163, %c0_164] : memref<9x32x32xf32, #tpu.memory_space<vmem>>, vector<1x32x32xf32>
    %184 = vector.shape_cast %183 : vector<1x32x32xf32> to vector<32x32xf32>
    %c0_165 = arith.constant 0 : index
    %c148_166 = arith.constant 148 : index
    %185 = vector.load %arg8[%c0_165, %c148_166] : memref<32x768xf32, #tpu.memory_space<vmem>>, vector<32x512xf32>
    %cst_167 = arith.constant dense<0.000000e+00> : vector<32x512xf32>
    %186 = tpu.matmul %184, %185, %cst_167 {dimension_numbers = #tpu.dot_dimension_numbers<[1], [0], [0], [1], [0, 0, 1, 1], [], []>} : vector<32x32xf32>, vector<32x512xf32>, vector<32x512xf32> -> vector<32x512xf32>
    %187 = arith.addf %182, %186 : vector<32x512xf32>
    %c8_168 = arith.constant 8 : index
    %c0_169 = arith.constant 0 : index
    %c0_170 = arith.constant 0 : index
    %188 = vector.load %arg3[%c8_168, %c0_169, %c0_170] : memref<9x32x32xf32, #tpu.memory_space<vmem>>, vector<1x32x32xf32>
    %189 = vector.shape_cast %188 : vector<1x32x32xf32> to vector<32x32xf32>
    %c0_171 = arith.constant 0 : index
    %c149_172 = arith.constant 149 : index
    %190 = vector.load %arg8[%c0_171, %c149_172] : memref<32x768xf32, #tpu.memory_space<vmem>>, vector<32x512xf32>
    %cst_173 = arith.constant dense<0.000000e+00> : vector<32x512xf32>
    %191 = tpu.matmul %189, %190, %cst_173 {dimension_numbers = #tpu.dot_dimension_numbers<[1], [0], [0], [1], [0, 0, 1, 1], [], []>} : vector<32x32xf32>, vector<32x512xf32>, vector<32x512xf32> -> vector<32x512xf32>
    %192 = arith.addf %187, %191 : vector<32x512xf32>
    %c1_174 = arith.constant 1 : index
    %c0_175 = arith.constant 0 : index
    %c0_176 = arith.constant 0 : index
    %193 = vector.load %arg5[%c1_174, %c0_175, %c0_176] : memref<3x32x1xf32, #tpu.memory_space<vmem>>, vector<1x32x1xf32>
    %194 = vector.shape_cast %193 : vector<1x32x1xf32> to vector<32x1xf32>
    %195 = vector.broadcast %194 : vector<32x1xf32> to vector<32x512xf32>
    %196 = arith.addf %192, %195 : vector<32x512xf32>
    %cst_177 = arith.constant 0.000000e+00 : f32
    %197 = vector.broadcast %cst_177 : f32 to vector<32x512xf32>
    %198 = arith.cmpf ogt, %196, %197 : vector<32x512xf32>
    %cst_178 = arith.constant 0.000000e+00 : f32
    %199 = vector.broadcast %cst_178 : f32 to vector<32x512xf32>
    %200 = arith.minimumf %196, %199 : vector<32x512xf32>
    %201 = math.exp %200 : vector<32x512xf32>
    %cst_179 = arith.constant 1.000000e+00 : f32
    %202 = vector.broadcast %cst_179 : f32 to vector<32x512xf32>
    %203 = arith.subf %201, %202 : vector<32x512xf32>
    %204 = arith.select %198, %196, %203 : vector<32x512xi1>, vector<32x512xf32>
    %205 = arith.mulf %204, %4 : vector<32x512xf32>
    %c0_180 = arith.constant 0 : index
    %c32 = arith.constant 32 : index
    %c0_181 = arith.constant 0 : index
    %206 = vector.load %arg7[%c0_180, %c32, %c0_181] : memref<1x96x512xf32, #tpu.memory_space<vmem>>, vector<1x32x512xf32>
    %207 = vector.shape_cast %206 : vector<1x32x512xf32> to vector<32x512xf32>
    %208 = vector.shape_cast %205 : vector<32x512xf32> to vector<1x32x512xf32>
    tpu.vector_store %arg7[%c0_180, %c32, %c0_181], %208 {strides = array<i32>} : memref<1x96x512xf32, #tpu.memory_space<vmem>>, vector<1x32x512xf32>,
    %c0_182 = arith.constant 0 : index
    %c128_183 = arith.constant 128 : index
    %209 = vector.load %arg8[%c0_182, %c128_183] : memref<32x768xf32, #tpu.memory_space<vmem>>, vector<32x512xf32>
    tpu.vector_store %arg8[%c0_182, %c128_183], %205 {strides = array<i32>} : memref<32x768xf32, #tpu.memory_space<vmem>>, vector<32x512xf32>,
    %c0_184 = arith.constant 0 : index
    %c0_185 = arith.constant 0 : index
    %c0_186 = arith.constant 0 : index
    %210 = vector.load %arg4[%c0_184, %c0_185, %c0_186] : memref<9x32x32xf32, #tpu.memory_space<vmem>>, vector<1x32x32xf32>
    %211 = vector.shape_cast %210 : vector<1x32x32xf32> to vector<32x32xf32>
    %c0_187 = arith.constant 0 : index
    %c107_188 = arith.constant 107 : index
    %212 = vector.load %arg8[%c0_187, %c107_188] : memref<32x768xf32, #tpu.memory_space<vmem>>, vector<32x512xf32>
    %cst_189 = arith.constant dense<0.000000e+00> : vector<32x512xf32>
    %213 = tpu.matmul %211, %212, %cst_189 {dimension_numbers = #tpu.dot_dimension_numbers<[1], [0], [0], [1], [0, 0, 1, 1], [], []>} : vector<32x32xf32>, vector<32x512xf32>, vector<32x512xf32> -> vector<32x512xf32>
    %c1_190 = arith.constant 1 : index
    %c0_191 = arith.constant 0 : index
    %c0_192 = arith.constant 0 : index
    %214 = vector.load %arg4[%c1_190, %c0_191, %c0_192] : memref<9x32x32xf32, #tpu.memory_space<vmem>>, vector<1x32x32xf32>
    %215 = vector.shape_cast %214 : vector<1x32x32xf32> to vector<32x32xf32>
    %c0_193 = arith.constant 0 : index
    %c108_194 = arith.constant 108 : index
    %216 = vector.load %arg8[%c0_193, %c108_194] : memref<32x768xf32, #tpu.memory_space<vmem>>, vector<32x512xf32>
    %cst_195 = arith.constant dense<0.000000e+00> : vector<32x512xf32>
    %217 = tpu.matmul %215, %216, %cst_195 {dimension_numbers = #tpu.dot_dimension_numbers<[1], [0], [0], [1], [0, 0, 1, 1], [], []>} : vector<32x32xf32>, vector<32x512xf32>, vector<32x512xf32> -> vector<32x512xf32>
    %218 = arith.addf %213, %217 : vector<32x512xf32>
    %c2_196 = arith.constant 2 : index
    %c0_197 = arith.constant 0 : index
    %c0_198 = arith.constant 0 : index
    %219 = vector.load %arg4[%c2_196, %c0_197, %c0_198] : memref<9x32x32xf32, #tpu.memory_space<vmem>>, vector<1x32x32xf32>
    %220 = vector.shape_cast %219 : vector<1x32x32xf32> to vector<32x32xf32>
    %c0_199 = arith.constant 0 : index
    %c109_200 = arith.constant 109 : index
    %221 = vector.load %arg8[%c0_199, %c109_200] : memref<32x768xf32, #tpu.memory_space<vmem>>, vector<32x512xf32>
    %cst_201 = arith.constant dense<0.000000e+00> : vector<32x512xf32>
    %222 = tpu.matmul %220, %221, %cst_201 {dimension_numbers = #tpu.dot_dimension_numbers<[1], [0], [0], [1], [0, 0, 1, 1], [], []>} : vector<32x32xf32>, vector<32x512xf32>, vector<32x512xf32> -> vector<32x512xf32>
    %223 = arith.addf %218, %222 : vector<32x512xf32>
    %c3_202 = arith.constant 3 : index
    %c0_203 = arith.constant 0 : index
    %c0_204 = arith.constant 0 : index
    %224 = vector.load %arg4[%c3_202, %c0_203, %c0_204] : memref<9x32x32xf32, #tpu.memory_space<vmem>>, vector<1x32x32xf32>
    %225 = vector.shape_cast %224 : vector<1x32x32xf32> to vector<32x32xf32>
    %c0_205 = arith.constant 0 : index
    %c127_206 = arith.constant 127 : index
    %226 = vector.load %arg8[%c0_205, %c127_206] : memref<32x768xf32, #tpu.memory_space<vmem>>, vector<32x512xf32>
    %cst_207 = arith.constant dense<0.000000e+00> : vector<32x512xf32>
    %227 = tpu.matmul %225, %226, %cst_207 {dimension_numbers = #tpu.dot_dimension_numbers<[1], [0], [0], [1], [0, 0, 1, 1], [], []>} : vector<32x32xf32>, vector<32x512xf32>, vector<32x512xf32> -> vector<32x512xf32>
    %228 = arith.addf %223, %227 : vector<32x512xf32>
    %c4_208 = arith.constant 4 : index
    %c0_209 = arith.constant 0 : index
    %c0_210 = arith.constant 0 : index
    %229 = vector.load %arg4[%c4_208, %c0_209, %c0_210] : memref<9x32x32xf32, #tpu.memory_space<vmem>>, vector<1x32x32xf32>
    %230 = vector.shape_cast %229 : vector<1x32x32xf32> to vector<32x32xf32>
    %c0_211 = arith.constant 0 : index
    %c128_212 = arith.constant 128 : index
    %231 = vector.load %arg8[%c0_211, %c128_212] : memref<32x768xf32, #tpu.memory_space<vmem>>, vector<32x512xf32>
    %cst_213 = arith.constant dense<0.000000e+00> : vector<32x512xf32>
    %232 = tpu.matmul %230, %231, %cst_213 {dimension_numbers = #tpu.dot_dimension_numbers<[1], [0], [0], [1], [0, 0, 1, 1], [], []>} : vector<32x32xf32>, vector<32x512xf32>, vector<32x512xf32> -> vector<32x512xf32>
    %233 = arith.addf %228, %232 : vector<32x512xf32>
    %c5_214 = arith.constant 5 : index
    %c0_215 = arith.constant 0 : index
    %c0_216 = arith.constant 0 : index
    %234 = vector.load %arg4[%c5_214, %c0_215, %c0_216] : memref<9x32x32xf32, #tpu.memory_space<vmem>>, vector<1x32x32xf32>
    %235 = vector.shape_cast %234 : vector<1x32x32xf32> to vector<32x32xf32>
    %c0_217 = arith.constant 0 : index
    %c129_218 = arith.constant 129 : index
    %236 = vector.load %arg8[%c0_217, %c129_218] : memref<32x768xf32, #tpu.memory_space<vmem>>, vector<32x512xf32>
    %cst_219 = arith.constant dense<0.000000e+00> : vector<32x512xf32>
    %237 = tpu.matmul %235, %236, %cst_219 {dimension_numbers = #tpu.dot_dimension_numbers<[1], [0], [0], [1], [0, 0, 1, 1], [], []>} : vector<32x32xf32>, vector<32x512xf32>, vector<32x512xf32> -> vector<32x512xf32>
    %238 = arith.addf %233, %237 : vector<32x512xf32>
    %c6_220 = arith.constant 6 : index
    %c0_221 = arith.constant 0 : index
    %c0_222 = arith.constant 0 : index
    %239 = vector.load %arg4[%c6_220, %c0_221, %c0_222] : memref<9x32x32xf32, #tpu.memory_space<vmem>>, vector<1x32x32xf32>
    %240 = vector.shape_cast %239 : vector<1x32x32xf32> to vector<32x32xf32>
    %c0_223 = arith.constant 0 : index
    %c147_224 = arith.constant 147 : index
    %241 = vector.load %arg8[%c0_223, %c147_224] : memref<32x768xf32, #tpu.memory_space<vmem>>, vector<32x512xf32>
    %cst_225 = arith.constant dense<0.000000e+00> : vector<32x512xf32>
    %242 = tpu.matmul %240, %241, %cst_225 {dimension_numbers = #tpu.dot_dimension_numbers<[1], [0], [0], [1], [0, 0, 1, 1], [], []>} : vector<32x32xf32>, vector<32x512xf32>, vector<32x512xf32> -> vector<32x512xf32>
    %243 = arith.addf %238, %242 : vector<32x512xf32>
    %c7_226 = arith.constant 7 : index
    %c0_227 = arith.constant 0 : index
    %c0_228 = arith.constant 0 : index
    %244 = vector.load %arg4[%c7_226, %c0_227, %c0_228] : memref<9x32x32xf32, #tpu.memory_space<vmem>>, vector<1x32x32xf32>
    %245 = vector.shape_cast %244 : vector<1x32x32xf32> to vector<32x32xf32>
    %c0_229 = arith.constant 0 : index
    %c148_230 = arith.constant 148 : index
    %246 = vector.load %arg8[%c0_229, %c148_230] : memref<32x768xf32, #tpu.memory_space<vmem>>, vector<32x512xf32>
    %cst_231 = arith.constant dense<0.000000e+00> : vector<32x512xf32>
    %247 = tpu.matmul %245, %246, %cst_231 {dimension_numbers = #tpu.dot_dimension_numbers<[1], [0], [0], [1], [0, 0, 1, 1], [], []>} : vector<32x32xf32>, vector<32x512xf32>, vector<32x512xf32> -> vector<32x512xf32>
    %248 = arith.addf %243, %247 : vector<32x512xf32>
    %c8_232 = arith.constant 8 : index
    %c0_233 = arith.constant 0 : index
    %c0_234 = arith.constant 0 : index
    %249 = vector.load %arg4[%c8_232, %c0_233, %c0_234] : memref<9x32x32xf32, #tpu.memory_space<vmem>>, vector<1x32x32xf32>
    %250 = vector.shape_cast %249 : vector<1x32x32xf32> to vector<32x32xf32>
    %c0_235 = arith.constant 0 : index
    %c149_236 = arith.constant 149 : index
    %251 = vector.load %arg8[%c0_235, %c149_236] : memref<32x768xf32, #tpu.memory_space<vmem>>, vector<32x512xf32>
    %cst_237 = arith.constant dense<0.000000e+00> : vector<32x512xf32>
    %252 = tpu.matmul %250, %251, %cst_237 {dimension_numbers = #tpu.dot_dimension_numbers<[1], [0], [0], [1], [0, 0, 1, 1], [], []>} : vector<32x32xf32>, vector<32x512xf32>, vector<32x512xf32> -> vector<32x512xf32>
    %253 = arith.addf %248, %252 : vector<32x512xf32>
    %c2_238 = arith.constant 2 : index
    %c0_239 = arith.constant 0 : index
    %c0_240 = arith.constant 0 : index
    %254 = vector.load %arg5[%c2_238, %c0_239, %c0_240] : memref<3x32x1xf32, #tpu.memory_space<vmem>>, vector<1x32x1xf32>
    %255 = vector.shape_cast %254 : vector<1x32x1xf32> to vector<32x1xf32>
    %256 = vector.broadcast %255 : vector<32x1xf32> to vector<32x512xf32>
    %257 = arith.addf %253, %256 : vector<32x512xf32>
    %cst_241 = arith.constant 0.000000e+00 : f32
    %258 = vector.broadcast %cst_241 : f32 to vector<32x512xf32>
    %259 = arith.cmpf ogt, %257, %258 : vector<32x512xf32>
    %cst_242 = arith.constant 0.000000e+00 : f32
    %260 = vector.broadcast %cst_242 : f32 to vector<32x512xf32>
    %261 = arith.minimumf %257, %260 : vector<32x512xf32>
    %262 = math.exp %261 : vector<32x512xf32>
    %cst_243 = arith.constant 1.000000e+00 : f32
    %263 = vector.broadcast %cst_243 : f32 to vector<32x512xf32>
    %264 = arith.subf %262, %263 : vector<32x512xf32>
    %265 = arith.select %259, %257, %264 : vector<32x512xi1>, vector<32x512xf32>
    %c0_244 = arith.constant 0 : index
    %c64 = arith.constant 64 : index
    %c0_245 = arith.constant 0 : index
    %266 = vector.load %arg7[%c0_244, %c64, %c0_245] : memref<1x96x512xf32, #tpu.memory_space<vmem>>, vector<1x32x512xf32>
    %267 = vector.shape_cast %266 : vector<1x32x512xf32> to vector<32x512xf32>
    %268 = vector.shape_cast %265 : vector<32x512xf32> to vector<1x32x512xf32>
    tpu.vector_store %arg7[%c0_244, %c64, %c0_245], %268 {strides = array<i32>} : memref<1x96x512xf32, #tpu.memory_space<vmem>>, vector<1x32x512xf32>,
    return
  }
  func.func @transform_0(%arg0: i32) -> (i32, i32, i32) {
    %c0_i32 = arith.constant 0 : i32
    %c0_i32_0 = arith.constant 0 : i32
    %c0_i32_1 = arith.constant 0 : i32
    return %arg0, %c0_i32, %c0_i32_0 : i32, i32, i32
  }
  func.func @transform_1(%arg0: i32) -> (i32, i32, i32) {
    %c0_i32 = arith.constant 0 : i32
    %c0_i32_0 = arith.constant 0 : i32
    %c0_i32_1 = arith.constant 0 : i32
    %c0_i32_2 = arith.constant 0 : i32
    return %c0_i32, %c0_i32_0, %c0_i32_1 : i32, i32, i32
  }
  func.func @transform_2(%arg0: i32) -> (i32, i32, i32) {
    %c0_i32 = arith.constant 0 : i32
    %c0_i32_0 = arith.constant 0 : i32
    %c0_i32_1 = arith.constant 0 : i32
    %c0_i32_2 = arith.constant 0 : i32
    return %c0_i32, %c0_i32_0, %c0_i32_1 : i32, i32, i32
  }
  func.func @transform_3(%arg0: i32) -> (i32, i32, i32) {
    %c0_i32 = arith.constant 0 : i32
    %c0_i32_0 = arith.constant 0 : i32
    %c0_i32_1 = arith.constant 0 : i32
    %c0_i32_2 = arith.constant 0 : i32
    return %c0_i32, %c0_i32_0, %c0_i32_1 : i32, i32, i32
  }
  func.func @transform_4(%arg0: i32) -> (i32, i32, i32) {
    %c0_i32 = arith.constant 0 : i32
    %c0_i32_0 = arith.constant 0 : i32
    %c0_i32_1 = arith.constant 0 : i32
    %c0_i32_2 = arith.constant 0 : i32
    return %c0_i32, %c0_i32_0, %c0_i32_1 : i32, i32, i32
  }
  func.func @transform_5(%arg0: i32) -> (i32, i32) {
    %c0_i32 = arith.constant 0 : i32
    %c0_i32_0 = arith.constant 0 : i32
    %c0_i32_1 = arith.constant 0 : i32
    return %c0_i32, %c0_i32_0 : i32, i32
  }
  func.func @transform_6(%arg0: i32) -> (i32, i32, i32) {
    %c0_i32 = arith.constant 0 : i32
    %c0_i32_0 = arith.constant 0 : i32
    %c0_i32_1 = arith.constant 0 : i32
    return %arg0, %c0_i32, %c0_i32_0 : i32, i32, i32
  }
}

</mosaic_0001>

<llo_original>
// kernel: stacked2d_core_forward.1
$region0: #{stacked2d_core_forward.1}
  #allocation0 [shape = 'u32[]', space=smem, size = 0x4, offset = 0x4, fixed_abs, tag = 'smem constant byte address 0x4 - core index']
  #allocation1 [shape = 'u32[144,128]{1,0:T(1,128)}', space=vmem, size = 0x12000, scoped, tag = 'internal scratch']
  #allocation2 [shape = 'f32[32,768]{1,0:T(8,128)}', space=vmem, size = 0x18000, scoped, tag = 'scratch operand']
  %s0 = inlined_call_operand.vmem [shape: f32[2,8,512], index: 0, kind: input, shape index: {}]
  %s1 = inlined_call_operand.vmem [shape: f32[25,32,8], index: 1, kind: input, shape index: {}]
  %s2 = inlined_call_operand.vmem [shape: f32[9,32,32], index: 2, kind: input, shape index: {}]
  %s3 = inlined_call_operand.vmem [shape: f32[9,32,32], index: 3, kind: input, shape index: {}]
  %s4 = inlined_call_operand.vmem [shape: f32[3,32,1], index: 4, kind: input, shape index: {}]
  %s5 = inlined_call_operand.vmem [shape: f32[1,512], index: 5, kind: input, shape index: {}]
  %s6 = inlined_call_operand.vmem [shape: f32[2,96,512], index: 6, kind: output, shape index: {}]
  %s7 = sld [smem:[#allocation0]]
  $region57: #{stacked2d_core_forward.1} parent=0
    _
  %s9 = ssub.s32 1, %s7
  %s10 = scalar_select 0, %s9, %s7
  loop: start=0, step=1, limit=4
  $region2: #{stacked2d_core_forward.1} parent=0 // loop_pre_header
    _
  $region3: #{stacked2d_core_forward.1} parent=0 // loop_header
    %s12 = sphi 0, %s16
    %p13 = scmp.ge.s32.totalorder %s12, 4
    %s22 = sphi 0, %s24
    %s25 = sphi 0, %s22
    %s26 = sphi 0, %s25
    %s42 = sphi 0, %s26
    %s46 = sphi 0, %s46
    %s48 = sphi 0, %s46
    %s49 = sphi 0, %s48
    %s63 = sphi 0, %s49
    %s67 = sphi 0, %s67
    %s69 = sphi 0, %s67
    %s70 = sphi 0, %s69
    %s84 = sphi 0, %s70
    %s88 = sphi 0, %s88
    %s90 = sphi 0, %s88
    %s91 = sphi 0, %s90
    %s105 = sphi 0, %s91
    %s109 = sphi 0, %s109
    %s111 = sphi 0, %s109
    %s112 = sphi 0, %s111
    %s126 = sphi 0, %s112
    %s130 = sphi 0, %s130
    %s132 = sphi 0, %s130
    %s133 = sphi 0, %s132
    %s147 = sphi 0, %s133
    %s153 = sphi 0, %s155
    %s156 = sphi 0, %s153
    %s157 = sphi 0, %s156
    %s173 = sphi 0, %s157
  $region4: #{stacked2d_core_forward.1} parent=0 // loop_header_branch
    %15 = sbr.rel (%p13) target = $region8
  $region5: #{stacked2d_core_forward.1} parent=0 // loop_body
    %s17 = ssub.s32 %s12, 1
    %s18 = ssub.s32 %s12, 2
    %s19 = sadd.s32 %s12, 1
    %s20 = ssub.s32 %s12, %s19
    %p21 = scmp.eq.s32.totalorder %s20, 0
    %s23 = sadd.s32 %s22, 1
    %s24 = scalar_select %p21, %s22, %s23
    %p27 = pneg %p21
    %p28 = scmp.eq.s32.totalorder %s12, 1
    %p29 = por %p27, %p28
    %p30 = scmp.ne.s32.totalorder %s22, %s25
    %p31 = scmp.eq.s32.totalorder %s12, 0
    %p32 = por %p30, %p31
    %p33 = scmp.ne.s32.totalorder %s22, %s25
    %p34 = scmp.eq.s32.totalorder %s17, 1
    %p35 = por %p33, %p34
    %p36 = scmp.ne.s32.totalorder %s25, %s26
    %p37 = scmp.eq.s32.totalorder %s17, 0
    %p38 = por %p36, %p37
    %p39 = scmp.ne.s32.totalorder %s25, %s26
    %p40 = scmp.eq.s32.totalorder %s18, 1
    %p41 = por %p39, %p40
    %p43 = scmp.ne.s32.totalorder %s26, %s42
    %p44 = scmp.eq.s32.totalorder %s18, 0
    %p45 = por %p43, %p44
    %s47 = sadd.s32 %s46, 1
    %p50 = scmp.eq.s32.totalorder %s12, 1
    %p51 = scmp.ne.s32.totalorder %s46, %s48
    %p52 = scmp.eq.s32.totalorder %s12, 0
    %p53 = por %p51, %p52
    %p54 = scmp.ne.s32.totalorder %s46, %s48
    %p55 = scmp.eq.s32.totalorder %s17, 1
    %p56 = por %p54, %p55
    %p57 = scmp.ne.s32.totalorder %s48, %s49
    %p58 = scmp.eq.s32.totalorder %s17, 0
    %p59 = por %p57, %p58
    %p60 = scmp.ne.s32.totalorder %s48, %s49
    %p61 = scmp.eq.s32.totalorder %s18, 1
    %p62 = por %p60, %p61
    %p64 = scmp.ne.s32.totalorder %s49, %s63
    %p65 = scmp.eq.s32.totalorder %s18, 0
    %p66 = por %p64, %p65
    %s68 = sadd.s32 %s67, 1
    %p71 = scmp.eq.s32.totalorder %s12, 1
    %p72 = scmp.ne.s32.totalorder %s67, %s69
    %p73 = scmp.eq.s32.totalorder %s12, 0
    %p74 = por %p72, %p73
    %p75 = scmp.ne.s32.totalorder %s67, %s69
    %p76 = scmp.eq.s32.totalorder %s17, 1
    %p77 = por %p75, %p76
    %p78 = scmp.ne.s32.totalorder %s69, %s70
    %p79 = scmp.eq.s32.totalorder %s17, 0
    %p80 = por %p78, %p79
    %p81 = scmp.ne.s32.totalorder %s69, %s70
    %p82 = scmp.eq.s32.totalorder %s18, 1
    %p83 = por %p81, %p82
    %p85 = scmp.ne.s32.totalorder %s70, %s84
    %p86 = scmp.eq.s32.totalorder %s18, 0
    %p87 = por %p85, %p86
    %s89 = sadd.s32 %s88, 1
    %p92 = scmp.eq.s32.totalorder %s12, 1
    %p93 = scmp.ne.s32.totalorder %s88, %s90
    %p94 = scmp.eq.s32.totalorder %s12, 0
    %p95 = por %p93, %p94
    %p96 = scmp.ne.s32.totalorder %s88, %s90
    %p97 = scmp.eq.s32.totalorder %s17, 1
    %p98 = por %p96, %p97
    %p99 = scmp.ne.s32.totalorder %s90, %s91
    %p100 = scmp.eq.s32.totalorder %s17, 0
    %p101 = por %p99, %p100
    %p102 = scmp.ne.s32.totalorder %s90, %s91
    %p103 = scmp.eq.s32.totalorder %s18, 1
    %p104 = por %p102, %p103
    %p106 = scmp.ne.s32.totalorder %s91, %s105
    %p107 = scmp.eq.s32.totalorder %s18, 0
    %p108 = por %p106, %p107
    %s110 = sadd.s32 %s109, 1
    %p113 = scmp.eq.s32.totalorder %s12, 1
    %p114 = scmp.ne.s32.totalorder %s109, %s111
    %p115 = scmp.eq.s32.totalorder %s12, 0
    %p116 = por %p114, %p115
    %p117 = scmp.ne.s32.totalorder %s109, %s111
    %p118 = scmp.eq.s32.totalorder %s17, 1
    %p119 = por %p117, %p118
    %p120 = scmp.ne.s32.totalorder %s111, %s112
    %p121 = scmp.eq.s32.totalorder %s17, 0
    %p122 = por %p120, %p121
    %p123 = scmp.ne.s32.totalorder %s111, %s112
    %p124 = scmp.eq.s32.totalorder %s18, 1
    %p125 = por %p123, %p124
    %p127 = scmp.ne.s32.totalorder %s112, %s126
    %p128 = scmp.eq.s32.totalorder %s18, 0
    %p129 = por %p127, %p128
    %s131 = sadd.s32 %s130, 1
    %p134 = scmp.eq.s32.totalorder %s12, 1
    %p135 = scmp.ne.s32.totalorder %s130, %s132
    %p136 = scmp.eq.s32.totalorder %s12, 0
    %p137 = por %p135, %p136
    %p138 = scmp.ne.s32.totalorder %s130, %s132
    %p139 = scmp.eq.s32.totalorder %s17, 1
    %p140 = por %p138, %p139
    %p141 = scmp.ne.s32.totalorder %s132, %s133
    %p142 = scmp.eq.s32.totalorder %s17, 0
    %p143 = por %p141, %p142
    %p144 = scmp.ne.s32.totalorder %s132, %s133
    %p145 = scmp.eq.s32.totalorder %s18, 1
    %p146 = por %p144, %p145
    %p148 = scmp.ne.s32.totalorder %s133, %s147
    %p149 = scmp.eq.s32.totalorder %s18, 0
    %p150 = por %p148, %p149
    %s151 = ssub.s32 %s12, %s19
    %p152 = scmp.eq.s32.totalorder %s151, 0
    %s154 = sadd.s32 %s153, 1
    %s155 = scalar_select %p152, %s153, %s154
    %p158 = pneg %p152
    %p159 = scmp.eq.s32.totalorder %s12, 1
    %p160 = por %p158, %p159
    %p161 = scmp.ne.s32.totalorder %s153, %s156
    %p162 = scmp.eq.s32.totalorder %s12, 0
    %p163 = por %p161, %p162
    %p164 = scmp.ne.s32.totalorder %s153, %s156
    %p165 = scmp.eq.s32.totalorder %s17, 1
    %p166 = por %p164, %p165
    %p167 = scmp.ne.s32.totalorder %s156, %s157
    %p168 = scmp.eq.s32.totalorder %s17, 0
    %p169 = por %p167, %p168
    %p170 = scmp.ne.s32.totalorder %s156, %s157
    %p171 = scmp.eq.s32.totalorder %s18, 1
    %p172 = por %p170, %p171
    %p174 = scmp.ne.s32.totalorder %s157, %s173
    %p175 = scmp.eq.s32.totalorder %s18, 0
    %p176 = por %p174, %p175
    %p177 = scmp.le.s32.totalorder 1, %s12
    %p178 = scmp.lt.s32.totalorder %s12, 3
    %p179 = pnand %p177, %p178
    %p180 = pneg %p179
    // Predicated region
    $region9: #{stacked2d_core_forward.1} parent=5 // pred_check
      _
    $region10: #{stacked2d_core_forward.1} parent=5 // pred_check_branch
      %182 = sbr.rel (%p179) target = $region12
    $region11: #{stacked2d_core_forward.1} parent=5 // pred_region
      %s183 = ssub.s32 %s12, 1
      // Predicated region
      $region13: #{stacked2d_core_forward.1} parent=11 // pred_check
        %p184 = pneg %p59
      $region14: #{stacked2d_core_forward.1} parent=11 // pred_check_branch
        %186 = sbr.rel (%p184) target = $region16
      $region15: #{stacked2d_core_forward.1} parent=11 // pred_region
        _
      $region16: #{stacked2d_core_forward.1} parent=11 // pred_fallthru
        _
      // Predicated region
      $region17: #{stacked2d_core_forward.1} parent=11 // pred_check
        %p187 = pneg %p80
      $region18: #{stacked2d_core_forward.1} parent=11 // pred_check_branch
        %189 = sbr.rel (%p187) target = $region20
      $region19: #{stacked2d_core_forward.1} parent=11 // pred_region
        _
      $region20: #{stacked2d_core_forward.1} parent=11 // pred_fallthru
        _
      // Predicated region
      $region21: #{stacked2d_core_forward.1} parent=11 // pred_check
        %p190 = pneg %p101
      $region22: #{stacked2d_core_forward.1} parent=11 // pred_check_branch
        %192 = sbr.rel (%p190) target = $region24
      $region23: #{stacked2d_core_forward.1} parent=11 // pred_region
        _
      $region24: #{stacked2d_core_forward.1} parent=11 // pred_fallthru
        _
      // Predicated region
      $region25: #{stacked2d_core_forward.1} parent=11 // pred_check
        %p193 = pneg %p122
      $region26: #{stacked2d_core_forward.1} parent=11 // pred_check_branch
        %195 = sbr.rel (%p193) target = $region28
      $region27: #{stacked2d_core_forward.1} parent=11 // pred_region
        _
      $region28: #{stacked2d_core_forward.1} parent=11 // pred_fallthru
        _
      // Predicated region
      $region29: #{stacked2d_core_forward.1} parent=11 // pred_check
        %p196 = pneg %p143
      $region30: #{stacked2d_core_forward.1} parent=11 // pred_check_branch
        %198 = sbr.rel (%p196) target = $region32
      $region31: #{stacked2d_core_forward.1} parent=11 // pred_region
        _
      $region32: #{stacked2d_core_forward.1} parent=11 // pred_fallthru
        _
    $region12: #{stacked2d_core_forward.1} parent=5 // pred_fallthru
      _
    %p199 = scmp.lt.s32.totalorder %s12, 2
    // Predicated region
    $region33: #{stacked2d_core_forward.1} parent=5 // pred_check
      %p200 = pneg %p199
    $region34: #{stacked2d_core_forward.1} parent=5 // pred_check_branch
      %202 = sbr.rel (%p200) target = $region36
    $region35: #{stacked2d_core_forward.1} parent=5 // pred_region
      // Predicated region
      $region37: #{stacked2d_core_forward.1} parent=35 // pred_check
        %p203 = pneg %p32
      $region38: #{stacked2d_core_forward.1} parent=35 // pred_check_branch
        %205 = sbr.rel (%p203) target = $region40
      $region39: #{stacked2d_core_forward.1} parent=35 // pred_region
        %p206 = scmp.lt.s32.totalorder %s12, 1
        %s207 = scalar_select %p206, %s12, 1
        %s208 = smul.addr %s207, 4
        %s209 = smul.addr %s208, 8
        %s210 = scalar_lea.vmem %s0, %s209
      $region40: #{stacked2d_core_forward.1} parent=35 // pred_fallthru
        _
    $region36: #{stacked2d_core_forward.1} parent=5 // pred_fallthru
      _
    %p211 = scmp.le.s32.totalorder 1, %s12
    %p212 = scmp.lt.s32.totalorder %s12, 3
    %p213 = pnand %p211, %p212
    %p214 = pneg %p213
    // Predicated region
    $region41: #{stacked2d_core_forward.1} parent=5 // pred_check
      _
    $region42: #{stacked2d_core_forward.1} parent=5 // pred_check_branch
      %216 = sbr.rel (%p213) target = $region44
    $region43: #{stacked2d_core_forward.1} parent=5 // pred_region
      %s217 = ssub.s32 %s12, 1
      %p218 = scmp.lt.s32.totalorder %s17, 1
      %s219 = scalar_select %p218, %s17, 1
      %s220 = smul.addr %s219, 4
      %s221 = smul.addr %s220, 8
      %s222 = scalar_lea.vmem %s0, %s221
      %p223 = pneg %p38
      %p224 = pneg %p35
      %p225 = pneg %p59
      %p226 = pneg %p56
      %p227 = pneg %p80
      %p228 = pneg %p77
      %p229 = pneg %p101
      %p230 = pneg %p98
      %p231 = pneg %p122
      %p232 = pneg %p119
      %p233 = pneg %p143
      %p234 = pneg %p140
      %p235 = pneg %p169
      %p236 = pneg %p166
      %p237 = scmp.lt.s32.totalorder %s17, 1
      %s238 = scalar_select %p237, %s17, 1
      %s239 = smul.addr %s238, 48
      %s240 = smul.addr %s239, 8
      %s241 = scalar_lea.vmem %s6, %s240
      %p242 = scmp.lt.s32.totalorder %s17, 1
      %s243 = scalar_select %p242, %s17, 1
      %s244 = smul.addr %s243, 4
      %s245 = smul.addr %s244, 8
      %s246 = scalar_lea.vmem %s0, %s245
      %p247 = scmp.lt.s32.totalorder %s17, 1
      %s248 = scalar_select %p247, %s17, 1
      %s249 = smul.addr %s248, 48
      %s250 = smul.addr %s249, 8
      %s251 = scalar_lea.vmem %s6, %s250
      %252 = vst [vmem:[#allocation2] sm:$0xff] 0.0
      %253 = vst [vmem:[#allocation2 + $0x8] sm:$0xff] 0.0
      %254 = vst [vmem:[#allocation2 + $0x10] sm:$0xff] 0.0
      %255 = vst [vmem:[#allocation2 + $0x18] sm:$0xff] 0.0
      %256 = vst [vmem:[#allocation2 + $0x20] sm:$0xff] 0.0
      %257 = vst [vmem:[#allocation2 + $0x28] sm:$0xff] 0.0
      %258 = vst [vmem:[#allocation2 + $0x30] sm:$0xff] 0.0
      %259 = vst [vmem:[#allocation2 + $0x38] sm:$0xff] 0.0
      %260 = vst [vmem:[#allocation2 + $0x40] sm:$0xff] 0.0
      %261 = vst [vmem:[#allocation2 + $0x48] sm:$0xff] 0.0
      %262 = vst [vmem:[#allocation2 + $0x50] sm:$0xff] 0.0
      %263 = vst [vmem:[#allocation2 + $0x58] sm:$0xff] 0.0
      %264 = vst [vmem:[#allocation2 + $0x60] sm:$0xff] 0.0
      %265 = vst [vmem:[#allocation2 + $0x68] sm:$0xff] 0.0
      %266 = vst [vmem:[#allocation2 + $0x70] sm:$0xff] 0.0
      %267 = vst [vmem:[#allocation2 + $0x78] sm:$0xff] 0.0
      %268 = vst [vmem:[#allocation2 + $0x80] sm:$0xff] 0.0
      %269 = vst [vmem:[#allocation2 + $0x88] sm:$0xff] 0.0
      %270 = vst [vmem:[#allocation2 + $0x90] sm:$0xff] 0.0
      %271 = vst [vmem:[#allocation2 + $0x98] sm:$0xff] 0.0
      %272 = vst [vmem:[#allocation2 + $0xa0] sm:$0xff] 0.0
      %273 = vst [vmem:[#allocation2 + $0xa8] sm:$0xff] 0.0
      %274 = vst [vmem:[#allocation2 + $0xb0] sm:$0xff] 0.0
      %275 = vst [vmem:[#allocation2 + $0xb8] sm:$0xff] 0.0
      %v276 = vld [vmem:[%s5] sm:$0xf]
      %v278 = vlaneseq
      %v279 = vshrl.u32 %v278, 7
      %v280 = vsub.s32 0, %v279
      %v281 = vrot.slane %v276, %v280
      %v282 = vlaneseq
      %v283 = vshrl.u32 %v282, 7
      %v284 = vsub.s32 1, %v283
      %v285 = vrot.slane %v276, %v284
      %v286 = vlaneseq
      %v287 = vshrl.u32 %v286, 7
      %v288 = vsub.s32 2, %v287
      %v289 = vrot.slane %v276, %v288
      %v290 = vlaneseq
      %v291 = vshrl.u32 %v290, 7
      %v292 = vsub.s32 3, %v291
      %v293 = vrot.slane %v276, %v292
      %v298 = vld [vmem:[%s246] sm:$0xff]
      %v299 = vld [vmem:[%s246 + $0x8] sm:$0xff]
      %v300 = vld [vmem:[%s246 + $0x10] sm:$0xff]
      %v301 = vld [vmem:[%s246 + $0x18] sm:$0xff]
      %302 = vst [vmem:[#allocation2 + $0x8] sm:$0xff] %v298
      %303 = vst [vmem:[#allocation2 + $0x10] sm:$0xff] %v299
      %304 = vst [vmem:[#allocation2 + $0x18] sm:$0xff] %v300
      %305 = vst [vmem:[#allocation2 + $0x20] sm:$0xff] %v301
      %v306 = vld [vmem:[%s1] sm:$0xff]
      %v307 = vld [vmem:[%s1 + $0x8] sm:$0xff]
      %v308 = vld [vmem:[%s1 + $0x10] sm:$0xff]
      %v309 = vld [vmem:[%s1 + $0x18] sm:$0xff]
      %v310 = vld [vmem:[#allocation2] sm:$0xff]
      %v311 = vld [vmem:[#allocation2 + $0x8] sm:$0xff]
      %v312 = vld [vmem:[#allocation2 + $0x10] sm:$0xff]
      %v313 = vld [vmem:[#allocation2 + $0x18] sm:$0xff]
      %v314 = vld [vmem:[#allocation2 + $0x20] sm:$0xff]
      %s315 = scalar_lea.vmem %s1, 32
      %v316 = vld [vmem:[%s315] sm:$0xff]
      %v317 = vld [vmem:[%s315 + $0x8] sm:$0xff]
      %v318 = vld [vmem:[%s315 + $0x10] sm:$0xff]
      %v319 = vld [vmem:[%s315 + $0x18] sm:$0xff]
      %325 = vrot.lane.b32.xlu0 %v310, 41
      %v326 = vpop.permute.xlu0 %325
      %327 = vrot.lane.b32.xlu0 %v311, 41
      %v328 = vpop.permute.xlu0 %327
      %329 = vrot.lane.b32.xlu0 %v312, 41
      %v330 = vpop.permute.xlu0 %329
      %331 = vrot.lane.b32.xlu0 %v313, 41
      %v332 = vpop.permute.xlu0 %331
      %333 = vrot.lane.b32.xlu0 %v314, 41
      %v334 = vpop.permute.xlu0 %333
      %vm335 = vcmask 334848
      %v336 = vsel %vm335, %v326, %v328
      %v337 = vsel %vm335, %v328, %v330
      %v338 = vsel %vm335, %v330, %v332
      %v339 = vsel %vm335, %v332, %v334
      %vm344 = vcmask 64512
      %v346 = vsel %vm344, %v316, 0
      %v349 = vsel %vm344, %v317, 0
      %v352 = vsel %vm344, %v318, 0
      %v355 = vsel %vm344, %v319, 0
      %357 = vmatprep.subr.mxu0 %v337
      %358 = vmatpush1.msra.mxu0 %v336
      %359 = vmatprep.subr.mxu0 0.0
      %360 = vmatpush1.msra.mxu0 0.0
      %361 = vmatprep.subr.mxu0 0.0
      %362 = vmatpush1.msra.mxu0 0.0
      %363 = vmatprep.subr.mxu0 0.0
      %364 = vmatpush1.msra.mxu0 0.0
      %365 = vmatprep.subr.mxu0 0.0
      %366 = vmatpush1.msra.mxu0 0.0
      %367 = vmatprep.subr.mxu0 0.0
      %368 = vmatpush1.msra.mxu0 0.0
      %369 = vmatprep.subr.mxu0 0.0
      %370 = vmatpush1.msra.mxu0 0.0
      %371 = vmatprep.subr.mxu0 0.0
      %372 = vmatpush1.msra.mxu0 0.0
      %373 = vmatprep.subr.mxu0 0.0
      %374 = vmatpush1.msra.mxu0 0.0
      %375 = vmatprep.subr.mxu0 0.0
      %376 = vmatpush1.msra.mxu0 0.0
      %377 = vmatprep.subr.mxu0 0.0
      %378 = vmatpush1.msra.mxu0 0.0
      %379 = vmatprep.subr.mxu0 0.0
      %380 = vmatpush1.msra.mxu0 0.0
      %381 = vmatprep.subr.mxu0 0.0
      %382 = vmatpush1.msra.mxu0 0.0
      %383 = vmatprep.subr.mxu0 0.0
      %384 = vmatpush1.msra.mxu0 0.0
      %385 = vmatprep.subr.mxu0 0.0
      %386 = vmatpush1.msra.mxu0 0.0
      %387 = vmatprep.subr.mxu0 0.0
      %388 = vmatpush1.msra.mxu0 0.0
      %389 = vmatprep.subr.mxu0 0.0
      %390 = vmatpush1.msra.mxu0 0.0
      %391 = vmatprep.subr.mxu0 0.0
      %392 = vmatpush1.msra.mxu0 0.0
      %393 = vmatprep.subr.mxu0 0.0
      %394 = vmatpush1.msra.mxu0 0.0
      %395 = vmatprep.subr.mxu0 0.0
      %396 = vmatpush1.msra.mxu0 0.0
      %397 = vmatprep.subr.mxu0 0.0
      %398 = vmatpush1.msra.mxu0 0.0
      %399 = vmatprep.subr.mxu0 0.0
      %400 = vmatpush1.msra.mxu0 0.0
      %401 = vmatprep.subr.mxu0 0.0
      %402 = vmatpush1.msra.mxu0 0.0
      %403 = vmatprep.subr.mxu0 0.0
      %404 = vmatpush1.msra.mxu0 0.0
      %405 = vmatprep.subr.mxu0 0.0
      %406 = vmatpush1.msra.mxu0 0.0
      %407 = vmatprep.subr.mxu0 0.0
      %408 = vmatpush1.msra.mxu0 0.0
      %409 = vmatprep.subr.mxu0 0.0
      %410 = vmatpush1.msra.mxu0 0.0
      %411 = vmatprep.subr.mxu0 0.0
      %412 = vmatpush1.msra.mxu0 0.0
      %413 = vmatprep.subr.mxu0 0.0
      %414 = vmatpush1.msra.mxu0 0.0
      %415 = vmatprep.subr.mxu0 0.0
      %416 = vmatpush1.msra.mxu0 0.0
      %417 = vmatprep.subr.mxu0 0.0
      %418 = vmatpush1.msra.mxu0 0.0
      %419 = vmatprep.subr.mxu0 0.0
      %420 = vmatpush1.msra.mxu0 0.0
      %421 = vmatprep.mubr.f32.mxu0 0.0
      %422 = vmatmul.mubr.f32.gmra.mrb[0].mxu0 %v346
      %v423 = vpop.f32.mrb[0].mxu0
      %v424 = vadd.f32 0.0, %v423
      %v425 = vpop.f32.mrb[0].mxu0
      %v426 = vadd.f32 0.0, %v425
      %427 = vmatprep.mubr.f32.mxu0 0.0
      %428 = vmatmul.mubr.f32.gmra.mrb[0].mxu0 %v349
      %v429 = vpop.f32.mrb[0].mxu0
      %v430 = vadd.f32 0.0, %v429
      %v431 = vpop.f32.mrb[0].mxu0
      %v432 = vadd.f32 0.0, %v431
      %433 = vmatprep.mubr.f32.mxu0 0.0
      %434 = vmatmul.mubr.f32.gmra.mrb[0].mxu0 %v352
      %v435 = vpop.f32.mrb[0].mxu0
      %v436 = vadd.f32 0.0, %v435
      %v437 = vpop.f32.mrb[0].mxu0
      %v438 = vadd.f32 0.0, %v437
      %439 = vmatprep.mubr.f32.mxu0 0.0
      %440 = vmatmul.mubr.f32.gmra.mrb[0].mxu0 %v355
      %v441 = vpop.f32.mrb[0].mxu0
      %v442 = vadd.f32 0.0, %v441
      %v443 = vpop.f32.mrb[0].mxu0
      %v444 = vadd.f32 0.0, %v443
      %445 = vdwg.mxu0
      %446 = vmatprep.subr.mxu0 %v339
      %447 = vmatpush1.msra.mxu0 %v338
      %448 = vmatprep.subr.mxu0 0.0
      %449 = vmatpush1.msra.mxu0 0.0
      %450 = vmatprep.subr.mxu0 0.0
      %451 = vmatpush1.msra.mxu0 0.0
      %452 = vmatprep.subr.mxu0 0.0
      %453 = vmatpush1.msra.mxu0 0.0
      %454 = vmatprep.subr.mxu0 0.0
      %455 = vmatpush1.msra.mxu0 0.0
      %456 = vmatprep.subr.mxu0 0.0
      %457 = vmatpush1.msra.mxu0 0.0
      %458 = vmatprep.subr.mxu0 0.0
      %459 = vmatpush1.msra.mxu0 0.0
      %460 = vmatprep.subr.mxu0 0.0
      %461 = vmatpush1.msra.mxu0 0.0
      %462 = vmatprep.subr.mxu0 0.0
      %463 = vmatpush1.msra.mxu0 0.0
      %464 = vmatprep.subr.mxu0 0.0
      %465 = vmatpush1.msra.mxu0 0.0
      %466 = vmatprep.subr.mxu0 0.0
      %467 = vmatpush1.msra.mxu0 0.0
      %468 = vmatprep.subr.mxu0 0.0
      %469 = vmatpush1.msra.mxu0 0.0
      %470 = vmatprep.subr.mxu0 0.0
      %471 = vmatpush1.msra.mxu0 0.0
      %472 = vmatprep.subr.mxu0 0.0
      %473 = vmatpush1.msra.mxu0 0.0
      %474 = vmatprep.subr.mxu0 0.0
      %475 = vmatpush1.msra.mxu0 0.0
      %476 = vmatprep.subr.mxu0 0.0
      %477 = vmatpush1.msra.mxu0 0.0
      %478 = vmatprep.subr.mxu0 0.0
      %479 = vmatpush1.msra.mxu0 0.0
      %480 = vmatprep.subr.mxu0 0.0
      %481 = vmatpush1.msra.mxu0 0.0
      %482 = vmatprep.subr.mxu0 0.0
      %483 = vmatpush1.msra.mxu0 0.0
      %484 = vmatprep.subr.mxu0 0.0
      %485 = vmatpush1.msra.mxu0 0.0
      %486 = vmatprep.subr.mxu0 0.0
      %487 = vmatpush1.msra.mxu0 0.0
      %488 = vmatprep.subr.mxu0 0.0
      %489 = vmatpush1.msra.mxu0 0.0
      %490 = vmatprep.subr.mxu0 0.0
      %491 = vmatpush1.msra.mxu0 0.0
      %492 = vmatprep.subr.mxu0 0.0
      %493 = vmatpush1.msra.mxu0 0.0
      %494 = vmatprep.subr.mxu0 0.0
      %495 = vmatpush1.msra.mxu0 0.0
      %496 = vmatprep.subr.mxu0 0.0
      %497 = vmatpush1.msra.mxu0 0.0
      %498 = vmatprep.subr.mxu0 0.0
      %499 = vmatpush1.msra.mxu0 0.0
      %500 = vmatprep.subr.mxu0 0.0
      %501 = vmatpush1.msra.mxu0 0.0
      %502 = vmatprep.subr.mxu0 0.0
      %503 = vmatpush1.msra.mxu0 0.0
      %504 = vmatprep.subr.mxu0 0.0
      %505 = vmatpush1.msra.mxu0 0.0
      %506 = vmatprep.subr.mxu0 0.0
      %507 = vmatpush1.msra.mxu0 0.0
      %508 = vmatprep.subr.mxu0 0.0
      %509 = vmatpush1.msra.mxu0 0.0
      %510 = vmatprep.mubr.f32.mxu0 0.0
      %511 = vmatmul.mubr.f32.gmra.mrb[0].mxu0 %v346
      %v512 = vpop.f32.mrb[0].mxu0
      %v513 = vadd.f32 0.0, %v512
      %v514 = vpop.f32.mrb[0].mxu0
      %v515 = vadd.f32 0.0, %v514
      %516 = vmatprep.mubr.f32.mxu0 0.0
      %517 = vmatmul.mubr.f32.gmra.mrb[0].mxu0 %v349
      %v518 = vpop.f32.mrb[0].mxu0
      %v519 = vadd.f32 0.0, %v518
      %v520 = vpop.f32.mrb[0].mxu0
      %v521 = vadd.f32 0.0, %v520
      %522 = vmatprep.mubr.f32.mxu0 0.0
      %523 = vmatmul.mubr.f32.gmra.mrb[0].mxu0 %v352
      %v524 = vpop.f32.mrb[0].mxu0
      %v525 = vadd.f32 0.0, %v524
      %v526 = vpop.f32.mrb[0].mxu0
      %v527 = vadd.f32 0.0, %v526
      %528 = vmatprep.mubr.f32.mxu0 0.0
      %529 = vmatmul.mubr.f32.gmra.mrb[0].mxu0 %v355
      %v530 = vpop.f32.mrb[0].mxu0
      %v531 = vadd.f32 0.0, %v530
      %v532 = vpop.f32.mrb[0].mxu0
      %v533 = vadd.f32 0.0, %v532
      %534 = vdwg.mxu0
      %535 = vrot.lane.b32.xlu0 %v310, 42
      %v536 = vpop.permute.xlu0 %535
      %537 = vrot.lane.b32.xlu0 %v311, 42
      %v538 = vpop.permute.xlu0 %537
      %539 = vrot.lane.b32.xlu0 %v312, 42
      %v540 = vpop.permute.xlu0 %539
      %541 = vrot.lane.b32.xlu0 %v313, 42
      %v542 = vpop.permute.xlu0 %541
      %543 = vrot.lane.b32.xlu0 %v314, 42
      %v544 = vpop.permute.xlu0 %543
      %vm545 = vcmask 343040
      %v546 = vsel %vm545, %v536, %v538
      %v547 = vsel %vm545, %v538, %v540
      %v548 = vsel %vm545, %v540, %v542
      %v549 = vsel %vm545, %v542, %v544
      %v555 = vsel %vm344, %v306, 0
      %v558 = vsel %vm344, %v307, 0
      %v561 = vsel %vm344, %v308, 0
      %v564 = vsel %vm344, %v309, 0
      %566 = vmatprep.subr.mxu0 %v547
      %567 = vmatpush1.msra.mxu0 %v546
      %568 = vmatprep.subr.mxu0 0.0
      %569 = vmatpush1.msra.mxu0 0.0
      %570 = vmatprep.subr.mxu0 0.0
      %571 = vmatpush1.msra.mxu0 0.0
      %572 = vmatprep.subr.mxu0 0.0
      %573 = vmatpush1.msra.mxu0 0.0
      %574 = vmatprep.subr.mxu0 0.0
      %575 = vmatpush1.msra.mxu0 0.0
      %576 = vmatprep.subr.mxu0 0.0
      %577 = vmatpush1.msra.mxu0 0.0
      %578 = vmatprep.subr.mxu0 0.0
      %579 = vmatpush1.msra.mxu0 0.0
      %580 = vmatprep.subr.mxu0 0.0
      %581 = vmatpush1.msra.mxu0 0.0
      %582 = vmatprep.subr.mxu0 0.0
      %583 = vmatpush1.msra.mxu0 0.0
      %584 = vmatprep.subr.mxu0 0.0
      %585 = vmatpush1.msra.mxu0 0.0
      %586 = vmatprep.subr.mxu0 0.0
      %587 = vmatpush1.msra.mxu0 0.0
      %588 = vmatprep.subr.mxu0 0.0
      %589 = vmatpush1.msra.mxu0 0.0
      %590 = vmatprep.subr.mxu0 0.0
      %591 = vmatpush1.msra.mxu0 0.0
      %592 = vmatprep.subr.mxu0 0.0
      %593 = vmatpush1.msra.mxu0 0.0
      %594 = vmatprep.subr.mxu0 0.0
      %595 = vmatpush1.msra.mxu0 0.0
      %596 = vmatprep.subr.mxu0 0.0
      %597 = vmatpush1.msra.mxu0 0.0
      %598 = vmatprep.subr.mxu0 0.0
      %599 = vmatpush1.msra.mxu0 0.0
      %600 = vmatprep.subr.mxu0 0.0
      %601 = vmatpush1.msra.mxu0 0.0
      %602 = vmatprep.subr.mxu0 0.0
      %603 = vmatpush1.msra.mxu0 0.0
      %604 = vmatprep.subr.mxu0 0.0
      %605 = vmatpush1.msra.mxu0 0.0
      %606 = vmatprep.subr.mxu0 0.0
      %607 = vmatpush1.msra.mxu0 0.0
      %608 = vmatprep.subr.mxu0 0.0
      %609 = vmatpush1.msra.mxu0 0.0
      %610 = vmatprep.subr.mxu0 0.0
      %611 = vmatpush1.msra.mxu0 0.0
      %612 = vmatprep.subr.mxu0 0.0
      %613 = vmatpush1.msra.mxu0 0.0
      %614 = vmatprep.subr.mxu0 0.0
      %615 = vmatpush1.msra.mxu0 0.0
      %616 = vmatprep.subr.mxu0 0.0
      %617 = vmatpush1.msra.mxu0 0.0
      %618 = vmatprep.subr.mxu0 0.0
      %619 = vmatpush1.msra.mxu0 0.0
      %620 = vmatprep.subr.mxu0 0.0
      %621 = vmatpush1.msra.mxu0 0.0
      %622 = vmatprep.subr.mxu0 0.0
      %623 = vmatpush1.msra.mxu0 0.0
      %624 = vmatprep.subr.mxu0 0.0
      %625 = vmatpush1.msra.mxu0 0.0
      %626 = vmatprep.subr.mxu0 0.0
      %627 = vmatpush1.msra.mxu0 0.0
      %628 = vmatprep.subr.mxu0 0.0
      %629 = vmatpush1.msra.mxu0 0.0
      %630 = vmatprep.mubr.f32.mxu0 0.0
      %631 = vmatmul.mubr.f32.gmra.mrb[0].mxu0 %v555
      %v632 = vpop.f32.mrb[0].mxu0
      %v633 = vadd.f32 %v424, %v632
      %v634 = vpop.f32.mrb[0].mxu0
      %v635 = vadd.f32 %v426, %v634
      %636 = vmatprep.mubr.f32.mxu0 0.0
      %637 = vmatmul.mubr.f32.gmra.mrb[0].mxu0 %v558
      %v638 = vpop.f32.mrb[0].mxu0
      %v639 = vadd.f32 %v430, %v638
      %v640 = vpop.f32.mrb[0].mxu0
      %v641 = vadd.f32 %v432, %v640
      %642 = vmatprep.mubr.f32.mxu0 0.0
      %643 = vmatmul.mubr.f32.gmra.mrb[0].mxu0 %v561
      %v644 = vpop.f32.mrb[0].mxu0
      %v645 = vadd.f32 %v436, %v644
      %v646 = vpop.f32.mrb[0].mxu0
      %v647 = vadd.f32 %v438, %v646
      %648 = vmatprep.mubr.f32.mxu0 0.0
      %649 = vmatmul.mubr.f32.gmra.mrb[0].mxu0 %v564
      %v650 = vpop.f32.mrb[0].mxu0
      %v651 = vadd.f32 %v442, %v650
      %v652 = vpop.f32.mrb[0].mxu0
      %v653 = vadd.f32 %v444, %v652
      %654 = vdwg.mxu0
      %655 = vmatprep.subr.mxu0 %v549
      %656 = vmatpush1.msra.mxu0 %v548
      %657 = vmatprep.subr.mxu0 0.0
      %658 = vmatpush1.msra.mxu0 0.0
      %659 = vmatprep.subr.mxu0 0.0
      %660 = vmatpush1.msra.mxu0 0.0
      %661 = vmatprep.subr.mxu0 0.0
      %662 = vmatpush1.msra.mxu0 0.0
      %663 = vmatprep.subr.mxu0 0.0
      %664 = vmatpush1.msra.mxu0 0.0
      %665 = vmatprep.subr.mxu0 0.0
      %666 = vmatpush1.msra.mxu0 0.0
      %667 = vmatprep.subr.mxu0 0.0
      %668 = vmatpush1.msra.mxu0 0.0
      %669 = vmatprep.subr.mxu0 0.0
      %670 = vmatpush1.msra.mxu0 0.0
      %671 = vmatprep.subr.mxu0 0.0
      %672 = vmatpush1.msra.mxu0 0.0
      %673 = vmatprep.subr.mxu0 0.0
      %674 = vmatpush1.msra.mxu0 0.0
      %675 = vmatprep.subr.mxu0 0.0
      %676 = vmatpush1.msra.mxu0 0.0
      %677 = vmatprep.subr.mxu0 0.0
      %678 = vmatpush1.msra.mxu0 0.0
      %679 = vmatprep.subr.mxu0 0.0
      %680 = vmatpush1.msra.mxu0 0.0
      %681 = vmatprep.subr.mxu0 0.0
      %682 = vmatpush1.msra.mxu0 0.0
      %683 = vmatprep.subr.mxu0 0.0
      %684 = vmatpush1.msra.mxu0 0.0
      %685 = vmatprep.subr.mxu0 0.0
      %686 = vmatpush1.msra.mxu0 0.0
      %687 = vmatprep.subr.mxu0 0.0
      %688 = vmatpush1.msra.mxu0 0.0
      %689 = vmatprep.subr.mxu0 0.0
      %690 = vmatpush1.msra.mxu0 0.0
      %691 = vmatprep.subr.mxu0 0.0
      %692 = vmatpush1.msra.mxu0 0.0
      %693 = vmatprep.subr.mxu0 0.0
      %694 = vmatpush1.msra.mxu0 0.0
      %695 = vmatprep.subr.mxu0 0.0
      %696 = vmatpush1.msra.mxu0 0.0
      %697 = vmatprep.subr.mxu0 0.0
      %698 = vmatpush1.msra.mxu0 0.0
      %699 = vmatprep.subr.mxu0 0.0
      %700 = vmatpush1.msra.mxu0 0.0
      %701 = vmatprep.subr.mxu0 0.0
      %702 = vmatpush1.msra.mxu0 0.0
      %703 = vmatprep.subr.mxu0 0.0
      %704 = vmatpush1.msra.mxu0 0.0
      %705 = vmatprep.subr.mxu0 0.0
      %706 = vmatpush1.msra.mxu0 0.0
      %707 = vmatprep.subr.mxu0 0.0
      %708 = vmatpush1.msra.mxu0 0.0
      %709 = vmatprep.subr.mxu0 0.0
      %710 = vmatpush1.msra.mxu0 0.0
      %711 = vmatprep.subr.mxu0 0.0
      %712 = vmatpush1.msra.mxu0 0.0
      %713 = vmatprep.subr.mxu0 0.0
      %714 = vmatpush1.msra.mxu0 0.0
      %715 = vmatprep.subr.mxu0 0.0
      %716 = vmatpush1.msra.mxu0 0.0
      %717 = vmatprep.subr.mxu0 0.0
      %718 = vmatpush1.msra.mxu0 0.0
      %719 = vmatprep.mubr.f32.mxu0 0.0
      %720 = vmatmul.mubr.f32.gmra.mrb[0].mxu0 %v555
      %v721 = vpop.f32.mrb[0].mxu0
      %v722 = vadd.f32 %v513, %v721
      %v723 = vpop.f32.mrb[0].mxu0
      %v724 = vadd.f32 %v515, %v723
      %725 = vmatprep.mubr.f32.mxu0 0.0
      %726 = vmatmul.mubr.f32.gmra.mrb[0].mxu0 %v558
      %v727 = vpop.f32.mrb[0].mxu0
      %v728 = vadd.f32 %v519, %v727
      %v729 = vpop.f32.mrb[0].mxu0
      %v730 = vadd.f32 %v521, %v729
      %731 = vmatprep.mubr.f32.mxu0 0.0
      %732 = vmatmul.mubr.f32.gmra.mrb[0].mxu0 %v561
      %v733 = vpop.f32.mrb[0].mxu0
      %v734 = vadd.f32 %v525, %v733
      %v735 = vpop.f32.mrb[0].mxu0
      %v736 = vadd.f32 %v527, %v735
      %737 = vmatprep.mubr.f32.mxu0 0.0
      %738 = vmatmul.mubr.f32.gmra.mrb[0].mxu0 %v564
      %v739 = vpop.f32.mrb[0].mxu0
      %v740 = vadd.f32 %v531, %v739
      %v741 = vpop.f32.mrb[0].mxu0
      %v742 = vadd.f32 %v533, %v741
      %743 = vdwg.mxu0
      %s744 = scalar_lea.vmem %s1, 64
      %v745 = vld [vmem:[%s744] sm:$0xff]
      %v746 = vld [vmem:[%s744 + $0x8] sm:$0xff]
      %v747 = vld [vmem:[%s744 + $0x10] sm:$0xff]
      %v748 = vld [vmem:[%s744 + $0x18] sm:$0xff]
      %749 = vrot.lane.b32.xlu0 %v310, 40
      %v750 = vpop.permute.xlu0 %749
      %751 = vrot.lane.b32.xlu0 %v311, 40
      %v752 = vpop.permute.xlu0 %751
      %753 = vrot.lane.b32.xlu0 %v312, 40
      %v754 = vpop.permute.xlu0 %753
      %755 = vrot.lane.b32.xlu0 %v313, 40
      %v756 = vpop.permute.xlu0 %755
      %757 = vrot.lane.b32.xlu0 %v314, 40
      %v758 = vpop.permute.xlu0 %757
      %vm759 = vcmask 326656
      %v760 = vsel %vm759, %v750, %v752
      %v761 = vsel %vm759, %v752, %v754
      %v762 = vsel %vm759, %v754, %v756
      %v763 = vsel %vm759, %v756, %v758
      %v769 = vsel %vm344, %v745, 0
      %v772 = vsel %vm344, %v746, 0
      %v775 = vsel %vm344, %v747, 0
      %v778 = vsel %vm344, %v748, 0
      %780 = vmatprep.subr.mxu0 %v761
      %781 = vmatpush1.msra.mxu0 %v760
      %782 = vmatprep.subr.mxu0 0.0
      %783 = vmatpush1.msra.mxu0 0.0
      %784 = vmatprep.subr.mxu0 0.0
      %785 = vmatpush1.msra.mxu0 0.0
      %786 = vmatprep.subr.mxu0 0.0
      %787 = vmatpush1.msra.mxu0 0.0
      %788 = vmatprep.subr.mxu0 0.0
      %789 = vmatpush1.msra.mxu0 0.0
      %790 = vmatprep.subr.mxu0 0.0
      %791 = vmatpush1.msra.mxu0 0.0
      %792 = vmatprep.subr.mxu0 0.0
      %793 = vmatpush1.msra.mxu0 0.0
      %794 = vmatprep.subr.mxu0 0.0
      %795 = vmatpush1.msra.mxu0 0.0
      %796 = vmatprep.subr.mxu0 0.0
      %797 = vmatpush1.msra.mxu0 0.0
      %798 = vmatprep.subr.mxu0 0.0
      %799 = vmatpush1.msra.mxu0 0.0
      %800 = vmatprep.subr.mxu0 0.0
      %801 = vmatpush1.msra.mxu0 0.0
      %802 = vmatprep.subr.mxu0 0.0
      %803 = vmatpush1.msra.mxu0 0.0
      %804 = vmatprep.subr.mxu0 0.0
      %805 = vmatpush1.msra.mxu0 0.0
      %806 = vmatprep.subr.mxu0 0.0
      %807 = vmatpush1.msra.mxu0 0.0
      %808 = vmatprep.subr.mxu0 0.0
      %809 = vmatpush1.msra.mxu0 0.0
      %810 = vmatprep.subr.mxu0 0.0
      %811 = vmatpush1.msra.mxu0 0.0
      %812 = vmatprep.subr.mxu0 0.0
      %813 = vmatpush1.msra.mxu0 0.0
      %814 = vmatprep.subr.mxu0 0.0
      %815 = vmatpush1.msra.mxu0 0.0
      %816 = vmatprep.subr.mxu0 0.0
      %817 = vmatpush1.msra.mxu0 0.0
      %818 = vmatprep.subr.mxu0 0.0
      %819 = vmatpush1.msra.mxu0 0.0
      %820 = vmatprep.subr.mxu0 0.0
      %821 = vmatpush1.msra.mxu0 0.0
      %822 = vmatprep.subr.mxu0 0.0
      %823 = vmatpush1.msra.mxu0 0.0
      %824 = vmatprep.subr.mxu0 0.0
      %825 = vmatpush1.msra.mxu0 0.0
      %826 = vmatprep.subr.mxu0 0.0
      %827 = vmatpush1.msra.mxu0 0.0
      %828 = vmatprep.subr.mxu0 0.0
      %829 = vmatpush1.msra.mxu0 0.0
      %830 = vmatprep.subr.mxu0 0.0
      %831 = vmatpush1.msra.mxu0 0.0
      %832 = vmatprep.subr.mxu0 0.0
      %833 = vmatpush1.msra.mxu0 0.0
      %834 = vmatprep.subr.mxu0 0.0
      %835 = vmatpush1.msra.mxu0 0.0
      %836 = vmatprep.subr.mxu0 0.0
      %837 = vmatpush1.msra.mxu0 0.0
      %838 = vmatprep.subr.mxu0 0.0
      %839 = vmatpush1.msra.mxu0 0.0
      %840 = vmatprep.subr.mxu0 0.0
      %841 = vmatpush1.msra.mxu0 0.0
      %842 = vmatprep.subr.mxu0 0.0
      %843 = vmatpush1.msra.mxu0 0.0
      %844 = vmatprep.mubr.f32.mxu0 0.0
      %845 = vmatmul.mubr.f32.gmra.mrb[0].mxu0 %v769
      %v846 = vpop.f32.mrb[0].mxu0
      %v847 = vadd.f32 0.0, %v846
      %v848 = vpop.f32.mrb[0].mxu0
      %v849 = vadd.f32 0.0, %v848
      %850 = vmatprep.mubr.f32.mxu0 0.0
      %851 = vmatmul.mubr.f32.gmra.mrb[0].mxu0 %v772
      %v852 = vpop.f32.mrb[0].mxu0
      %v853 = vadd.f32 0.0, %v852
      %v854 = vpop.f32.mrb[0].mxu0
      %v855 = vadd.f32 0.0, %v854
      %856 = vmatprep.mubr.f32.mxu0 0.0
      %857 = vmatmul.mubr.f32.gmra.mrb[0].mxu0 %v775
      %v858 = vpop.f32.mrb[0].mxu0
      %v859 = vadd.f32 0.0, %v858
      %v860 = vpop.f32.mrb[0].mxu0
      %v861 = vadd.f32 0.0, %v860
      %862 = vmatprep.mubr.f32.mxu0 0.0
      %863 = vmatmul.mubr.f32.gmra.mrb[0].mxu0 %v778
      %v864 = vpop.f32.mrb[0].mxu0
      %v865 = vadd.f32 0.0, %v864
      %v866 = vpop.f32.mrb[0].mxu0
      %v867 = vadd.f32 0.0, %v866
      %868 = vdwg.mxu0
      %869 = vmatprep.subr.mxu0 %v763
      %870 = vmatpush1.msra.mxu0 %v762
      %871 = vmatprep.subr.mxu0 0.0
      %872 = vmatpush1.msra.mxu0 0.0
      %873 = vmatprep.subr.mxu0 0.0
      %874 = vmatpush1.msra.mxu0 0.0
      %875 = vmatprep.subr.mxu0 0.0
      %876 = vmatpush1.msra.mxu0 0.0
      %877 = vmatprep.subr.mxu0 0.0
      %878 = vmatpush1.msra.mxu0 0.0
      %879 = vmatprep.subr.mxu0 0.0
      %880 = vmatpush1.msra.mxu0 0.0
      %881 = vmatprep.subr.mxu0 0.0
      %882 = vmatpush1.msra.mxu0 0.0
      %883 = vmatprep.subr.mxu0 0.0
      %884 = vmatpush1.msra.mxu0 0.0
      %885 = vmatprep.subr.mxu0 0.0
      %886 = vmatpush1.msra.mxu0 0.0
      %887 = vmatprep.subr.mxu0 0.0
      %888 = vmatpush1.msra.mxu0 0.0
      %889 = vmatprep.subr.mxu0 0.0
      %890 = vmatpush1.msra.mxu0 0.0
      %891 = vmatprep.subr.mxu0 0.0
      %892 = vmatpush1.msra.mxu0 0.0
      %893 = vmatprep.subr.mxu0 0.0
      %894 = vmatpush1.msra.mxu0 0.0
      %895 = vmatprep.subr.mxu0 0.0
      %896 = vmatpush1.msra.mxu0 0.0
      %897 = vmatprep.subr.mxu0 0.0
      %898 = vmatpush1.msra.mxu0 0.0
      %899 = vmatprep.subr.mxu0 0.0
      %900 = vmatpush1.msra.mxu0 0.0
      %901 = vmatprep.subr.mxu0 0.0
      %902 = vmatpush1.msra.mxu0 0.0
      %903 = vmatprep.subr.mxu0 0.0
      %904 = vmatpush1.msra.mxu0 0.0
      %905 = vmatprep.subr.mxu0 0.0
      %906 = vmatpush1.msra.mxu0 0.0
      %907 = vmatprep.subr.mxu0 0.0
      %908 = vmatpush1.msra.mxu0 0.0
      %909 = vmatprep.subr.mxu0 0.0
      %910 = vmatpush1.msra.mxu0 0.0
      %911 = vmatprep.subr.mxu0 0.0
      %912 = vmatpush1.msra.mxu0 0.0
      %913 = vmatprep.subr.mxu0 0.0
      %914 = vmatpush1.msra.mxu0 0.0
      %915 = vmatprep.subr.mxu0 0.0
      %916 = vmatpush1.msra.mxu0 0.0
      %917 = vmatprep.subr.mxu0 0.0
      %918 = vmatpush1.msra.mxu0 0.0
      %919 = vmatprep.subr.mxu0 0.0
      %920 = vmatpush1.msra.mxu0 0.0
      %921 = vmatprep.subr.mxu0 0.0
      %922 = vmatpush1.msra.mxu0 0.0
      %923 = vmatprep.subr.mxu0 0.0
      %924 = vmatpush1.msra.mxu0 0.0
      %925 = vmatprep.subr.mxu0 0.0
      %926 = vmatpush1.msra.mxu0 0.0
      %927 = vmatprep.subr.mxu0 0.0
      %928 = vmatpush1.msra.mxu0 0.0
      %929 = vmatprep.subr.mxu0 0.0
      %930 = vmatpush1.msra.mxu0 0.0
      %931 = vmatprep.subr.mxu0 0.0
      %932 = vmatpush1.msra.mxu0 0.0
      %933 = vmatprep.mubr.f32.mxu0 0.0
      %934 = vmatmul.mubr.f32.gmra.mrb[0].mxu0 %v769
      %v935 = vpop.f32.mrb[0].mxu0
      %v936 = vadd.f32 0.0, %v935
      %v937 = vpop.f32.mrb[0].mxu0
      %v938 = vadd.f32 0.0, %v937
      %939 = vmatprep.mubr.f32.mxu0 0.0
      %940 = vmatmul.mubr.f32.gmra.mrb[0].mxu0 %v772
      %v941 = vpop.f32.mrb[0].mxu0
      %v942 = vadd.f32 0.0, %v941
      %v943 = vpop.f32.mrb[0].mxu0
      %v944 = vadd.f32 0.0, %v943
      %945 = vmatprep.mubr.f32.mxu0 0.0
      %946 = vmatmul.mubr.f32.gmra.mrb[0].mxu0 %v775
      %v947 = vpop.f32.mrb[0].mxu0
      %v948 = vadd.f32 0.0, %v947
      %v949 = vpop.f32.mrb[0].mxu0
      %v950 = vadd.f32 0.0, %v949
      %951 = vmatprep.mubr.f32.mxu0 0.0
      %952 = vmatmul.mubr.f32.gmra.mrb[0].mxu0 %v778
      %v953 = vpop.f32.mrb[0].mxu0
      %v954 = vadd.f32 0.0, %v953
      %v955 = vpop.f32.mrb[0].mxu0
      %v956 = vadd.f32 0.0, %v955
      %957 = vdwg.mxu0
      %v958 = vadd.f32 %v633, %v847
      %v959 = vadd.f32 %v635, %v849
      %v960 = vadd.f32 %v722, %v936
      %v961 = vadd.f32 %v724, %v938
      %v962 = vadd.f32 %v639, %v853
      %v963 = vadd.f32 %v641, %v855
      %v964 = vadd.f32 %v728, %v942
      %v965 = vadd.f32 %v730, %v944
      %v966 = vadd.f32 %v645, %v859
      %v967 = vadd.f32 %v647, %v861
      %v968 = vadd.f32 %v734, %v948
      %v969 = vadd.f32 %v736, %v950
      %v970 = vadd.f32 %v651, %v865
      %v971 = vadd.f32 %v653, %v867
      %v972 = vadd.f32 %v740, %v954
      %v973 = vadd.f32 %v742, %v956
      %s974 = scalar_lea.vmem %s1, 96
      %v975 = vld [vmem:[%s974] sm:$0xff]
      %v976 = vld [vmem:[%s974 + $0x8] sm:$0xff]
      %v977 = vld [vmem:[%s974 + $0x10] sm:$0xff]
      %v978 = vld [vmem:[%s974 + $0x18] sm:$0xff]
      %979 = vrot.lane.b32.xlu0 %v310, 39
      %v980 = vpop.permute.xlu0 %979
      %981 = vrot.lane.b32.xlu0 %v311, 39
      %v982 = vpop.permute.xlu0 %981
      %983 = vrot.lane.b32.xlu0 %v312, 39
      %v984 = vpop.permute.xlu0 %983
      %985 = vrot.lane.b32.xlu0 %v313, 39
      %v986 = vpop.permute.xlu0 %985
      %987 = vrot.lane.b32.xlu0 %v314, 39
      %v988 = vpop.permute.xlu0 %987
      %vm989 = vcmask 318464
      %v990 = vsel %vm989, %v980, %v982
      %v991 = vsel %vm989, %v982, %v984
      %v992 = vsel %vm989, %v984, %v986
      %v993 = vsel %vm989, %v986, %v988
      %v999 = vsel %vm344, %v975, 0
      %v1002 = vsel %vm344, %v976, 0
      %v1005 = vsel %vm344, %v977, 0
      %v1008 = vsel %vm344, %v978, 0
      %1010 = vmatprep.subr.mxu0 %v991
      %1011 = vmatpush1.msra.mxu0 %v990
      %1012 = vmatprep.subr.mxu0 0.0
      %1013 = vmatpush1.msra.mxu0 0.0
      %1014 = vmatprep.subr.mxu0 0.0
      %1015 = vmatpush1.msra.mxu0 0.0
      %1016 = vmatprep.subr.mxu0 0.0
      %1017 = vmatpush1.msra.mxu0 0.0
      %1018 = vmatprep.subr.mxu0 0.0
      %1019 = vmatpush1.msra.mxu0 0.0
      %1020 = vmatprep.subr.mxu0 0.0
      %1021 = vmatpush1.msra.mxu0 0.0
      %1022 = vmatprep.subr.mxu0 0.0
      %1023 = vmatpush1.msra.mxu0 0.0
      %1024 = vmatprep.subr.mxu0 0.0
      %1025 = vmatpush1.msra.mxu0 0.0
      %1026 = vmatprep.subr.mxu0 0.0
      %1027 = vmatpush1.msra.mxu0 0.0
      %1028 = vmatprep.subr.mxu0 0.0
      %1029 = vmatpush1.msra.mxu0 0.0
      %1030 = vmatprep.subr.mxu0 0.0
      %1031 = vmatpush1.msra.mxu0 0.0
      %1032 = vmatprep.subr.mxu0 0.0
      %1033 = vmatpush1.msra.mxu0 0.0
      %1034 = vmatprep.subr.mxu0 0.0
      %1035 = vmatpush1.msra.mxu0 0.0
      %1036 = vmatprep.subr.mxu0 0.0
      %1037 = vmatpush1.msra.mxu0 0.0
      %1038 = vmatprep.subr.mxu0 0.0
      %1039 = vmatpush1.msra.mxu0 0.0
      %1040 = vmatprep.subr.mxu0 0.0
      %1041 = vmatpush1.msra.mxu0 0.0
      %1042 = vmatprep.subr.mxu0 0.0
      %1043 = vmatpush1.msra.mxu0 0.0
      %1044 = vmatprep.subr.mxu0 0.0
      %1045 = vmatpush1.msra.mxu0 0.0
      %1046 = vmatprep.subr.mxu0 0.0
      %1047 = vmatpush1.msra.mxu0 0.0
      %1048 = vmatprep.subr.mxu0 0.0
      %1049 = vmatpush1.msra.mxu0 0.0
      %1050 = vmatprep.subr.mxu0 0.0
      %1051 = vmatpush1.msra.mxu0 0.0
      %1052 = vmatprep.subr.mxu0 0.0
      %1053 = vmatpush1.msra.mxu0 0.0
      %1054 = vmatprep.subr.mxu0 0.0
      %1055 = vmatpush1.msra.mxu0 0.0
      %1056 = vmatprep.subr.mxu0 0.0
      %1057 = vmatpush1.msra.mxu0 0.0
      %1058 = vmatprep.subr.mxu0 0.0
      %1059 = vmatpush1.msra.mxu0 0.0
      %1060 = vmatprep.subr.mxu0 0.0
      %1061 = vmatpush1.msra.mxu0 0.0
      %1062 = vmatprep.subr.mxu0 0.0
      %1063 = vmatpush1.msra.mxu0 0.0
      %1064 = vmatprep.subr.mxu0 0.0
      %1065 = vmatpush1.msra.mxu0 0.0
      %1066 = vmatprep.subr.mxu0 0.0
      %1067 = vmatpush1.msra.mxu0 0.0
      %1068 = vmatprep.subr.mxu0 0.0
      %1069 = vmatpush1.msra.mxu0 0.0
      %1070 = vmatprep.subr.mxu0 0.0
      %1071 = vmatpush1.msra.mxu0 0.0
      %1072 = vmatprep.subr.mxu0 0.0
      %1073 = vmatpush1.msra.mxu0 0.0
      %1074 = vmatprep.mubr.f32.mxu0 0.0
      %1075 = vmatmul.mubr.f32.gmra.mrb[0].mxu0 %v999
      %v1076 = vpop.f32.mrb[0].mxu0
      %v1077 = vadd.f32 0.0, %v1076
      %v1078 = vpop.f32.mrb[0].mxu0
      %v1079 = vadd.f32 0.0, %v1078
      %1080 = vmatprep.mubr.f32.mxu0 0.0
      %1081 = vmatmul.mubr.f32.gmra.mrb[0].mxu0 %v1002
      %v1082 = vpop.f32.mrb[0].mxu0
      %v1083 = vadd.f32 0.0, %v1082
      %v1084 = vpop.f32.mrb[0].mxu0
      %v1085 = vadd.f32 0.0, %v1084
      %1086 = vmatprep.mubr.f32.mxu0 0.0
      %1087 = vmatmul.mubr.f32.gmra.mrb[0].mxu0 %v1005
      %v1088 = vpop.f32.mrb[0].mxu0
      %v1089 = vadd.f32 0.0, %v1088
      %v1090 = vpop.f32.mrb[0].mxu0
      %v1091 = vadd.f32 0.0, %v1090
      %1092 = vmatprep.mubr.f32.mxu0 0.0
      %1093 = vmatmul.mubr.f32.gmra.mrb[0].mxu0 %v1008
      %v1094 = vpop.f32.mrb[0].mxu0
      %v1095 = vadd.f32 0.0, %v1094
      %v1096 = vpop.f32.mrb[0].mxu0
      %v1097 = vadd.f32 0.0, %v1096
      %1098 = vdwg.mxu0
      %1099 = vmatprep.subr.mxu0 %v993
      %1100 = vmatpush1.msra.mxu0 %v992
      %1101 = vmatprep.subr.mxu0 0.0
      %1102 = vmatpush1.msra.mxu0 0.0
      %1103 = vmatprep.subr.mxu0 0.0
      %1104 = vmatpush1.msra.mxu0 0.0
      %1105 = vmatprep.subr.mxu0 0.0
      %1106 = vmatpush1.msra.mxu0 0.0
      %1107 = vmatprep.subr.mxu0 0.0
      %1108 = vmatpush1.msra.mxu0 0.0
      %1109 = vmatprep.subr.mxu0 0.0
      %1110 = vmatpush1.msra.mxu0 0.0
      %1111 = vmatprep.subr.mxu0 0.0
      %1112 = vmatpush1.msra.mxu0 0.0
      %1113 = vmatprep.subr.mxu0 0.0
      %1114 = vmatpush1.msra.mxu0 0.0
      %1115 = vmatprep.subr.mxu0 0.0
      %1116 = vmatpush1.msra.mxu0 0.0
      %1117 = vmatprep.subr.mxu0 0.0
      %1118 = vmatpush1.msra.mxu0 0.0
      %1119 = vmatprep.subr.mxu0 0.0
      %1120 = vmatpush1.msra.mxu0 0.0
      %1121 = vmatprep.subr.mxu0 0.0
      %1122 = vmatpush1.msra.mxu0 0.0
      %1123 = vmatprep.subr.mxu0 0.0
      %1124 = vmatpush1.msra.mxu0 0.0
      %1125 = vmatprep.subr.mxu0 0.0
      %1126 = vmatpush1.msra.mxu0 0.0
      %1127 = vmatprep.subr.mxu0 0.0
      %1128 = vmatpush1.msra.mxu0 0.0
      %1129 = vmatprep.subr.mxu0 0.0
      %1130 = vmatpush1.msra.mxu0 0.0
      %1131 = vmatprep.subr.mxu0 0.0
      %1132 = vmatpush1.msra.mxu0 0.0
      %1133 = vmatprep.subr.mxu0 0.0
      %1134 = vmatpush1.msra.mxu0 0.0
      %1135 = vmatprep.subr.mxu0 0.0
      %1136 = vmatpush1.msra.mxu0 0.0
      %1137 = vmatprep.subr.mxu0 0.0
      %1138 = vmatpush1.msra.mxu0 0.0
      %1139 = vmatprep.subr.mxu0 0.0
      %1140 = vmatpush1.msra.mxu0 0.0
      %1141 = vmatprep.subr.mxu0 0.0
      %1142 = vmatpush1.msra.mxu0 0.0
      %1143 = vmatprep.subr.mxu0 0.0
      %1144 = vmatpush1.msra.mxu0 0.0
      %1145 = vmatprep.subr.mxu0 0.0
      %1146 = vmatpush1.msra.mxu0 0.0
      %1147 = vmatprep.subr.mxu0 0.0
      %1148 = vmatpush1.msra.mxu0 0.0
      %1149 = vmatprep.subr.mxu0 0.0
      %1150 = vmatpush1.msra.mxu0 0.0
      %1151 = vmatprep.subr.mxu0 0.0
      %1152 = vmatpush1.msra.mxu0 0.0
      %1153 = vmatprep.subr.mxu0 0.0
      %1154 = vmatpush1.msra.mxu0 0.0
      %1155 = vmatprep.subr.mxu0 0.0
      %1156 = vmatpush1.msra.mxu0 0.0
      %1157 = vmatprep.subr.mxu0 0.0
      %1158 = vmatpush1.msra.mxu0 0.0
      %1159 = vmatprep.subr.mxu0 0.0
      %1160 = vmatpush1.msra.mxu0 0.0
      %1161 = vmatprep.subr.mxu0 0.0
      %1162 = vmatpush1.msra.mxu0 0.0
      %1163 = vmatprep.mubr.f32.mxu0 0.0
      %1164 = vmatmul.mubr.f32.gmra.mrb[0].mxu0 %v999
      %v1165 = vpop.f32.mrb[0].mxu0
      %v1166 = vadd.f32 0.0, %v1165
      %v1167 = vpop.f32.mrb[0].mxu0
      %v1168 = vadd.f32 0.0, %v1167
      %1169 = vmatprep.mubr.f32.mxu0 0.0
      %1170 = vmatmul.mubr.f32.gmra.mrb[0].mxu0 %v1002
      %v1171 = vpop.f32.mrb[0].mxu0
      %v1172 = vadd.f32 0.0, %v1171
      %v1173 = vpop.f32.mrb[0].mxu0
      %v1174 = vadd.f32 0.0, %v1173
      %1175 = vmatprep.mubr.f32.mxu0 0.0
      %1176 = vmatmul.mubr.f32.gmra.mrb[0].mxu0 %v1005
      %v1177 = vpop.f32.mrb[0].mxu0
      %v1178 = vadd.f32 0.0, %v1177
      %v1179 = vpop.f32.mrb[0].mxu0
      %v1180 = vadd.f32 0.0, %v1179
      %1181 = vmatprep.mubr.f32.mxu0 0.0
      %1182 = vmatmul.mubr.f32.gmra.mrb[0].mxu0 %v1008
      %v1183 = vpop.f32.mrb[0].mxu0
      %v1184 = vadd.f32 0.0, %v1183
      %v1185 = vpop.f32.mrb[0].mxu0
      %v1186 = vadd.f32 0.0, %v1185
      %1187 = vdwg.mxu0
      %v1188 = vadd.f32 %v958, %v1077
      %v1189 = vadd.f32 %v959, %v1079
      %v1190 = vadd.f32 %v960, %v1166
      %v1191 = vadd.f32 %v961, %v1168
      %v1192 = vadd.f32 %v962, %v1083
      %v1193 = vadd.f32 %v963, %v1085
      %v1194 = vadd.f32 %v964, %v1172
      %v1195 = vadd.f32 %v965, %v1174
      %v1196 = vadd.f32 %v966, %v1089
      %v1197 = vadd.f32 %v967, %v1091
      %v1198 = vadd.f32 %v968, %v1178
      %v1199 = vadd.f32 %v969, %v1180
      %v1200 = vadd.f32 %v970, %v1095
      %v1201 = vadd.f32 %v971, %v1097
      %v1202 = vadd.f32 %v972, %v1184
      %v1203 = vadd.f32 %v973, %v1186
      %s1204 = scalar_lea.vmem %s1, 128
      %v1205 = vld [vmem:[%s1204] sm:$0xff]
      %v1206 = vld [vmem:[%s1204 + $0x8] sm:$0xff]
      %v1207 = vld [vmem:[%s1204 + $0x10] sm:$0xff]
      %v1208 = vld [vmem:[%s1204 + $0x18] sm:$0xff]
      %1209 = vrot.lane.b32.xlu0 %v310, 38
      %v1210 = vpop.permute.xlu0 %1209
      %1211 = vrot.lane.b32.xlu0 %v311, 38
      %v1212 = vpop.permute.xlu0 %1211
      %1213 = vrot.lane.b32.xlu0 %v312, 38
      %v1214 = vpop.permute.xlu0 %1213
      %1215 = vrot.lane.b32.xlu0 %v313, 38
      %v1216 = vpop.permute.xlu0 %1215
      %1217 = vrot.lane.b32.xlu0 %v314, 38
      %v1218 = vpop.permute.xlu0 %1217
      %vm1219 = vcmask 310272
      %v1220 = vsel %vm1219, %v1210, %v1212
      %v1221 = vsel %vm1219, %v1212, %v1214
      %v1222 = vsel %vm1219, %v1214, %v1216
      %v1223 = vsel %vm1219, %v1216, %v1218
      %v1229 = vsel %vm344, %v1205, 0
      %v1232 = vsel %vm344, %v1206, 0
      %v1235 = vsel %vm344, %v1207, 0
      %v1238 = vsel %vm344, %v1208, 0
      %1240 = vmatprep.subr.mxu0 %v1221
      %1241 = vmatpush1.msra.mxu0 %v1220
      %1242 = vmatprep.subr.mxu0 0.0
      %1243 = vmatpush1.msra.mxu0 0.0
      %1244 = vmatprep.subr.mxu0 0.0
      %1245 = vmatpush1.msra.mxu0 0.0
      %1246 = vmatprep.subr.mxu0 0.0
      %1247 = vmatpush1.msra.mxu0 0.0
      %1248 = vmatprep.subr.mxu0 0.0
      %1249 = vmatpush1.msra.mxu0 0.0
      %1250 = vmatprep.subr.mxu0 0.0
      %1251 = vmatpush1.msra.mxu0 0.0
      %1252 = vmatprep.subr.mxu0 0.0
      %1253 = vmatpush1.msra.mxu0 0.0
      %1254 = vmatprep.subr.mxu0 0.0
      %1255 = vmatpush1.msra.mxu0 0.0
      %1256 = vmatprep.subr.mxu0 0.0
      %1257 = vmatpush1.msra.mxu0 0.0
      %1258 = vmatprep.subr.mxu0 0.0
      %1259 = vmatpush1.msra.mxu0 0.0
      %1260 = vmatprep.subr.mxu0 0.0
      %1261 = vmatpush1.msra.mxu0 0.0
      %1262 = vmatprep.subr.mxu0 0.0
      %1263 = vmatpush1.msra.mxu0 0.0
      %1264 = vmatprep.subr.mxu0 0.0
      %1265 = vmatpush1.msra.mxu0 0.0
      %1266 = vmatprep.subr.mxu0 0.0
      %1267 = vmatpush1.msra.mxu0 0.0
      %1268 = vmatprep.subr.mxu0 0.0
      %1269 = vmatpush1.msra.mxu0 0.0
      %1270 = vmatprep.subr.mxu0 0.0
      %1271 = vmatpush1.msra.mxu0 0.0
      %1272 = vmatprep.subr.mxu0 0.0
      %1273 = vmatpush1.msra.mxu0 0.0
      %1274 = vmatprep.subr.mxu0 0.0
      %1275 = vmatpush1.msra.mxu0 0.0
      %1276 = vmatprep.subr.mxu0 0.0
      %1277 = vmatpush1.msra.mxu0 0.0
      %1278 = vmatprep.subr.mxu0 0.0
      %1279 = vmatpush1.msra.mxu0 0.0
      %1280 = vmatprep.subr.mxu0 0.0
      %1281 = vmatpush1.msra.mxu0 0.0
      %1282 = vmatprep.subr.mxu0 0.0
      %1283 = vmatpush1.msra.mxu0 0.0
      %1284 = vmatprep.subr.mxu0 0.0
      %1285 = vmatpush1.msra.mxu0 0.0
      %1286 = vmatprep.subr.mxu0 0.0
      %1287 = vmatpush1.msra.mxu0 0.0
      %1288 = vmatprep.subr.mxu0 0.0
      %1289 = vmatpush1.msra.mxu0 0.0
      %1290 = vmatprep.subr.mxu0 0.0
      %1291 = vmatpush1.msra.mxu0 0.0
      %1292 = vmatprep.subr.mxu0 0.0
      %1293 = vmatpush1.msra.mxu0 0.0
      %1294 = vmatprep.subr.mxu0 0.0
      %1295 = vmatpush1.msra.mxu0 0.0
      %1296 = vmatprep.subr.mxu0 0.0
      %1297 = vmatpush1.msra.mxu0 0.0
      %1298 = vmatprep.subr.mxu0 0.0
      %1299 = vmatpush1.msra.mxu0 0.0
      %1300 = vmatprep.subr.mxu0 0.0
      %1301 = vmatpush1.msra.mxu0 0.0
      %1302 = vmatprep.subr.mxu0 0.0
      %1303 = vmatpush1.msra.mxu0 0.0
      %1304 = vmatprep.mubr.f32.mxu0 0.0
      %1305 = vmatmul.mubr.f32.gmra.mrb[0].mxu0 %v1229
      %v1306 = vpop.f32.mrb[0].mxu0
      %v1307 = vadd.f32 0.0, %v1306
      %v1308 = vpop.f32.mrb[0].mxu0
      %v1309 = vadd.f32 0.0, %v1308
      %1310 = vmatprep.mubr.f32.mxu0 0.0
      %1311 = vmatmul.mubr.f32.gmra.mrb[0].mxu0 %v1232
      %v1312 = vpop.f32.mrb[0].mxu0
      %v1313 = vadd.f32 0.0, %v1312
      %v1314 = vpop.f32.mrb[0].mxu0
      %v1315 = vadd.f32 0.0, %v1314
      %1316 = vmatprep.mubr.f32.mxu0 0.0
      %1317 = vmatmul.mubr.f32.gmra.mrb[0].mxu0 %v1235
      %v1318 = vpop.f32.mrb[0].mxu0
      %v1319 = vadd.f32 0.0, %v1318
      %v1320 = vpop.f32.mrb[0].mxu0
      %v1321 = vadd.f32 0.0, %v1320
      %1322 = vmatprep.mubr.f32.mxu0 0.0
      %1323 = vmatmul.mubr.f32.gmra.mrb[0].mxu0 %v1238
      %v1324 = vpop.f32.mrb[0].mxu0
      %v1325 = vadd.f32 0.0, %v1324
      %v1326 = vpop.f32.mrb[0].mxu0
      %v1327 = vadd.f32 0.0, %v1326
      %1328 = vdwg.mxu0
      %1329 = vmatprep.subr.mxu0 %v1223
      %1330 = vmatpush1.msra.mxu0 %v1222
      %1331 = vmatprep.subr.mxu0 0.0
      %1332 = vmatpush1.msra.mxu0 0.0
      %1333 = vmatprep.subr.mxu0 0.0
      %1334 = vmatpush1.msra.mxu0 0.0
      %1335 = vmatprep.subr.mxu0 0.0
      %1336 = vmatpush1.msra.mxu0 0.0
      %1337 = vmatprep.subr.mxu0 0.0
      %1338 = vmatpush1.msra.mxu0 0.0
      %1339 = vmatprep.subr.mxu0 0.0
      %1340 = vmatpush1.msra.mxu0 0.0
      %1341 = vmatprep.subr.mxu0 0.0
      %1342 = vmatpush1.msra.mxu0 0.0
      %1343 = vmatprep.subr.mxu0 0.0
      %1344 = vmatpush1.msra.mxu0 0.0
      %1345 = vmatprep.subr.mxu0 0.0
      %1346 = vmatpush1.msra.mxu0 0.0
      %1347 = vmatprep.subr.mxu0 0.0
      %1348 = vmatpush1.msra.mxu0 0.0
      %1349 = vmatprep.subr.mxu0 0.0
      %1350 = vmatpush1.msra.mxu0 0.0
      %1351 = vmatprep.subr.mxu0 0.0
      %1352 = vmatpush1.msra.mxu0 0.0
      %1353 = vmatprep.subr.mxu0 0.0
      %1354 = vmatpush1.msra.mxu0 0.0
      %1355 = vmatprep.subr.mxu0 0.0
      %1356 = vmatpush1.msra.mxu0 0.0
      %1357 = vmatprep.subr.mxu0 0.0
      %1358 = vmatpush1.msra.mxu0 0.0
      %1359 = vmatprep.subr.mxu0 0.0
      %1360 = vmatpush1.msra.mxu0 0.0
      %1361 = vmatprep.subr.mxu0 0.0
      %1362 = vmatpush1.msra.mxu0 0.0
      %1363 = vmatprep.subr.mxu0 0.0
      %1364 = vmatpush1.msra.mxu0 0.0
      %1365 = vmatprep.subr.mxu0 0.0
      %1366 = vmatpush1.msra.mxu0 0.0
      %1367 = vmatprep.subr.mxu0 0.0
      %1368 = vmatpush1.msra.mxu0 0.0
      %1369 = vmatprep.subr.mxu0 0.0
      %1370 = vmatpush1.msra.mxu0 0.0
      %1371 = vmatprep.subr.mxu0 0.0
      %1372 = vmatpush1.msra.mxu0 0.0
      %1373 = vmatprep.subr.mxu0 0.0
      %1374 = vmatpush1.msra.mxu0 0.0
      %1375 = vmatprep.subr.mxu0 0.0
      %1376 = vmatpush1.msra.mxu0 0.0
      %1377 = vmatprep.subr.mxu0 0.0
      %1378 = vmatpush1.msra.mxu0 0.0
      %1379 = vmatprep.subr.mxu0 0.0
      %1380 = vmatpush1.msra.mxu0 0.0
      %1381 = vmatprep.subr.mxu0 0.0
      %1382 = vmatpush1.msra.mxu0 0.0
      %1383 = vmatprep.subr.mxu0 0.0
      %1384 = vmatpush1.msra.mxu0 0.0
      %1385 = vmatprep.subr.mxu0 0.0
      %1386 = vmatpush1.msra.mxu0 0.0
      %1387 = vmatprep.subr.mxu0 0.0
      %1388 = vmatpush1.msra.mxu0 0.0
      %1389 = vmatprep.subr.mxu0 0.0
      %1390 = vmatpush1.msra.mxu0 0.0
      %1391 = vmatprep.subr.mxu0 0.0
      %1392 = vmatpush1.msra.mxu0 0.0
      %1393 = vmatprep.mubr.f32.mxu0 0.0
      %1394 = vmatmul.mubr.f32.gmra.mrb[0].mxu0 %v1229
      %v1395 = vpop.f32.mrb[0].mxu0
      %v1396 = vadd.f32 0.0, %v1395
      %v1397 = vpop.f32.mrb[0].mxu0
      %v1398 = vadd.f32 0.0, %v1397
      %1399 = vmatprep.mubr.f32.mxu0 0.0
      %1400 = vmatmul.mubr.f32.gmra.mrb[0].mxu0 %v1232
      %v1401 = vpop.f32.mrb[0].mxu0
      %v1402 = vadd.f32 0.0, %v1401
      %v1403 = vpop.f32.mrb[0].mxu0
      %v1404 = vadd.f32 0.0, %v1403
      %1405 = vmatprep.mubr.f32.mxu0 0.0
      %1406 = vmatmul.mubr.f32.gmra.mrb[0].mxu0 %v1235
      %v1407 = vpop.f32.mrb[0].mxu0
      %v1408 = vadd.f32 0.0, %v1407
      %v1409 = vpop.f32.mrb[0].mxu0
      %v1410 = vadd.f32 0.0, %v1409
      %1411 = vmatprep.mubr.f32.mxu0 0.0
      %1412 = vmatmul.mubr.f32.gmra.mrb[0].mxu0 %v1238
      %v1413 = vpop.f32.mrb[0].mxu0
      %v1414 = vadd.f32 0.0, %v1413
      %v1415 = vpop.f32.mrb[0].mxu0
      %v1416 = vadd.f32 0.0, %v1415
      %1417 = vdwg.mxu0
      %v1418 = vadd.f32 %v1188, %v1307
      %v1419 = vadd.f32 %v1189, %v1309
      %v1420 = vadd.f32 %v1190, %v1396
      %v1421 = vadd.f32 %v1191, %v1398
      %v1422 = vadd.f32 %v1192, %v1313
      %v1423 = vadd.f32 %v1193, %v1315
      %v1424 = vadd.f32 %v1194, %v1402
      %v1425 = vadd.f32 %v1195, %v1404
      %v1426 = vadd.f32 %v1196, %v1319
      %v1427 = vadd.f32 %v1197, %v1321
      %v1428 = vadd.f32 %v1198, %v1408
      %v1429 = vadd.f32 %v1199, %v1410
      %v1430 = vadd.f32 %v1200, %v1325
      %v1431 = vadd.f32 %v1201, %v1327
      %v1432 = vadd.f32 %v1202, %v1414
      %v1433 = vadd.f32 %v1203, %v1416
      %s1434 = scalar_lea.vmem %s1, 160
      %v1435 = vld [vmem:[%s1434] sm:$0xff]
      %v1436 = vld [vmem:[%s1434 + $0x8] sm:$0xff]
      %v1437 = vld [vmem:[%s1434 + $0x10] sm:$0xff]
      %v1438 = vld [vmem:[%s1434 + $0x18] sm:$0xff]
      %1439 = vrot.lane.b32.xlu0 %v310, 22
      %v1440 = vpop.permute.xlu0 %1439
      %1441 = vrot.lane.b32.xlu0 %v311, 22
      %v1442 = vpop.permute.xlu0 %1441
      %1443 = vrot.lane.b32.xlu0 %v312, 22
      %v1444 = vpop.permute.xlu0 %1443
      %1445 = vrot.lane.b32.xlu0 %v313, 22
      %v1446 = vpop.permute.xlu0 %1445
      %1447 = vrot.lane.b32.xlu0 %v314, 22
      %v1448 = vpop.permute.xlu0 %1447
      %vm1449 = vcmask 179200
      %v1450 = vsel %vm1449, %v1440, %v1442
      %v1451 = vsel %vm1449, %v1442, %v1444
      %v1452 = vsel %vm1449, %v1444, %v1446
      %v1453 = vsel %vm1449, %v1446, %v1448
      %v1459 = vsel %vm344, %v1435, 0
      %v1462 = vsel %vm344, %v1436, 0
      %v1465 = vsel %vm344, %v1437, 0
      %v1468 = vsel %vm344, %v1438, 0
      %1470 = vmatprep.subr.mxu0 %v1451
      %1471 = vmatpush1.msra.mxu0 %v1450
      %1472 = vmatprep.subr.mxu0 0.0
      %1473 = vmatpush1.msra.mxu0 0.0
      %1474 = vmatprep.subr.mxu0 0.0
      %1475 = vmatpush1.msra.mxu0 0.0
      %1476 = vmatprep.subr.mxu0 0.0
      %1477 = vmatpush1.msra.mxu0 0.0
      %1478 = vmatprep.subr.mxu0 0.0
      %1479 = vmatpush1.msra.mxu0 0.0
      %1480 = vmatprep.subr.mxu0 0.0
      %1481 = vmatpush1.msra.mxu0 0.0
      %1482 = vmatprep.subr.mxu0 0.0
      %1483 = vmatpush1.msra.mxu0 0.0
      %1484 = vmatprep.subr.mxu0 0.0
      %1485 = vmatpush1.msra.mxu0 0.0
      %1486 = vmatprep.subr.mxu0 0.0
      %1487 = vmatpush1.msra.mxu0 0.0
      %1488 = vmatprep.subr.mxu0 0.0
      %1489 = vmatpush1.msra.mxu0 0.0
      %1490 = vmatprep.subr.mxu0 0.0
      %1491 = vmatpush1.msra.mxu0 0.0
      %1492 = vmatprep.subr.mxu0 0.0
      %1493 = vmatpush1.msra.mxu0 0.0
      %1494 = vmatprep.subr.mxu0 0.0
      %1495 = vmatpush1.msra.mxu0 0.0
      %1496 = vmatprep.subr.mxu0 0.0
      %1497 = vmatpush1.msra.mxu0 0.0
      %1498 = vmatprep.subr.mxu0 0.0
      %1499 = vmatpush1.msra.mxu0 0.0
      %1500 = vmatprep.subr.mxu0 0.0
      %1501 = vmatpush1.msra.mxu0 0.0
      %1502 = vmatprep.subr.mxu0 0.0
      %1503 = vmatpush1.msra.mxu0 0.0
      %1504 = vmatprep.subr.mxu0 0.0
      %1505 = vmatpush1.msra.mxu0 0.0
      %1506 = vmatprep.subr.mxu0 0.0
      %1507 = vmatpush1.msra.mxu0 0.0
      %1508 = vmatprep.subr.mxu0 0.0
      %1509 = vmatpush1.msra.mxu0 0.0
      %1510 = vmatprep.subr.mxu0 0.0
      %1511 = vmatpush1.msra.mxu0 0.0
      %1512 = vmatprep.subr.mxu0 0.0
      %1513 = vmatpush1.msra.mxu0 0.0
      %1514 = vmatprep.subr.mxu0 0.0
      %1515 = vmatpush1.msra.mxu0 0.0
      %1516 = vmatprep.subr.mxu0 0.0
      %1517 = vmatpush1.msra.mxu0 0.0
      %1518 = vmatprep.subr.mxu0 0.0
      %1519 = vmatpush1.msra.mxu0 0.0
      %1520 = vmatprep.subr.mxu0 0.0
      %1521 = vmatpush1.msra.mxu0 0.0
      %1522 = vmatprep.subr.mxu0 0.0
      %1523 = vmatpush1.msra.mxu0 0.0
      %1524 = vmatprep.subr.mxu0 0.0
      %1525 = vmatpush1.msra.mxu0 0.0
      %1526 = vmatprep.subr.mxu0 0.0
      %1527 = vmatpush1.msra.mxu0 0.0
      %1528 = vmatprep.subr.mxu0 0.0
      %1529 = vmatpush1.msra.mxu0 0.0
      %1530 = vmatprep.subr.mxu0 0.0
      %1531 = vmatpush1.msra.mxu0 0.0
      %1532 = vmatprep.subr.mxu0 0.0
      %1533 = vmatpush1.msra.mxu0 0.0
      %1534 = vmatprep.mubr.f32.mxu0 0.0
      %1535 = vmatmul.mubr.f32.gmra.mrb[0].mxu0 %v1459
      %v1536 = vpop.f32.mrb[0].mxu0
      %v1537 = vadd.f32 0.0, %v1536
      %v1538 = vpop.f32.mrb[0].mxu0
      %v1539 = vadd.f32 0.0, %v1538
      %1540 = vmatprep.mubr.f32.mxu0 0.0
      %1541 = vmatmul.mubr.f32.gmra.mrb[0].mxu0 %v1462
      %v1542 = vpop.f32.mrb[0].mxu0
      %v1543 = vadd.f32 0.0, %v1542
      %v1544 = vpop.f32.mrb[0].mxu0
      %v1545 = vadd.f32 0.0, %v1544
      %1546 = vmatprep.mubr.f32.mxu0 0.0
      %1547 = vmatmul.mubr.f32.gmra.mrb[0].mxu0 %v1465
      %v1548 = vpop.f32.mrb[0].mxu0
      %v1549 = vadd.f32 0.0, %v1548
      %v1550 = vpop.f32.mrb[0].mxu0
      %v1551 = vadd.f32 0.0, %v1550
      %1552 = vmatprep.mubr.f32.mxu0 0.0
      %1553 = vmatmul.mubr.f32.gmra.mrb[0].mxu0 %v1468
      %v1554 = vpop.f32.mrb[0].mxu0
      %v1555 = vadd.f32 0.0, %v1554
      %v1556 = vpop.f32.mrb[0].mxu0
      %v1557 = vadd.f32 0.0, %v1556
      %1558 = vdwg.mxu0
      %1559 = vmatprep.subr.mxu0 %v1453
      %1560 = vmatpush1.msra.mxu0 %v1452
      %1561 = vmatprep.subr.mxu0 0.0
      %1562 = vmatpush1.msra.mxu0 0.0
      %1563 = vmatprep.subr.mxu0 0.0
      %1564 = vmatpush1.msra.mxu0 0.0
      %1565 = vmatprep.subr.mxu0 0.0
      %1566 = vmatpush1.msra.mxu0 0.0
      %1567 = vmatprep.subr.mxu0 0.0
      %1568 = vmatpush1.msra.mxu0 0.0
      %1569 = vmatprep.subr.mxu0 0.0
      %1570 = vmatpush1.msra.mxu0 0.0
      %1571 = vmatprep.subr.mxu0 0.0
      %1572 = vmatpush1.msra.mxu0 0.0
      %1573 = vmatprep.subr.mxu0 0.0
      %1574 = vmatpush1.msra.mxu0 0.0
      %1575 = vmatprep.subr.mxu0 0.0
      %1576 = vmatpush1.msra.mxu0 0.0
      %1577 = vmatprep.subr.mxu0 0.0
      %1578 = vmatpush1.msra.mxu0 0.0
      %1579 = vmatprep.subr.mxu0 0.0
      %1580 = vmatpush1.msra.mxu0 0.0
      %1581 = vmatprep.subr.mxu0 0.0
      %1582 = vmatpush1.msra.mxu0 0.0
      %1583 = vmatprep.subr.mxu0 0.0
      %1584 = vmatpush1.msra.mxu0 0.0
      %1585 = vmatprep.subr.mxu0 0.0
      %1586 = vmatpush1.msra.mxu0 0.0
      %1587 = vmatprep.subr.mxu0 0.0
      %1588 = vmatpush1.msra.mxu0 0.0
      %1589 = vmatprep.subr.mxu0 0.0
      %1590 = vmatpush1.msra.mxu0 0.0
      %1591 = vmatprep.subr.mxu0 0.0
      %1592 = vmatpush1.msra.mxu0 0.0
      %1593 = vmatprep.subr.mxu0 0.0
      %1594 = vmatpush1.msra.mxu0 0.0
      %1595 = vmatprep.subr.mxu0 0.0
      %1596 = vmatpush1.msra.mxu0 0.0
      %1597 = vmatprep.subr.mxu0 0.0
      %1598 = vmatpush1.msra.mxu0 0.0
      %1599 = vmatprep.subr.mxu0 0.0
      %1600 = vmatpush1.msra.mxu0 0.0
      %1601 = vmatprep.subr.mxu0 0.0
      %1602 = vmatpush1.msra.mxu0 0.0
      %1603 = vmatprep.subr.mxu0 0.0
      %1604 = vmatpush1.msra.mxu0 0.0
      %1605 = vmatprep.subr.mxu0 0.0
      %1606 = vmatpush1.msra.mxu0 0.0
      %1607 = vmatprep.subr.mxu0 0.0
      %1608 = vmatpush1.msra.mxu0 0.0
      %1609 = vmatprep.subr.mxu0 0.0
      %1610 = vmatpush1.msra.mxu0 0.0
      %1611 = vmatprep.subr.mxu0 0.0
      %1612 = vmatpush1.msra.mxu0 0.0
      %1613 = vmatprep.subr.mxu0 0.0
      %1614 = vmatpush1.msra.mxu0 0.0
      %1615 = vmatprep.subr.mxu0 0.0
      %1616 = vmatpush1.msra.mxu0 0.0
      %1617 = vmatprep.subr.mxu0 0.0
      %1618 = vmatpush1.msra.mxu0 0.0
      %1619 = vmatprep.subr.mxu0 0.0
      %1620 = vmatpush1.msra.mxu0 0.0
      %1621 = vmatprep.subr.mxu0 0.0
      %1622 = vmatpush1.msra.mxu0 0.0
      %1623 = vmatprep.mubr.f32.mxu0 0.0
      %1624 = vmatmul.mubr.f32.gmra.mrb[0].mxu0 %v1459
      %v1625 = vpop.f32.mrb[0].mxu0
      %v1626 = vadd.f32 0.0, %v1625
      %v1627 = vpop.f32.mrb[0].mxu0
      %v1628 = vadd.f32 0.0, %v1627
      %1629 = vmatprep.mubr.f32.mxu0 0.0
      %1630 = vmatmul.mubr.f32.gmra.mrb[0].mxu0 %v1462
      %v1631 = vpop.f32.mrb[0].mxu0
      %v1632 = vadd.f32 0.0, %v1631
      %v1633 = vpop.f32.mrb[0].mxu0
      %v1634 = vadd.f32 0.0, %v1633
      %1635 = vmatprep.mubr.f32.mxu0 0.0
      %1636 = vmatmul.mubr.f32.gmra.mrb[0].mxu0 %v1465
      %v1637 = vpop.f32.mrb[0].mxu0
      %v1638 = vadd.f32 0.0, %v1637
      %v1639 = vpop.f32.mrb[0].mxu0
      %v1640 = vadd.f32 0.0, %v1639
      %1641 = vmatprep.mubr.f32.mxu0 0.0
      %1642 = vmatmul.mubr.f32.gmra.mrb[0].mxu0 %v1468
      %v1643 = vpop.f32.mrb[0].mxu0
      %v1644 = vadd.f32 0.0, %v1643
      %v1645 = vpop.f32.mrb[0].mxu0
      %v1646 = vadd.f32 0.0, %v1645
      %1647 = vdwg.mxu0
      %v1648 = vadd.f32 %v1418, %v1537
      %v1649 = vadd.f32 %v1419, %v1539
      %v1650 = vadd.f32 %v1420, %v1626
      %v1651 = vadd.f32 %v1421, %v1628
      %v1652 = vadd.f32 %v1422, %v1543
      %v1653 = vadd.f32 %v1423, %v1545
      %v1654 = vadd.f32 %v1424, %v1632
      %v1655 = vadd.f32 %v1425, %v1634
      %v1656 = vadd.f32 %v1426, %v1549
      %v1657 = vadd.f32 %v1427, %v1551
      %v1658 = vadd.f32 %v1428, %v1638
      %v1659 = vadd.f32 %v1429, %v1640
      %v1660 = vadd.f32 %v1430, %v1555
      %v1661 = vadd.f32 %v1431, %v1557
      %v1662 = vadd.f32 %v1432, %v1644
      %v1663 = vadd.f32 %v1433, %v1646
      %s1664 = scalar_lea.vmem %s1, 192
      %v1665 = vld [vmem:[%s1664] sm:$0xff]
      %v1666 = vld [vmem:[%s1664 + $0x8] sm:$0xff]
      %v1667 = vld [vmem:[%s1664 + $0x10] sm:$0xff]
      %v1668 = vld [vmem:[%s1664 + $0x18] sm:$0xff]
      %1669 = vrot.lane.b32.xlu0 %v310, 21
      %v1670 = vpop.permute.xlu0 %1669
      %1671 = vrot.lane.b32.xlu0 %v311, 21
      %v1672 = vpop.permute.xlu0 %1671
      %1673 = vrot.lane.b32.xlu0 %v312, 21
      %v1674 = vpop.permute.xlu0 %1673
      %1675 = vrot.lane.b32.xlu0 %v313, 21
      %v1676 = vpop.permute.xlu0 %1675
      %1677 = vrot.lane.b32.xlu0 %v314, 21
      %v1678 = vpop.permute.xlu0 %1677
      %vm1679 = vcmask 171008
      %v1680 = vsel %vm1679, %v1670, %v1672
      %v1681 = vsel %vm1679, %v1672, %v1674
      %v1682 = vsel %vm1679, %v1674, %v1676
      %v1683 = vsel %vm1679, %v1676, %v1678
      %v1689 = vsel %vm344, %v1665, 0
      %v1692 = vsel %vm344, %v1666, 0
      %v1695 = vsel %vm344, %v1667, 0
      %v1698 = vsel %vm344, %v1668, 0
      %1700 = vmatprep.subr.mxu0 %v1681
      %1701 = vmatpush1.msra.mxu0 %v1680
      %1702 = vmatprep.subr.mxu0 0.0
      %1703 = vmatpush1.msra.mxu0 0.0
      %1704 = vmatprep.subr.mxu0 0.0
      %1705 = vmatpush1.msra.mxu0 0.0
      %1706 = vmatprep.subr.mxu0 0.0
      %1707 = vmatpush1.msra.mxu0 0.0
      %1708 = vmatprep.subr.mxu0 0.0
      %1709 = vmatpush1.msra.mxu0 0.0
      %1710 = vmatprep.subr.mxu0 0.0
      %1711 = vmatpush1.msra.mxu0 0.0
      %1712 = vmatprep.subr.mxu0 0.0
      %1713 = vmatpush1.msra.mxu0 0.0
      %1714 = vmatprep.subr.mxu0 0.0
      %1715 = vmatpush1.msra.mxu0 0.0
      %1716 = vmatprep.subr.mxu0 0.0
      %1717 = vmatpush1.msra.mxu0 0.0
      %1718 = vmatprep.subr.mxu0 0.0
      %1719 = vmatpush1.msra.mxu0 0.0
      %1720 = vmatprep.subr.mxu0 0.0
      %1721 = vmatpush1.msra.mxu0 0.0
      %1722 = vmatprep.subr.mxu0 0.0
      %1723 = vmatpush1.msra.mxu0 0.0
      %1724 = vmatprep.subr.mxu0 0.0
      %1725 = vmatpush1.msra.mxu0 0.0
      %1726 = vmatprep.subr.mxu0 0.0
      %1727 = vmatpush1.msra.mxu0 0.0
      %1728 = vmatprep.subr.mxu0 0.0
      %1729 = vmatpush1.msra.mxu0 0.0
      %1730 = vmatprep.subr.mxu0 0.0
      %1731 = vmatpush1.msra.mxu0 0.0
      %1732 = vmatprep.subr.mxu0 0.0
      %1733 = vmatpush1.msra.mxu0 0.0
      %1734 = vmatprep.subr.mxu0 0.0
      %1735 = vmatpush1.msra.mxu0 0.0
      %1736 = vmatprep.subr.mxu0 0.0
      %1737 = vmatpush1.msra.mxu0 0.0
      %1738 = vmatprep.subr.mxu0 0.0
      %1739 = vmatpush1.msra.mxu0 0.0
      %1740 = vmatprep.subr.mxu0 0.0
      %1741 = vmatpush1.msra.mxu0 0.0
      %1742 = vmatprep.subr.mxu0 0.0
      %1743 = vmatpush1.msra.mxu0 0.0
      %1744 = vmatprep.subr.mxu0 0.0
      %1745 = vmatpush1.msra.mxu0 0.0
      %1746 = vmatprep.subr.mxu0 0.0
      %1747 = vmatpush1.msra.mxu0 0.0
      %1748 = vmatprep.subr.mxu0 0.0
      %1749 = vmatpush1.msra.mxu0 0.0
      %1750 = vmatprep.subr.mxu0 0.0
      %1751 = vmatpush1.msra.mxu0 0.0
      %1752 = vmatprep.subr.mxu0 0.0
      %1753 = vmatpush1.msra.mxu0 0.0
      %1754 = vmatprep.subr.mxu0 0.0
      %1755 = vmatpush1.msra.mxu0 0.0
      %1756 = vmatprep.subr.mxu0 0.0
      %1757 = vmatpush1.msra.mxu0 0.0
      %1758 = vmatprep.subr.mxu0 0.0
      %1759 = vmatpush1.msra.mxu0 0.0
      %1760 = vmatprep.subr.mxu0 0.0
      %1761 = vmatpush1.msra.mxu0 0.0
      %1762 = vmatprep.subr.mxu0 0.0
      %1763 = vmatpush1.msra.mxu0 0.0
      %1764 = vmatprep.mubr.f32.mxu0 0.0
      %1765 = vmatmul.mubr.f32.gmra.mrb[0].mxu0 %v1689
      %v1766 = vpop.f32.mrb[0].mxu0
      %v1767 = vadd.f32 0.0, %v1766
      %v1768 = vpop.f32.mrb[0].mxu0
      %v1769 = vadd.f32 0.0, %v1768
      %1770 = vmatprep.mubr.f32.mxu0 0.0
      %1771 = vmatmul.mubr.f32.gmra.mrb[0].mxu0 %v1692
      %v1772 = vpop.f32.mrb[0].mxu0
      %v1773 = vadd.f32 0.0, %v1772
      %v1774 = vpop.f32.mrb[0].mxu0
      %v1775 = vadd.f32 0.0, %v1774
      %1776 = vmatprep.mubr.f32.mxu0 0.0
      %1777 = vmatmul.mubr.f32.gmra.mrb[0].mxu0 %v1695
      %v1778 = vpop.f32.mrb[0].mxu0
      %v1779 = vadd.f32 0.0, %v1778
      %v1780 = vpop.f32.mrb[0].mxu0
      %v1781 = vadd.f32 0.0, %v1780
      %1782 = vmatprep.mubr.f32.mxu0 0.0
      %1783 = vmatmul.mubr.f32.gmra.mrb[0].mxu0 %v1698
      %v1784 = vpop.f32.mrb[0].mxu0
      %v1785 = vadd.f32 0.0, %v1784
      %v1786 = vpop.f32.mrb[0].mxu0
      %v1787 = vadd.f32 0.0, %v1786
      %1788 = vdwg.mxu0
      %1789 = vmatprep.subr.mxu0 %v1683
      %1790 = vmatpush1.msra.mxu0 %v1682
      %1791 = vmatprep.subr.mxu0 0.0
      %1792 = vmatpush1.msra.mxu0 0.0
      %1793 = vmatprep.subr.mxu0 0.0
      %1794 = vmatpush1.msra.mxu0 0.0
      %1795 = vmatprep.subr.mxu0 0.0
      %1796 = vmatpush1.msra.mxu0 0.0
      %1797 = vmatprep.subr.mxu0 0.0
      %1798 = vmatpush1.msra.mxu0 0.0
      %1799 = vmatprep.subr.mxu0 0.0
      %1800 = vmatpush1.msra.mxu0 0.0
      %1801 = vmatprep.subr.mxu0 0.0
      %1802 = vmatpush1.msra.mxu0 0.0
      %1803 = vmatprep.subr.mxu0 0.0
      %1804 = vmatpush1.msra.mxu0 0.0
      %1805 = vmatprep.subr.mxu0 0.0
      %1806 = vmatpush1.msra.mxu0 0.0
      %1807 = vmatprep.subr.mxu0 0.0
      %1808 = vmatpush1.msra.mxu0 0.0
      %1809 = vmatprep.subr.mxu0 0.0
      %1810 = vmatpush1.msra.mxu0 0.0
      %1811 = vmatprep.subr.mxu0 0.0
      %1812 = vmatpush1.msra.mxu0 0.0
      %1813 = vmatprep.subr.mxu0 0.0
      %1814 = vmatpush1.msra.mxu0 0.0
      %1815 = vmatprep.subr.mxu0 0.0
      %1816 = vmatpush1.msra.mxu0 0.0
      %1817 = vmatprep.subr.mxu0 0.0
      %1818 = vmatpush1.msra.mxu0 0.0
      %1819 = vmatprep.subr.mxu0 0.0
      %1820 = vmatpush1.msra.mxu0 0.0
      %1821 = vmatprep.subr.mxu0 0.0
      %1822 = vmatpush1.msra.mxu0 0.0
      %1823 = vmatprep.subr.mxu0 0.0
      %1824 = vmatpush1.msra.mxu0 0.0
      %1825 = vmatprep.subr.mxu0 0.0
      %1826 = vmatpush1.msra.mxu0 0.0
      %1827 = vmatprep.subr.mxu0 0.0
      %1828 = vmatpush1.msra.mxu0 0.0
      %1829 = vmatprep.subr.mxu0 0.0
      %1830 = vmatpush1.msra.mxu0 0.0
      %1831 = vmatprep.subr.mxu0 0.0
      %1832 = vmatpush1.msra.mxu0 0.0
      %1833 = vmatprep.subr.mxu0 0.0
      %1834 = vmatpush1.msra.mxu0 0.0
      %1835 = vmatprep.subr.mxu0 0.0
      %1836 = vmatpush1.msra.mxu0 0.0
      %1837 = vmatprep.subr.mxu0 0.0
      %1838 = vmatpush1.msra.mxu0 0.0
      %1839 = vmatprep.subr.mxu0 0.0
      %1840 = vmatpush1.msra.mxu0 0.0
      %1841 = vmatprep.subr.mxu0 0.0
      %1842 = vmatpush1.msra.mxu0 0.0
      %1843 = vmatprep.subr.mxu0 0.0
      %1844 = vmatpush1.msra.mxu0 0.0
      %1845 = vmatprep.subr.mxu0 0.0
      %1846 = vmatpush1.msra.mxu0 0.0
      %1847 = vmatprep.subr.mxu0 0.0
      %1848 = vmatpush1.msra.mxu0 0.0
      %1849 = vmatprep.subr.mxu0 0.0
      %1850 = vmatpush1.msra.mxu0 0.0
      %1851 = vmatprep.subr.mxu0 0.0
      %1852 = vmatpush1.msra.mxu0 0.0
      %1853 = vmatprep.mubr.f32.mxu0 0.0
      %1854 = vmatmul.mubr.f32.gmra.mrb[0].mxu0 %v1689
      %v1855 = vpop.f32.mrb[0].mxu0
      %v1856 = vadd.f32 0.0, %v1855
      %v1857 = vpop.f32.mrb[0].mxu0
      %v1858 = vadd.f32 0.0, %v1857
      %1859 = vmatprep.mubr.f32.mxu0 0.0
      %1860 = vmatmul.mubr.f32.gmra.mrb[0].mxu0 %v1692
      %v1861 = vpop.f32.mrb[0].mxu0
      %v1862 = vadd.f32 0.0, %v1861
      %v1863 = vpop.f32.mrb[0].mxu0
      %v1864 = vadd.f32 0.0, %v1863
      %1865 = vmatprep.mubr.f32.mxu0 0.0
      %1866 = vmatmul.mubr.f32.gmra.mrb[0].mxu0 %v1695
      %v1867 = vpop.f32.mrb[0].mxu0
      %v1868 = vadd.f32 0.0, %v1867
      %v1869 = vpop.f32.mrb[0].mxu0
      %v1870 = vadd.f32 0.0, %v1869
      %1871 = vmatprep.mubr.f32.mxu0 0.0
      %1872 = vmatmul.mubr.f32.gmra.mrb[0].mxu0 %v1698
      %v1873 = vpop.f32.mrb[0].mxu0
      %v1874 = vadd.f32 0.0, %v1873
      %v1875 = vpop.f32.mrb[0].mxu0
      %v1876 = vadd.f32 0.0, %v1875
      %1877 = vdwg.mxu0
      %v1878 = vadd.f32 %v1648, %v1767
      %v1879 = vadd.f32 %v1649, %v1769
      %v1880 = vadd.f32 %v1650, %v1856
      %v1881 = vadd.f32 %v1651, %v1858
      %v1882 = vadd.f32 %v1652, %v1773
      %v1883 = vadd.f32 %v1653, %v1775
      %v1884 = vadd.f32 %v1654, %v1862
      %v1885 = vadd.f32 %v1655, %v1864
      %v1886 = vadd.f32 %v1656, %v1779
      %v1887 = vadd.f32 %v1657, %v1781
      %v1888 = vadd.f32 %v1658, %v1868
      %v1889 = vadd.f32 %v1659, %v1870
      %v1890 = vadd.f32 %v1660, %v1785
      %v1891 = vadd.f32 %v1661, %v1787
      %v1892 = vadd.f32 %v1662, %v1874
      %v1893 = vadd.f32 %v1663, %v1876
      %s1894 = scalar_lea.vmem %s1, 224
      %v1895 = vld [vmem:[%s1894] sm:$0xff]
      %v1896 = vld [vmem:[%s1894 + $0x8] sm:$0xff]
      %v1897 = vld [vmem:[%s1894 + $0x10] sm:$0xff]
      %v1898 = vld [vmem:[%s1894 + $0x18] sm:$0xff]
      %1899 = vrot.lane.b32.xlu0 %v310, 20
      %v1900 = vpop.permute.xlu0 %1899
      %1901 = vrot.lane.b32.xlu0 %v311, 20
      %v1902 = vpop.permute.xlu0 %1901
      %1903 = vrot.lane.b32.xlu0 %v312, 20
      %v1904 = vpop.permute.xlu0 %1903
      %1905 = vrot.lane.b32.xlu0 %v313, 20
      %v1906 = vpop.permute.xlu0 %1905
      %1907 = vrot.lane.b32.xlu0 %v314, 20
      %v1908 = vpop.permute.xlu0 %1907
      %vm1909 = vcmask 162816
      %v1910 = vsel %vm1909, %v1900, %v1902
      %v1911 = vsel %vm1909, %v1902, %v1904
      %v1912 = vsel %vm1909, %v1904, %v1906
      %v1913 = vsel %vm1909, %v1906, %v1908
      %v1919 = vsel %vm344, %v1895, 0
      %v1922 = vsel %vm344, %v1896, 0
      %v1925 = vsel %vm344, %v1897, 0
      %v1928 = vsel %vm344, %v1898, 0
      %1930 = vmatprep.subr.mxu0 %v1911
      %1931 = vmatpush1.msra.mxu0 %v1910
      %1932 = vmatprep.subr.mxu0 0.0
      %1933 = vmatpush1.msra.mxu0 0.0
      %1934 = vmatprep.subr.mxu0 0.0
      %1935 = vmatpush1.msra.mxu0 0.0
      %1936 = vmatprep.subr.mxu0 0.0
      %1937 = vmatpush1.msra.mxu0 0.0
      %1938 = vmatprep.subr.mxu0 0.0
      %1939 = vmatpush1.msra.mxu0 0.0
      %1940 = vmatprep.subr.mxu0 0.0
      %1941 = vmatpush1.msra.mxu0 0.0
      %1942 = vmatprep.subr.mxu0 0.0
      %1943 = vmatpush1.msra.mxu0 0.0
      %1944 = vmatprep.subr.mxu0 0.0
      %1945 = vmatpush1.msra.mxu0 0.0
      %1946 = vmatprep.subr.mxu0 0.0
      %1947 = vmatpush1.msra.mxu0 0.0
      %1948 = vmatprep.subr.mxu0 0.0
      %1949 = vmatpush1.msra.mxu0 0.0
      %1950 = vmatprep.subr.mxu0 0.0
      %1951 = vmatpush1.msra.mxu0 0.0
      %1952 = vmatprep.subr.mxu0 0.0
      %1953 = vmatpush1.msra.mxu0 0.0
      %1954 = vmatprep.subr.mxu0 0.0
      %1955 = vmatpush1.msra.mxu0 0.0
      %1956 = vmatprep.subr.mxu0 0.0
      %1957 = vmatpush1.msra.mxu0 0.0
      %1958 = vmatprep.subr.mxu0 0.0
      %1959 = vmatpush1.msra.mxu0 0.0
      %1960 = vmatprep.subr.mxu0 0.0
      %1961 = vmatpush1.msra.mxu0 0.0
      %1962 = vmatprep.subr.mxu0 0.0
      %1963 = vmatpush1.msra.mxu0 0.0
      %1964 = vmatprep.subr.mxu0 0.0
      %1965 = vmatpush1.msra.mxu0 0.0
      %1966 = vmatprep.subr.mxu0 0.0
      %1967 = vmatpush1.msra.mxu0 0.0
      %1968 = vmatprep.subr.mxu0 0.0
      %1969 = vmatpush1.msra.mxu0 0.0
      %1970 = vmatprep.subr.mxu0 0.0
      %1971 = vmatpush1.msra.mxu0 0.0
      %1972 = vmatprep.subr.mxu0 0.0
      %1973 = vmatpush1.msra.mxu0 0.0
      %1974 = vmatprep.subr.mxu0 0.0
      %1975 = vmatpush1.msra.mxu0 0.0
      %1976 = vmatprep.subr.mxu0 0.0
      %1977 = vmatpush1.msra.mxu0 0.0
      %1978 = vmatprep.subr.mxu0 0.0
      %1979 = vmatpush1.msra.mxu0 0.0
      %1980 = vmatprep.subr.mxu0 0.0
      %1981 = vmatpush1.msra.mxu0 0.0
      %1982 = vmatprep.subr.mxu0 0.0
      %1983 = vmatpush1.msra.mxu0 0.0
      %1984 = vmatprep.subr.mxu0 0.0
      %1985 = vmatpush1.msra.mxu0 0.0
      %1986 = vmatprep.subr.mxu0 0.0
      %1987 = vmatpush1.msra.mxu0 0.0
      %1988 = vmatprep.subr.mxu0 0.0
      %1989 = vmatpush1.msra.mxu0 0.0
      %1990 = vmatprep.subr.mxu0 0.0
      %1991 = vmatpush1.msra.mxu0 0.0
      %1992 = vmatprep.subr.mxu0 0.0
      %1993 = vmatpush1.msra.mxu0 0.0
      %1994 = vmatprep.mubr.f32.mxu0 0.0
      %1995 = vmatmul.mubr.f32.gmra.mrb[0].mxu0 %v1919
      %v1996 = vpop.f32.mrb[0].mxu0
      %v1997 = vadd.f32 0.0, %v1996
      %v1998 = vpop.f32.mrb[0].mxu0
      %v1999 = vadd.f32 0.0, %v1998
      %2000 = vmatprep.mubr.f32.mxu0 0.0
      %2001 = vmatmul.mubr.f32.gmra.mrb[0].mxu0 %v1922
      %v2002 = vpop.f32.mrb[0].mxu0
      %v2003 = vadd.f32 0.0, %v2002
      %v2004 = vpop.f32.mrb[0].mxu0
      %v2005 = vadd.f32 0.0, %v2004
      %2006 = vmatprep.mubr.f32.mxu0 0.0
      %2007 = vmatmul.mubr.f32.gmra.mrb[0].mxu0 %v1925
      %v2008 = vpop.f32.mrb[0].mxu0
      %v2009 = vadd.f32 0.0, %v2008
      %v2010 = vpop.f32.mrb[0].mxu0
      %v2011 = vadd.f32 0.0, %v2010
      %2012 = vmatprep.mubr.f32.mxu0 0.0
      %2013 = vmatmul.mubr.f32.gmra.mrb[0].mxu0 %v1928
      %v2014 = vpop.f32.mrb[0].mxu0
      %v2015 = vadd.f32 0.0, %v2014
      %v2016 = vpop.f32.mrb[0].mxu0
      %v2017 = vadd.f32 0.0, %v2016
      %2018 = vdwg.mxu0
      %2019 = vmatprep.subr.mxu0 %v1913
      %2020 = vmatpush1.msra.mxu0 %v1912
      %2021 = vmatprep.subr.mxu0 0.0
      %2022 = vmatpush1.msra.mxu0 0.0
      %2023 = vmatprep.subr.mxu0 0.0
      %2024 = vmatpush1.msra.mxu0 0.0
      %2025 = vmatprep.subr.mxu0 0.0
      %2026 = vmatpush1.msra.mxu0 0.0
      %2027 = vmatprep.subr.mxu0 0.0
      %2028 = vmatpush1.msra.mxu0 0.0
      %2029 = vmatprep.subr.mxu0 0.0
      %2030 = vmatpush1.msra.mxu0 0.0
      %2031 = vmatprep.subr.mxu0 0.0
      %2032 = vmatpush1.msra.mxu0 0.0
      %2033 = vmatprep.subr.mxu0 0.0
      %2034 = vmatpush1.msra.mxu0 0.0
      %2035 = vmatprep.subr.mxu0 0.0
      %2036 = vmatpush1.msra.mxu0 0.0
      %2037 = vmatprep.subr.mxu0 0.0
      %2038 = vmatpush1.msra.mxu0 0.0
      %2039 = vmatprep.subr.mxu0 0.0
      %2040 = vmatpush1.msra.mxu0 0.0
      %2041 = vmatprep.subr.mxu0 0.0
      %2042 = vmatpush1.msra.mxu0 0.0
      %2043 = vmatprep.subr.mxu0 0.0
      %2044 = vmatpush1.msra.mxu0 0.0
      %2045 = vmatprep.subr.mxu0 0.0
      %2046 = vmatpush1.msra.mxu0 0.0
      %2047 = vmatprep.subr.mxu0 0.0
      %2048 = vmatpush1.msra.mxu0 0.0
      %2049 = vmatprep.subr.mxu0 0.0
      %2050 = vmatpush1.msra.mxu0 0.0
      %2051 = vmatprep.subr.mxu0 0.0
      %2052 = vmatpush1.msra.mxu0 0.0
      %2053 = vmatprep.subr.mxu0 0.0
      %2054 = vmatpush1.msra.mxu0 0.0
      %2055 = vmatprep.subr.mxu0 0.0
      %2056 = vmatpush1.msra.mxu0 0.0
      %2057 = vmatprep.subr.mxu0 0.0
      %2058 = vmatpush1.msra.mxu0 0.0
      %2059 = vmatprep.subr.mxu0 0.0
      %2060 = vmatpush1.msra.mxu0 0.0
      %2061 = vmatprep.subr.mxu0 0.0
      %2062 = vmatpush1.msra.mxu0 0.0
      %2063 = vmatprep.subr.mxu0 0.0
      %2064 = vmatpush1.msra.mxu0 0.0
      %2065 = vmatprep.subr.mxu0 0.0
      %2066 = vmatpush1.msra.mxu0 0.0
      %2067 = vmatprep.subr.mxu0 0.0
      %2068 = vmatpush1.msra.mxu0 0.0
      %2069 = vmatprep.subr.mxu0 0.0
      %2070 = vmatpush1.msra.mxu0 0.0
      %2071 = vmatprep.subr.mxu0 0.0
      %2072 = vmatpush1.msra.mxu0 0.0
      %2073 = vmatprep.subr.mxu0 0.0
      %2074 = vmatpush1.msra.mxu0 0.0
      %2075 = vmatprep.subr.mxu0 0.0
      %2076 = vmatpush1.msra.mxu0 0.0
      %2077 = vmatprep.subr.mxu0 0.0
      %2078 = vmatpush1.msra.mxu0 0.0
      %2079 = vmatprep.subr.mxu0 0.0
      %2080 = vmatpush1.msra.mxu0 0.0
      %2081 = vmatprep.subr.mxu0 0.0
      %2082 = vmatpush1.msra.mxu0 0.0
      %2083 = vmatprep.mubr.f32.mxu0 0.0
      %2084 = vmatmul.mubr.f32.gmra.mrb[0].mxu0 %v1919
      %v2085 = vpop.f32.mrb[0].mxu0
      %v2086 = vadd.f32 0.0, %v2085
      %v2087 = vpop.f32.mrb[0].mxu0
      %v2088 = vadd.f32 0.0, %v2087
      %2089 = vmatprep.mubr.f32.mxu0 0.0
      %2090 = vmatmul.mubr.f32.gmra.mrb[0].mxu0 %v1922
      %v2091 = vpop.f32.mrb[0].mxu0
      %v2092 = vadd.f32 0.0, %v2091
      %v2093 = vpop.f32.mrb[0].mxu0
      %v2094 = vadd.f32 0.0, %v2093
      %2095 = vmatprep.mubr.f32.mxu0 0.0
      %2096 = vmatmul.mubr.f32.gmra.mrb[0].mxu0 %v1925
      %v2097 = vpop.f32.mrb[0].mxu0
      %v2098 = vadd.f32 0.0, %v2097
      %v2099 = vpop.f32.mrb[0].mxu0
      %v2100 = vadd.f32 0.0, %v2099
      %2101 = vmatprep.mubr.f32.mxu0 0.0
      %2102 = vmatmul.mubr.f32.gmra.mrb[0].mxu0 %v1928
      %v2103 = vpop.f32.mrb[0].mxu0
      %v2104 = vadd.f32 0.0, %v2103
      %v2105 = vpop.f32.mrb[0].mxu0
      %v2106 = vadd.f32 0.0, %v2105
      %2107 = vdwg.mxu0
      %v2108 = vadd.f32 %v1878, %v1997
      %v2109 = vadd.f32 %v1879, %v1999
      %v2110 = vadd.f32 %v1880, %v2086
      %v2111 = vadd.f32 %v1881, %v2088
      %v2112 = vadd.f32 %v1882, %v2003
      %v2113 = vadd.f32 %v1883, %v2005
      %v2114 = vadd.f32 %v1884, %v2092
      %v2115 = vadd.f32 %v1885, %v2094
      %v2116 = vadd.f32 %v1886, %v2009
      %v2117 = vadd.f32 %v1887, %v2011
      %v2118 = vadd.f32 %v1888, %v2098
      %v2119 = vadd.f32 %v1889, %v2100
      %v2120 = vadd.f32 %v1890, %v2015
      %v2121 = vadd.f32 %v1891, %v2017
      %v2122 = vadd.f32 %v1892, %v2104
      %v2123 = vadd.f32 %v1893, %v2106
      %s2124 = scalar_lea.vmem %s1, 256
      %v2125 = vld [vmem:[%s2124] sm:$0xff]
      %v2126 = vld [vmem:[%s2124 + $0x8] sm:$0xff]
      %v2127 = vld [vmem:[%s2124 + $0x10] sm:$0xff]
      %v2128 = vld [vmem:[%s2124 + $0x18] sm:$0xff]
      %2129 = vrot.lane.b32.xlu0 %v310, 19
      %v2130 = vpop.permute.xlu0 %2129
      %2131 = vrot.lane.b32.xlu0 %v311, 19
      %v2132 = vpop.permute.xlu0 %2131
      %2133 = vrot.lane.b32.xlu0 %v312, 19
      %v2134 = vpop.permute.xlu0 %2133
      %2135 = vrot.lane.b32.xlu0 %v313, 19
      %v2136 = vpop.permute.xlu0 %2135
      %2137 = vrot.lane.b32.xlu0 %v314, 19
      %v2138 = vpop.permute.xlu0 %2137
      %vm2139 = vcmask 154624
      %v2140 = vsel %vm2139, %v2130, %v2132
      %v2141 = vsel %vm2139, %v2132, %v2134
      %v2142 = vsel %vm2139, %v2134, %v2136
      %v2143 = vsel %vm2139, %v2136, %v2138
      %v2149 = vsel %vm344, %v2125, 0
      %v2152 = vsel %vm344, %v2126, 0
      %v2155 = vsel %vm344, %v2127, 0
      %v2158 = vsel %vm344, %v2128, 0
      %2160 = vmatprep.subr.mxu0 %v2141
      %2161 = vmatpush1.msra.mxu0 %v2140
      %2162 = vmatprep.subr.mxu0 0.0
      %2163 = vmatpush1.msra.mxu0 0.0
      %2164 = vmatprep.subr.mxu0 0.0
      %2165 = vmatpush1.msra.mxu0 0.0
      %2166 = vmatprep.subr.mxu0 0.0
      %2167 = vmatpush1.msra.mxu0 0.0
      %2168 = vmatprep.subr.mxu0 0.0
      %2169 = vmatpush1.msra.mxu0 0.0
      %2170 = vmatprep.subr.mxu0 0.0
      %2171 = vmatpush1.msra.mxu0 0.0
      %2172 = vmatprep.subr.mxu0 0.0
      %2173 = vmatpush1.msra.mxu0 0.0
      %2174 = vmatprep.subr.mxu0 0.0
      %2175 = vmatpush1.msra.mxu0 0.0
      %2176 = vmatprep.subr.mxu0 0.0
      %2177 = vmatpush1.msra.mxu0 0.0
      %2178 = vmatprep.subr.mxu0 0.0
      %2179 = vmatpush1.msra.mxu0 0.0
      %2180 = vmatprep.subr.mxu0 0.0
      %2181 = vmatpush1.msra.mxu0 0.0
      %2182 = vmatprep.subr.mxu0 0.0
      %2183 = vmatpush1.msra.mxu0 0.0
      %2184 = vmatprep.subr.mxu0 0.0
      %2185 = vmatpush1.msra.mxu0 0.0
      %2186 = vmatprep.subr.mxu0 0.0
      %2187 = vmatpush1.msra.mxu0 0.0
      %2188 = vmatprep.subr.mxu0 0.0
      %2189 = vmatpush1.msra.mxu0 0.0
      %2190 = vmatprep.subr.mxu0 0.0
      %2191 = vmatpush1.msra.mxu0 0.0
      %2192 = vmatprep.subr.mxu0 0.0
      %2193 = vmatpush1.msra.mxu0 0.0
      %2194 = vmatprep.subr.mxu0 0.0
      %2195 = vmatpush1.msra.mxu0 0.0
      %2196 = vmatprep.subr.mxu0 0.0
      %2197 = vmatpush1.msra.mxu0 0.0
      %2198 = vmatprep.subr.mxu0 0.0
      %2199 = vmatpush1.msra.mxu0 0.0
      %2200 = vmatprep.subr.mxu0 0.0
      %2201 = vmatpush1.msra.mxu0 0.0
      %2202 = vmatprep.subr.mxu0 0.0
      %2203 = vmatpush1.msra.mxu0 0.0
      %2204 = vmatprep.subr.mxu0 0.0
      %2205 = vmatpush1.msra.mxu0 0.0
      %2206 = vmatprep.subr.mxu0 0.0
      %2207 = vmatpush1.msra.mxu0 0.0
      %2208 = vmatprep.subr.mxu0 0.0
      %2209 = vmatpush1.msra.mxu0 0.0
      %2210 = vmatprep.subr.mxu0 0.0
      %2211 = vmatpush1.msra.mxu0 0.0
      %2212 = vmatprep.subr.mxu0 0.0
      %2213 = vmatpush1.msra.mxu0 0.0
      %2214 = vmatprep.subr.mxu0 0.0
      %2215 = vmatpush1.msra.mxu0 0.0
      %2216 = vmatprep.subr.mxu0 0.0
      %2217 = vmatpush1.msra.mxu0 0.0
      %2218 = vmatprep.subr.mxu0 0.0
      %2219 = vmatpush1.msra.mxu0 0.0
      %2220 = vmatprep.subr.mxu0 0.0
      %2221 = vmatpush1.msra.mxu0 0.0
      %2222 = vmatprep.subr.mxu0 0.0
      %2223 = vmatpush1.msra.mxu0 0.0
      %2224 = vmatprep.mubr.f32.mxu0 0.0
      %2225 = vmatmul.mubr.f32.gmra.mrb[0].mxu0 %v2149
      %v2226 = vpop.f32.mrb[0].mxu0
      %v2227 = vadd.f32 0.0, %v2226
      %v2228 = vpop.f32.mrb[0].mxu0
      %v2229 = vadd.f32 0.0, %v2228
      %2230 = vmatprep.mubr.f32.mxu0 0.0
      %2231 = vmatmul.mubr.f32.gmra.mrb[0].mxu0 %v2152
      %v2232 = vpop.f32.mrb[0].mxu0
      %v2233 = vadd.f32 0.0, %v2232
      %v2234 = vpop.f32.mrb[0].mxu0
      %v2235 = vadd.f32 0.0, %v2234
      %2236 = vmatprep.mubr.f32.mxu0 0.0
      %2237 = vmatmul.mubr.f32.gmra.mrb[0].mxu0 %v2155
      %v2238 = vpop.f32.mrb[0].mxu0
      %v2239 = vadd.f32 0.0, %v2238
      %v2240 = vpop.f32.mrb[0].mxu0
      %v2241 = vadd.f32 0.0, %v2240
      %2242 = vmatprep.mubr.f32.mxu0 0.0
      %2243 = vmatmul.mubr.f32.gmra.mrb[0].mxu0 %v2158
      %v2244 = vpop.f32.mrb[0].mxu0
      %v2245 = vadd.f32 0.0, %v2244
      %v2246 = vpop.f32.mrb[0].mxu0
      %v2247 = vadd.f32 0.0, %v2246
      %2248 = vdwg.mxu0
      %2249 = vmatprep.subr.mxu0 %v2143
      %2250 = vmatpush1.msra.mxu0 %v2142
      %2251 = vmatprep.subr.mxu0 0.0
      %2252 = vmatpush1.msra.mxu0 0.0
      %2253 = vmatprep.subr.mxu0 0.0
      %2254 = vmatpush1.msra.mxu0 0.0
      %2255 = vmatprep.subr.mxu0 0.0
      %2256 = vmatpush1.msra.mxu0 0.0
      %2257 = vmatprep.subr.mxu0 0.0
      %2258 = vmatpush1.msra.mxu0 0.0
      %2259 = vmatprep.subr.mxu0 0.0
      %2260 = vmatpush1.msra.mxu0 0.0
      %2261 = vmatprep.subr.mxu0 0.0
      %2262 = vmatpush1.msra.mxu0 0.0
      %2263 = vmatprep.subr.mxu0 0.0
      %2264 = vmatpush1.msra.mxu0 0.0
      %2265 = vmatprep.subr.mxu0 0.0
      %2266 = vmatpush1.msra.mxu0 0.0
      %2267 = vmatprep.subr.mxu0 0.0
      %2268 = vmatpush1.msra.mxu0 0.0
      %2269 = vmatprep.subr.mxu0 0.0
      %2270 = vmatpush1.msra.mxu0 0.0
      %2271 = vmatprep.subr.mxu0 0.0
      %2272 = vmatpush1.msra.mxu0 0.0
      %2273 = vmatprep.subr.mxu0 0.0
      %2274 = vmatpush1.msra.mxu0 0.0
      %2275 = vmatprep.subr.mxu0 0.0
      %2276 = vmatpush1.msra.mxu0 0.0
      %2277 = vmatprep.subr.mxu0 0.0
      %2278 = vmatpush1.msra.mxu0 0.0
      %2279 = vmatprep.subr.mxu0 0.0
      %2280 = vmatpush1.msra.mxu0 0.0
      %2281 = vmatprep.subr.mxu0 0.0
      %2282 = vmatpush1.msra.mxu0 0.0
      %2283 = vmatprep.subr.mxu0 0.0
      %2284 = vmatpush1.msra.mxu0 0.0
      %2285 = vmatprep.subr.mxu0 0.0
      %2286 = vmatpush1.msra.mxu0 0.0
      %2287 = vmatprep.subr.mxu0 0.0
      %2288 = vmatpush1.msra.mxu0 0.0
      %2289 = vmatprep.subr.mxu0 0.0
      %2290 = vmatpush1.msra.mxu0 0.0
      %2291 = vmatprep.subr.mxu0 0.0
      %2292 = vmatpush1.msra.mxu0 0.0
      %2293 = vmatprep.subr.mxu0 0.0
      %2294 = vmatpush1.msra.mxu0 0.0
      %2295 = vmatprep.subr.mxu0 0.0
      %2296 = vmatpush1.msra.mxu0 0.0
      %2297 = vmatprep.subr.mxu0 0.0
      %2298 = vmatpush1.msra.mxu0 0.0
      %2299 = vmatprep.subr.mxu0 0.0
      %2300 = vmatpush1.msra.mxu0 0.0
      %2301 = vmatprep.subr.mxu0 0.0
      %2302 = vmatpush1.msra.mxu0 0.0
      %2303 = vmatprep.subr.mxu0 0.0
      %2304 = vmatpush1.msra.mxu0 0.0
      %2305 = vmatprep.subr.mxu0 0.0
      %2306 = vmatpush1.msra.mxu0 0.0
      %2307 = vmatprep.subr.mxu0 0.0
      %2308 = vmatpush1.msra.mxu0 0.0
      %2309 = vmatprep.subr.mxu0 0.0
      %2310 = vmatpush1.msra.mxu0 0.0
      %2311 = vmatprep.subr.mxu0 0.0
      %2312 = vmatpush1.msra.mxu0 0.0
      %2313 = vmatprep.mubr.f32.mxu0 0.0
      %2314 = vmatmul.mubr.f32.gmra.mrb[0].mxu0 %v2149
      %v2315 = vpop.f32.mrb[0].mxu0
      %v2316 = vadd.f32 0.0, %v2315
      %v2317 = vpop.f32.mrb[0].mxu0
      %v2318 = vadd.f32 0.0, %v2317
      %2319 = vmatprep.mubr.f32.mxu0 0.0
      %2320 = vmatmul.mubr.f32.gmra.mrb[0].mxu0 %v2152
      %v2321 = vpop.f32.mrb[0].mxu0
      %v2322 = vadd.f32 0.0, %v2321
      %v2323 = vpop.f32.mrb[0].mxu0
      %v2324 = vadd.f32 0.0, %v2323
      %2325 = vmatprep.mubr.f32.mxu0 0.0
      %2326 = vmatmul.mubr.f32.gmra.mrb[0].mxu0 %v2155
      %v2327 = vpop.f32.mrb[0].mxu0
      %v2328 = vadd.f32 0.0, %v2327
      %v2329 = vpop.f32.mrb[0].mxu0
      %v2330 = vadd.f32 0.0, %v2329
      %2331 = vmatprep.mubr.f32.mxu0 0.0
      %2332 = vmatmul.mubr.f32.gmra.mrb[0].mxu0 %v2158
      %v2333 = vpop.f32.mrb[0].mxu0
      %v2334 = vadd.f32 0.0, %v2333
      %v2335 = vpop.f32.mrb[0].mxu0
      %v2336 = vadd.f32 0.0, %v2335
      %2337 = vdwg.mxu0
      %v2338 = vadd.f32 %v2108, %v2227
      %v2339 = vadd.f32 %v2109, %v2229
      %v2340 = vadd.f32 %v2110, %v2316
      %v2341 = vadd.f32 %v2111, %v2318
      %v2342 = vadd.f32 %v2112, %v2233
      %v2343 = vadd.f32 %v2113, %v2235
      %v2344 = vadd.f32 %v2114, %v2322
      %v2345 = vadd.f32 %v2115, %v2324
      %v2346 = vadd.f32 %v2116, %v2239
      %v2347 = vadd.f32 %v2117, %v2241
      %v2348 = vadd.f32 %v2118, %v2328
      %v2349 = vadd.f32 %v2119, %v2330
      %v2350 = vadd.f32 %v2120, %v2245
      %v2351 = vadd.f32 %v2121, %v2247
      %v2352 = vadd.f32 %v2122, %v2334
      %v2353 = vadd.f32 %v2123, %v2336
      %s2354 = scalar_lea.vmem %s1, 288
      %v2355 = vld [vmem:[%s2354] sm:$0xff]
      %v2356 = vld [vmem:[%s2354 + $0x8] sm:$0xff]
      %v2357 = vld [vmem:[%s2354 + $0x10] sm:$0xff]
      %v2358 = vld [vmem:[%s2354 + $0x18] sm:$0xff]
      %2359 = vrot.lane.b32.xlu0 %v310, 18
      %v2360 = vpop.permute.xlu0 %2359
      %2361 = vrot.lane.b32.xlu0 %v311, 18
      %v2362 = vpop.permute.xlu0 %2361
      %2363 = vrot.lane.b32.xlu0 %v312, 18
      %v2364 = vpop.permute.xlu0 %2363
      %2365 = vrot.lane.b32.xlu0 %v313, 18
      %v2366 = vpop.permute.xlu0 %2365
      %2367 = vrot.lane.b32.xlu0 %v314, 18
      %v2368 = vpop.permute.xlu0 %2367
      %vm2369 = vcmask 146432
      %v2370 = vsel %vm2369, %v2360, %v2362
      %v2371 = vsel %vm2369, %v2362, %v2364
      %v2372 = vsel %vm2369, %v2364, %v2366
      %v2373 = vsel %vm2369, %v2366, %v2368
      %v2379 = vsel %vm344, %v2355, 0
      %v2382 = vsel %vm344, %v2356, 0
      %v2385 = vsel %vm344, %v2357, 0
      %v2388 = vsel %vm344, %v2358, 0
      %2390 = vmatprep.subr.mxu0 %v2371
      %2391 = vmatpush1.msra.mxu0 %v2370
      %2392 = vmatprep.subr.mxu0 0.0
      %2393 = vmatpush1.msra.mxu0 0.0
      %2394 = vmatprep.subr.mxu0 0.0
      %2395 = vmatpush1.msra.mxu0 0.0
      %2396 = vmatprep.subr.mxu0 0.0
      %2397 = vmatpush1.msra.mxu0 0.0
      %2398 = vmatprep.subr.mxu0 0.0
      %2399 = vmatpush1.msra.mxu0 0.0
      %2400 = vmatprep.subr.mxu0 0.0
      %2401 = vmatpush1.msra.mxu0 0.0
      %2402 = vmatprep.subr.mxu0 0.0
      %2403 = vmatpush1.msra.mxu0 0.0
      %2404 = vmatprep.subr.mxu0 0.0
      %2405 = vmatpush1.msra.mxu0 0.0
      %2406 = vmatprep.subr.mxu0 0.0
      %2407 = vmatpush1.msra.mxu0 0.0
      %2408 = vmatprep.subr.mxu0 0.0
      %2409 = vmatpush1.msra.mxu0 0.0
      %2410 = vmatprep.subr.mxu0 0.0
      %2411 = vmatpush1.msra.mxu0 0.0
      %2412 = vmatprep.subr.mxu0 0.0
      %2413 = vmatpush1.msra.mxu0 0.0
      %2414 = vmatprep.subr.mxu0 0.0
      %2415 = vmatpush1.msra.mxu0 0.0
      %2416 = vmatprep.subr.mxu0 0.0
      %2417 = vmatpush1.msra.mxu0 0.0
      %2418 = vmatprep.subr.mxu0 0.0
      %2419 = vmatpush1.msra.mxu0 0.0
      %2420 = vmatprep.subr.mxu0 0.0
      %2421 = vmatpush1.msra.mxu0 0.0
      %2422 = vmatprep.subr.mxu0 0.0
      %2423 = vmatpush1.msra.mxu0 0.0
      %2424 = vmatprep.subr.mxu0 0.0
      %2425 = vmatpush1.msra.mxu0 0.0
      %2426 = vmatprep.subr.mxu0 0.0
      %2427 = vmatpush1.msra.mxu0 0.0
      %2428 = vmatprep.subr.mxu0 0.0
      %2429 = vmatpush1.msra.mxu0 0.0
      %2430 = vmatprep.subr.mxu0 0.0
      %2431 = vmatpush1.msra.mxu0 0.0
      %2432 = vmatprep.subr.mxu0 0.0
      %2433 = vmatpush1.msra.mxu0 0.0
      %2434 = vmatprep.subr.mxu0 0.0
      %2435 = vmatpush1.msra.mxu0 0.0
      %2436 = vmatprep.subr.mxu0 0.0
      %2437 = vmatpush1.msra.mxu0 0.0
      %2438 = vmatprep.subr.mxu0 0.0
      %2439 = vmatpush1.msra.mxu0 0.0
      %2440 = vmatprep.subr.mxu0 0.0
      %2441 = vmatpush1.msra.mxu0 0.0
      %2442 = vmatprep.subr.mxu0 0.0
      %2443 = vmatpush1.msra.mxu0 0.0
      %2444 = vmatprep.subr.mxu0 0.0
      %2445 = vmatpush1.msra.mxu0 0.0
      %2446 = vmatprep.subr.mxu0 0.0
      %2447 = vmatpush1.msra.mxu0 0.0
      %2448 = vmatprep.subr.mxu0 0.0
      %2449 = vmatpush1.msra.mxu0 0.0
      %2450 = vmatprep.subr.mxu0 0.0
      %2451 = vmatpush1.msra.mxu0 0.0
      %2452 = vmatprep.subr.mxu0 0.0
      %2453 = vmatpush1.msra.mxu0 0.0
      %2454 = vmatprep.mubr.f32.mxu0 0.0
      %2455 = vmatmul.mubr.f32.gmra.mrb[0].mxu0 %v2379
      %v2456 = vpop.f32.mrb[0].mxu0
      %v2457 = vadd.f32 0.0, %v2456
      %v2458 = vpop.f32.mrb[0].mxu0
      %v2459 = vadd.f32 0.0, %v2458
      %2460 = vmatprep.mubr.f32.mxu0 0.0
      %2461 = vmatmul.mubr.f32.gmra.mrb[0].mxu0 %v2382
      %v2462 = vpop.f32.mrb[0].mxu0
      %v2463 = vadd.f32 0.0, %v2462
      %v2464 = vpop.f32.mrb[0].mxu0
      %v2465 = vadd.f32 0.0, %v2464
      %2466 = vmatprep.mubr.f32.mxu0 0.0
      %2467 = vmatmul.mubr.f32.gmra.mrb[0].mxu0 %v2385
      %v2468 = vpop.f32.mrb[0].mxu0
      %v2469 = vadd.f32 0.0, %v2468
      %v2470 = vpop.f32.mrb[0].mxu0
      %v2471 = vadd.f32 0.0, %v2470
      %2472 = vmatprep.mubr.f32.mxu0 0.0
      %2473 = vmatmul.mubr.f32.gmra.mrb[0].mxu0 %v2388
      %v2474 = vpop.f32.mrb[0].mxu0
      %v2475 = vadd.f32 0.0, %v2474
      %v2476 = vpop.f32.mrb[0].mxu0
      %v2477 = vadd.f32 0.0, %v2476
      %2478 = vdwg.mxu0
      %2479 = vmatprep.subr.mxu0 %v2373
      %2480 = vmatpush1.msra.mxu0 %v2372
      %2481 = vmatprep.subr.mxu0 0.0
      %2482 = vmatpush1.msra.mxu0 0.0
      %2483 = vmatprep.subr.mxu0 0.0
      %2484 = vmatpush1.msra.mxu0 0.0
      %2485 = vmatprep.subr.mxu0 0.0
      %2486 = vmatpush1.msra.mxu0 0.0
      %2487 = vmatprep.subr.mxu0 0.0
      %2488 = vmatpush1.msra.mxu0 0.0
      %2489 = vmatprep.subr.mxu0 0.0
      %2490 = vmatpush1.msra.mxu0 0.0
      %2491 = vmatprep.subr.mxu0 0.0
      %2492 = vmatpush1.msra.mxu0 0.0
      %2493 = vmatprep.subr.mxu0 0.0
      %2494 = vmatpush1.msra.mxu0 0.0
      %2495 = vmatprep.subr.mxu0 0.0
      %2496 = vmatpush1.msra.mxu0 0.0
      %2497 = vmatprep.subr.mxu0 0.0
      %2498 = vmatpush1.msra.mxu0 0.0
      %2499 = vmatprep.subr.mxu0 0.0
      %2500 = vmatpush1.msra.mxu0 0.0
      %2501 = vmatprep.subr.mxu0 0.0
      %2502 = vmatpush1.msra.mxu0 0.0
      %2503 = vmatprep.subr.mxu0 0.0
      %2504 = vmatpush1.msra.mxu0 0.0
      %2505 = vmatprep.subr.mxu0 0.0
      %2506 = vmatpush1.msra.mxu0 0.0
      %2507 = vmatprep.subr.mxu0 0.0
      %2508 = vmatpush1.msra.mxu0 0.0
      %2509 = vmatprep.subr.mxu0 0.0
      %2510 = vmatpush1.msra.mxu0 0.0
      %2511 = vmatprep.subr.mxu0 0.0
      %2512 = vmatpush1.msra.mxu0 0.0
      %2513 = vmatprep.subr.mxu0 0.0
      %2514 = vmatpush1.msra.mxu0 0.0
      %2515 = vmatprep.subr.mxu0 0.0
      %2516 = vmatpush1.msra.mxu0 0.0
      %2517 = vmatprep.subr.mxu0 0.0
      %2518 = vmatpush1.msra.mxu0 0.0
      %2519 = vmatprep.subr.mxu0 0.0
      %2520 = vmatpush1.msra.mxu0 0.0
      %2521 = vmatprep.subr.mxu0 0.0
      %2522 = vmatpush1.msra.mxu0 0.0
      %2523 = vmatprep.subr.mxu0 0.0
      %2524 = vmatpush1.msra.mxu0 0.0
      %2525 = vmatprep.subr.mxu0 0.0
      %2526 = vmatpush1.msra.mxu0 0.0
      %2527 = vmatprep.subr.mxu0 0.0
      %2528 = vmatpush1.msra.mxu0 0.0
      %2529 = vmatprep.subr.mxu0 0.0
      %2530 = vmatpush1.msra.mxu0 0.0
      %2531 = vmatprep.subr.mxu0 0.0
      %2532 = vmatpush1.msra.mxu0 0.0
      %2533 = vmatprep.subr.mxu0 0.0
      %2534 = vmatpush1.msra.mxu0 0.0
      %2535 = vmatprep.subr.mxu0 0.0
      %2536 = vmatpush1.msra.mxu0 0.0
      %2537 = vmatprep.subr.mxu0 0.0
      %2538 = vmatpush1.msra.mxu0 0.0
      %2539 = vmatprep.subr.mxu0 0.0
      %2540 = vmatpush1.msra.mxu0 0.0
      %2541 = vmatprep.subr.mxu0 0.0
      %2542 = vmatpush1.msra.mxu0 0.0
      %2543 = vmatprep.mubr.f32.mxu0 0.0
      %2544 = vmatmul.mubr.f32.gmra.mrb[0].mxu0 %v2379
      %v2545 = vpop.f32.mrb[0].mxu0
      %v2546 = vadd.f32 0.0, %v2545
      %v2547 = vpop.f32.mrb[0].mxu0
      %v2548 = vadd.f32 0.0, %v2547
      %2549 = vmatprep.mubr.f32.mxu0 0.0
      %2550 = vmatmul.mubr.f32.gmra.mrb[0].mxu0 %v2382
      %v2551 = vpop.f32.mrb[0].mxu0
      %v2552 = vadd.f32 0.0, %v2551
      %v2553 = vpop.f32.mrb[0].mxu0
      %v2554 = vadd.f32 0.0, %v2553
      %2555 = vmatprep.mubr.f32.mxu0 0.0
      %2556 = vmatmul.mubr.f32.gmra.mrb[0].mxu0 %v2385
      %v2557 = vpop.f32.mrb[0].mxu0
      %v2558 = vadd.f32 0.0, %v2557
      %v2559 = vpop.f32.mrb[0].mxu0
      %v2560 = vadd.f32 0.0, %v2559
      %2561 = vmatprep.mubr.f32.mxu0 0.0
      %2562 = vmatmul.mubr.f32.gmra.mrb[0].mxu0 %v2388
      %v2563 = vpop.f32.mrb[0].mxu0
      %v2564 = vadd.f32 0.0, %v2563
      %v2565 = vpop.f32.mrb[0].mxu0
      %v2566 = vadd.f32 0.0, %v2565
      %2567 = vdwg.mxu0
      %v2568 = vadd.f32 %v2338, %v2457
      %v2569 = vadd.f32 %v2339, %v2459
      %v2570 = vadd.f32 %v2340, %v2546
      %v2571 = vadd.f32 %v2341, %v2548
      %v2572 = vadd.f32 %v2342, %v2463
      %v2573 = vadd.f32 %v2343, %v2465
      %v2574 = vadd.f32 %v2344, %v2552
      %v2575 = vadd.f32 %v2345, %v2554
      %v2576 = vadd.f32 %v2346, %v2469
      %v2577 = vadd.f32 %v2347, %v2471
      %v2578 = vadd.f32 %v2348, %v2558
      %v2579 = vadd.f32 %v2349, %v2560
      %v2580 = vadd.f32 %v2350, %v2475
      %v2581 = vadd.f32 %v2351, %v2477
      %v2582 = vadd.f32 %v2352, %v2564
      %v2583 = vadd.f32 %v2353, %v2566
      %s2584 = scalar_lea.vmem %s1, 320
      %v2585 = vld [vmem:[%s2584] sm:$0xff]
      %v2586 = vld [vmem:[%s2584 + $0x8] sm:$0xff]
      %v2587 = vld [vmem:[%s2584 + $0x10] sm:$0xff]
      %v2588 = vld [vmem:[%s2584 + $0x18] sm:$0xff]
      %2589 = vrot.lane.b32.xlu0 %v310, 2
      %v2590 = vpop.permute.xlu0 %2589
      %2591 = vrot.lane.b32.xlu0 %v311, 2
      %v2592 = vpop.permute.xlu0 %2591
      %2593 = vrot.lane.b32.xlu0 %v312, 2
      %v2594 = vpop.permute.xlu0 %2593
      %2595 = vrot.lane.b32.xlu0 %v313, 2
      %v2596 = vpop.permute.xlu0 %2595
      %2597 = vrot.lane.b32.xlu0 %v314, 2
      %v2598 = vpop.permute.xlu0 %2597
      %vm2599 = vcmask 15360
      %v2600 = vsel %vm2599, %v2590, %v2592
      %v2601 = vsel %vm2599, %v2592, %v2594
      %v2602 = vsel %vm2599, %v2594, %v2596
      %v2603 = vsel %vm2599, %v2596, %v2598
      %v2609 = vsel %vm344, %v2585, 0
      %v2612 = vsel %vm344, %v2586, 0
      %v2615 = vsel %vm344, %v2587, 0
      %v2618 = vsel %vm344, %v2588, 0
      %2620 = vmatprep.subr.mxu0 %v2601
      %2621 = vmatpush1.msra.mxu0 %v2600
      %2622 = vmatprep.subr.mxu0 0.0
      %2623 = vmatpush1.msra.mxu0 0.0
      %2624 = vmatprep.subr.mxu0 0.0
      %2625 = vmatpush1.msra.mxu0 0.0
      %2626 = vmatprep.subr.mxu0 0.0
      %2627 = vmatpush1.msra.mxu0 0.0
      %2628 = vmatprep.subr.mxu0 0.0
      %2629 = vmatpush1.msra.mxu0 0.0
      %2630 = vmatprep.subr.mxu0 0.0
      %2631 = vmatpush1.msra.mxu0 0.0
      %2632 = vmatprep.subr.mxu0 0.0
      %2633 = vmatpush1.msra.mxu0 0.0
      %2634 = vmatprep.subr.mxu0 0.0
      %2635 = vmatpush1.msra.mxu0 0.0
      %2636 = vmatprep.subr.mxu0 0.0
      %2637 = vmatpush1.msra.mxu0 0.0
      %2638 = vmatprep.subr.mxu0 0.0
      %2639 = vmatpush1.msra.mxu0 0.0
      %2640 = vmatprep.subr.mxu0 0.0
      %2641 = vmatpush1.msra.mxu0 0.0
      %2642 = vmatprep.subr.mxu0 0.0
      %2643 = vmatpush1.msra.mxu0 0.0
      %2644 = vmatprep.subr.mxu0 0.0
      %2645 = vmatpush1.msra.mxu0 0.0
      %2646 = vmatprep.subr.mxu0 0.0
      %2647 = vmatpush1.msra.mxu0 0.0
      %2648 = vmatprep.subr.mxu0 0.0
      %2649 = vmatpush1.msra.mxu0 0.0
      %2650 = vmatprep.subr.mxu0 0.0
      %2651 = vmatpush1.msra.mxu0 0.0
      %2652 = vmatprep.subr.mxu0 0.0
      %2653 = vmatpush1.msra.mxu0 0.0
      %2654 = vmatprep.subr.mxu0 0.0
      %2655 = vmatpush1.msra.mxu0 0.0
      %2656 = vmatprep.subr.mxu0 0.0
      %2657 = vmatpush1.msra.mxu0 0.0
      %2658 = vmatprep.subr.mxu0 0.0
      %2659 = vmatpush1.msra.mxu0 0.0
      %2660 = vmatprep.subr.mxu0 0.0
      %2661 = vmatpush1.msra.mxu0 0.0
      %2662 = vmatprep.subr.mxu0 0.0
      %2663 = vmatpush1.msra.mxu0 0.0
      %2664 = vmatprep.subr.mxu0 0.0
      %2665 = vmatpush1.msra.mxu0 0.0
      %2666 = vmatprep.subr.mxu0 0.0
      %2667 = vmatpush1.msra.mxu0 0.0
      %2668 = vmatprep.subr.mxu0 0.0
      %2669 = vmatpush1.msra.mxu0 0.0
      %2670 = vmatprep.subr.mxu0 0.0
      %2671 = vmatpush1.msra.mxu0 0.0
      %2672 = vmatprep.subr.mxu0 0.0
      %2673 = vmatpush1.msra.mxu0 0.0
      %2674 = vmatprep.subr.mxu0 0.0
      %2675 = vmatpush1.msra.mxu0 0.0
      %2676 = vmatprep.subr.mxu0 0.0
      %2677 = vmatpush1.msra.mxu0 0.0
      %2678 = vmatprep.subr.mxu0 0.0
      %2679 = vmatpush1.msra.mxu0 0.0
      %2680 = vmatprep.subr.mxu0 0.0
      %2681 = vmatpush1.msra.mxu0 0.0
      %2682 = vmatprep.subr.mxu0 0.0
      %2683 = vmatpush1.msra.mxu0 0.0
      %2684 = vmatprep.mubr.f32.mxu0 0.0
      %2685 = vmatmul.mubr.f32.gmra.mrb[0].mxu0 %v2609
      %v2686 = vpop.f32.mrb[0].mxu0
      %v2687 = vadd.f32 0.0, %v2686
      %v2688 = vpop.f32.mrb[0].mxu0
      %v2689 = vadd.f32 0.0, %v2688
      %2690 = vmatprep.mubr.f32.mxu0 0.0
      %2691 = vmatmul.mubr.f32.gmra.mrb[0].mxu0 %v2612
      %v2692 = vpop.f32.mrb[0].mxu0
      %v2693 = vadd.f32 0.0, %v2692
      %v2694 = vpop.f32.mrb[0].mxu0
      %v2695 = vadd.f32 0.0, %v2694
      %2696 = vmatprep.mubr.f32.mxu0 0.0
      %2697 = vmatmul.mubr.f32.gmra.mrb[0].mxu0 %v2615
      %v2698 = vpop.f32.mrb[0].mxu0
      %v2699 = vadd.f32 0.0, %v2698
      %v2700 = vpop.f32.mrb[0].mxu0
      %v2701 = vadd.f32 0.0, %v2700
      %2702 = vmatprep.mubr.f32.mxu0 0.0
      %2703 = vmatmul.mubr.f32.gmra.mrb[0].mxu0 %v2618
      %v2704 = vpop.f32.mrb[0].mxu0
      %v2705 = vadd.f32 0.0, %v2704
      %v2706 = vpop.f32.mrb[0].mxu0
      %v2707 = vadd.f32 0.0, %v2706
      %2708 = vdwg.mxu0
      %2709 = vmatprep.subr.mxu0 %v2603
      %2710 = vmatpush1.msra.mxu0 %v2602
      %2711 = vmatprep.subr.mxu0 0.0
      %2712 = vmatpush1.msra.mxu0 0.0
      %2713 = vmatprep.subr.mxu0 0.0
      %2714 = vmatpush1.msra.mxu0 0.0
      %2715 = vmatprep.subr.mxu0 0.0
      %2716 = vmatpush1.msra.mxu0 0.0
      %2717 = vmatprep.subr.mxu0 0.0
      %2718 = vmatpush1.msra.mxu0 0.0
      %2719 = vmatprep.subr.mxu0 0.0
      %2720 = vmatpush1.msra.mxu0 0.0
      %2721 = vmatprep.subr.mxu0 0.0
      %2722 = vmatpush1.msra.mxu0 0.0
      %2723 = vmatprep.subr.mxu0 0.0
      %2724 = vmatpush1.msra.mxu0 0.0
      %2725 = vmatprep.subr.mxu0 0.0
      %2726 = vmatpush1.msra.mxu0 0.0
      %2727 = vmatprep.subr.mxu0 0.0
      %2728 = vmatpush1.msra.mxu0 0.0
      %2729 = vmatprep.subr.mxu0 0.0
      %2730 = vmatpush1.msra.mxu0 0.0
      %2731 = vmatprep.subr.mxu0 0.0
      %2732 = vmatpush1.msra.mxu0 0.0
      %2733 = vmatprep.subr.mxu0 0.0
      %2734 = vmatpush1.msra.mxu0 0.0
      %2735 = vmatprep.subr.mxu0 0.0
      %2736 = vmatpush1.msra.mxu0 0.0
      %2737 = vmatprep.subr.mxu0 0.0
      %2738 = vmatpush1.msra.mxu0 0.0
      %2739 = vmatprep.subr.mxu0 0.0
      %2740 = vmatpush1.msra.mxu0 0.0
      %2741 = vmatprep.subr.mxu0 0.0
      %2742 = vmatpush1.msra.mxu0 0.0
      %2743 = vmatprep.subr.mxu0 0.0
      %2744 = vmatpush1.msra.mxu0 0.0
      %2745 = vmatprep.subr.mxu0 0.0
      %2746 = vmatpush1.msra.mxu0 0.0
      %2747 = vmatprep.subr.mxu0 0.0
      %2748 = vmatpush1.msra.mxu0 0.0
      %2749 = vmatprep.subr.mxu0 0.0
      %2750 = vmatpush1.msra.mxu0 0.0
      %2751 = vmatprep.subr.mxu0 0.0
      %2752 = vmatpush1.msra.mxu0 0.0
      %2753 = vmatprep.subr.mxu0 0.0
      %2754 = vmatpush1.msra.mxu0 0.0
      %2755 = vmatprep.subr.mxu0 0.0
      %2756 = vmatpush1.msra.mxu0 0.0
      %2757 = vmatprep.subr.mxu0 0.0
      %2758 = vmatpush1.msra.mxu0 0.0
      %2759 = vmatprep.subr.mxu0 0.0
      %2760 = vmatpush1.msra.mxu0 0.0
      %2761 = vmatprep.subr.mxu0 0.0
      %2762 = vmatpush1.msra.mxu0 0.0
      %2763 = vmatprep.subr.mxu0 0.0
      %2764 = vmatpush1.msra.mxu0 0.0
      %2765 = vmatprep.subr.mxu0 0.0
      %2766 = vmatpush1.msra.mxu0 0.0
      %2767 = vmatprep.subr.mxu0 0.0
      %2768 = vmatpush1.msra.mxu0 0.0
      %2769 = vmatprep.subr.mxu0 0.0
      %2770 = vmatpush1.msra.mxu0 0.0
      %2771 = vmatprep.subr.mxu0 0.0
      %2772 = vmatpush1.msra.mxu0 0.0
      %2773 = vmatprep.mubr.f32.mxu0 0.0
      %2774 = vmatmul.mubr.f32.gmra.mrb[0].mxu0 %v2609
      %v2775 = vpop.f32.mrb[0].mxu0
      %v2776 = vadd.f32 0.0, %v2775
      %v2777 = vpop.f32.mrb[0].mxu0
      %v2778 = vadd.f32 0.0, %v2777
      %2779 = vmatprep.mubr.f32.mxu0 0.0
      %2780 = vmatmul.mubr.f32.gmra.mrb[0].mxu0 %v2612
      %v2781 = vpop.f32.mrb[0].mxu0
      %v2782 = vadd.f32 0.0, %v2781
      %v2783 = vpop.f32.mrb[0].mxu0
      %v2784 = vadd.f32 0.0, %v2783
      %2785 = vmatprep.mubr.f32.mxu0 0.0
      %2786 = vmatmul.mubr.f32.gmra.mrb[0].mxu0 %v2615
      %v2787 = vpop.f32.mrb[0].mxu0
      %v2788 = vadd.f32 0.0, %v2787
      %v2789 = vpop.f32.mrb[0].mxu0
      %v2790 = vadd.f32 0.0, %v2789
      %2791 = vmatprep.mubr.f32.mxu0 0.0
      %2792 = vmatmul.mubr.f32.gmra.mrb[0].mxu0 %v2618
      %v2793 = vpop.f32.mrb[0].mxu0
      %v2794 = vadd.f32 0.0, %v2793
      %v2795 = vpop.f32.mrb[0].mxu0
      %v2796 = vadd.f32 0.0, %v2795
      %2797 = vdwg.mxu0
      %v2798 = vadd.f32 %v2568, %v2687
      %v2799 = vadd.f32 %v2569, %v2689
      %v2800 = vadd.f32 %v2570, %v2776
      %v2801 = vadd.f32 %v2571, %v2778
      %v2802 = vadd.f32 %v2572, %v2693
      %v2803 = vadd.f32 %v2573, %v2695
      %v2804 = vadd.f32 %v2574, %v2782
      %v2805 = vadd.f32 %v2575, %v2784
      %v2806 = vadd.f32 %v2576, %v2699
      %v2807 = vadd.f32 %v2577, %v2701
      %v2808 = vadd.f32 %v2578, %v2788
      %v2809 = vadd.f32 %v2579, %v2790
      %v2810 = vadd.f32 %v2580, %v2705
      %v2811 = vadd.f32 %v2581, %v2707
      %v2812 = vadd.f32 %v2582, %v2794
      %v2813 = vadd.f32 %v2583, %v2796
      %s2814 = scalar_lea.vmem %s1, 352
      %v2815 = vld [vmem:[%s2814] sm:$0xff]
      %v2816 = vld [vmem:[%s2814 + $0x8] sm:$0xff]
      %v2817 = vld [vmem:[%s2814 + $0x10] sm:$0xff]
      %v2818 = vld [vmem:[%s2814 + $0x18] sm:$0xff]
      %2819 = vrot.lane.b32.xlu0 %v310, 1
      %v2820 = vpop.permute.xlu0 %2819
      %2821 = vrot.lane.b32.xlu0 %v311, 1
      %v2822 = vpop.permute.xlu0 %2821
      %2823 = vrot.lane.b32.xlu0 %v312, 1
      %v2824 = vpop.permute.xlu0 %2823
      %2825 = vrot.lane.b32.xlu0 %v313, 1
      %v2826 = vpop.permute.xlu0 %2825
      %2827 = vrot.lane.b32.xlu0 %v314, 1
      %v2828 = vpop.permute.xlu0 %2827
      %vm2829 = vcmask 7168
      %v2830 = vsel %vm2829, %v2820, %v2822
      %v2831 = vsel %vm2829, %v2822, %v2824
      %v2832 = vsel %vm2829, %v2824, %v2826
      %v2833 = vsel %vm2829, %v2826, %v2828
      %v2839 = vsel %vm344, %v2815, 0
      %v2842 = vsel %vm344, %v2816, 0
      %v2845 = vsel %vm344, %v2817, 0
      %v2848 = vsel %vm344, %v2818, 0
      %2850 = vmatprep.subr.mxu0 %v2831
      %2851 = vmatpush1.msra.mxu0 %v2830
      %2852 = vmatprep.subr.mxu0 0.0
      %2853 = vmatpush1.msra.mxu0 0.0
      %2854 = vmatprep.subr.mxu0 0.0
      %2855 = vmatpush1.msra.mxu0 0.0
      %2856 = vmatprep.subr.mxu0 0.0
      %2857 = vmatpush1.msra.mxu0 0.0
      %2858 = vmatprep.subr.mxu0 0.0
      %2859 = vmatpush1.msra.mxu0 0.0
      %2860 = vmatprep.subr.mxu0 0.0
      %2861 = vmatpush1.msra.mxu0 0.0
      %2862 = vmatprep.subr.mxu0 0.0
      %2863 = vmatpush1.msra.mxu0 0.0
      %2864 = vmatprep.subr.mxu0 0.0
      %2865 = vmatpush1.msra.mxu0 0.0
      %2866 = vmatprep.subr.mxu0 0.0
      %2867 = vmatpush1.msra.mxu0 0.0
      %2868 = vmatprep.subr.mxu0 0.0
      %2869 = vmatpush1.msra.mxu0 0.0
      %2870 = vmatprep.subr.mxu0 0.0
      %2871 = vmatpush1.msra.mxu0 0.0
      %2872 = vmatprep.subr.mxu0 0.0
      %2873 = vmatpush1.msra.mxu0 0.0
      %2874 = vmatprep.subr.mxu0 0.0
      %2875 = vmatpush1.msra.mxu0 0.0
      %2876 = vmatprep.subr.mxu0 0.0
      %2877 = vmatpush1.msra.mxu0 0.0
      %2878 = vmatprep.subr.mxu0 0.0
      %2879 = vmatpush1.msra.mxu0 0.0
      %2880 = vmatprep.subr.mxu0 0.0
      %2881 = vmatpush1.msra.mxu0 0.0
      %2882 = vmatprep.subr.mxu0 0.0
      %2883 = vmatpush1.msra.mxu0 0.0
      %2884 = vmatprep.subr.mxu0 0.0
      %2885 = vmatpush1.msra.mxu0 0.0
      %2886 = vmatprep.subr.mxu0 0.0
      %2887 = vmatpush1.msra.mxu0 0.0
      %2888 = vmatprep.subr.mxu0 0.0
      %2889 = vmatpush1.msra.mxu0 0.0
      %2890 = vmatprep.subr.mxu0 0.0
      %2891 = vmatpush1.msra.mxu0 0.0
      %2892 = vmatprep.subr.mxu0 0.0
      %2893 = vmatpush1.msra.mxu0 0.0
      %2894 = vmatprep.subr.mxu0 0.0
      %2895 = vmatpush1.msra.mxu0 0.0
      %2896 = vmatprep.subr.mxu0 0.0
      %2897 = vmatpush1.msra.mxu0 0.0
      %2898 = vmatprep.subr.mxu0 0.0
      %2899 = vmatpush1.msra.mxu0 0.0
      %2900 = vmatprep.subr.mxu0 0.0
      %2901 = vmatpush1.msra.mxu0 0.0
      %2902 = vmatprep.subr.mxu0 0.0
      %2903 = vmatpush1.msra.mxu0 0.0
      %2904 = vmatprep.subr.mxu0 0.0
      %2905 = vmatpush1.msra.mxu0 0.0
      %2906 = vmatprep.subr.mxu0 0.0
      %2907 = vmatpush1.msra.mxu0 0.0
      %2908 = vmatprep.subr.mxu0 0.0
      %2909 = vmatpush1.msra.mxu0 0.0
      %2910 = vmatprep.subr.mxu0 0.0
      %2911 = vmatpush1.msra.mxu0 0.0
      %2912 = vmatprep.subr.mxu0 0.0
      %2913 = vmatpush1.msra.mxu0 0.0
      %2914 = vmatprep.mubr.f32.mxu0 0.0
      %2915 = vmatmul.mubr.f32.gmra.mrb[0].mxu0 %v2839
      %v2916 = vpop.f32.mrb[0].mxu0
      %v2917 = vadd.f32 0.0, %v2916
      %v2918 = vpop.f32.mrb[0].mxu0
      %v2919 = vadd.f32 0.0, %v2918
      %2920 = vmatprep.mubr.f32.mxu0 0.0
      %2921 = vmatmul.mubr.f32.gmra.mrb[0].mxu0 %v2842
      %v2922 = vpop.f32.mrb[0].mxu0
      %v2923 = vadd.f32 0.0, %v2922
      %v2924 = vpop.f32.mrb[0].mxu0
      %v2925 = vadd.f32 0.0, %v2924
      %2926 = vmatprep.mubr.f32.mxu0 0.0
      %2927 = vmatmul.mubr.f32.gmra.mrb[0].mxu0 %v2845
      %v2928 = vpop.f32.mrb[0].mxu0
      %v2929 = vadd.f32 0.0, %v2928
      %v2930 = vpop.f32.mrb[0].mxu0
      %v2931 = vadd.f32 0.0, %v2930
      %2932 = vmatprep.mubr.f32.mxu0 0.0
      %2933 = vmatmul.mubr.f32.gmra.mrb[0].mxu0 %v2848
      %v2934 = vpop.f32.mrb[0].mxu0
      %v2935 = vadd.f32 0.0, %v2934
      %v2936 = vpop.f32.mrb[0].mxu0
      %v2937 = vadd.f32 0.0, %v2936
      %2938 = vdwg.mxu0
      %2939 = vmatprep.subr.mxu0 %v2833
      %2940 = vmatpush1.msra.mxu0 %v2832
      %2941 = vmatprep.subr.mxu0 0.0
      %2942 = vmatpush1.msra.mxu0 0.0
      %2943 = vmatprep.subr.mxu0 0.0
      %2944 = vmatpush1.msra.mxu0 0.0
      %2945 = vmatprep.subr.mxu0 0.0
      %2946 = vmatpush1.msra.mxu0 0.0
      %2947 = vmatprep.subr.mxu0 0.0
      %2948 = vmatpush1.msra.mxu0 0.0
      %2949 = vmatprep.subr.mxu0 0.0
      %2950 = vmatpush1.msra.mxu0 0.0
      %2951 = vmatprep.subr.mxu0 0.0
      %2952 = vmatpush1.msra.mxu0 0.0
      %2953 = vmatprep.subr.mxu0 0.0
      %2954 = vmatpush1.msra.mxu0 0.0
      %2955 = vmatprep.subr.mxu0 0.0
      %2956 = vmatpush1.msra.mxu0 0.0
      %2957 = vmatprep.subr.mxu0 0.0
      %2958 = vmatpush1.msra.mxu0 0.0
      %2959 = vmatprep.subr.mxu0 0.0
      %2960 = vmatpush1.msra.mxu0 0.0
      %2961 = vmatprep.subr.mxu0 0.0
      %2962 = vmatpush1.msra.mxu0 0.0
      %2963 = vmatprep.subr.mxu0 0.0
      %2964 = vmatpush1.msra.mxu0 0.0
      %2965 = vmatprep.subr.mxu0 0.0
      %2966 = vmatpush1.msra.mxu0 0.0
      %2967 = vmatprep.subr.mxu0 0.0
      %2968 = vmatpush1.msra.mxu0 0.0
      %2969 = vmatprep.subr.mxu0 0.0
      %2970 = vmatpush1.msra.mxu0 0.0
      %2971 = vmatprep.subr.mxu0 0.0
      %2972 = vmatpush1.msra.mxu0 0.0
      %2973 = vmatprep.subr.mxu0 0.0
      %2974 = vmatpush1.msra.mxu0 0.0
      %2975 = vmatprep.subr.mxu0 0.0
      %2976 = vmatpush1.msra.mxu0 0.0
      %2977 = vmatprep.subr.mxu0 0.0
      %2978 = vmatpush1.msra.mxu0 0.0
      %2979 = vmatprep.subr.mxu0 0.0
      %2980 = vmatpush1.msra.mxu0 0.0
      %2981 = vmatprep.subr.mxu0 0.0
      %2982 = vmatpush1.msra.mxu0 0.0
      %2983 = vmatprep.subr.mxu0 0.0
      %2984 = vmatpush1.msra.mxu0 0.0
      %2985 = vmatprep.subr.mxu0 0.0
      %2986 = vmatpush1.msra.mxu0 0.0
      %2987 = vmatprep.subr.mxu0 0.0
      %2988 = vmatpush1.msra.mxu0 0.0
      %2989 = vmatprep.subr.mxu0 0.0
      %2990 = vmatpush1.msra.mxu0 0.0
      %2991 = vmatprep.subr.mxu0 0.0
      %2992 = vmatpush1.msra.mxu0 0.0
      %2993 = vmatprep.subr.mxu0 0.0
      %2994 = vmatpush1.msra.mxu0 0.0
      %2995 = vmatprep.subr.mxu0 0.0
      %2996 = vmatpush1.msra.mxu0 0.0
      %2997 = vmatprep.subr.mxu0 0.0
      %2998 = vmatpush1.msra.mxu0 0.0
      %2999 = vmatprep.subr.mxu0 0.0
      %3000 = vmatpush1.msra.mxu0 0.0
      %3001 = vmatprep.subr.mxu0 0.0
      %3002 = vmatpush1.msra.mxu0 0.0
      %3003 = vmatprep.mubr.f32.mxu0 0.0
      %3004 = vmatmul.mubr.f32.gmra.mrb[0].mxu0 %v2839
      %v3005 = vpop.f32.mrb[0].mxu0
      %v3006 = vadd.f32 0.0, %v3005
      %v3007 = vpop.f32.mrb[0].mxu0
      %v3008 = vadd.f32 0.0, %v3007
      %3009 = vmatprep.mubr.f32.mxu0 0.0
      %3010 = vmatmul.mubr.f32.gmra.mrb[0].mxu0 %v2842
      %v3011 = vpop.f32.mrb[0].mxu0
      %v3012 = vadd.f32 0.0, %v3011
      %v3013 = vpop.f32.mrb[0].mxu0
      %v3014 = vadd.f32 0.0, %v3013
      %3015 = vmatprep.mubr.f32.mxu0 0.0
      %3016 = vmatmul.mubr.f32.gmra.mrb[0].mxu0 %v2845
      %v3017 = vpop.f32.mrb[0].mxu0
      %v3018 = vadd.f32 0.0, %v3017
      %v3019 = vpop.f32.mrb[0].mxu0
      %v3020 = vadd.f32 0.0, %v3019
      %3021 = vmatprep.mubr.f32.mxu0 0.0
      %3022 = vmatmul.mubr.f32.gmra.mrb[0].mxu0 %v2848
      %v3023 = vpop.f32.mrb[0].mxu0
      %v3024 = vadd.f32 0.0, %v3023
      %v3025 = vpop.f32.mrb[0].mxu0
      %v3026 = vadd.f32 0.0, %v3025
      %3027 = vdwg.mxu0
      %v3028 = vadd.f32 %v2798, %v2917
      %v3029 = vadd.f32 %v2799, %v2919
      %v3030 = vadd.f32 %v2800, %v3006
      %v3031 = vadd.f32 %v2801, %v3008
      %v3032 = vadd.f32 %v2802, %v2923
      %v3033 = vadd.f32 %v2803, %v2925
      %v3034 = vadd.f32 %v2804, %v3012
      %v3035 = vadd.f32 %v2805, %v3014
      %v3036 = vadd.f32 %v2806, %v2929
      %v3037 = vadd.f32 %v2807, %v2931
      %v3038 = vadd.f32 %v2808, %v3018
      %v3039 = vadd.f32 %v2809, %v3020
      %v3040 = vadd.f32 %v2810, %v2935
      %v3041 = vadd.f32 %v2811, %v2937
      %v3042 = vadd.f32 %v2812, %v3024
      %v3043 = vadd.f32 %v2813, %v3026
      %s3044 = scalar_lea.vmem %s1, 384
      %v3045 = vld [vmem:[%s3044] sm:$0xff]
      %v3046 = vld [vmem:[%s3044 + $0x8] sm:$0xff]
      %v3047 = vld [vmem:[%s3044 + $0x10] sm:$0xff]
      %v3048 = vld [vmem:[%s3044 + $0x18] sm:$0xff]
      %v3050 = vsel %vm344, %v3045, 0
      %v3053 = vsel %vm344, %v3046, 0
      %v3056 = vsel %vm344, %v3047, 0
      %v3059 = vsel %vm344, %v3048, 0
      %3061 = vmatprep.subr.mxu0 %v312
      %3062 = vmatpush1.msra.mxu0 %v311
      %3063 = vmatprep.subr.mxu0 0.0
      %3064 = vmatpush1.msra.mxu0 0.0
      %3065 = vmatprep.subr.mxu0 0.0
      %3066 = vmatpush1.msra.mxu0 0.0
      %3067 = vmatprep.subr.mxu0 0.0
      %3068 = vmatpush1.msra.mxu0 0.0
      %3069 = vmatprep.subr.mxu0 0.0
      %3070 = vmatpush1.msra.mxu0 0.0
      %3071 = vmatprep.subr.mxu0 0.0
      %3072 = vmatpush1.msra.mxu0 0.0
      %3073 = vmatprep.subr.mxu0 0.0
      %3074 = vmatpush1.msra.mxu0 0.0
      %3075 = vmatprep.subr.mxu0 0.0
      %3076 = vmatpush1.msra.mxu0 0.0
      %3077 = vmatprep.subr.mxu0 0.0
      %3078 = vmatpush1.msra.mxu0 0.0
      %3079 = vmatprep.subr.mxu0 0.0
      %3080 = vmatpush1.msra.mxu0 0.0
      %3081 = vmatprep.subr.mxu0 0.0
      %3082 = vmatpush1.msra.mxu0 0.0
      %3083 = vmatprep.subr.mxu0 0.0
      %3084 = vmatpush1.msra.mxu0 0.0
      %3085 = vmatprep.subr.mxu0 0.0
      %3086 = vmatpush1.msra.mxu0 0.0
      %3087 = vmatprep.subr.mxu0 0.0
      %3088 = vmatpush1.msra.mxu0 0.0
      %3089 = vmatprep.subr.mxu0 0.0
      %3090 = vmatpush1.msra.mxu0 0.0
      %3091 = vmatprep.subr.mxu0 0.0
      %3092 = vmatpush1.msra.mxu0 0.0
      %3093 = vmatprep.subr.mxu0 0.0
      %3094 = vmatpush1.msra.mxu0 0.0
      %3095 = vmatprep.subr.mxu0 0.0
      %3096 = vmatpush1.msra.mxu0 0.0
      %3097 = vmatprep.subr.mxu0 0.0
      %3098 = vmatpush1.msra.mxu0 0.0
      %3099 = vmatprep.subr.mxu0 0.0
      %3100 = vmatpush1.msra.mxu0 0.0
      %3101 = vmatprep.subr.mxu0 0.0
      %3102 = vmatpush1.msra.mxu0 0.0
      %3103 = vmatprep.subr.mxu0 0.0
      %3104 = vmatpush1.msra.mxu0 0.0
      %3105 = vmatprep.subr.mxu0 0.0
      %3106 = vmatpush1.msra.mxu0 0.0
      %3107 = vmatprep.subr.mxu0 0.0
      %3108 = vmatpush1.msra.mxu0 0.0
      %3109 = vmatprep.subr.mxu0 0.0
      %3110 = vmatpush1.msra.mxu0 0.0
      %3111 = vmatprep.subr.mxu0 0.0
      %3112 = vmatpush1.msra.mxu0 0.0
      %3113 = vmatprep.subr.mxu0 0.0
      %3114 = vmatpush1.msra.mxu0 0.0
      %3115 = vmatprep.subr.mxu0 0.0
      %3116 = vmatpush1.msra.mxu0 0.0
      %3117 = vmatprep.subr.mxu0 0.0
      %3118 = vmatpush1.msra.mxu0 0.0
      %3119 = vmatprep.subr.mxu0 0.0
      %3120 = vmatpush1.msra.mxu0 0.0
      %3121 = vmatprep.subr.mxu0 0.0
      %3122 = vmatpush1.msra.mxu0 0.0
      %3123 = vmatprep.subr.mxu0 0.0
      %3124 = vmatpush1.msra.mxu0 0.0
      %3125 = vmatprep.mubr.f32.mxu0 0.0
      %3126 = vmatmul.mubr.f32.gmra.mrb[0].mxu0 %v3050
      %v3127 = vpop.f32.mrb[0].mxu0
      %v3128 = vadd.f32 0.0, %v3127
      %v3129 = vpop.f32.mrb[0].mxu0
      %v3130 = vadd.f32 0.0, %v3129
      %3131 = vmatprep.mubr.f32.mxu0 0.0
      %3132 = vmatmul.mubr.f32.gmra.mrb[0].mxu0 %v3053
      %v3133 = vpop.f32.mrb[0].mxu0
      %v3134 = vadd.f32 0.0, %v3133
      %v3135 = vpop.f32.mrb[0].mxu0
      %v3136 = vadd.f32 0.0, %v3135
      %3137 = vmatprep.mubr.f32.mxu0 0.0
      %3138 = vmatmul.mubr.f32.gmra.mrb[0].mxu0 %v3056
      %v3139 = vpop.f32.mrb[0].mxu0
      %v3140 = vadd.f32 0.0, %v3139
      %v3141 = vpop.f32.mrb[0].mxu0
      %v3142 = vadd.f32 0.0, %v3141
      %3143 = vmatprep.mubr.f32.mxu0 0.0
      %3144 = vmatmul.mubr.f32.gmra.mrb[0].mxu0 %v3059
      %v3145 = vpop.f32.mrb[0].mxu0
      %v3146 = vadd.f32 0.0, %v3145
      %v3147 = vpop.f32.mrb[0].mxu0
      %v3148 = vadd.f32 0.0, %v3147
      %3149 = vdwg.mxu0
      %3150 = vmatprep.subr.mxu0 %v314
      %3151 = vmatpush1.msra.mxu0 %v313
      %3152 = vmatprep.subr.mxu0 0.0
      %3153 = vmatpush1.msra.mxu0 0.0
      %3154 = vmatprep.subr.mxu0 0.0
      %3155 = vmatpush1.msra.mxu0 0.0
      %3156 = vmatprep.subr.mxu0 0.0
      %3157 = vmatpush1.msra.mxu0 0.0
      %3158 = vmatprep.subr.mxu0 0.0
      %3159 = vmatpush1.msra.mxu0 0.0
      %3160 = vmatprep.subr.mxu0 0.0
      %3161 = vmatpush1.msra.mxu0 0.0
      %3162 = vmatprep.subr.mxu0 0.0
      %3163 = vmatpush1.msra.mxu0 0.0
      %3164 = vmatprep.subr.mxu0 0.0
      %3165 = vmatpush1.msra.mxu0 0.0
      %3166 = vmatprep.subr.mxu0 0.0
      %3167 = vmatpush1.msra.mxu0 0.0
      %3168 = vmatprep.subr.mxu0 0.0
      %3169 = vmatpush1.msra.mxu0 0.0
      %3170 = vmatprep.subr.mxu0 0.0
      %3171 = vmatpush1.msra.mxu0 0.0
      %3172 = vmatprep.subr.mxu0 0.0
      %3173 = vmatpush1.msra.mxu0 0.0
      %3174 = vmatprep.subr.mxu0 0.0
      %3175 = vmatpush1.msra.mxu0 0.0
      %3176 = vmatprep.subr.mxu0 0.0
      %3177 = vmatpush1.msra.mxu0 0.0
      %3178 = vmatprep.subr.mxu0 0.0
      %3179 = vmatpush1.msra.mxu0 0.0
      %3180 = vmatprep.subr.mxu0 0.0
      %3181 = vmatpush1.msra.mxu0 0.0
      %3182 = vmatprep.subr.mxu0 0.0
      %3183 = vmatpush1.msra.mxu0 0.0
      %3184 = vmatprep.subr.mxu0 0.0
      %3185 = vmatpush1.msra.mxu0 0.0
      %3186 = vmatprep.subr.mxu0 0.0
      %3187 = vmatpush1.msra.mxu0 0.0
      %3188 = vmatprep.subr.mxu0 0.0
      %3189 = vmatpush1.msra.mxu0 0.0
      %3190 = vmatprep.subr.mxu0 0.0
      %3191 = vmatpush1.msra.mxu0 0.0
      %3192 = vmatprep.subr.mxu0 0.0
      %3193 = vmatpush1.msra.mxu0 0.0
      %3194 = vmatprep.subr.mxu0 0.0
      %3195 = vmatpush1.msra.mxu0 0.0
      %3196 = vmatprep.subr.mxu0 0.0
      %3197 = vmatpush1.msra.mxu0 0.0
      %3198 = vmatprep.subr.mxu0 0.0
      %3199 = vmatpush1.msra.mxu0 0.0
      %3200 = vmatprep.subr.mxu0 0.0
      %3201 = vmatpush1.msra.mxu0 0.0
      %3202 = vmatprep.subr.mxu0 0.0
      %3203 = vmatpush1.msra.mxu0 0.0
      %3204 = vmatprep.subr.mxu0 0.0
      %3205 = vmatpush1.msra.mxu0 0.0
      %3206 = vmatprep.subr.mxu0 0.0
      %3207 = vmatpush1.msra.mxu0 0.0
      %3208 = vmatprep.subr.mxu0 0.0
      %3209 = vmatpush1.msra.mxu0 0.0
      %3210 = vmatprep.subr.mxu0 0.0
      %3211 = vmatpush1.msra.mxu0 0.0
      %3212 = vmatprep.subr.mxu0 0.0
      %3213 = vmatpush1.msra.mxu0 0.0
      %3214 = vmatprep.mubr.f32.mxu0 0.0
      %3215 = vmatmul.mubr.f32.gmra.mrb[0].mxu0 %v3050
      %v3216 = vpop.f32.mrb[0].mxu0
      %v3217 = vadd.f32 0.0, %v3216
      %v3218 = vpop.f32.mrb[0].mxu0
      %v3219 = vadd.f32 0.0, %v3218
      %3220 = vmatprep.mubr.f32.mxu0 0.0
      %3221 = vmatmul.mubr.f32.gmra.mrb[0].mxu0 %v3053
      %v3222 = vpop.f32.mrb[0].mxu0
      %v3223 = vadd.f32 0.0, %v3222
      %v3224 = vpop.f32.mrb[0].mxu0
      %v3225 = vadd.f32 0.0, %v3224
      %3226 = vmatprep.mubr.f32.mxu0 0.0
      %3227 = vmatmul.mubr.f32.gmra.mrb[0].mxu0 %v3056
      %v3228 = vpop.f32.mrb[0].mxu0
      %v3229 = vadd.f32 0.0, %v3228
      %v3230 = vpop.f32.mrb[0].mxu0
      %v3231 = vadd.f32 0.0, %v3230
      %3232 = vmatprep.mubr.f32.mxu0 0.0
      %3233 = vmatmul.mubr.f32.gmra.mrb[0].mxu0 %v3059
      %v3234 = vpop.f32.mrb[0].mxu0
      %v3235 = vadd.f32 0.0, %v3234
      %v3236 = vpop.f32.mrb[0].mxu0
      %v3237 = vadd.f32 0.0, %v3236
      %3238 = vdwg.mxu0
      %v3239 = vadd.f32 %v3028, %v3128
      %v3240 = vadd.f32 %v3029, %v3130
      %v3241 = vadd.f32 %v3030, %v3217
      %v3242 = vadd.f32 %v3031, %v3219
      %v3243 = vadd.f32 %v3032, %v3134
      %v3244 = vadd.f32 %v3033, %v3136
      %v3245 = vadd.f32 %v3034, %v3223
      %v3246 = vadd.f32 %v3035, %v3225
      %v3247 = vadd.f32 %v3036, %v3140
      %v3248 = vadd.f32 %v3037, %v3142
      %v3249 = vadd.f32 %v3038, %v3229
      %v3250 = vadd.f32 %v3039, %v3231
      %v3251 = vadd.f32 %v3040, %v3146
      %v3252 = vadd.f32 %v3041, %v3148
      %v3253 = vadd.f32 %v3042, %v3235
      %v3254 = vadd.f32 %v3043, %v3237
      %s3255 = scalar_lea.vmem %s1, 416
      %v3256 = vld [vmem:[%s3255] sm:$0xff]
      %v3257 = vld [vmem:[%s3255 + $0x8] sm:$0xff]
      %v3258 = vld [vmem:[%s3255 + $0x10] sm:$0xff]
      %v3259 = vld [vmem:[%s3255 + $0x18] sm:$0xff]
      %v3260 = vld [vmem:[#allocation2 + $0x8] sm:$0xff]
      %v3261 = vld [vmem:[#allocation2 + $0x10] sm:$0xff]
      %v3262 = vld [vmem:[#allocation2 + $0x18] sm:$0xff]
      %v3263 = vld [vmem:[#allocation2 + $0x20] sm:$0xff]
      %v3264 = vld [vmem:[#allocation2 + $0x28] sm:$0xff]
      %3270 = vrot.lane.b32.xlu0 %v3260, 127
      %v3271 = vpop.permute.xlu0 %3270
      %3272 = vrot.lane.b32.xlu0 %v3261, 127
      %v3273 = vpop.permute.xlu0 %3272
      %3274 = vrot.lane.b32.xlu0 %v3262, 127
      %v3275 = vpop.permute.xlu0 %3274
      %3276 = vrot.lane.b32.xlu0 %v3263, 127
      %v3277 = vpop.permute.xlu0 %3276
      %3278 = vrot.lane.b32.xlu0 %v3264, 127
      %v3279 = vpop.permute.xlu0 %3278
      %vm3280 = vcmask 1039360
      %v3281 = vsel %vm3280, %v3271, %v3273
      %v3282 = vsel %vm3280, %v3273, %v3275
      %v3283 = vsel %vm3280, %v3275, %v3277
      %v3284 = vsel %vm3280, %v3277, %v3279
      %v3290 = vsel %vm344, %v3256, 0
      %v3293 = vsel %vm344, %v3257, 0
      %v3296 = vsel %vm344, %v3258, 0
      %v3299 = vsel %vm344, %v3259, 0
      %3301 = vmatprep.subr.mxu0 %v3282
      %3302 = vmatpush1.msra.mxu0 %v3281
      %3303 = vmatprep.subr.mxu0 0.0
      %3304 = vmatpush1.msra.mxu0 0.0
      %3305 = vmatprep.subr.mxu0 0.0
      %3306 = vmatpush1.msra.mxu0 0.0
      %3307 = vmatprep.subr.mxu0 0.0
      %3308 = vmatpush1.msra.mxu0 0.0
      %3309 = vmatprep.subr.mxu0 0.0
      %3310 = vmatpush1.msra.mxu0 0.0
      %3311 = vmatprep.subr.mxu0 0.0
      %3312 = vmatpush1.msra.mxu0 0.0
      %3313 = vmatprep.subr.mxu0 0.0
      %3314 = vmatpush1.msra.mxu0 0.0
      %3315 = vmatprep.subr.mxu0 0.0
      %3316 = vmatpush1.msra.mxu0 0.0
      %3317 = vmatprep.subr.mxu0 0.0
      %3318 = vmatpush1.msra.mxu0 0.0
      %3319 = vmatprep.subr.mxu0 0.0
      %3320 = vmatpush1.msra.mxu0 0.0
      %3321 = vmatprep.subr.mxu0 0.0
      %3322 = vmatpush1.msra.mxu0 0.0
      %3323 = vmatprep.subr.mxu0 0.0
      %3324 = vmatpush1.msra.mxu0 0.0
      %3325 = vmatprep.subr.mxu0 0.0
      %3326 = vmatpush1.msra.mxu0 0.0
      %3327 = vmatprep.subr.mxu0 0.0
      %3328 = vmatpush1.msra.mxu0 0.0
      %3329 = vmatprep.subr.mxu0 0.0
      %3330 = vmatpush1.msra.mxu0 0.0
      %3331 = vmatprep.subr.mxu0 0.0
      %3332 = vmatpush1.msra.mxu0 0.0
      %3333 = vmatprep.subr.mxu0 0.0
      %3334 = vmatpush1.msra.mxu0 0.0
      %3335 = vmatprep.subr.mxu0 0.0
      %3336 = vmatpush1.msra.mxu0 0.0
      %3337 = vmatprep.subr.mxu0 0.0
      %3338 = vmatpush1.msra.mxu0 0.0
      %3339 = vmatprep.subr.mxu0 0.0
      %3340 = vmatpush1.msra.mxu0 0.0
      %3341 = vmatprep.subr.mxu0 0.0
      %3342 = vmatpush1.msra.mxu0 0.0
      %3343 = vmatprep.subr.mxu0 0.0
      %3344 = vmatpush1.msra.mxu0 0.0
      %3345 = vmatprep.subr.mxu0 0.0
      %3346 = vmatpush1.msra.mxu0 0.0
      %3347 = vmatprep.subr.mxu0 0.0
      %3348 = vmatpush1.msra.mxu0 0.0
      %3349 = vmatprep.subr.mxu0 0.0
      %3350 = vmatpush1.msra.mxu0 0.0
      %3351 = vmatprep.subr.mxu0 0.0
      %3352 = vmatpush1.msra.mxu0 0.0
      %3353 = vmatprep.subr.mxu0 0.0
      %3354 = vmatpush1.msra.mxu0 0.0
      %3355 = vmatprep.subr.mxu0 0.0
      %3356 = vmatpush1.msra.mxu0 0.0
      %3357 = vmatprep.subr.mxu0 0.0
      %3358 = vmatpush1.msra.mxu0 0.0
      %3359 = vmatprep.subr.mxu0 0.0
      %3360 = vmatpush1.msra.mxu0 0.0
      %3361 = vmatprep.subr.mxu0 0.0
      %3362 = vmatpush1.msra.mxu0 0.0
      %3363 = vmatprep.subr.mxu0 0.0
      %3364 = vmatpush1.msra.mxu0 0.0
      %3365 = vmatprep.mubr.f32.mxu0 0.0
      %3366 = vmatmul.mubr.f32.gmra.mrb[0].mxu0 %v3290
      %v3367 = vpop.f32.mrb[0].mxu0
      %v3368 = vadd.f32 0.0, %v3367
      %v3369 = vpop.f32.mrb[0].mxu0
      %v3370 = vadd.f32 0.0, %v3369
      %3371 = vmatprep.mubr.f32.mxu0 0.0
      %3372 = vmatmul.mubr.f32.gmra.mrb[0].mxu0 %v3293
      %v3373 = vpop.f32.mrb[0].mxu0
      %v3374 = vadd.f32 0.0, %v3373
      %v3375 = vpop.f32.mrb[0].mxu0
      %v3376 = vadd.f32 0.0, %v3375
      %3377 = vmatprep.mubr.f32.mxu0 0.0
      %3378 = vmatmul.mubr.f32.gmra.mrb[0].mxu0 %v3296
      %v3379 = vpop.f32.mrb[0].mxu0
      %v3380 = vadd.f32 0.0, %v3379
      %v3381 = vpop.f32.mrb[0].mxu0
      %v3382 = vadd.f32 0.0, %v3381
      %3383 = vmatprep.mubr.f32.mxu0 0.0
      %3384 = vmatmul.mubr.f32.gmra.mrb[0].mxu0 %v3299
      %v3385 = vpop.f32.mrb[0].mxu0
      %v3386 = vadd.f32 0.0, %v3385
      %v3387 = vpop.f32.mrb[0].mxu0
      %v3388 = vadd.f32 0.0, %v3387
      %3389 = vdwg.mxu0
      %3390 = vmatprep.subr.mxu0 %v3284
      %3391 = vmatpush1.msra.mxu0 %v3283
      %3392 = vmatprep.subr.mxu0 0.0
      %3393 = vmatpush1.msra.mxu0 0.0
      %3394 = vmatprep.subr.mxu0 0.0
      %3395 = vmatpush1.msra.mxu0 0.0
      %3396 = vmatprep.subr.mxu0 0.0
      %3397 = vmatpush1.msra.mxu0 0.0
      %3398 = vmatprep.subr.mxu0 0.0
      %3399 = vmatpush1.msra.mxu0 0.0
      %3400 = vmatprep.subr.mxu0 0.0
      %3401 = vmatpush1.msra.mxu0 0.0
      %3402 = vmatprep.subr.mxu0 0.0
      %3403 = vmatpush1.msra.mxu0 0.0
      %3404 = vmatprep.subr.mxu0 0.0
      %3405 = vmatpush1.msra.mxu0 0.0
      %3406 = vmatprep.subr.mxu0 0.0
      %3407 = vmatpush1.msra.mxu0 0.0
      %3408 = vmatprep.subr.mxu0 0.0
      %3409 = vmatpush1.msra.mxu0 0.0
      %3410 = vmatprep.subr.mxu0 0.0
      %3411 = vmatpush1.msra.mxu0 0.0
      %3412 = vmatprep.subr.mxu0 0.0
      %3413 = vmatpush1.msra.mxu0 0.0
      %3414 = vmatprep.subr.mxu0 0.0
      %3415 = vmatpush1.msra.mxu0 0.0
      %3416 = vmatprep.subr.mxu0 0.0
      %3417 = vmatpush1.msra.mxu0 0.0
      %3418 = vmatprep.subr.mxu0 0.0
      %3419 = vmatpush1.msra.mxu0 0.0
      %3420 = vmatprep.subr.mxu0 0.0
      %3421 = vmatpush1.msra.mxu0 0.0
      %3422 = vmatprep.subr.mxu0 0.0
      %3423 = vmatpush1.msra.mxu0 0.0
      %3424 = vmatprep.subr.mxu0 0.0
      %3425 = vmatpush1.msra.mxu0 0.0
      %3426 = vmatprep.subr.mxu0 0.0
      %3427 = vmatpush1.msra.mxu0 0.0
      %3428 = vmatprep.subr.mxu0 0.0
      %3429 = vmatpush1.msra.mxu0 0.0
      %3430 = vmatprep.subr.mxu0 0.0
      %3431 = vmatpush1.msra.mxu0 0.0
      %3432 = vmatprep.subr.mxu0 0.0
      %3433 = vmatpush1.msra.mxu0 0.0
      %3434 = vmatprep.subr.mxu0 0.0
      %3435 = vmatpush1.msra.mxu0 0.0
      %3436 = vmatprep.subr.mxu0 0.0
      %3437 = vmatpush1.msra.mxu0 0.0
      %3438 = vmatprep.subr.mxu0 0.0
      %3439 = vmatpush1.msra.mxu0 0.0
      %3440 = vmatprep.subr.mxu0 0.0
      %3441 = vmatpush1.msra.mxu0 0.0
      %3442 = vmatprep.subr.mxu0 0.0
      %3443 = vmatpush1.msra.mxu0 0.0
      %3444 = vmatprep.subr.mxu0 0.0
      %3445 = vmatpush1.msra.mxu0 0.0
      %3446 = vmatprep.subr.mxu0 0.0
      %3447 = vmatpush1.msra.mxu0 0.0
      %3448 = vmatprep.subr.mxu0 0.0
      %3449 = vmatpush1.msra.mxu0 0.0
      %3450 = vmatprep.subr.mxu0 0.0
      %3451 = vmatpush1.msra.mxu0 0.0
      %3452 = vmatprep.subr.mxu0 0.0
      %3453 = vmatpush1.msra.mxu0 0.0
      %3454 = vmatprep.mubr.f32.mxu0 0.0
      %3455 = vmatmul.mubr.f32.gmra.mrb[0].mxu0 %v3290
      %v3456 = vpop.f32.mrb[0].mxu0
      %v3457 = vadd.f32 0.0, %v3456
      %v3458 = vpop.f32.mrb[0].mxu0
      %v3459 = vadd.f32 0.0, %v3458
      %3460 = vmatprep.mubr.f32.mxu0 0.0
      %3461 = vmatmul.mubr.f32.gmra.mrb[0].mxu0 %v3293
      %v3462 = vpop.f32.mrb[0].mxu0
      %v3463 = vadd.f32 0.0, %v3462
      %v3464 = vpop.f32.mrb[0].mxu0
      %v3465 = vadd.f32 0.0, %v3464
      %3466 = vmatprep.mubr.f32.mxu0 0.0
      %3467 = vmatmul.mubr.f32.gmra.mrb[0].mxu0 %v3296
      %v3468 = vpop.f32.mrb[0].mxu0
      %v3469 = vadd.f32 0.0, %v3468
      %v3470 = vpop.f32.mrb[0].mxu0
      %v3471 = vadd.f32 0.0, %v3470
      %3472 = vmatprep.mubr.f32.mxu0 0.0
      %3473 = vmatmul.mubr.f32.gmra.mrb[0].mxu0 %v3299
      %v3474 = vpop.f32.mrb[0].mxu0
      %v3475 = vadd.f32 0.0, %v3474
      %v3476 = vpop.f32.mrb[0].mxu0
      %v3477 = vadd.f32 0.0, %v3476
      %3478 = vdwg.mxu0
      %v3479 = vadd.f32 %v3239, %v3368
      %v3480 = vadd.f32 %v3240, %v3370
      %v3481 = vadd.f32 %v3241, %v3457
      %v3482 = vadd.f32 %v3242, %v3459
      %v3483 = vadd.f32 %v3243, %v3374
      %v3484 = vadd.f32 %v3244, %v3376
      %v3485 = vadd.f32 %v3245, %v3463
      %v3486 = vadd.f32 %v3246, %v3465
      %v3487 = vadd.f32 %v3247, %v3380
      %v3488 = vadd.f32 %v3248, %v3382
      %v3489 = vadd.f32 %v3249, %v3469
      %v3490 = vadd.f32 %v3250, %v3471
      %v3491 = vadd.f32 %v3251, %v3386
      %v3492 = vadd.f32 %v3252, %v3388
      %v3493 = vadd.f32 %v3253, %v3475
      %v3494 = vadd.f32 %v3254, %v3477
      %s3495 = scalar_lea.vmem %s1, 448
      %v3496 = vld [vmem:[%s3495] sm:$0xff]
      %v3497 = vld [vmem:[%s3495 + $0x8] sm:$0xff]
      %v3498 = vld [vmem:[%s3495 + $0x10] sm:$0xff]
      %v3499 = vld [vmem:[%s3495 + $0x18] sm:$0xff]
      %3500 = vrot.lane.b32.xlu0 %v3260, 126
      %v3501 = vpop.permute.xlu0 %3500
      %3502 = vrot.lane.b32.xlu0 %v3261, 126
      %v3503 = vpop.permute.xlu0 %3502
      %3504 = vrot.lane.b32.xlu0 %v3262, 126
      %v3505 = vpop.permute.xlu0 %3504
      %3506 = vrot.lane.b32.xlu0 %v3263, 126
      %v3507 = vpop.permute.xlu0 %3506
      %3508 = vrot.lane.b32.xlu0 %v3264, 126
      %v3509 = vpop.permute.xlu0 %3508
      %vm3510 = vcmask 1031168
      %v3511 = vsel %vm3510, %v3501, %v3503
      %v3512 = vsel %vm3510, %v3503, %v3505
      %v3513 = vsel %vm3510, %v3505, %v3507
      %v3514 = vsel %vm3510, %v3507, %v3509
      %v3520 = vsel %vm344, %v3496, 0
      %v3523 = vsel %vm344, %v3497, 0
      %v3526 = vsel %vm344, %v3498, 0
      %v3529 = vsel %vm344, %v3499, 0
      %3531 = vmatprep.subr.mxu0 %v3512
      %3532 = vmatpush1.msra.mxu0 %v3511
      %3533 = vmatprep.subr.mxu0 0.0
      %3534 = vmatpush1.msra.mxu0 0.0
      %3535 = vmatprep.subr.mxu0 0.0
      %3536 = vmatpush1.msra.mxu0 0.0
      %3537 = vmatprep.subr.mxu0 0.0
      %3538 = vmatpush1.msra.mxu0 0.0
      %3539 = vmatprep.subr.mxu0 0.0
      %3540 = vmatpush1.msra.mxu0 0.0
      %3541 = vmatprep.subr.mxu0 0.0
      %3542 = vmatpush1.msra.mxu0 0.0
      %3543 = vmatprep.subr.mxu0 0.0
      %3544 = vmatpush1.msra.mxu0 0.0
      %3545 = vmatprep.subr.mxu0 0.0
      %3546 = vmatpush1.msra.mxu0 0.0
      %3547 = vmatprep.subr.mxu0 0.0
      %3548 = vmatpush1.msra.mxu0 0.0
      %3549 = vmatprep.subr.mxu0 0.0
      %3550 = vmatpush1.msra.mxu0 0.0
      %3551 = vmatprep.subr.mxu0 0.0
      %3552 = vmatpush1.msra.mxu0 0.0
      %3553 = vmatprep.subr.mxu0 0.0
      %3554 = vmatpush1.msra.mxu0 0.0
      %3555 = vmatprep.subr.mxu0 0.0
      %3556 = vmatpush1.msra.mxu0 0.0
      %3557 = vmatprep.subr.mxu0 0.0
      %3558 = vmatpush1.msra.mxu0 0.0
      %3559 = vmatprep.subr.mxu0 0.0
      %3560 = vmatpush1.msra.mxu0 0.0
      %3561 = vmatprep.subr.mxu0 0.0
      %3562 = vmatpush1.msra.mxu0 0.0
      %3563 = vmatprep.subr.mxu0 0.0
      %3564 = vmatpush1.msra.mxu0 0.0
      %3565 = vmatprep.subr.mxu0 0.0
      %3566 = vmatpush1.msra.mxu0 0.0
      %3567 = vmatprep.subr.mxu0 0.0
      %3568 = vmatpush1.msra.mxu0 0.0
      %3569 = vmatprep.subr.mxu0 0.0
      %3570 = vmatpush1.msra.mxu0 0.0
      %3571 = vmatprep.subr.mxu0 0.0
      %3572 = vmatpush1.msra.mxu0 0.0
      %3573 = vmatprep.subr.mxu0 0.0
      %3574 = vmatpush1.msra.mxu0 0.0
      %3575 = vmatprep.subr.mxu0 0.0
      %3576 = vmatpush1.msra.mxu0 0.0
      %3577 = vmatprep.subr.mxu0 0.0
      %3578 = vmatpush1.msra.mxu0 0.0
      %3579 = vmatprep.subr.mxu0 0.0
      %3580 = vmatpush1.msra.mxu0 0.0
      %3581 = vmatprep.subr.mxu0 0.0
      %3582 = vmatpush1.msra.mxu0 0.0
      %3583 = vmatprep.subr.mxu0 0.0
      %3584 = vmatpush1.msra.mxu0 0.0
      %3585 = vmatprep.subr.mxu0 0.0
      %3586 = vmatpush1.msra.mxu0 0.0
      %3587 = vmatprep.subr.mxu0 0.0
      %3588 = vmatpush1.msra.mxu0 0.0
      %3589 = vmatprep.subr.mxu0 0.0
      %3590 = vmatpush1.msra.mxu0 0.0
      %3591 = vmatprep.subr.mxu0 0.0
      %3592 = vmatpush1.msra.mxu0 0.0
      %3593 = vmatprep.subr.mxu0 0.0
      %3594 = vmatpush1.msra.mxu0 0.0
      %3595 = vmatprep.mubr.f32.mxu0 0.0
      %3596 = vmatmul.mubr.f32.gmra.mrb[0].mxu0 %v3520
      %v3597 = vpop.f32.mrb[0].mxu0
      %v3598 = vadd.f32 0.0, %v3597
      %v3599 = vpop.f32.mrb[0].mxu0
      %v3600 = vadd.f32 0.0, %v3599
      %3601 = vmatprep.mubr.f32.mxu0 0.0
      %3602 = vmatmul.mubr.f32.gmra.mrb[0].mxu0 %v3523
      %v3603 = vpop.f32.mrb[0].mxu0
      %v3604 = vadd.f32 0.0, %v3603
      %v3605 = vpop.f32.mrb[0].mxu0
      %v3606 = vadd.f32 0.0, %v3605
      %3607 = vmatprep.mubr.f32.mxu0 0.0
      %3608 = vmatmul.mubr.f32.gmra.mrb[0].mxu0 %v3526
      %v3609 = vpop.f32.mrb[0].mxu0
      %v3610 = vadd.f32 0.0, %v3609
      %v3611 = vpop.f32.mrb[0].mxu0
      %v3612 = vadd.f32 0.0, %v3611
      %3613 = vmatprep.mubr.f32.mxu0 0.0
      %3614 = vmatmul.mubr.f32.gmra.mrb[0].mxu0 %v3529
      %v3615 = vpop.f32.mrb[0].mxu0
      %v3616 = vadd.f32 0.0, %v3615
      %v3617 = vpop.f32.mrb[0].mxu0
      %v3618 = vadd.f32 0.0, %v3617
      %3619 = vdwg.mxu0
      %3620 = vmatprep.subr.mxu0 %v3514
      %3621 = vmatpush1.msra.mxu0 %v3513
      %3622 = vmatprep.subr.mxu0 0.0
      %3623 = vmatpush1.msra.mxu0 0.0
      %3624 = vmatprep.subr.mxu0 0.0
      %3625 = vmatpush1.msra.mxu0 0.0
      %3626 = vmatprep.subr.mxu0 0.0
      %3627 = vmatpush1.msra.mxu0 0.0
      %3628 = vmatprep.subr.mxu0 0.0
      %3629 = vmatpush1.msra.mxu0 0.0
      %3630 = vmatprep.subr.mxu0 0.0
      %3631 = vmatpush1.msra.mxu0 0.0
      %3632 = vmatprep.subr.mxu0 0.0
      %3633 = vmatpush1.msra.mxu0 0.0
      %3634 = vmatprep.subr.mxu0 0.0
      %3635 = vmatpush1.msra.mxu0 0.0
      %3636 = vmatprep.subr.mxu0 0.0
      %3637 = vmatpush1.msra.mxu0 0.0
      %3638 = vmatprep.subr.mxu0 0.0
      %3639 = vmatpush1.msra.mxu0 0.0
      %3640 = vmatprep.subr.mxu0 0.0
      %3641 = vmatpush1.msra.mxu0 0.0
      %3642 = vmatprep.subr.mxu0 0.0
      %3643 = vmatpush1.msra.mxu0 0.0
      %3644 = vmatprep.subr.mxu0 0.0
      %3645 = vmatpush1.msra.mxu0 0.0
      %3646 = vmatprep.subr.mxu0 0.0
      %3647 = vmatpush1.msra.mxu0 0.0
      %3648 = vmatprep.subr.mxu0 0.0
      %3649 = vmatpush1.msra.mxu0 0.0
      %3650 = vmatprep.subr.mxu0 0.0
      %3651 = vmatpush1.msra.mxu0 0.0
      %3652 = vmatprep.subr.mxu0 0.0
      %3653 = vmatpush1.msra.mxu0 0.0
      %3654 = vmatprep.subr.mxu0 0.0
      %3655 = vmatpush1.msra.mxu0 0.0
      %3656 = vmatprep.subr.mxu0 0.0
      %3657 = vmatpush1.msra.mxu0 0.0
      %3658 = vmatprep.subr.mxu0 0.0
      %3659 = vmatpush1.msra.mxu0 0.0
      %3660 = vmatprep.subr.mxu0 0.0
      %3661 = vmatpush1.msra.mxu0 0.0
      %3662 = vmatprep.subr.mxu0 0.0
      %3663 = vmatpush1.msra.mxu0 0.0
      %3664 = vmatprep.subr.mxu0 0.0
      %3665 = vmatpush1.msra.mxu0 0.0
      %3666 = vmatprep.subr.mxu0 0.0
      %3667 = vmatpush1.msra.mxu0 0.0
      %3668 = vmatprep.subr.mxu0 0.0
      %3669 = vmatpush1.msra.mxu0 0.0
      %3670 = vmatprep.subr.mxu0 0.0
      %3671 = vmatpush1.msra.mxu0 0.0
      %3672 = vmatprep.subr.mxu0 0.0
      %3673 = vmatpush1.msra.mxu0 0.0
      %3674 = vmatprep.subr.mxu0 0.0
      %3675 = vmatpush1.msra.mxu0 0.0
      %3676 = vmatprep.subr.mxu0 0.0
      %3677 = vmatpush1.msra.mxu0 0.0
      %3678 = vmatprep.subr.mxu0 0.0
      %3679 = vmatpush1.msra.mxu0 0.0
      %3680 = vmatprep.subr.mxu0 0.0
      %3681 = vmatpush1.msra.mxu0 0.0
      %3682 = vmatprep.subr.mxu0 0.0
      %3683 = vmatpush1.msra.mxu0 0.0
      %3684 = vmatprep.mubr.f32.mxu0 0.0
      %3685 = vmatmul.mubr.f32.gmra.mrb[0].mxu0 %v3520
      %v3686 = vpop.f32.mrb[0].mxu0
      %v3687 = vadd.f32 0.0, %v3686
      %v3688 = vpop.f32.mrb[0].mxu0
      %v3689 = vadd.f32 0.0, %v3688
      %3690 = vmatprep.mubr.f32.mxu0 0.0
      %3691 = vmatmul.mubr.f32.gmra.mrb[0].mxu0 %v3523
      %v3692 = vpop.f32.mrb[0].mxu0
      %v3693 = vadd.f32 0.0, %v3692
      %v3694 = vpop.f32.mrb[0].mxu0
      %v3695 = vadd.f32 0.0, %v3694
      %3696 = vmatprep.mubr.f32.mxu0 0.0
      %3697 = vmatmul.mubr.f32.gmra.mrb[0].mxu0 %v3526
      %v3698 = vpop.f32.mrb[0].mxu0
      %v3699 = vadd.f32 0.0, %v3698
      %v3700 = vpop.f32.mrb[0].mxu0
      %v3701 = vadd.f32 0.0, %v3700
      %3702 = vmatprep.mubr.f32.mxu0 0.0
      %3703 = vmatmul.mubr.f32.gmra.mrb[0].mxu0 %v3529
      %v3704 = vpop.f32.mrb[0].mxu0
      %v3705 = vadd.f32 0.0, %v3704
      %v3706 = vpop.f32.mrb[0].mxu0
      %v3707 = vadd.f32 0.0, %v3706
      %3708 = vdwg.mxu0
      %v3709 = vadd.f32 %v3479, %v3598
      %v3710 = vadd.f32 %v3480, %v3600
      %v3711 = vadd.f32 %v3481, %v3687
      %v3712 = vadd.f32 %v3482, %v3689
      %v3713 = vadd.f32 %v3483, %v3604
      %v3714 = vadd.f32 %v3484, %v3606
      %v3715 = vadd.f32 %v3485, %v3693
      %v3716 = vadd.f32 %v3486, %v3695
      %v3717 = vadd.f32 %v3487, %v3610
      %v3718 = vadd.f32 %v3488, %v3612
      %v3719 = vadd.f32 %v3489, %v3699
      %v3720 = vadd.f32 %v3490, %v3701
      %v3721 = vadd.f32 %v3491, %v3616
      %v3722 = vadd.f32 %v3492, %v3618
      %v3723 = vadd.f32 %v3493, %v3705
      %v3724 = vadd.f32 %v3494, %v3707
      %s3725 = scalar_lea.vmem %s1, 480
      %v3726 = vld [vmem:[%s3725] sm:$0xff]
      %v3727 = vld [vmem:[%s3725 + $0x8] sm:$0xff]
      %v3728 = vld [vmem:[%s3725 + $0x10] sm:$0xff]
      %v3729 = vld [vmem:[%s3725 + $0x18] sm:$0xff]
      %3730 = vrot.lane.b32.xlu0 %v3260, 110
      %v3731 = vpop.permute.xlu0 %3730
      %3732 = vrot.lane.b32.xlu0 %v3261, 110
      %v3733 = vpop.permute.xlu0 %3732
      %3734 = vrot.lane.b32.xlu0 %v3262, 110
      %v3735 = vpop.permute.xlu0 %3734
      %3736 = vrot.lane.b32.xlu0 %v3263, 110
      %v3737 = vpop.permute.xlu0 %3736
      %3738 = vrot.lane.b32.xlu0 %v3264, 110
      %v3739 = vpop.permute.xlu0 %3738
      %vm3740 = vcmask 900096
      %v3741 = vsel %vm3740, %v3731, %v3733
      %v3742 = vsel %vm3740, %v3733, %v3735
      %v3743 = vsel %vm3740, %v3735, %v3737
      %v3744 = vsel %vm3740, %v3737, %v3739
      %v3750 = vsel %vm344, %v3726, 0
      %v3753 = vsel %vm344, %v3727, 0
      %v3756 = vsel %vm344, %v3728, 0
      %v3759 = vsel %vm344, %v3729, 0
      %3761 = vmatprep.subr.mxu0 %v3742
      %3762 = vmatpush1.msra.mxu0 %v3741
      %3763 = vmatprep.subr.mxu0 0.0
      %3764 = vmatpush1.msra.mxu0 0.0
      %3765 = vmatprep.subr.mxu0 0.0
      %3766 = vmatpush1.msra.mxu0 0.0
      %3767 = vmatprep.subr.mxu0 0.0
      %3768 = vmatpush1.msra.mxu0 0.0
      %3769 = vmatprep.subr.mxu0 0.0
      %3770 = vmatpush1.msra.mxu0 0.0
      %3771 = vmatprep.subr.mxu0 0.0
      %3772 = vmatpush1.msra.mxu0 0.0
      %3773 = vmatprep.subr.mxu0 0.0
      %3774 = vmatpush1.msra.mxu0 0.0
      %3775 = vmatprep.subr.mxu0 0.0
      %3776 = vmatpush1.msra.mxu0 0.0
      %3777 = vmatprep.subr.mxu0 0.0
      %3778 = vmatpush1.msra.mxu0 0.0
      %3779 = vmatprep.subr.mxu0 0.0
      %3780 = vmatpush1.msra.mxu0 0.0
      %3781 = vmatprep.subr.mxu0 0.0
      %3782 = vmatpush1.msra.mxu0 0.0
      %3783 = vmatprep.subr.mxu0 0.0
      %3784 = vmatpush1.msra.mxu0 0.0
      %3785 = vmatprep.subr.mxu0 0.0
      %3786 = vmatpush1.msra.mxu0 0.0
      %3787 = vmatprep.subr.mxu0 0.0
      %3788 = vmatpush1.msra.mxu0 0.0
      %3789 = vmatprep.subr.mxu0 0.0
      %3790 = vmatpush1.msra.mxu0 0.0
      %3791 = vmatprep.subr.mxu0 0.0
      %3792 = vmatpush1.msra.mxu0 0.0
      %3793 = vmatprep.subr.mxu0 0.0
      %3794 = vmatpush1.msra.mxu0 0.0
      %3795 = vmatprep.subr.mxu0 0.0
      %3796 = vmatpush1.msra.mxu0 0.0
      %3797 = vmatprep.subr.mxu0 0.0
      %3798 = vmatpush1.msra.mxu0 0.0
      %3799 = vmatprep.subr.mxu0 0.0
      %3800 = vmatpush1.msra.mxu0 0.0
      %3801 = vmatprep.subr.mxu0 0.0
      %3802 = vmatpush1.msra.mxu0 0.0
      %3803 = vmatprep.subr.mxu0 0.0
      %3804 = vmatpush1.msra.mxu0 0.0
      %3805 = vmatprep.subr.mxu0 0.0
      %3806 = vmatpush1.msra.mxu0 0.0
      %3807 = vmatprep.subr.mxu0 0.0
      %3808 = vmatpush1.msra.mxu0 0.0
      %3809 = vmatprep.subr.mxu0 0.0
      %3810 = vmatpush1.msra.mxu0 0.0
      %3811 = vmatprep.subr.mxu0 0.0
      %3812 = vmatpush1.msra.mxu0 0.0
      %3813 = vmatprep.subr.mxu0 0.0
      %3814 = vmatpush1.msra.mxu0 0.0
      %3815 = vmatprep.subr.mxu0 0.0
      %3816 = vmatpush1.msra.mxu0 0.0
      %3817 = vmatprep.subr.mxu0 0.0
      %3818 = vmatpush1.msra.mxu0 0.0
      %3819 = vmatprep.subr.mxu0 0.0
      %3820 = vmatpush1.msra.mxu0 0.0
      %3821 = vmatprep.subr.mxu0 0.0
      %3822 = vmatpush1.msra.mxu0 0.0
      %3823 = vmatprep.subr.mxu0 0.0
      %3824 = vmatpush1.msra.mxu0 0.0
      %3825 = vmatprep.mubr.f32.mxu0 0.0
      %3826 = vmatmul.mubr.f32.gmra.mrb[0].mxu0 %v3750
      %v3827 = vpop.f32.mrb[0].mxu0
      %v3828 = vadd.f32 0.0, %v3827
      %v3829 = vpop.f32.mrb[0].mxu0
      %v3830 = vadd.f32 0.0, %v3829
      %3831 = vmatprep.mubr.f32.mxu0 0.0
      %3832 = vmatmul.mubr.f32.gmra.mrb[0].mxu0 %v3753
      %v3833 = vpop.f32.mrb[0].mxu0
      %v3834 = vadd.f32 0.0, %v3833
      %v3835 = vpop.f32.mrb[0].mxu0
      %v3836 = vadd.f32 0.0, %v3835
      %3837 = vmatprep.mubr.f32.mxu0 0.0
      %3838 = vmatmul.mubr.f32.gmra.mrb[0].mxu0 %v3756
      %v3839 = vpop.f32.mrb[0].mxu0
      %v3840 = vadd.f32 0.0, %v3839
      %v3841 = vpop.f32.mrb[0].mxu0
      %v3842 = vadd.f32 0.0, %v3841
      %3843 = vmatprep.mubr.f32.mxu0 0.0
      %3844 = vmatmul.mubr.f32.gmra.mrb[0].mxu0 %v3759
      %v3845 = vpop.f32.mrb[0].mxu0
      %v3846 = vadd.f32 0.0, %v3845
      %v3847 = vpop.f32.mrb[0].mxu0
      %v3848 = vadd.f32 0.0, %v3847
      %3849 = vdwg.mxu0
      %3850 = vmatprep.subr.mxu0 %v3744
      %3851 = vmatpush1.msra.mxu0 %v3743
      %3852 = vmatprep.subr.mxu0 0.0
      %3853 = vmatpush1.msra.mxu0 0.0
      %3854 = vmatprep.subr.mxu0 0.0
      %3855 = vmatpush1.msra.mxu0 0.0
      %3856 = vmatprep.subr.mxu0 0.0
      %3857 = vmatpush1.msra.mxu0 0.0
      %3858 = vmatprep.subr.mxu0 0.0
      %3859 = vmatpush1.msra.mxu0 0.0
      %3860 = vmatprep.subr.mxu0 0.0
      %3861 = vmatpush1.msra.mxu0 0.0
      %3862 = vmatprep.subr.mxu0 0.0
      %3863 = vmatpush1.msra.mxu0 0.0
      %3864 = vmatprep.subr.mxu0 0.0
      %3865 = vmatpush1.msra.mxu0 0.0
      %3866 = vmatprep.subr.mxu0 0.0
      %3867 = vmatpush1.msra.mxu0 0.0
      %3868 = vmatprep.subr.mxu0 0.0
      %3869 = vmatpush1.msra.mxu0 0.0
      %3870 = vmatprep.subr.mxu0 0.0
      %3871 = vmatpush1.msra.mxu0 0.0
      %3872 = vmatprep.subr.mxu0 0.0
      %3873 = vmatpush1.msra.mxu0 0.0
      %3874 = vmatprep.subr.mxu0 0.0
      %3875 = vmatpush1.msra.mxu0 0.0
      %3876 = vmatprep.subr.mxu0 0.0
      %3877 = vmatpush1.msra.mxu0 0.0
      %3878 = vmatprep.subr.mxu0 0.0
      %3879 = vmatpush1.msra.mxu0 0.0
      %3880 = vmatprep.subr.mxu0 0.0
      %3881 = vmatpush1.msra.mxu0 0.0
      %3882 = vmatprep.subr.mxu0 0.0
      %3883 = vmatpush1.msra.mxu0 0.0
      %3884 = vmatprep.subr.mxu0 0.0
      %3885 = vmatpush1.msra.mxu0 0.0
      %3886 = vmatprep.subr.mxu0 0.0
      %3887 = vmatpush1.msra.mxu0 0.0
      %3888 = vmatprep.subr.mxu0 0.0
      %3889 = vmatpush1.msra.mxu0 0.0
      %3890 = vmatprep.subr.mxu0 0.0
      %3891 = vmatpush1.msra.mxu0 0.0
      %3892 = vmatprep.subr.mxu0 0.0
      %3893 = vmatpush1.msra.mxu0 0.0
      %3894 = vmatprep.subr.mxu0 0.0
      %3895 = vmatpush1.msra.mxu0 0.0
      %3896 = vmatprep.subr.mxu0 0.0
      %3897 = vmatpush1.msra.mxu0 0.0
      %3898 = vmatprep.subr.mxu0 0.0
      %3899 = vmatpush1.msra.mxu0 0.0
      %3900 = vmatprep.subr.mxu0 0.0
      %3901 = vmatpush1.msra.mxu0 0.0
      %3902 = vmatprep.subr.mxu0 0.0
      %3903 = vmatpush1.msra.mxu0 0.0
      %3904 = vmatprep.subr.mxu0 0.0
      %3905 = vmatpush1.msra.mxu0 0.0
      %3906 = vmatprep.subr.mxu0 0.0
      %3907 = vmatpush1.msra.mxu0 0.0
      %3908 = vmatprep.subr.mxu0 0.0
      %3909 = vmatpush1.msra.mxu0 0.0
      %3910 = vmatprep.subr.mxu0 0.0
      %3911 = vmatpush1.msra.mxu0 0.0
      %3912 = vmatprep.subr.mxu0 0.0
      %3913 = vmatpush1.msra.mxu0 0.0
      %3914 = vmatprep.mubr.f32.mxu0 0.0
      %3915 = vmatmul.mubr.f32.gmra.mrb[0].mxu0 %v3750
      %v3916 = vpop.f32.mrb[0].mxu0
      %v3917 = vadd.f32 0.0, %v3916
      %v3918 = vpop.f32.mrb[0].mxu0
      %v3919 = vadd.f32 0.0, %v3918
      %3920 = vmatprep.mubr.f32.mxu0 0.0
      %3921 = vmatmul.mubr.f32.gmra.mrb[0].mxu0 %v3753
      %v3922 = vpop.f32.mrb[0].mxu0
      %v3923 = vadd.f32 0.0, %v3922
      %v3924 = vpop.f32.mrb[0].mxu0
      %v3925 = vadd.f32 0.0, %v3924
      %3926 = vmatprep.mubr.f32.mxu0 0.0
      %3927 = vmatmul.mubr.f32.gmra.mrb[0].mxu0 %v3756
      %v3928 = vpop.f32.mrb[0].mxu0
      %v3929 = vadd.f32 0.0, %v3928
      %v3930 = vpop.f32.mrb[0].mxu0
      %v3931 = vadd.f32 0.0, %v3930
      %3932 = vmatprep.mubr.f32.mxu0 0.0
      %3933 = vmatmul.mubr.f32.gmra.mrb[0].mxu0 %v3759
      %v3934 = vpop.f32.mrb[0].mxu0
      %v3935 = vadd.f32 0.0, %v3934
      %v3936 = vpop.f32.mrb[0].mxu0
      %v3937 = vadd.f32 0.0, %v3936
      %3938 = vdwg.mxu0
      %v3939 = vadd.f32 %v3709, %v3828
      %v3940 = vadd.f32 %v3710, %v3830
      %v3941 = vadd.f32 %v3711, %v3917
      %v3942 = vadd.f32 %v3712, %v3919
      %v3943 = vadd.f32 %v3713, %v3834
      %v3944 = vadd.f32 %v3714, %v3836
      %v3945 = vadd.f32 %v3715, %v3923
      %v3946 = vadd.f32 %v3716, %v3925
      %v3947 = vadd.f32 %v3717, %v3840
      %v3948 = vadd.f32 %v3718, %v3842
      %v3949 = vadd.f32 %v3719, %v3929
      %v3950 = vadd.f32 %v3720, %v3931
      %v3951 = vadd.f32 %v3721, %v3846
      %v3952 = vadd.f32 %v3722, %v3848
      %v3953 = vadd.f32 %v3723, %v3935
      %v3954 = vadd.f32 %v3724, %v3937
      %s3955 = scalar_lea.vmem %s1, 512
      %v3956 = vld [vmem:[%s3955] sm:$0xff]
      %v3957 = vld [vmem:[%s3955 + $0x8] sm:$0xff]
      %v3958 = vld [vmem:[%s3955 + $0x10] sm:$0xff]
      %v3959 = vld [vmem:[%s3955 + $0x18] sm:$0xff]
      %3960 = vrot.lane.b32.xlu0 %v3260, 109
      %v3961 = vpop.permute.xlu0 %3960
      %3962 = vrot.lane.b32.xlu0 %v3261, 109
      %v3963 = vpop.permute.xlu0 %3962
      %3964 = vrot.lane.b32.xlu0 %v3262, 109
      %v3965 = vpop.permute.xlu0 %3964
      %3966 = vrot.lane.b32.xlu0 %v3263, 109
      %v3967 = vpop.permute.xlu0 %3966
      %3968 = vrot.lane.b32.xlu0 %v3264, 109
      %v3969 = vpop.permute.xlu0 %3968
      %vm3970 = vcmask 891904
      %v3971 = vsel %vm3970, %v3961, %v3963
      %v3972 = vsel %vm3970, %v3963, %v3965
      %v3973 = vsel %vm3970, %v3965, %v3967
      %v3974 = vsel %vm3970, %v3967, %v3969
      %v3980 = vsel %vm344, %v3956, 0
      %v3983 = vsel %vm344, %v3957, 0
      %v3986 = vsel %vm344, %v3958, 0
      %v3989 = vsel %vm344, %v3959, 0
      %3991 = vmatprep.subr.mxu0 %v3972
      %3992 = vmatpush1.msra.mxu0 %v3971
      %3993 = vmatprep.subr.mxu0 0.0
      %3994 = vmatpush1.msra.mxu0 0.0
      %3995 = vmatprep.subr.mxu0 0.0
      %3996 = vmatpush1.msra.mxu0 0.0
      %3997 = vmatprep.subr.mxu0 0.0
      %3998 = vmatpush1.msra.mxu0 0.0
      %3999 = vmatprep.subr.mxu0 0.0
      %4000 = vmatpush1.msra.mxu0 0.0
      %4001 = vmatprep.subr.mxu0 0.0
      %4002 = vmatpush1.msra.mxu0 0.0
      %4003 = vmatprep.subr.mxu0 0.0
      %4004 = vmatpush1.msra.mxu0 0.0
      %4005 = vmatprep.subr.mxu0 0.0
      %4006 = vmatpush1.msra.mxu0 0.0
      %4007 = vmatprep.subr.mxu0 0.0
      %4008 = vmatpush1.msra.mxu0 0.0
      %4009 = vmatprep.subr.mxu0 0.0
      %4010 = vmatpush1.msra.mxu0 0.0
      %4011 = vmatprep.subr.mxu0 0.0
      %4012 = vmatpush1.msra.mxu0 0.0
      %4013 = vmatprep.subr.mxu0 0.0
      %4014 = vmatpush1.msra.mxu0 0.0
      %4015 = vmatprep.subr.mxu0 0.0
      %4016 = vmatpush1.msra.mxu0 0.0
      %4017 = vmatprep.subr.mxu0 0.0
      %4018 = vmatpush1.msra.mxu0 0.0
      %4019 = vmatprep.subr.mxu0 0.0
      %4020 = vmatpush1.msra.mxu0 0.0
      %4021 = vmatprep.subr.mxu0 0.0
      %4022 = vmatpush1.msra.mxu0 0.0
      %4023 = vmatprep.subr.mxu0 0.0
      %4024 = vmatpush1.msra.mxu0 0.0
      %4025 = vmatprep.subr.mxu0 0.0
      %4026 = vmatpush1.msra.mxu0 0.0
      %4027 = vmatprep.subr.mxu0 0.0
      %4028 = vmatpush1.msra.mxu0 0.0
      %4029 = vmatprep.subr.mxu0 0.0
      %4030 = vmatpush1.msra.mxu0 0.0
      %4031 = vmatprep.subr.mxu0 0.0
      %4032 = vmatpush1.msra.mxu0 0.0
      %4033 = vmatprep.subr.mxu0 0.0
      %4034 = vmatpush1.msra.mxu0 0.0
      %4035 = vmatprep.subr.mxu0 0.0
      %4036 = vmatpush1.msra.mxu0 0.0
      %4037 = vmatprep.subr.mxu0 0.0
      %4038 = vmatpush1.msra.mxu0 0.0
      %4039 = vmatprep.subr.mxu0 0.0
      %4040 = vmatpush1.msra.mxu0 0.0
      %4041 = vmatprep.subr.mxu0 0.0
      %4042 = vmatpush1.msra.mxu0 0.0
      %4043 = vmatprep.subr.mxu0 0.0
      %4044 = vmatpush1.msra.mxu0 0.0
      %4045 = vmatprep.subr.mxu0 0.0
      %4046 = vmatpush1.msra.mxu0 0.0
      %4047 = vmatprep.subr.mxu0 0.0
      %4048 = vmatpush1.msra.mxu0 0.0
      %4049 = vmatprep.subr.mxu0 0.0
      %4050 = vmatpush1.msra.mxu0 0.0
      %4051 = vmatprep.subr.mxu0 0.0
      %4052 = vmatpush1.msra.mxu0 0.0
      %4053 = vmatprep.subr.mxu0 0.0
      %4054 = vmatpush1.msra.mxu0 0.0
      %4055 = vmatprep.mubr.f32.mxu0 0.0
      %4056 = vmatmul.mubr.f32.gmra.mrb[0].mxu0 %v3980
      %v4057 = vpop.f32.mrb[0].mxu0
      %v4058 = vadd.f32 0.0, %v4057
      %v4059 = vpop.f32.mrb[0].mxu0
      %v4060 = vadd.f32 0.0, %v4059
      %4061 = vmatprep.mubr.f32.mxu0 0.0
      %4062 = vmatmul.mubr.f32.gmra.mrb[0].mxu0 %v3983
      %v4063 = vpop.f32.mrb[0].mxu0
      %v4064 = vadd.f32 0.0, %v4063
      %v4065 = vpop.f32.mrb[0].mxu0
      %v4066 = vadd.f32 0.0, %v4065
      %4067 = vmatprep.mubr.f32.mxu0 0.0
      %4068 = vmatmul.mubr.f32.gmra.mrb[0].mxu0 %v3986
      %v4069 = vpop.f32.mrb[0].mxu0
      %v4070 = vadd.f32 0.0, %v4069
      %v4071 = vpop.f32.mrb[0].mxu0
      %v4072 = vadd.f32 0.0, %v4071
      %4073 = vmatprep.mubr.f32.mxu0 0.0
      %4074 = vmatmul.mubr.f32.gmra.mrb[0].mxu0 %v3989
      %v4075 = vpop.f32.mrb[0].mxu0
      %v4076 = vadd.f32 0.0, %v4075
      %v4077 = vpop.f32.mrb[0].mxu0
      %v4078 = vadd.f32 0.0, %v4077
      %4079 = vdwg.mxu0
      %4080 = vmatprep.subr.mxu0 %v3974
      %4081 = vmatpush1.msra.mxu0 %v3973
      %4082 = vmatprep.subr.mxu0 0.0
      %4083 = vmatpush1.msra.mxu0 0.0
      %4084 = vmatprep.subr.mxu0 0.0
      %4085 = vmatpush1.msra.mxu0 0.0
      %4086 = vmatprep.subr.mxu0 0.0
      %4087 = vmatpush1.msra.mxu0 0.0
      %4088 = vmatprep.subr.mxu0 0.0
      %4089 = vmatpush1.msra.mxu0 0.0
      %4090 = vmatprep.subr.mxu0 0.0
      %4091 = vmatpush1.msra.mxu0 0.0
      %4092 = vmatprep.subr.mxu0 0.0
      %4093 = vmatpush1.msra.mxu0 0.0
      %4094 = vmatprep.subr.mxu0 0.0
      %4095 = vmatpush1.msra.mxu0 0.0
      %4096 = vmatprep.subr.mxu0 0.0
      %4097 = vmatpush1.msra.mxu0 0.0
      %4098 = vmatprep.subr.mxu0 0.0
      %4099 = vmatpush1.msra.mxu0 0.0
      %4100 = vmatprep.subr.mxu0 0.0
      %4101 = vmatpush1.msra.mxu0 0.0
      %4102 = vmatprep.subr.mxu0 0.0
      %4103 = vmatpush1.msra.mxu0 0.0
      %4104 = vmatprep.subr.mxu0 0.0
      %4105 = vmatpush1.msra.mxu0 0.0
      %4106 = vmatprep.subr.mxu0 0.0
      %4107 = vmatpush1.msra.mxu0 0.0
      %4108 = vmatprep.subr.mxu0 0.0
      %4109 = vmatpush1.msra.mxu0 0.0
      %4110 = vmatprep.subr.mxu0 0.0
      %4111 = vmatpush1.msra.mxu0 0.0
      %4112 = vmatprep.subr.mxu0 0.0
      %4113 = vmatpush1.msra.mxu0 0.0
      %4114 = vmatprep.subr.mxu0 0.0
      %4115 = vmatpush1.msra.mxu0 0.0
      %4116 = vmatprep.subr.mxu0 0.0
      %4117 = vmatpush1.msra.mxu0 0.0
      %4118 = vmatprep.subr.mxu0 0.0
      %4119 = vmatpush1.msra.mxu0 0.0
      %4120 = vmatprep.subr.mxu0 0.0
      %4121 = vmatpush1.msra.mxu0 0.0
      %4122 = vmatprep.subr.mxu0 0.0
      %4123 = vmatpush1.msra.mxu0 0.0
      %4124 = vmatprep.subr.mxu0 0.0
      %4125 = vmatpush1.msra.mxu0 0.0
      %4126 = vmatprep.subr.mxu0 0.0
      %4127 = vmatpush1.msra.mxu0 0.0
      %4128 = vmatprep.subr.mxu0 0.0
      %4129 = vmatpush1.msra.mxu0 0.0
      %4130 = vmatprep.subr.mxu0 0.0
      %4131 = vmatpush1.msra.mxu0 0.0
      %4132 = vmatprep.subr.mxu0 0.0
      %4133 = vmatpush1.msra.mxu0 0.0
      %4134 = vmatprep.subr.mxu0 0.0
      %4135 = vmatpush1.msra.mxu0 0.0
      %4136 = vmatprep.subr.mxu0 0.0
      %4137 = vmatpush1.msra.mxu0 0.0
      %4138 = vmatprep.subr.mxu0 0.0
      %4139 = vmatpush1.msra.mxu0 0.0
      %4140 = vmatprep.subr.mxu0 0.0
      %4141 = vmatpush1.msra.mxu0 0.0
      %4142 = vmatprep.subr.mxu0 0.0
      %4143 = vmatpush1.msra.mxu0 0.0
      %4144 = vmatprep.mubr.f32.mxu0 0.0
      %4145 = vmatmul.mubr.f32.gmra.mrb[0].mxu0 %v3980
      %v4146 = vpop.f32.mrb[0].mxu0
      %v4147 = vadd.f32 0.0, %v4146
      %v4148 = vpop.f32.mrb[0].mxu0
      %v4149 = vadd.f32 0.0, %v4148
      %4150 = vmatprep.mubr.f32.mxu0 0.0
      %4151 = vmatmul.mubr.f32.gmra.mrb[0].mxu0 %v3983
      %v4152 = vpop.f32.mrb[0].mxu0
      %v4153 = vadd.f32 0.0, %v4152
      %v4154 = vpop.f32.mrb[0].mxu0
      %v4155 = vadd.f32 0.0, %v4154
      %4156 = vmatprep.mubr.f32.mxu0 0.0
      %4157 = vmatmul.mubr.f32.gmra.mrb[0].mxu0 %v3986
      %v4158 = vpop.f32.mrb[0].mxu0
      %v4159 = vadd.f32 0.0, %v4158
      %v4160 = vpop.f32.mrb[0].mxu0
      %v4161 = vadd.f32 0.0, %v4160
      %4162 = vmatprep.mubr.f32.mxu0 0.0
      %4163 = vmatmul.mubr.f32.gmra.mrb[0].mxu0 %v3989
      %v4164 = vpop.f32.mrb[0].mxu0
      %v4165 = vadd.f32 0.0, %v4164
      %v4166 = vpop.f32.mrb[0].mxu0
      %v4167 = vadd.f32 0.0, %v4166
      %4168 = vdwg.mxu0
      %v4169 = vadd.f32 %v3939, %v4058
      %v4170 = vadd.f32 %v3940, %v4060
      %v4171 = vadd.f32 %v3941, %v4147
      %v4172 = vadd.f32 %v3942, %v4149
      %v4173 = vadd.f32 %v3943, %v4064
      %v4174 = vadd.f32 %v3944, %v4066
      %v4175 = vadd.f32 %v3945, %v4153
      %v4176 = vadd.f32 %v3946, %v4155
      %v4177 = vadd.f32 %v3947, %v4070
      %v4178 = vadd.f32 %v3948, %v4072
      %v4179 = vadd.f32 %v3949, %v4159
      %v4180 = vadd.f32 %v3950, %v4161
      %v4181 = vadd.f32 %v3951, %v4076
      %v4182 = vadd.f32 %v3952, %v4078
      %v4183 = vadd.f32 %v3953, %v4165
      %v4184 = vadd.f32 %v3954, %v4167
      %s4185 = scalar_lea.vmem %s1, 544
      %v4186 = vld [vmem:[%s4185] sm:$0xff]
      %v4187 = vld [vmem:[%s4185 + $0x8] sm:$0xff]
      %v4188 = vld [vmem:[%s4185 + $0x10] sm:$0xff]
      %v4189 = vld [vmem:[%s4185 + $0x18] sm:$0xff]
      %4190 = vrot.lane.b32.xlu0 %v3260, 108
      %v4191 = vpop.permute.xlu0 %4190
      %4192 = vrot.lane.b32.xlu0 %v3261, 108
      %v4193 = vpop.permute.xlu0 %4192
      %4194 = vrot.lane.b32.xlu0 %v3262, 108
      %v4195 = vpop.permute.xlu0 %4194
      %4196 = vrot.lane.b32.xlu0 %v3263, 108
      %v4197 = vpop.permute.xlu0 %4196
      %4198 = vrot.lane.b32.xlu0 %v3264, 108
      %v4199 = vpop.permute.xlu0 %4198
      %vm4200 = vcmask 883712
      %v4201 = vsel %vm4200, %v4191, %v4193
      %v4202 = vsel %vm4200, %v4193, %v4195
      %v4203 = vsel %vm4200, %v4195, %v4197
      %v4204 = vsel %vm4200, %v4197, %v4199
      %v4210 = vsel %vm344, %v4186, 0
      %v4213 = vsel %vm344, %v4187, 0
      %v4216 = vsel %vm344, %v4188, 0
      %v4219 = vsel %vm344, %v4189, 0
      %4221 = vmatprep.subr.mxu0 %v4202
      %4222 = vmatpush1.msra.mxu0 %v4201
      %4223 = vmatprep.subr.mxu0 0.0
      %4224 = vmatpush1.msra.mxu0 0.0
      %4225 = vmatprep.subr.mxu0 0.0
      %4226 = vmatpush1.msra.mxu0 0.0
      %4227 = vmatprep.subr.mxu0 0.0
      %4228 = vmatpush1.msra.mxu0 0.0
      %4229 = vmatprep.subr.mxu0 0.0
      %4230 = vmatpush1.msra.mxu0 0.0
      %4231 = vmatprep.subr.mxu0 0.0
      %4232 = vmatpush1.msra.mxu0 0.0
      %4233 = vmatprep.subr.mxu0 0.0
      %4234 = vmatpush1.msra.mxu0 0.0
      %4235 = vmatprep.subr.mxu0 0.0
      %4236 = vmatpush1.msra.mxu0 0.0
      %4237 = vmatprep.subr.mxu0 0.0
      %4238 = vmatpush1.msra.mxu0 0.0
      %4239 = vmatprep.subr.mxu0 0.0
      %4240 = vmatpush1.msra.mxu0 0.0
      %4241 = vmatprep.subr.mxu0 0.0
      %4242 = vmatpush1.msra.mxu0 0.0
      %4243 = vmatprep.subr.mxu0 0.0
      %4244 = vmatpush1.msra.mxu0 0.0
      %4245 = vmatprep.subr.mxu0 0.0
      %4246 = vmatpush1.msra.mxu0 0.0
      %4247 = vmatprep.subr.mxu0 0.0
      %4248 = vmatpush1.msra.mxu0 0.0
      %4249 = vmatprep.subr.mxu0 0.0
      %4250 = vmatpush1.msra.mxu0 0.0
      %4251 = vmatprep.subr.mxu0 0.0
      %4252 = vmatpush1.msra.mxu0 0.0
      %4253 = vmatprep.subr.mxu0 0.0
      %4254 = vmatpush1.msra.mxu0 0.0
      %4255 = vmatprep.subr.mxu0 0.0
      %4256 = vmatpush1.msra.mxu0 0.0
      %4257 = vmatprep.subr.mxu0 0.0
      %4258 = vmatpush1.msra.mxu0 0.0
      %4259 = vmatprep.subr.mxu0 0.0
      %4260 = vmatpush1.msra.mxu0 0.0
      %4261 = vmatprep.subr.mxu0 0.0
      %4262 = vmatpush1.msra.mxu0 0.0
      %4263 = vmatprep.subr.mxu0 0.0
      %4264 = vmatpush1.msra.mxu0 0.0
      %4265 = vmatprep.subr.mxu0 0.0
      %4266 = vmatpush1.msra.mxu0 0.0
      %4267 = vmatprep.subr.mxu0 0.0
      %4268 = vmatpush1.msra.mxu0 0.0
      %4269 = vmatprep.subr.mxu0 0.0
      %4270 = vmatpush1.msra.mxu0 0.0
      %4271 = vmatprep.subr.mxu0 0.0
      %4272 = vmatpush1.msra.mxu0 0.0
      %4273 = vmatprep.subr.mxu0 0.0
      %4274 = vmatpush1.msra.mxu0 0.0
      %4275 = vmatprep.subr.mxu0 0.0
      %4276 = vmatpush1.msra.mxu0 0.0
      %4277 = vmatprep.subr.mxu0 0.0
      %4278 = vmatpush1.msra.mxu0 0.0
      %4279 = vmatprep.subr.mxu0 0.0
      %4280 = vmatpush1.msra.mxu0 0.0
      %4281 = vmatprep.subr.mxu0 0.0
      %4282 = vmatpush1.msra.mxu0 0.0
      %4283 = vmatprep.subr.mxu0 0.0
      %4284 = vmatpush1.msra.mxu0 0.0
      %4285 = vmatprep.mubr.f32.mxu0 0.0
      %4286 = vmatmul.mubr.f32.gmra.mrb[0].mxu0 %v4210
      %v4287 = vpop.f32.mrb[0].mxu0
      %v4288 = vadd.f32 0.0, %v4287
      %v4289 = vpop.f32.mrb[0].mxu0
      %v4290 = vadd.f32 0.0, %v4289
      %4291 = vmatprep.mubr.f32.mxu0 0.0
      %4292 = vmatmul.mubr.f32.gmra.mrb[0].mxu0 %v4213
      %v4293 = vpop.f32.mrb[0].mxu0
      %v4294 = vadd.f32 0.0, %v4293
      %v4295 = vpop.f32.mrb[0].mxu0
      %v4296 = vadd.f32 0.0, %v4295
      %4297 = vmatprep.mubr.f32.mxu0 0.0
      %4298 = vmatmul.mubr.f32.gmra.mrb[0].mxu0 %v4216
      %v4299 = vpop.f32.mrb[0].mxu0
      %v4300 = vadd.f32 0.0, %v4299
      %v4301 = vpop.f32.mrb[0].mxu0
      %v4302 = vadd.f32 0.0, %v4301
      %4303 = vmatprep.mubr.f32.mxu0 0.0
      %4304 = vmatmul.mubr.f32.gmra.mrb[0].mxu0 %v4219
      %v4305 = vpop.f32.mrb[0].mxu0
      %v4306 = vadd.f32 0.0, %v4305
      %v4307 = vpop.f32.mrb[0].mxu0
      %v4308 = vadd.f32 0.0, %v4307
      %4309 = vdwg.mxu0
      %4310 = vmatprep.subr.mxu0 %v4204
      %4311 = vmatpush1.msra.mxu0 %v4203
      %4312 = vmatprep.subr.mxu0 0.0
      %4313 = vmatpush1.msra.mxu0 0.0
      %4314 = vmatprep.subr.mxu0 0.0
      %4315 = vmatpush1.msra.mxu0 0.0
      %4316 = vmatprep.subr.mxu0 0.0
      %4317 = vmatpush1.msra.mxu0 0.0
      %4318 = vmatprep.subr.mxu0 0.0
      %4319 = vmatpush1.msra.mxu0 0.0
      %4320 = vmatprep.subr.mxu0 0.0
      %4321 = vmatpush1.msra.mxu0 0.0
      %4322 = vmatprep.subr.mxu0 0.0
      %4323 = vmatpush1.msra.mxu0 0.0
      %4324 = vmatprep.subr.mxu0 0.0
      %4325 = vmatpush1.msra.mxu0 0.0
      %4326 = vmatprep.subr.mxu0 0.0
      %4327 = vmatpush1.msra.mxu0 0.0
      %4328 = vmatprep.subr.mxu0 0.0
      %4329 = vmatpush1.msra.mxu0 0.0
      %4330 = vmatprep.subr.mxu0 0.0
      %4331 = vmatpush1.msra.mxu0 0.0
      %4332 = vmatprep.subr.mxu0 0.0
      %4333 = vmatpush1.msra.mxu0 0.0
      %4334 = vmatprep.subr.mxu0 0.0
      %4335 = vmatpush1.msra.mxu0 0.0
      %4336 = vmatprep.subr.mxu0 0.0
      %4337 = vmatpush1.msra.mxu0 0.0
      %4338 = vmatprep.subr.mxu0 0.0
      %4339 = vmatpush1.msra.mxu0 0.0
      %4340 = vmatprep.subr.mxu0 0.0
      %4341 = vmatpush1.msra.mxu0 0.0
      %4342 = vmatprep.subr.mxu0 0.0
      %4343 = vmatpush1.msra.mxu0 0.0
      %4344 = vmatprep.subr.mxu0 0.0
      %4345 = vmatpush1.msra.mxu0 0.0
      %4346 = vmatprep.subr.mxu0 0.0
      %4347 = vmatpush1.msra.mxu0 0.0
      %4348 = vmatprep.subr.mxu0 0.0
      %4349 = vmatpush1.msra.mxu0 0.0
      %4350 = vmatprep.subr.mxu0 0.0
      %4351 = vmatpush1.msra.mxu0 0.0
      %4352 = vmatprep.subr.mxu0 0.0
      %4353 = vmatpush1.msra.mxu0 0.0
      %4354 = vmatprep.subr.mxu0 0.0
      %4355 = vmatpush1.msra.mxu0 0.0
      %4356 = vmatprep.subr.mxu0 0.0
      %4357 = vmatpush1.msra.mxu0 0.0
      %4358 = vmatprep.subr.mxu0 0.0
      %4359 = vmatpush1.msra.mxu0 0.0
      %4360 = vmatprep.subr.mxu0 0.0
      %4361 = vmatpush1.msra.mxu0 0.0
      %4362 = vmatprep.subr.mxu0 0.0
      %4363 = vmatpush1.msra.mxu0 0.0
      %4364 = vmatprep.subr.mxu0 0.0
      %4365 = vmatpush1.msra.mxu0 0.0
      %4366 = vmatprep.subr.mxu0 0.0
      %4367 = vmatpush1.msra.mxu0 0.0
      %4368 = vmatprep.subr.mxu0 0.0
      %4369 = vmatpush1.msra.mxu0 0.0
      %4370 = vmatprep.subr.mxu0 0.0
      %4371 = vmatpush1.msra.mxu0 0.0
      %4372 = vmatprep.subr.mxu0 0.0
      %4373 = vmatpush1.msra.mxu0 0.0
      %4374 = vmatprep.mubr.f32.mxu0 0.0
      %4375 = vmatmul.mubr.f32.gmra.mrb[0].mxu0 %v4210
      %v4376 = vpop.f32.mrb[0].mxu0
      %v4377 = vadd.f32 0.0, %v4376
      %v4378 = vpop.f32.mrb[0].mxu0
      %v4379 = vadd.f32 0.0, %v4378
      %4380 = vmatprep.mubr.f32.mxu0 0.0
      %4381 = vmatmul.mubr.f32.gmra.mrb[0].mxu0 %v4213
      %v4382 = vpop.f32.mrb[0].mxu0
      %v4383 = vadd.f32 0.0, %v4382
      %v4384 = vpop.f32.mrb[0].mxu0
      %v4385 = vadd.f32 0.0, %v4384
      %4386 = vmatprep.mubr.f32.mxu0 0.0
      %4387 = vmatmul.mubr.f32.gmra.mrb[0].mxu0 %v4216
      %v4388 = vpop.f32.mrb[0].mxu0
      %v4389 = vadd.f32 0.0, %v4388
      %v4390 = vpop.f32.mrb[0].mxu0
      %v4391 = vadd.f32 0.0, %v4390
      %4392 = vmatprep.mubr.f32.mxu0 0.0
      %4393 = vmatmul.mubr.f32.gmra.mrb[0].mxu0 %v4219
      %v4394 = vpop.f32.mrb[0].mxu0
      %v4395 = vadd.f32 0.0, %v4394
      %v4396 = vpop.f32.mrb[0].mxu0
      %v4397 = vadd.f32 0.0, %v4396
      %4398 = vdwg.mxu0
      %v4399 = vadd.f32 %v4169, %v4288
      %v4400 = vadd.f32 %v4170, %v4290
      %v4401 = vadd.f32 %v4171, %v4377
      %v4402 = vadd.f32 %v4172, %v4379
      %v4403 = vadd.f32 %v4173, %v4294
      %v4404 = vadd.f32 %v4174, %v4296
      %v4405 = vadd.f32 %v4175, %v4383
      %v4406 = vadd.f32 %v4176, %v4385
      %v4407 = vadd.f32 %v4177, %v4300
      %v4408 = vadd.f32 %v4178, %v4302
      %v4409 = vadd.f32 %v4179, %v4389
      %v4410 = vadd.f32 %v4180, %v4391
      %v4411 = vadd.f32 %v4181, %v4306
      %v4412 = vadd.f32 %v4182, %v4308
      %v4413 = vadd.f32 %v4183, %v4395
      %v4414 = vadd.f32 %v4184, %v4397
      %s4415 = scalar_lea.vmem %s1, 576
      %v4416 = vld [vmem:[%s4415] sm:$0xff]
      %v4417 = vld [vmem:[%s4415 + $0x8] sm:$0xff]
      %v4418 = vld [vmem:[%s4415 + $0x10] sm:$0xff]
      %v4419 = vld [vmem:[%s4415 + $0x18] sm:$0xff]
      %4420 = vrot.lane.b32.xlu0 %v3260, 107
      %v4421 = vpop.permute.xlu0 %4420
      %4422 = vrot.lane.b32.xlu0 %v3261, 107
      %v4423 = vpop.permute.xlu0 %4422
      %4424 = vrot.lane.b32.xlu0 %v3262, 107
      %v4425 = vpop.permute.xlu0 %4424
      %4426 = vrot.lane.b32.xlu0 %v3263, 107
      %v4427 = vpop.permute.xlu0 %4426
      %4428 = vrot.lane.b32.xlu0 %v3264, 107
      %v4429 = vpop.permute.xlu0 %4428
      %vm4430 = vcmask 875520
      %v4431 = vsel %vm4430, %v4421, %v4423
      %v4432 = vsel %vm4430, %v4423, %v4425
      %v4433 = vsel %vm4430, %v4425, %v4427
      %v4434 = vsel %vm4430, %v4427, %v4429
      %v4440 = vsel %vm344, %v4416, 0
      %v4443 = vsel %vm344, %v4417, 0
      %v4446 = vsel %vm344, %v4418, 0
      %v4449 = vsel %vm344, %v4419, 0
      %4451 = vmatprep.subr.mxu0 %v4432
      %4452 = vmatpush1.msra.mxu0 %v4431
      %4453 = vmatprep.subr.mxu0 0.0
      %4454 = vmatpush1.msra.mxu0 0.0
      %4455 = vmatprep.subr.mxu0 0.0
      %4456 = vmatpush1.msra.mxu0 0.0
      %4457 = vmatprep.subr.mxu0 0.0
      %4458 = vmatpush1.msra.mxu0 0.0
      %4459 = vmatprep.subr.mxu0 0.0
      %4460 = vmatpush1.msra.mxu0 0.0
      %4461 = vmatprep.subr.mxu0 0.0
      %4462 = vmatpush1.msra.mxu0 0.0
      %4463 = vmatprep.subr.mxu0 0.0
      %4464 = vmatpush1.msra.mxu0 0.0
      %4465 = vmatprep.subr.mxu0 0.0
      %4466 = vmatpush1.msra.mxu0 0.0
      %4467 = vmatprep.subr.mxu0 0.0
      %4468 = vmatpush1.msra.mxu0 0.0
      %4469 = vmatprep.subr.mxu0 0.0
      %4470 = vmatpush1.msra.mxu0 0.0
      %4471 = vmatprep.subr.mxu0 0.0
      %4472 = vmatpush1.msra.mxu0 0.0
      %4473 = vmatprep.subr.mxu0 0.0
      %4474 = vmatpush1.msra.mxu0 0.0
      %4475 = vmatprep.subr.mxu0 0.0
      %4476 = vmatpush1.msra.mxu0 0.0
      %4477 = vmatprep.subr.mxu0 0.0
      %4478 = vmatpush1.msra.mxu0 0.0
      %4479 = vmatprep.subr.mxu0 0.0
      %4480 = vmatpush1.msra.mxu0 0.0
      %4481 = vmatprep.subr.mxu0 0.0
      %4482 = vmatpush1.msra.mxu0 0.0
      %4483 = vmatprep.subr.mxu0 0.0
      %4484 = vmatpush1.msra.mxu0 0.0
      %4485 = vmatprep.subr.mxu0 0.0
      %4486 = vmatpush1.msra.mxu0 0.0
      %4487 = vmatprep.subr.mxu0 0.0
      %4488 = vmatpush1.msra.mxu0 0.0
      %4489 = vmatprep.subr.mxu0 0.0
      %4490 = vmatpush1.msra.mxu0 0.0
      %4491 = vmatprep.subr.mxu0 0.0
      %4492 = vmatpush1.msra.mxu0 0.0
      %4493 = vmatprep.subr.mxu0 0.0
      %4494 = vmatpush1.msra.mxu0 0.0
      %4495 = vmatprep.subr.mxu0 0.0
      %4496 = vmatpush1.msra.mxu0 0.0
      %4497 = vmatprep.subr.mxu0 0.0
      %4498 = vmatpush1.msra.mxu0 0.0
      %4499 = vmatprep.subr.mxu0 0.0
      %4500 = vmatpush1.msra.mxu0 0.0
      %4501 = vmatprep.subr.mxu0 0.0
      %4502 = vmatpush1.msra.mxu0 0.0
      %4503 = vmatprep.subr.mxu0 0.0
      %4504 = vmatpush1.msra.mxu0 0.0
      %4505 = vmatprep.subr.mxu0 0.0
      %4506 = vmatpush1.msra.mxu0 0.0
      %4507 = vmatprep.subr.mxu0 0.0
      %4508 = vmatpush1.msra.mxu0 0.0
      %4509 = vmatprep.subr.mxu0 0.0
      %4510 = vmatpush1.msra.mxu0 0.0
      %4511 = vmatprep.subr.mxu0 0.0
      %4512 = vmatpush1.msra.mxu0 0.0
      %4513 = vmatprep.subr.mxu0 0.0
      %4514 = vmatpush1.msra.mxu0 0.0
      %4515 = vmatprep.mubr.f32.mxu0 0.0
      %4516 = vmatmul.mubr.f32.gmra.mrb[0].mxu0 %v4440
      %v4517 = vpop.f32.mrb[0].mxu0
      %v4518 = vadd.f32 0.0, %v4517
      %v4519 = vpop.f32.mrb[0].mxu0
      %v4520 = vadd.f32 0.0, %v4519
      %4521 = vmatprep.mubr.f32.mxu0 0.0
      %4522 = vmatmul.mubr.f32.gmra.mrb[0].mxu0 %v4443
      %v4523 = vpop.f32.mrb[0].mxu0
      %v4524 = vadd.f32 0.0, %v4523
      %v4525 = vpop.f32.mrb[0].mxu0
      %v4526 = vadd.f32 0.0, %v4525
      %4527 = vmatprep.mubr.f32.mxu0 0.0
      %4528 = vmatmul.mubr.f32.gmra.mrb[0].mxu0 %v4446
      %v4529 = vpop.f32.mrb[0].mxu0
      %v4530 = vadd.f32 0.0, %v4529
      %v4531 = vpop.f32.mrb[0].mxu0
      %v4532 = vadd.f32 0.0, %v4531
      %4533 = vmatprep.mubr.f32.mxu0 0.0
      %4534 = vmatmul.mubr.f32.gmra.mrb[0].mxu0 %v4449
      %v4535 = vpop.f32.mrb[0].mxu0
      %v4536 = vadd.f32 0.0, %v4535
      %v4537 = vpop.f32.mrb[0].mxu0
      %v4538 = vadd.f32 0.0, %v4537
      %4539 = vdwg.mxu0
      %4540 = vmatprep.subr.mxu0 %v4434
      %4541 = vmatpush1.msra.mxu0 %v4433
      %4542 = vmatprep.subr.mxu0 0.0
      %4543 = vmatpush1.msra.mxu0 0.0
      %4544 = vmatprep.subr.mxu0 0.0
      %4545 = vmatpush1.msra.mxu0 0.0
      %4546 = vmatprep.subr.mxu0 0.0
      %4547 = vmatpush1.msra.mxu0 0.0
      %4548 = vmatprep.subr.mxu0 0.0
      %4549 = vmatpush1.msra.mxu0 0.0
      %4550 = vmatprep.subr.mxu0 0.0
      %4551 = vmatpush1.msra.mxu0 0.0
      %4552 = vmatprep.subr.mxu0 0.0
      %4553 = vmatpush1.msra.mxu0 0.0
      %4554 = vmatprep.subr.mxu0 0.0
      %4555 = vmatpush1.msra.mxu0 0.0
      %4556 = vmatprep.subr.mxu0 0.0
      %4557 = vmatpush1.msra.mxu0 0.0
      %4558 = vmatprep.subr.mxu0 0.0
      %4559 = vmatpush1.msra.mxu0 0.0
      %4560 = vmatprep.subr.mxu0 0.0
      %4561 = vmatpush1.msra.mxu0 0.0
      %4562 = vmatprep.subr.mxu0 0.0
      %4563 = vmatpush1.msra.mxu0 0.0
      %4564 = vmatprep.subr.mxu0 0.0
      %4565 = vmatpush1.msra.mxu0 0.0
      %4566 = vmatprep.subr.mxu0 0.0
      %4567 = vmatpush1.msra.mxu0 0.0
      %4568 = vmatprep.subr.mxu0 0.0
      %4569 = vmatpush1.msra.mxu0 0.0
      %4570 = vmatprep.subr.mxu0 0.0
      %4571 = vmatpush1.msra.mxu0 0.0
      %4572 = vmatprep.subr.mxu0 0.0
      %4573 = vmatpush1.msra.mxu0 0.0
      %4574 = vmatprep.subr.mxu0 0.0
      %4575 = vmatpush1.msra.mxu0 0.0
      %4576 = vmatprep.subr.mxu0 0.0
      %4577 = vmatpush1.msra.mxu0 0.0
      %4578 = vmatprep.subr.mxu0 0.0
      %4579 = vmatpush1.msra.mxu0 0.0
      %4580 = vmatprep.subr.mxu0 0.0
      %4581 = vmatpush1.msra.mxu0 0.0
      %4582 = vmatprep.subr.mxu0 0.0
      %4583 = vmatpush1.msra.mxu0 0.0
      %4584 = vmatprep.subr.mxu0 0.0
      %4585 = vmatpush1.msra.mxu0 0.0
      %4586 = vmatprep.subr.mxu0 0.0
      %4587 = vmatpush1.msra.mxu0 0.0
      %4588 = vmatprep.subr.mxu0 0.0
      %4589 = vmatpush1.msra.mxu0 0.0
      %4590 = vmatprep.subr.mxu0 0.0
      %4591 = vmatpush1.msra.mxu0 0.0
      %4592 = vmatprep.subr.mxu0 0.0
      %4593 = vmatpush1.msra.mxu0 0.0
      %4594 = vmatprep.subr.mxu0 0.0
      %4595 = vmatpush1.msra.mxu0 0.0
      %4596 = vmatprep.subr.mxu0 0.0
      %4597 = vmatpush1.msra.mxu0 0.0
      %4598 = vmatprep.subr.mxu0 0.0
      %4599 = vmatpush1.msra.mxu0 0.0
      %4600 = vmatprep.subr.mxu0 0.0
      %4601 = vmatpush1.msra.mxu0 0.0
      %4602 = vmatprep.subr.mxu0 0.0
      %4603 = vmatpush1.msra.mxu0 0.0
      %4604 = vmatprep.mubr.f32.mxu0 0.0
      %4605 = vmatmul.mubr.f32.gmra.mrb[0].mxu0 %v4440
      %v4606 = vpop.f32.mrb[0].mxu0
      %v4607 = vadd.f32 0.0, %v4606
      %v4608 = vpop.f32.mrb[0].mxu0
      %v4609 = vadd.f32 0.0, %v4608
      %4610 = vmatprep.mubr.f32.mxu0 0.0
      %4611 = vmatmul.mubr.f32.gmra.mrb[0].mxu0 %v4443
      %v4612 = vpop.f32.mrb[0].mxu0
      %v4613 = vadd.f32 0.0, %v4612
      %v4614 = vpop.f32.mrb[0].mxu0
      %v4615 = vadd.f32 0.0, %v4614
      %4616 = vmatprep.mubr.f32.mxu0 0.0
      %4617 = vmatmul.mubr.f32.gmra.mrb[0].mxu0 %v4446
      %v4618 = vpop.f32.mrb[0].mxu0
      %v4619 = vadd.f32 0.0, %v4618
      %v4620 = vpop.f32.mrb[0].mxu0
      %v4621 = vadd.f32 0.0, %v4620
      %4622 = vmatprep.mubr.f32.mxu0 0.0
      %4623 = vmatmul.mubr.f32.gmra.mrb[0].mxu0 %v4449
      %v4624 = vpop.f32.mrb[0].mxu0
      %v4625 = vadd.f32 0.0, %v4624
      %v4626 = vpop.f32.mrb[0].mxu0
      %v4627 = vadd.f32 0.0, %v4626
      %4628 = vdwg.mxu0
      %v4629 = vadd.f32 %v4399, %v4518
      %v4630 = vadd.f32 %v4400, %v4520
      %v4631 = vadd.f32 %v4401, %v4607
      %v4632 = vadd.f32 %v4402, %v4609
      %v4633 = vadd.f32 %v4403, %v4524
      %v4634 = vadd.f32 %v4404, %v4526
      %v4635 = vadd.f32 %v4405, %v4613
      %v4636 = vadd.f32 %v4406, %v4615
      %v4637 = vadd.f32 %v4407, %v4530
      %v4638 = vadd.f32 %v4408, %v4532
      %v4639 = vadd.f32 %v4409, %v4619
      %v4640 = vadd.f32 %v4410, %v4621
      %v4641 = vadd.f32 %v4411, %v4536
      %v4642 = vadd.f32 %v4412, %v4538
      %v4643 = vadd.f32 %v4413, %v4625
      %v4644 = vadd.f32 %v4414, %v4627
      %s4645 = scalar_lea.vmem %s1, 608
      %v4646 = vld [vmem:[%s4645] sm:$0xff]
      %v4647 = vld [vmem:[%s4645 + $0x8] sm:$0xff]
      %v4648 = vld [vmem:[%s4645 + $0x10] sm:$0xff]
      %v4649 = vld [vmem:[%s4645 + $0x18] sm:$0xff]
      %4650 = vrot.lane.b32.xlu0 %v3260, 106
      %v4651 = vpop.permute.xlu0 %4650
      %4652 = vrot.lane.b32.xlu0 %v3261, 106
      %v4653 = vpop.permute.xlu0 %4652
      %4654 = vrot.lane.b32.xlu0 %v3262, 106
      %v4655 = vpop.permute.xlu0 %4654
      %4656 = vrot.lane.b32.xlu0 %v3263, 106
      %v4657 = vpop.permute.xlu0 %4656
      %4658 = vrot.lane.b32.xlu0 %v3264, 106
      %v4659 = vpop.permute.xlu0 %4658
      %vm4660 = vcmask 867328
      %v4661 = vsel %vm4660, %v4651, %v4653
      %v4662 = vsel %vm4660, %v4653, %v4655
      %v4663 = vsel %vm4660, %v4655, %v4657
      %v4664 = vsel %vm4660, %v4657, %v4659
      %v4670 = vsel %vm344, %v4646, 0
      %v4673 = vsel %vm344, %v4647, 0
      %v4676 = vsel %vm344, %v4648, 0
      %v4679 = vsel %vm344, %v4649, 0
      %4681 = vmatprep.subr.mxu0 %v4662
      %4682 = vmatpush1.msra.mxu0 %v4661
      %4683 = vmatprep.subr.mxu0 0.0
      %4684 = vmatpush1.msra.mxu0 0.0
      %4685 = vmatprep.subr.mxu0 0.0
      %4686 = vmatpush1.msra.mxu0 0.0
      %4687 = vmatprep.subr.mxu0 0.0
      %4688 = vmatpush1.msra.mxu0 0.0
      %4689 = vmatprep.subr.mxu0 0.0
      %4690 = vmatpush1.msra.mxu0 0.0
      %4691 = vmatprep.subr.mxu0 0.0
      %4692 = vmatpush1.msra.mxu0 0.0
      %4693 = vmatprep.subr.mxu0 0.0
      %4694 = vmatpush1.msra.mxu0 0.0
      %4695 = vmatprep.subr.mxu0 0.0
      %4696 = vmatpush1.msra.mxu0 0.0
      %4697 = vmatprep.subr.mxu0 0.0
      %4698 = vmatpush1.msra.mxu0 0.0
      %4699 = vmatprep.subr.mxu0 0.0
      %4700 = vmatpush1.msra.mxu0 0.0
      %4701 = vmatprep.subr.mxu0 0.0
      %4702 = vmatpush1.msra.mxu0 0.0
      %4703 = vmatprep.subr.mxu0 0.0
      %4704 = vmatpush1.msra.mxu0 0.0
      %4705 = vmatprep.subr.mxu0 0.0
      %4706 = vmatpush1.msra.mxu0 0.0
      %4707 = vmatprep.subr.mxu0 0.0
      %4708 = vmatpush1.msra.mxu0 0.0
      %4709 = vmatprep.subr.mxu0 0.0
      %4710 = vmatpush1.msra.mxu0 0.0
      %4711 = vmatprep.subr.mxu0 0.0
      %4712 = vmatpush1.msra.mxu0 0.0
      %4713 = vmatprep.subr.mxu0 0.0
      %4714 = vmatpush1.msra.mxu0 0.0
      %4715 = vmatprep.subr.mxu0 0.0
      %4716 = vmatpush1.msra.mxu0 0.0
      %4717 = vmatprep.subr.mxu0 0.0
      %4718 = vmatpush1.msra.mxu0 0.0
      %4719 = vmatprep.subr.mxu0 0.0
      %4720 = vmatpush1.msra.mxu0 0.0
      %4721 = vmatprep.subr.mxu0 0.0
      %4722 = vmatpush1.msra.mxu0 0.0
      %4723 = vmatprep.subr.mxu0 0.0
      %4724 = vmatpush1.msra.mxu0 0.0
      %4725 = vmatprep.subr.mxu0 0.0
      %4726 = vmatpush1.msra.mxu0 0.0
      %4727 = vmatprep.subr.mxu0 0.0
      %4728 = vmatpush1.msra.mxu0 0.0
      %4729 = vmatprep.subr.mxu0 0.0
      %4730 = vmatpush1.msra.mxu0 0.0
      %4731 = vmatprep.subr.mxu0 0.0
      %4732 = vmatpush1.msra.mxu0 0.0
      %4733 = vmatprep.subr.mxu0 0.0
      %4734 = vmatpush1.msra.mxu0 0.0
      %4735 = vmatprep.subr.mxu0 0.0
      %4736 = vmatpush1.msra.mxu0 0.0
      %4737 = vmatprep.subr.mxu0 0.0
      %4738 = vmatpush1.msra.mxu0 0.0
      %4739 = vmatprep.subr.mxu0 0.0
      %4740 = vmatpush1.msra.mxu0 0.0
      %4741 = vmatprep.subr.mxu0 0.0
      %4742 = vmatpush1.msra.mxu0 0.0
      %4743 = vmatprep.subr.mxu0 0.0
      %4744 = vmatpush1.msra.mxu0 0.0
      %4745 = vmatprep.mubr.f32.mxu0 0.0
      %4746 = vmatmul.mubr.f32.gmra.mrb[0].mxu0 %v4670
      %v4747 = vpop.f32.mrb[0].mxu0
      %v4748 = vadd.f32 0.0, %v4747
      %v4749 = vpop.f32.mrb[0].mxu0
      %v4750 = vadd.f32 0.0, %v4749
      %4751 = vmatprep.mubr.f32.mxu0 0.0
      %4752 = vmatmul.mubr.f32.gmra.mrb[0].mxu0 %v4673
      %v4753 = vpop.f32.mrb[0].mxu0
      %v4754 = vadd.f32 0.0, %v4753
      %v4755 = vpop.f32.mrb[0].mxu0
      %v4756 = vadd.f32 0.0, %v4755
      %4757 = vmatprep.mubr.f32.mxu0 0.0
      %4758 = vmatmul.mubr.f32.gmra.mrb[0].mxu0 %v4676
      %v4759 = vpop.f32.mrb[0].mxu0
      %v4760 = vadd.f32 0.0, %v4759
      %v4761 = vpop.f32.mrb[0].mxu0
      %v4762 = vadd.f32 0.0, %v4761
      %4763 = vmatprep.mubr.f32.mxu0 0.0
      %4764 = vmatmul.mubr.f32.gmra.mrb[0].mxu0 %v4679
      %v4765 = vpop.f32.mrb[0].mxu0
      %v4766 = vadd.f32 0.0, %v4765
      %v4767 = vpop.f32.mrb[0].mxu0
      %v4768 = vadd.f32 0.0, %v4767
      %4769 = vdwg.mxu0
      %4770 = vmatprep.subr.mxu0 %v4664
      %4771 = vmatpush1.msra.mxu0 %v4663
      %4772 = vmatprep.subr.mxu0 0.0
      %4773 = vmatpush1.msra.mxu0 0.0
      %4774 = vmatprep.subr.mxu0 0.0
      %4775 = vmatpush1.msra.mxu0 0.0
      %4776 = vmatprep.subr.mxu0 0.0
      %4777 = vmatpush1.msra.mxu0 0.0
      %4778 = vmatprep.subr.mxu0 0.0
      %4779 = vmatpush1.msra.mxu0 0.0
      %4780 = vmatprep.subr.mxu0 0.0
      %4781 = vmatpush1.msra.mxu0 0.0
      %4782 = vmatprep.subr.mxu0 0.0
      %4783 = vmatpush1.msra.mxu0 0.0
      %4784 = vmatprep.subr.mxu0 0.0
      %4785 = vmatpush1.msra.mxu0 0.0
      %4786 = vmatprep.subr.mxu0 0.0
      %4787 = vmatpush1.msra.mxu0 0.0
      %4788 = vmatprep.subr.mxu0 0.0
      %4789 = vmatpush1.msra.mxu0 0.0
      %4790 = vmatprep.subr.mxu0 0.0
      %4791 = vmatpush1.msra.mxu0 0.0
      %4792 = vmatprep.subr.mxu0 0.0
      %4793 = vmatpush1.msra.mxu0 0.0
      %4794 = vmatprep.subr.mxu0 0.0
      %4795 = vmatpush1.msra.mxu0 0.0
      %4796 = vmatprep.subr.mxu0 0.0
      %4797 = vmatpush1.msra.mxu0 0.0
      %4798 = vmatprep.subr.mxu0 0.0
      %4799 = vmatpush1.msra.mxu0 0.0
      %4800 = vmatprep.subr.mxu0 0.0
      %4801 = vmatpush1.msra.mxu0 0.0
      %4802 = vmatprep.subr.mxu0 0.0
      %4803 = vmatpush1.msra.mxu0 0.0
      %4804 = vmatprep.subr.mxu0 0.0
      %4805 = vmatpush1.msra.mxu0 0.0
      %4806 = vmatprep.subr.mxu0 0.0
      %4807 = vmatpush1.msra.mxu0 0.0
      %4808 = vmatprep.subr.mxu0 0.0
      %4809 = vmatpush1.msra.mxu0 0.0
      %4810 = vmatprep.subr.mxu0 0.0
      %4811 = vmatpush1.msra.mxu0 0.0
      %4812 = vmatprep.subr.mxu0 0.0
      %4813 = vmatpush1.msra.mxu0 0.0
      %4814 = vmatprep.subr.mxu0 0.0
      %4815 = vmatpush1.msra.mxu0 0.0
      %4816 = vmatprep.subr.mxu0 0.0
      %4817 = vmatpush1.msra.mxu0 0.0
      %4818 = vmatprep.subr.mxu0 0.0
      %4819 = vmatpush1.msra.mxu0 0.0
      %4820 = vmatprep.subr.mxu0 0.0
      %4821 = vmatpush1.msra.mxu0 0.0
      %4822 = vmatprep.subr.mxu0 0.0
      %4823 = vmatpush1.msra.mxu0 0.0
      %4824 = vmatprep.subr.mxu0 0.0
      %4825 = vmatpush1.msra.mxu0 0.0
      %4826 = vmatprep.subr.mxu0 0.0
      %4827 = vmatpush1.msra.mxu0 0.0
      %4828 = vmatprep.subr.mxu0 0.0
      %4829 = vmatpush1.msra.mxu0 0.0
      %4830 = vmatprep.subr.mxu0 0.0
      %4831 = vmatpush1.msra.mxu0 0.0
      %4832 = vmatprep.subr.mxu0 0.0
      %4833 = vmatpush1.msra.mxu0 0.0
      %4834 = vmatprep.mubr.f32.mxu0 0.0
      %4835 = vmatmul.mubr.f32.gmra.mrb[0].mxu0 %v4670
      %v4836 = vpop.f32.mrb[0].mxu0
      %v4837 = vadd.f32 0.0, %v4836
      %v4838 = vpop.f32.mrb[0].mxu0
      %v4839 = vadd.f32 0.0, %v4838
      %4840 = vmatprep.mubr.f32.mxu0 0.0
      %4841 = vmatmul.mubr.f32.gmra.mrb[0].mxu0 %v4673
      %v4842 = vpop.f32.mrb[0].mxu0
      %v4843 = vadd.f32 0.0, %v4842
      %v4844 = vpop.f32.mrb[0].mxu0
      %v4845 = vadd.f32 0.0, %v4844
      %4846 = vmatprep.mubr.f32.mxu0 0.0
      %4847 = vmatmul.mubr.f32.gmra.mrb[0].mxu0 %v4676
      %v4848 = vpop.f32.mrb[0].mxu0
      %v4849 = vadd.f32 0.0, %v4848
      %v4850 = vpop.f32.mrb[0].mxu0
      %v4851 = vadd.f32 0.0, %v4850
      %4852 = vmatprep.mubr.f32.mxu0 0.0
      %4853 = vmatmul.mubr.f32.gmra.mrb[0].mxu0 %v4679
      %v4854 = vpop.f32.mrb[0].mxu0
      %v4855 = vadd.f32 0.0, %v4854
      %v4856 = vpop.f32.mrb[0].mxu0
      %v4857 = vadd.f32 0.0, %v4856
      %4858 = vdwg.mxu0
      %v4859 = vadd.f32 %v4629, %v4748
      %v4860 = vadd.f32 %v4630, %v4750
      %v4861 = vadd.f32 %v4631, %v4837
      %v4862 = vadd.f32 %v4632, %v4839
      %v4863 = vadd.f32 %v4633, %v4754
      %v4864 = vadd.f32 %v4634, %v4756
      %v4865 = vadd.f32 %v4635, %v4843
      %v4866 = vadd.f32 %v4636, %v4845
      %v4867 = vadd.f32 %v4637, %v4760
      %v4868 = vadd.f32 %v4638, %v4762
      %v4869 = vadd.f32 %v4639, %v4849
      %v4870 = vadd.f32 %v4640, %v4851
      %v4871 = vadd.f32 %v4641, %v4766
      %v4872 = vadd.f32 %v4642, %v4768
      %v4873 = vadd.f32 %v4643, %v4855
      %v4874 = vadd.f32 %v4644, %v4857
      %s4875 = scalar_lea.vmem %s1, 640
      %v4876 = vld [vmem:[%s4875] sm:$0xff]
      %v4877 = vld [vmem:[%s4875 + $0x8] sm:$0xff]
      %v4878 = vld [vmem:[%s4875 + $0x10] sm:$0xff]
      %v4879 = vld [vmem:[%s4875 + $0x18] sm:$0xff]
      %4880 = vrot.lane.b32.xlu0 %v3260, 90
      %v4881 = vpop.permute.xlu0 %4880
      %4882 = vrot.lane.b32.xlu0 %v3261, 90
      %v4883 = vpop.permute.xlu0 %4882
      %4884 = vrot.lane.b32.xlu0 %v3262, 90
      %v4885 = vpop.permute.xlu0 %4884
      %4886 = vrot.lane.b32.xlu0 %v3263, 90
      %v4887 = vpop.permute.xlu0 %4886
      %4888 = vrot.lane.b32.xlu0 %v3264, 90
      %v4889 = vpop.permute.xlu0 %4888
      %vm4890 = vcmask 736256
      %v4891 = vsel %vm4890, %v4881, %v4883
      %v4892 = vsel %vm4890, %v4883, %v4885
      %v4893 = vsel %vm4890, %v4885, %v4887
      %v4894 = vsel %vm4890, %v4887, %v4889
      %v4900 = vsel %vm344, %v4876, 0
      %v4903 = vsel %vm344, %v4877, 0
      %v4906 = vsel %vm344, %v4878, 0
      %v4909 = vsel %vm344, %v4879, 0
      %4911 = vmatprep.subr.mxu0 %v4892
      %4912 = vmatpush1.msra.mxu0 %v4891
      %4913 = vmatprep.subr.mxu0 0.0
      %4914 = vmatpush1.msra.mxu0 0.0
      %4915 = vmatprep.subr.mxu0 0.0
      %4916 = vmatpush1.msra.mxu0 0.0
      %4917 = vmatprep.subr.mxu0 0.0
      %4918 = vmatpush1.msra.mxu0 0.0
      %4919 = vmatprep.subr.mxu0 0.0
      %4920 = vmatpush1.msra.mxu0 0.0
      %4921 = vmatprep.subr.mxu0 0.0
      %4922 = vmatpush1.msra.mxu0 0.0
      %4923 = vmatprep.subr.mxu0 0.0
      %4924 = vmatpush1.msra.mxu0 0.0
      %4925 = vmatprep.subr.mxu0 0.0
      %4926 = vmatpush1.msra.mxu0 0.0
      %4927 = vmatprep.subr.mxu0 0.0
      %4928 = vmatpush1.msra.mxu0 0.0
      %4929 = vmatprep.subr.mxu0 0.0
      %4930 = vmatpush1.msra.mxu0 0.0
      %4931 = vmatprep.subr.mxu0 0.0
      %4932 = vmatpush1.msra.mxu0 0.0
      %4933 = vmatprep.subr.mxu0 0.0
      %4934 = vmatpush1.msra.mxu0 0.0
      %4935 = vmatprep.subr.mxu0 0.0
      %4936 = vmatpush1.msra.mxu0 0.0
      %4937 = vmatprep.subr.mxu0 0.0
      %4938 = vmatpush1.msra.mxu0 0.0
      %4939 = vmatprep.subr.mxu0 0.0
      %4940 = vmatpush1.msra.mxu0 0.0
      %4941 = vmatprep.subr.mxu0 0.0
      %4942 = vmatpush1.msra.mxu0 0.0
      %4943 = vmatprep.subr.mxu0 0.0
      %4944 = vmatpush1.msra.mxu0 0.0
      %4945 = vmatprep.subr.mxu0 0.0
      %4946 = vmatpush1.msra.mxu0 0.0
      %4947 = vmatprep.subr.mxu0 0.0
      %4948 = vmatpush1.msra.mxu0 0.0
      %4949 = vmatprep.subr.mxu0 0.0
      %4950 = vmatpush1.msra.mxu0 0.0
      %4951 = vmatprep.subr.mxu0 0.0
      %4952 = vmatpush1.msra.mxu0 0.0
      %4953 = vmatprep.subr.mxu0 0.0
      %4954 = vmatpush1.msra.mxu0 0.0
      %4955 = vmatprep.subr.mxu0 0.0
      %4956 = vmatpush1.msra.mxu0 0.0
      %4957 = vmatprep.subr.mxu0 0.0
      %4958 = vmatpush1.msra.mxu0 0.0
      %4959 = vmatprep.subr.mxu0 0.0
      %4960 = vmatpush1.msra.mxu0 0.0
      %4961 = vmatprep.subr.mxu0 0.0
      %4962 = vmatpush1.msra.mxu0 0.0
      %4963 = vmatprep.subr.mxu0 0.0
      %4964 = vmatpush1.msra.mxu0 0.0
      %4965 = vmatprep.subr.mxu0 0.0
      %4966 = vmatpush1.msra.mxu0 0.0
      %4967 = vmatprep.subr.mxu0 0.0
      %4968 = vmatpush1.msra.mxu0 0.0
      %4969 = vmatprep.subr.mxu0 0.0
      %4970 = vmatpush1.msra.mxu0 0.0
      %4971 = vmatprep.subr.mxu0 0.0
      %4972 = vmatpush1.msra.mxu0 0.0
      %4973 = vmatprep.subr.mxu0 0.0
      %4974 = vmatpush1.msra.mxu0 0.0
      %4975 = vmatprep.mubr.f32.mxu0 0.0
      %4976 = vmatmul.mubr.f32.gmra.mrb[0].mxu0 %v4900
      %v4977 = vpop.f32.mrb[0].mxu0
      %v4978 = vadd.f32 0.0, %v4977
      %v4979 = vpop.f32.mrb[0].mxu0
      %v4980 = vadd.f32 0.0, %v4979
      %4981 = vmatprep.mubr.f32.mxu0 0.0
      %4982 = vmatmul.mubr.f32.gmra.mrb[0].mxu0 %v4903
      %v4983 = vpop.f32.mrb[0].mxu0
      %v4984 = vadd.f32 0.0, %v4983
      %v4985 = vpop.f32.mrb[0].mxu0
      %v4986 = vadd.f32 0.0, %v4985
      %4987 = vmatprep.mubr.f32.mxu0 0.0
      %4988 = vmatmul.mubr.f32.gmra.mrb[0].mxu0 %v4906
      %v4989 = vpop.f32.mrb[0].mxu0
      %v4990 = vadd.f32 0.0, %v4989
      %v4991 = vpop.f32.mrb[0].mxu0
      %v4992 = vadd.f32 0.0, %v4991
      %4993 = vmatprep.mubr.f32.mxu0 0.0
      %4994 = vmatmul.mubr.f32.gmra.mrb[0].mxu0 %v4909
      %v4995 = vpop.f32.mrb[0].mxu0
      %v4996 = vadd.f32 0.0, %v4995
      %v4997 = vpop.f32.mrb[0].mxu0
      %v4998 = vadd.f32 0.0, %v4997
      %4999 = vdwg.mxu0
      %5000 = vmatprep.subr.mxu0 %v4894
      %5001 = vmatpush1.msra.mxu0 %v4893
      %5002 = vmatprep.subr.mxu0 0.0
      %5003 = vmatpush1.msra.mxu0 0.0
      %5004 = vmatprep.subr.mxu0 0.0
      %5005 = vmatpush1.msra.mxu0 0.0
      %5006 = vmatprep.subr.mxu0 0.0
      %5007 = vmatpush1.msra.mxu0 0.0
      %5008 = vmatprep.subr.mxu0 0.0
      %5009 = vmatpush1.msra.mxu0 0.0
      %5010 = vmatprep.subr.mxu0 0.0
      %5011 = vmatpush1.msra.mxu0 0.0
      %5012 = vmatprep.subr.mxu0 0.0
      %5013 = vmatpush1.msra.mxu0 0.0
      %5014 = vmatprep.subr.mxu0 0.0
      %5015 = vmatpush1.msra.mxu0 0.0
      %5016 = vmatprep.subr.mxu0 0.0
      %5017 = vmatpush1.msra.mxu0 0.0
      %5018 = vmatprep.subr.mxu0 0.0
      %5019 = vmatpush1.msra.mxu0 0.0
      %5020 = vmatprep.subr.mxu0 0.0
      %5021 = vmatpush1.msra.mxu0 0.0
      %5022 = vmatprep.subr.mxu0 0.0
      %5023 = vmatpush1.msra.mxu0 0.0
      %5024 = vmatprep.subr.mxu0 0.0
      %5025 = vmatpush1.msra.mxu0 0.0
      %5026 = vmatprep.subr.mxu0 0.0
      %5027 = vmatpush1.msra.mxu0 0.0
      %5028 = vmatprep.subr.mxu0 0.0
      %5029 = vmatpush1.msra.mxu0 0.0
      %5030 = vmatprep.subr.mxu0 0.0
      %5031 = vmatpush1.msra.mxu0 0.0
      %5032 = vmatprep.subr.mxu0 0.0
      %5033 = vmatpush1.msra.mxu0 0.0
      %5034 = vmatprep.subr.mxu0 0.0
      %5035 = vmatpush1.msra.mxu0 0.0
      %5036 = vmatprep.subr.mxu0 0.0
      %5037 = vmatpush1.msra.mxu0 0.0
      %5038 = vmatprep.subr.mxu0 0.0
      %5039 = vmatpush1.msra.mxu0 0.0
      %5040 = vmatprep.subr.mxu0 0.0
      %5041 = vmatpush1.msra.mxu0 0.0
      %5042 = vmatprep.subr.mxu0 0.0
      %5043 = vmatpush1.msra.mxu0 0.0
      %5044 = vmatprep.subr.mxu0 0.0
      %5045 = vmatpush1.msra.mxu0 0.0
      %5046 = vmatprep.subr.mxu0 0.0
      %5047 = vmatpush1.msra.mxu0 0.0
      %5048 = vmatprep.subr.mxu0 0.0
      %5049 = vmatpush1.msra.mxu0 0.0
      %5050 = vmatprep.subr.mxu0 0.0
      %5051 = vmatpush1.msra.mxu0 0.0
      %5052 = vmatprep.subr.mxu0 0.0
      %5053 = vmatpush1.msra.mxu0 0.0
      %5054 = vmatprep.subr.mxu0 0.0
      %5055 = vmatpush1.msra.mxu0 0.0
      %5056 = vmatprep.subr.mxu0 0.0
      %5057 = vmatpush1.msra.mxu0 0.0
      %5058 = vmatprep.subr.mxu0 0.0
      %5059 = vmatpush1.msra.mxu0 0.0
      %5060 = vmatprep.subr.mxu0 0.0
      %5061 = vmatpush1.msra.mxu0 0.0
      %5062 = vmatprep.subr.mxu0 0.0
      %5063 = vmatpush1.msra.mxu0 0.0
      %5064 = vmatprep.mubr.f32.mxu0 0.0
      %5065 = vmatmul.mubr.f32.gmra.mrb[0].mxu0 %v4900
      %v5066 = vpop.f32.mrb[0].mxu0
      %v5067 = vadd.f32 0.0, %v5066
      %v5068 = vpop.f32.mrb[0].mxu0
      %v5069 = vadd.f32 0.0, %v5068
      %5070 = vmatprep.mubr.f32.mxu0 0.0
      %5071 = vmatmul.mubr.f32.gmra.mrb[0].mxu0 %v4903
      %v5072 = vpop.f32.mrb[0].mxu0
      %v5073 = vadd.f32 0.0, %v5072
      %v5074 = vpop.f32.mrb[0].mxu0
      %v5075 = vadd.f32 0.0, %v5074
      %5076 = vmatprep.mubr.f32.mxu0 0.0
      %5077 = vmatmul.mubr.f32.gmra.mrb[0].mxu0 %v4906
      %v5078 = vpop.f32.mrb[0].mxu0
      %v5079 = vadd.f32 0.0, %v5078
      %v5080 = vpop.f32.mrb[0].mxu0
      %v5081 = vadd.f32 0.0, %v5080
      %5082 = vmatprep.mubr.f32.mxu0 0.0
      %5083 = vmatmul.mubr.f32.gmra.mrb[0].mxu0 %v4909
      %v5084 = vpop.f32.mrb[0].mxu0
      %v5085 = vadd.f32 0.0, %v5084
      %v5086 = vpop.f32.mrb[0].mxu0
      %v5087 = vadd.f32 0.0, %v5086
      %5088 = vdwg.mxu0
      %v5089 = vadd.f32 %v4859, %v4978
      %v5090 = vadd.f32 %v4860, %v4980
      %v5091 = vadd.f32 %v4861, %v5067
      %v5092 = vadd.f32 %v4862, %v5069
      %v5093 = vadd.f32 %v4863, %v4984
      %v5094 = vadd.f32 %v4864, %v4986
      %v5095 = vadd.f32 %v4865, %v5073
      %v5096 = vadd.f32 %v4866, %v5075
      %v5097 = vadd.f32 %v4867, %v4990
      %v5098 = vadd.f32 %v4868, %v4992
      %v5099 = vadd.f32 %v4869, %v5079
      %v5100 = vadd.f32 %v4870, %v5081
      %v5101 = vadd.f32 %v4871, %v4996
      %v5102 = vadd.f32 %v4872, %v4998
      %v5103 = vadd.f32 %v4873, %v5085
      %v5104 = vadd.f32 %v4874, %v5087
      %s5105 = scalar_lea.vmem %s1, 672
      %v5106 = vld [vmem:[%s5105] sm:$0xff]
      %v5107 = vld [vmem:[%s5105 + $0x8] sm:$0xff]
      %v5108 = vld [vmem:[%s5105 + $0x10] sm:$0xff]
      %v5109 = vld [vmem:[%s5105 + $0x18] sm:$0xff]
      %5110 = vrot.lane.b32.xlu0 %v3260, 89
      %v5111 = vpop.permute.xlu0 %5110
      %5112 = vrot.lane.b32.xlu0 %v3261, 89
      %v5113 = vpop.permute.xlu0 %5112
      %5114 = vrot.lane.b32.xlu0 %v3262, 89
      %v5115 = vpop.permute.xlu0 %5114
      %5116 = vrot.lane.b32.xlu0 %v3263, 89
      %v5117 = vpop.permute.xlu0 %5116
      %5118 = vrot.lane.b32.xlu0 %v3264, 89
      %v5119 = vpop.permute.xlu0 %5118
      %vm5120 = vcmask 728064
      %v5121 = vsel %vm5120, %v5111, %v5113
      %v5122 = vsel %vm5120, %v5113, %v5115
      %v5123 = vsel %vm5120, %v5115, %v5117
      %v5124 = vsel %vm5120, %v5117, %v5119
      %v5130 = vsel %vm344, %v5106, 0
      %v5133 = vsel %vm344, %v5107, 0
      %v5136 = vsel %vm344, %v5108, 0
      %v5139 = vsel %vm344, %v5109, 0
      %5141 = vmatprep.subr.mxu0 %v5122
      %5142 = vmatpush1.msra.mxu0 %v5121
      %5143 = vmatprep.subr.mxu0 0.0
      %5144 = vmatpush1.msra.mxu0 0.0
      %5145 = vmatprep.subr.mxu0 0.0
      %5146 = vmatpush1.msra.mxu0 0.0
      %5147 = vmatprep.subr.mxu0 0.0
      %5148 = vmatpush1.msra.mxu0 0.0
      %5149 = vmatprep.subr.mxu0 0.0
      %5150 = vmatpush1.msra.mxu0 0.0
      %5151 = vmatprep.subr.mxu0 0.0
      %5152 = vmatpush1.msra.mxu0 0.0
      %5153 = vmatprep.subr.mxu0 0.0
      %5154 = vmatpush1.msra.mxu0 0.0
      %5155 = vmatprep.subr.mxu0 0.0
      %5156 = vmatpush1.msra.mxu0 0.0
      %5157 = vmatprep.subr.mxu0 0.0
      %5158 = vmatpush1.msra.mxu0 0.0
      %5159 = vmatprep.subr.mxu0 0.0
      %5160 = vmatpush1.msra.mxu0 0.0
      %5161 = vmatprep.subr.mxu0 0.0
      %5162 = vmatpush1.msra.mxu0 0.0
      %5163 = vmatprep.subr.mxu0 0.0
      %5164 = vmatpush1.msra.mxu0 0.0
      %5165 = vmatprep.subr.mxu0 0.0
      %5166 = vmatpush1.msra.mxu0 0.0
      %5167 = vmatprep.subr.mxu0 0.0
      %5168 = vmatpush1.msra.mxu0 0.0
      %5169 = vmatprep.subr.mxu0 0.0
      %5170 = vmatpush1.msra.mxu0 0.0
      %5171 = vmatprep.subr.mxu0 0.0
      %5172 = vmatpush1.msra.mxu0 0.0
      %5173 = vmatprep.subr.mxu0 0.0
      %5174 = vmatpush1.msra.mxu0 0.0
      %5175 = vmatprep.subr.mxu0 0.0
      %5176 = vmatpush1.msra.mxu0 0.0
      %5177 = vmatprep.subr.mxu0 0.0
      %5178 = vmatpush1.msra.mxu0 0.0
      %5179 = vmatprep.subr.mxu0 0.0
      %5180 = vmatpush1.msra.mxu0 0.0
      %5181 = vmatprep.subr.mxu0 0.0
      %5182 = vmatpush1.msra.mxu0 0.0
      %5183 = vmatprep.subr.mxu0 0.0
      %5184 = vmatpush1.msra.mxu0 0.0
      %5185 = vmatprep.subr.mxu0 0.0
      %5186 = vmatpush1.msra.mxu0 0.0
      %5187 = vmatprep.subr.mxu0 0.0
      %5188 = vmatpush1.msra.mxu0 0.0
      %5189 = vmatprep.subr.mxu0 0.0
      %5190 = vmatpush1.msra.mxu0 0.0
      %5191 = vmatprep.subr.mxu0 0.0
      %5192 = vmatpush1.msra.mxu0 0.0
      %5193 = vmatprep.subr.mxu0 0.0
      %5194 = vmatpush1.msra.mxu0 0.0
      %5195 = vmatprep.subr.mxu0 0.0
      %5196 = vmatpush1.msra.mxu0 0.0
      %5197 = vmatprep.subr.mxu0 0.0
      %5198 = vmatpush1.msra.mxu0 0.0
      %5199 = vmatprep.subr.mxu0 0.0
      %5200 = vmatpush1.msra.mxu0 0.0
      %5201 = vmatprep.subr.mxu0 0.0
      %5202 = vmatpush1.msra.mxu0 0.0
      %5203 = vmatprep.subr.mxu0 0.0
      %5204 = vmatpush1.msra.mxu0 0.0
      %5205 = vmatprep.mubr.f32.mxu0 0.0
      %5206 = vmatmul.mubr.f32.gmra.mrb[0].mxu0 %v5130
      %v5207 = vpop.f32.mrb[0].mxu0
      %v5208 = vadd.f32 0.0, %v5207
      %v5209 = vpop.f32.mrb[0].mxu0
      %v5210 = vadd.f32 0.0, %v5209
      %5211 = vmatprep.mubr.f32.mxu0 0.0
      %5212 = vmatmul.mubr.f32.gmra.mrb[0].mxu0 %v5133
      %v5213 = vpop.f32.mrb[0].mxu0
      %v5214 = vadd.f32 0.0, %v5213
      %v5215 = vpop.f32.mrb[0].mxu0
      %v5216 = vadd.f32 0.0, %v5215
      %5217 = vmatprep.mubr.f32.mxu0 0.0
      %5218 = vmatmul.mubr.f32.gmra.mrb[0].mxu0 %v5136
      %v5219 = vpop.f32.mrb[0].mxu0
      %v5220 = vadd.f32 0.0, %v5219
      %v5221 = vpop.f32.mrb[0].mxu0
      %v5222 = vadd.f32 0.0, %v5221
      %5223 = vmatprep.mubr.f32.mxu0 0.0
      %5224 = vmatmul.mubr.f32.gmra.mrb[0].mxu0 %v5139
      %v5225 = vpop.f32.mrb[0].mxu0
      %v5226 = vadd.f32 0.0, %v5225
      %v5227 = vpop.f32.mrb[0].mxu0
      %v5228 = vadd.f32 0.0, %v5227
      %5229 = vdwg.mxu0
      %5230 = vmatprep.subr.mxu0 %v5124
      %5231 = vmatpush1.msra.mxu0 %v5123
      %5232 = vmatprep.subr.mxu0 0.0
      %5233 = vmatpush1.msra.mxu0 0.0
      %5234 = vmatprep.subr.mxu0 0.0
      %5235 = vmatpush1.msra.mxu0 0.0
      %5236 = vmatprep.subr.mxu0 0.0
      %5237 = vmatpush1.msra.mxu0 0.0
      %5238 = vmatprep.subr.mxu0 0.0
      %5239 = vmatpush1.msra.mxu0 0.0
      %5240 = vmatprep.subr.mxu0 0.0
      %5241 = vmatpush1.msra.mxu0 0.0
      %5242 = vmatprep.subr.mxu0 0.0
      %5243 = vmatpush1.msra.mxu0 0.0
      %5244 = vmatprep.subr.mxu0 0.0
      %5245 = vmatpush1.msra.mxu0 0.0
      %5246 = vmatprep.subr.mxu0 0.0
      %5247 = vmatpush1.msra.mxu0 0.0
      %5248 = vmatprep.subr.mxu0 0.0
      %5249 = vmatpush1.msra.mxu0 0.0
      %5250 = vmatprep.subr.mxu0 0.0
      %5251 = vmatpush1.msra.mxu0 0.0
      %5252 = vmatprep.subr.mxu0 0.0
      %5253 = vmatpush1.msra.mxu0 0.0
      %5254 = vmatprep.subr.mxu0 0.0
      %5255 = vmatpush1.msra.mxu0 0.0
      %5256 = vmatprep.subr.mxu0 0.0
      %5257 = vmatpush1.msra.mxu0 0.0
      %5258 = vmatprep.subr.mxu0 0.0
      %5259 = vmatpush1.msra.mxu0 0.0
      %5260 = vmatprep.subr.mxu0 0.0
      %5261 = vmatpush1.msra.mxu0 0.0
      %5262 = vmatprep.subr.mxu0 0.0
      %5263 = vmatpush1.msra.mxu0 0.0
      %5264 = vmatprep.subr.mxu0 0.0
      %5265 = vmatpush1.msra.mxu0 0.0
      %5266 = vmatprep.subr.mxu0 0.0
      %5267 = vmatpush1.msra.mxu0 0.0
      %5268 = vmatprep.subr.mxu0 0.0
      %5269 = vmatpush1.msra.mxu0 0.0
      %5270 = vmatprep.subr.mxu0 0.0
      %5271 = vmatpush1.msra.mxu0 0.0
      %5272 = vmatprep.subr.mxu0 0.0
      %5273 = vmatpush1.msra.mxu0 0.0
      %5274 = vmatprep.subr.mxu0 0.0
      %5275 = vmatpush1.msra.mxu0 0.0
      %5276 = vmatprep.subr.mxu0 0.0
      %5277 = vmatpush1.msra.mxu0 0.0
      %5278 = vmatprep.subr.mxu0 0.0
      %5279 = vmatpush1.msra.mxu0 0.0
      %5280 = vmatprep.subr.mxu0 0.0
      %5281 = vmatpush1.msra.mxu0 0.0
      %5282 = vmatprep.subr.mxu0 0.0
      %5283 = vmatpush1.msra.mxu0 0.0
      %5284 = vmatprep.subr.mxu0 0.0
      %5285 = vmatpush1.msra.mxu0 0.0
      %5286 = vmatprep.subr.mxu0 0.0
      %5287 = vmatpush1.msra.mxu0 0.0
      %5288 = vmatprep.subr.mxu0 0.0
      %5289 = vmatpush1.msra.mxu0 0.0
      %5290 = vmatprep.subr.mxu0 0.0
      %5291 = vmatpush1.msra.mxu0 0.0
      %5292 = vmatprep.subr.mxu0 0.0
      %5293 = vmatpush1.msra.mxu0 0.0
      %5294 = vmatprep.mubr.f32.mxu0 0.0
      %5295 = vmatmul.mubr.f32.gmra.mrb[0].mxu0 %v5130
      %v5296 = vpop.f32.mrb[0].mxu0
      %v5297 = vadd.f32 0.0, %v5296
      %v5298 = vpop.f32.mrb[0].mxu0
      %v5299 = vadd.f32 0.0, %v5298
      %5300 = vmatprep.mubr.f32.mxu0 0.0
      %5301 = vmatmul.mubr.f32.gmra.mrb[0].mxu0 %v5133
      %v5302 = vpop.f32.mrb[0].mxu0
      %v5303 = vadd.f32 0.0, %v5302
      %v5304 = vpop.f32.mrb[0].mxu0
      %v5305 = vadd.f32 0.0, %v5304
      %5306 = vmatprep.mubr.f32.mxu0 0.0
      %5307 = vmatmul.mubr.f32.gmra.mrb[0].mxu0 %v5136
      %v5308 = vpop.f32.mrb[0].mxu0
      %v5309 = vadd.f32 0.0, %v5308
      %v5310 = vpop.f32.mrb[0].mxu0
      %v5311 = vadd.f32 0.0, %v5310
      %5312 = vmatprep.mubr.f32.mxu0 0.0
      %5313 = vmatmul.mubr.f32.gmra.mrb[0].mxu0 %v5139
      %v5314 = vpop.f32.mrb[0].mxu0
      %v5315 = vadd.f32 0.0, %v5314
      %v5316 = vpop.f32.mrb[0].mxu0
      %v5317 = vadd.f32 0.0, %v5316
      %5318 = vdwg.mxu0
      %v5319 = vadd.f32 %v5089, %v5208
      %v5320 = vadd.f32 %v5090, %v5210
      %v5321 = vadd.f32 %v5091, %v5297
      %v5322 = vadd.f32 %v5092, %v5299
      %v5323 = vadd.f32 %v5093, %v5214
      %v5324 = vadd.f32 %v5094, %v5216
      %v5325 = vadd.f32 %v5095, %v5303
      %v5326 = vadd.f32 %v5096, %v5305
      %v5327 = vadd.f32 %v5097, %v5220
      %v5328 = vadd.f32 %v5098, %v5222
      %v5329 = vadd.f32 %v5099, %v5309
      %v5330 = vadd.f32 %v5100, %v5311
      %v5331 = vadd.f32 %v5101, %v5226
      %v5332 = vadd.f32 %v5102, %v5228
      %v5333 = vadd.f32 %v5103, %v5315
      %v5334 = vadd.f32 %v5104, %v5317
      %s5335 = scalar_lea.vmem %s1, 704
      %v5336 = vld [vmem:[%s5335] sm:$0xff]
      %v5337 = vld [vmem:[%s5335 + $0x8] sm:$0xff]
      %v5338 = vld [vmem:[%s5335 + $0x10] sm:$0xff]
      %v5339 = vld [vmem:[%s5335 + $0x18] sm:$0xff]
      %5340 = vrot.lane.b32.xlu0 %v3260, 88
      %v5341 = vpop.permute.xlu0 %5340
      %5342 = vrot.lane.b32.xlu0 %v3261, 88
      %v5343 = vpop.permute.xlu0 %5342
      %5344 = vrot.lane.b32.xlu0 %v3262, 88
      %v5345 = vpop.permute.xlu0 %5344
      %5346 = vrot.lane.b32.xlu0 %v3263, 88
      %v5347 = vpop.permute.xlu0 %5346
      %5348 = vrot.lane.b32.xlu0 %v3264, 88
      %v5349 = vpop.permute.xlu0 %5348
      %vm5350 = vcmask 719872
      %v5351 = vsel %vm5350, %v5341, %v5343
      %v5352 = vsel %vm5350, %v5343, %v5345
      %v5353 = vsel %vm5350, %v5345, %v5347
      %v5354 = vsel %vm5350, %v5347, %v5349
      %v5360 = vsel %vm344, %v5336, 0
      %v5363 = vsel %vm344, %v5337, 0
      %v5366 = vsel %vm344, %v5338, 0
      %v5369 = vsel %vm344, %v5339, 0
      %5371 = vmatprep.subr.mxu0 %v5352
      %5372 = vmatpush1.msra.mxu0 %v5351
      %5373 = vmatprep.subr.mxu0 0.0
      %5374 = vmatpush1.msra.mxu0 0.0
      %5375 = vmatprep.subr.mxu0 0.0
      %5376 = vmatpush1.msra.mxu0 0.0
      %5377 = vmatprep.subr.mxu0 0.0
      %5378 = vmatpush1.msra.mxu0 0.0
      %5379 = vmatprep.subr.mxu0 0.0
      %5380 = vmatpush1.msra.mxu0 0.0
      %5381 = vmatprep.subr.mxu0 0.0
      %5382 = vmatpush1.msra.mxu0 0.0
      %5383 = vmatprep.subr.mxu0 0.0
      %5384 = vmatpush1.msra.mxu0 0.0
      %5385 = vmatprep.subr.mxu0 0.0
      %5386 = vmatpush1.msra.mxu0 0.0
      %5387 = vmatprep.subr.mxu0 0.0
      %5388 = vmatpush1.msra.mxu0 0.0
      %5389 = vmatprep.subr.mxu0 0.0
      %5390 = vmatpush1.msra.mxu0 0.0
      %5391 = vmatprep.subr.mxu0 0.0
      %5392 = vmatpush1.msra.mxu0 0.0
      %5393 = vmatprep.subr.mxu0 0.0
      %5394 = vmatpush1.msra.mxu0 0.0
      %5395 = vmatprep.subr.mxu0 0.0
      %5396 = vmatpush1.msra.mxu0 0.0
      %5397 = vmatprep.subr.mxu0 0.0
      %5398 = vmatpush1.msra.mxu0 0.0
      %5399 = vmatprep.subr.mxu0 0.0
      %5400 = vmatpush1.msra.mxu0 0.0
      %5401 = vmatprep.subr.mxu0 0.0
      %5402 = vmatpush1.msra.mxu0 0.0
      %5403 = vmatprep.subr.mxu0 0.0
      %5404 = vmatpush1.msra.mxu0 0.0
      %5405 = vmatprep.subr.mxu0 0.0
      %5406 = vmatpush1.msra.mxu0 0.0
      %5407 = vmatprep.subr.mxu0 0.0
      %5408 = vmatpush1.msra.mxu0 0.0
      %5409 = vmatprep.subr.mxu0 0.0
      %5410 = vmatpush1.msra.mxu0 0.0
      %5411 = vmatprep.subr.mxu0 0.0
      %5412 = vmatpush1.msra.mxu0 0.0
      %5413 = vmatprep.subr.mxu0 0.0
      %5414 = vmatpush1.msra.mxu0 0.0
      %5415 = vmatprep.subr.mxu0 0.0
      %5416 = vmatpush1.msra.mxu0 0.0
      %5417 = vmatprep.subr.mxu0 0.0
      %5418 = vmatpush1.msra.mxu0 0.0
      %5419 = vmatprep.subr.mxu0 0.0
      %5420 = vmatpush1.msra.mxu0 0.0
      %5421 = vmatprep.subr.mxu0 0.0
      %5422 = vmatpush1.msra.mxu0 0.0
      %5423 = vmatprep.subr.mxu0 0.0
      %5424 = vmatpush1.msra.mxu0 0.0
      %5425 = vmatprep.subr.mxu0 0.0
      %5426 = vmatpush1.msra.mxu0 0.0
      %5427 = vmatprep.subr.mxu0 0.0
      %5428 = vmatpush1.msra.mxu0 0.0
      %5429 = vmatprep.subr.mxu0 0.0
      %5430 = vmatpush1.msra.mxu0 0.0
      %5431 = vmatprep.subr.mxu0 0.0
      %5432 = vmatpush1.msra.mxu0 0.0
      %5433 = vmatprep.subr.mxu0 0.0
      %5434 = vmatpush1.msra.mxu0 0.0
      %5435 = vmatprep.mubr.f32.mxu0 0.0
      %5436 = vmatmul.mubr.f32.gmra.mrb[0].mxu0 %v5360
      %v5437 = vpop.f32.mrb[0].mxu0
      %v5438 = vadd.f32 0.0, %v5437
      %v5439 = vpop.f32.mrb[0].mxu0
      %v5440 = vadd.f32 0.0, %v5439
      %5441 = vmatprep.mubr.f32.mxu0 0.0
      %5442 = vmatmul.mubr.f32.gmra.mrb[0].mxu0 %v5363
      %v5443 = vpop.f32.mrb[0].mxu0
      %v5444 = vadd.f32 0.0, %v5443
      %v5445 = vpop.f32.mrb[0].mxu0
      %v5446 = vadd.f32 0.0, %v5445
      %5447 = vmatprep.mubr.f32.mxu0 0.0
      %5448 = vmatmul.mubr.f32.gmra.mrb[0].mxu0 %v5366
      %v5449 = vpop.f32.mrb[0].mxu0
      %v5450 = vadd.f32 0.0, %v5449
      %v5451 = vpop.f32.mrb[0].mxu0
      %v5452 = vadd.f32 0.0, %v5451
      %5453 = vmatprep.mubr.f32.mxu0 0.0
      %5454 = vmatmul.mubr.f32.gmra.mrb[0].mxu0 %v5369
      %v5455 = vpop.f32.mrb[0].mxu0
      %v5456 = vadd.f32 0.0, %v5455
      %v5457 = vpop.f32.mrb[0].mxu0
      %v5458 = vadd.f32 0.0, %v5457
      %5459 = vdwg.mxu0
      %5460 = vmatprep.subr.mxu0 %v5354
      %5461 = vmatpush1.msra.mxu0 %v5353
      %5462 = vmatprep.subr.mxu0 0.0
      %5463 = vmatpush1.msra.mxu0 0.0
      %5464 = vmatprep.subr.mxu0 0.0
      %5465 = vmatpush1.msra.mxu0 0.0
      %5466 = vmatprep.subr.mxu0 0.0
      %5467 = vmatpush1.msra.mxu0 0.0
      %5468 = vmatprep.subr.mxu0 0.0
      %5469 = vmatpush1.msra.mxu0 0.0
      %5470 = vmatprep.subr.mxu0 0.0
      %5471 = vmatpush1.msra.mxu0 0.0
      %5472 = vmatprep.subr.mxu0 0.0
      %5473 = vmatpush1.msra.mxu0 0.0
      %5474 = vmatprep.subr.mxu0 0.0
      %5475 = vmatpush1.msra.mxu0 0.0
      %5476 = vmatprep.subr.mxu0 0.0
      %5477 = vmatpush1.msra.mxu0 0.0
      %5478 = vmatprep.subr.mxu0 0.0
      %5479 = vmatpush1.msra.mxu0 0.0
      %5480 = vmatprep.subr.mxu0 0.0
      %5481 = vmatpush1.msra.mxu0 0.0
      %5482 = vmatprep.subr.mxu0 0.0
      %5483 = vmatpush1.msra.mxu0 0.0
      %5484 = vmatprep.subr.mxu0 0.0
      %5485 = vmatpush1.msra.mxu0 0.0
      %5486 = vmatprep.subr.mxu0 0.0
      %5487 = vmatpush1.msra.mxu0 0.0
      %5488 = vmatprep.subr.mxu0 0.0
      %5489 = vmatpush1.msra.mxu0 0.0
      %5490 = vmatprep.subr.mxu0 0.0
      %5491 = vmatpush1.msra.mxu0 0.0
      %5492 = vmatprep.subr.mxu0 0.0
      %5493 = vmatpush1.msra.mxu0 0.0
      %5494 = vmatprep.subr.mxu0 0.0
      %5495 = vmatpush1.msra.mxu0 0.0
      %5496 = vmatprep.subr.mxu0 0.0
      %5497 = vmatpush1.msra.mxu0 0.0
      %5498 = vmatprep.subr.mxu0 0.0
      %5499 = vmatpush1.msra.mxu0 0.0
      %5500 = vmatprep.subr.mxu0 0.0
      %5501 = vmatpush1.msra.mxu0 0.0
      %5502 = vmatprep.subr.mxu0 0.0
      %5503 = vmatpush1.msra.mxu0 0.0
      %5504 = vmatprep.subr.mxu0 0.0
      %5505 = vmatpush1.msra.mxu0 0.0
      %5506 = vmatprep.subr.mxu0 0.0
      %5507 = vmatpush1.msra.mxu0 0.0
      %5508 = vmatprep.subr.mxu0 0.0
      %5509 = vmatpush1.msra.mxu0 0.0
      %5510 = vmatprep.subr.mxu0 0.0
      %5511 = vmatpush1.msra.mxu0 0.0
      %5512 = vmatprep.subr.mxu0 0.0
      %5513 = vmatpush1.msra.mxu0 0.0
      %5514 = vmatprep.subr.mxu0 0.0
      %5515 = vmatpush1.msra.mxu0 0.0
      %5516 = vmatprep.subr.mxu0 0.0
      %5517 = vmatpush1.msra.mxu0 0.0
      %5518 = vmatprep.subr.mxu0 0.0
      %5519 = vmatpush1.msra.mxu0 0.0
      %5520 = vmatprep.subr.mxu0 0.0
      %5521 = vmatpush1.msra.mxu0 0.0
      %5522 = vmatprep.subr.mxu0 0.0
      %5523 = vmatpush1.msra.mxu0 0.0
      %5524 = vmatprep.mubr.f32.mxu0 0.0
      %5525 = vmatmul.mubr.f32.gmra.mrb[0].mxu0 %v5360
      %v5526 = vpop.f32.mrb[0].mxu0
      %v5527 = vadd.f32 0.0, %v5526
      %v5528 = vpop.f32.mrb[0].mxu0
      %v5529 = vadd.f32 0.0, %v5528
      %5530 = vmatprep.mubr.f32.mxu0 0.0
      %5531 = vmatmul.mubr.f32.gmra.mrb[0].mxu0 %v5363
      %v5532 = vpop.f32.mrb[0].mxu0
      %v5533 = vadd.f32 0.0, %v5532
      %v5534 = vpop.f32.mrb[0].mxu0
      %v5535 = vadd.f32 0.0, %v5534
      %5536 = vmatprep.mubr.f32.mxu0 0.0
      %5537 = vmatmul.mubr.f32.gmra.mrb[0].mxu0 %v5366
      %v5538 = vpop.f32.mrb[0].mxu0
      %v5539 = vadd.f32 0.0, %v5538
      %v5540 = vpop.f32.mrb[0].mxu0
      %v5541 = vadd.f32 0.0, %v5540
      %5542 = vmatprep.mubr.f32.mxu0 0.0
      %5543 = vmatmul.mubr.f32.gmra.mrb[0].mxu0 %v5369
      %v5544 = vpop.f32.mrb[0].mxu0
      %v5545 = vadd.f32 0.0, %v5544
      %v5546 = vpop.f32.mrb[0].mxu0
      %v5547 = vadd.f32 0.0, %v5546
      %5548 = vdwg.mxu0
      %v5549 = vadd.f32 %v5319, %v5438
      %v5550 = vadd.f32 %v5320, %v5440
      %v5551 = vadd.f32 %v5321, %v5527
      %v5552 = vadd.f32 %v5322, %v5529
      %v5553 = vadd.f32 %v5323, %v5444
      %v5554 = vadd.f32 %v5324, %v5446
      %v5555 = vadd.f32 %v5325, %v5533
      %v5556 = vadd.f32 %v5326, %v5535
      %v5557 = vadd.f32 %v5327, %v5450
      %v5558 = vadd.f32 %v5328, %v5452
      %v5559 = vadd.f32 %v5329, %v5539
      %v5560 = vadd.f32 %v5330, %v5541
      %v5561 = vadd.f32 %v5331, %v5456
      %v5562 = vadd.f32 %v5332, %v5458
      %v5563 = vadd.f32 %v5333, %v5545
      %v5564 = vadd.f32 %v5334, %v5547
      %s5565 = scalar_lea.vmem %s1, 736
      %v5566 = vld [vmem:[%s5565] sm:$0xff]
      %v5567 = vld [vmem:[%s5565 + $0x8] sm:$0xff]
      %v5568 = vld [vmem:[%s5565 + $0x10] sm:$0xff]
      %v5569 = vld [vmem:[%s5565 + $0x18] sm:$0xff]
      %5570 = vrot.lane.b32.xlu0 %v3260, 87
      %v5571 = vpop.permute.xlu0 %5570
      %5572 = vrot.lane.b32.xlu0 %v3261, 87
      %v5573 = vpop.permute.xlu0 %5572
      %5574 = vrot.lane.b32.xlu0 %v3262, 87
      %v5575 = vpop.permute.xlu0 %5574
      %5576 = vrot.lane.b32.xlu0 %v3263, 87
      %v5577 = vpop.permute.xlu0 %5576
      %5578 = vrot.lane.b32.xlu0 %v3264, 87
      %v5579 = vpop.permute.xlu0 %5578
      %vm5580 = vcmask 711680
      %v5581 = vsel %vm5580, %v5571, %v5573
      %v5582 = vsel %vm5580, %v5573, %v5575
      %v5583 = vsel %vm5580, %v5575, %v5577
      %v5584 = vsel %vm5580, %v5577, %v5579
      %v5590 = vsel %vm344, %v5566, 0
      %v5593 = vsel %vm344, %v5567, 0
      %v5596 = vsel %vm344, %v5568, 0
      %v5599 = vsel %vm344, %v5569, 0
      %5601 = vmatprep.subr.mxu0 %v5582
      %5602 = vmatpush1.msra.mxu0 %v5581
      %5603 = vmatprep.subr.mxu0 0.0
      %5604 = vmatpush1.msra.mxu0 0.0
      %5605 = vmatprep.subr.mxu0 0.0
      %5606 = vmatpush1.msra.mxu0 0.0
      %5607 = vmatprep.subr.mxu0 0.0
      %5608 = vmatpush1.msra.mxu0 0.0
      %5609 = vmatprep.subr.mxu0 0.0
      %5610 = vmatpush1.msra.mxu0 0.0
      %5611 = vmatprep.subr.mxu0 0.0
      %5612 = vmatpush1.msra.mxu0 0.0
      %5613 = vmatprep.subr.mxu0 0.0
      %5614 = vmatpush1.msra.mxu0 0.0
      %5615 = vmatprep.subr.mxu0 0.0
      %5616 = vmatpush1.msra.mxu0 0.0
      %5617 = vmatprep.subr.mxu0 0.0
      %5618 = vmatpush1.msra.mxu0 0.0
      %5619 = vmatprep.subr.mxu0 0.0
      %5620 = vmatpush1.msra.mxu0 0.0
      %5621 = vmatprep.subr.mxu0 0.0
      %5622 = vmatpush1.msra.mxu0 0.0
      %5623 = vmatprep.subr.mxu0 0.0
      %5624 = vmatpush1.msra.mxu0 0.0
      %5625 = vmatprep.subr.mxu0 0.0
      %5626 = vmatpush1.msra.mxu0 0.0
      %5627 = vmatprep.subr.mxu0 0.0
      %5628 = vmatpush1.msra.mxu0 0.0
      %5629 = vmatprep.subr.mxu0 0.0
      %5630 = vmatpush1.msra.mxu0 0.0
      %5631 = vmatprep.subr.mxu0 0.0
      %5632 = vmatpush1.msra.mxu0 0.0
      %5633 = vmatprep.subr.mxu0 0.0
      %5634 = vmatpush1.msra.mxu0 0.0
      %5635 = vmatprep.subr.mxu0 0.0
      %5636 = vmatpush1.msra.mxu0 0.0
      %5637 = vmatprep.subr.mxu0 0.0
      %5638 = vmatpush1.msra.mxu0 0.0
      %5639 = vmatprep.subr.mxu0 0.0
      %5640 = vmatpush1.msra.mxu0 0.0
      %5641 = vmatprep.subr.mxu0 0.0
      %5642 = vmatpush1.msra.mxu0 0.0
      %5643 = vmatprep.subr.mxu0 0.0
      %5644 = vmatpush1.msra.mxu0 0.0
      %5645 = vmatprep.subr.mxu0 0.0
      %5646 = vmatpush1.msra.mxu0 0.0
      %5647 = vmatprep.subr.mxu0 0.0
      %5648 = vmatpush1.msra.mxu0 0.0
      %5649 = vmatprep.subr.mxu0 0.0
      %5650 = vmatpush1.msra.mxu0 0.0
      %5651 = vmatprep.subr.mxu0 0.0
      %5652 = vmatpush1.msra.mxu0 0.0
      %5653 = vmatprep.subr.mxu0 0.0
      %5654 = vmatpush1.msra.mxu0 0.0
      %5655 = vmatprep.subr.mxu0 0.0
      %5656 = vmatpush1.msra.mxu0 0.0
      %5657 = vmatprep.subr.mxu0 0.0
      %5658 = vmatpush1.msra.mxu0 0.0
      %5659 = vmatprep.subr.mxu0 0.0
      %5660 = vmatpush1.msra.mxu0 0.0
      %5661 = vmatprep.subr.mxu0 0.0
      %5662 = vmatpush1.msra.mxu0 0.0
      %5663 = vmatprep.subr.mxu0 0.0
      %5664 = vmatpush1.msra.mxu0 0.0
      %5665 = vmatprep.mubr.f32.mxu0 0.0
      %5666 = vmatmul.mubr.f32.gmra.mrb[0].mxu0 %v5590
      %v5667 = vpop.f32.mrb[0].mxu0
      %v5668 = vadd.f32 0.0, %v5667
      %v5669 = vpop.f32.mrb[0].mxu0
      %v5670 = vadd.f32 0.0, %v5669
      %5671 = vmatprep.mubr.f32.mxu0 0.0
      %5672 = vmatmul.mubr.f32.gmra.mrb[0].mxu0 %v5593
      %v5673 = vpop.f32.mrb[0].mxu0
      %v5674 = vadd.f32 0.0, %v5673
      %v5675 = vpop.f32.mrb[0].mxu0
      %v5676 = vadd.f32 0.0, %v5675
      %5677 = vmatprep.mubr.f32.mxu0 0.0
      %5678 = vmatmul.mubr.f32.gmra.mrb[0].mxu0 %v5596
      %v5679 = vpop.f32.mrb[0].mxu0
      %v5680 = vadd.f32 0.0, %v5679
      %v5681 = vpop.f32.mrb[0].mxu0
      %v5682 = vadd.f32 0.0, %v5681
      %5683 = vmatprep.mubr.f32.mxu0 0.0
      %5684 = vmatmul.mubr.f32.gmra.mrb[0].mxu0 %v5599
      %v5685 = vpop.f32.mrb[0].mxu0
      %v5686 = vadd.f32 0.0, %v5685
      %v5687 = vpop.f32.mrb[0].mxu0
      %v5688 = vadd.f32 0.0, %v5687
      %5689 = vdwg.mxu0
      %5690 = vmatprep.subr.mxu0 %v5584
      %5691 = vmatpush1.msra.mxu0 %v5583
      %5692 = vmatprep.subr.mxu0 0.0
      %5693 = vmatpush1.msra.mxu0 0.0
      %5694 = vmatprep.subr.mxu0 0.0
      %5695 = vmatpush1.msra.mxu0 0.0
      %5696 = vmatprep.subr.mxu0 0.0
      %5697 = vmatpush1.msra.mxu0 0.0
      %5698 = vmatprep.subr.mxu0 0.0
      %5699 = vmatpush1.msra.mxu0 0.0
      %5700 = vmatprep.subr.mxu0 0.0
      %5701 = vmatpush1.msra.mxu0 0.0
      %5702 = vmatprep.subr.mxu0 0.0
      %5703 = vmatpush1.msra.mxu0 0.0
      %5704 = vmatprep.subr.mxu0 0.0
      %5705 = vmatpush1.msra.mxu0 0.0
      %5706 = vmatprep.subr.mxu0 0.0
      %5707 = vmatpush1.msra.mxu0 0.0
      %5708 = vmatprep.subr.mxu0 0.0
      %5709 = vmatpush1.msra.mxu0 0.0
      %5710 = vmatprep.subr.mxu0 0.0
      %5711 = vmatpush1.msra.mxu0 0.0
      %5712 = vmatprep.subr.mxu0 0.0
      %5713 = vmatpush1.msra.mxu0 0.0
      %5714 = vmatprep.subr.mxu0 0.0
      %5715 = vmatpush1.msra.mxu0 0.0
      %5716 = vmatprep.subr.mxu0 0.0
      %5717 = vmatpush1.msra.mxu0 0.0
      %5718 = vmatprep.subr.mxu0 0.0
      %5719 = vmatpush1.msra.mxu0 0.0
      %5720 = vmatprep.subr.mxu0 0.0
      %5721 = vmatpush1.msra.mxu0 0.0
      %5722 = vmatprep.subr.mxu0 0.0
      %5723 = vmatpush1.msra.mxu0 0.0
      %5724 = vmatprep.subr.mxu0 0.0
      %5725 = vmatpush1.msra.mxu0 0.0
      %5726 = vmatprep.subr.mxu0 0.0
      %5727 = vmatpush1.msra.mxu0 0.0
      %5728 = vmatprep.subr.mxu0 0.0
      %5729 = vmatpush1.msra.mxu0 0.0
      %5730 = vmatprep.subr.mxu0 0.0
      %5731 = vmatpush1.msra.mxu0 0.0
      %5732 = vmatprep.subr.mxu0 0.0
      %5733 = vmatpush1.msra.mxu0 0.0
      %5734 = vmatprep.subr.mxu0 0.0
      %5735 = vmatpush1.msra.mxu0 0.0
      %5736 = vmatprep.subr.mxu0 0.0
      %5737 = vmatpush1.msra.mxu0 0.0
      %5738 = vmatprep.subr.mxu0 0.0
      %5739 = vmatpush1.msra.mxu0 0.0
      %5740 = vmatprep.subr.mxu0 0.0
      %5741 = vmatpush1.msra.mxu0 0.0
      %5742 = vmatprep.subr.mxu0 0.0
      %5743 = vmatpush1.msra.mxu0 0.0
      %5744 = vmatprep.subr.mxu0 0.0
      %5745 = vmatpush1.msra.mxu0 0.0
      %5746 = vmatprep.subr.mxu0 0.0
      %5747 = vmatpush1.msra.mxu0 0.0
      %5748 = vmatprep.subr.mxu0 0.0
      %5749 = vmatpush1.msra.mxu0 0.0
      %5750 = vmatprep.subr.mxu0 0.0
      %5751 = vmatpush1.msra.mxu0 0.0
      %5752 = vmatprep.subr.mxu0 0.0
      %5753 = vmatpush1.msra.mxu0 0.0
      %5754 = vmatprep.mubr.f32.mxu0 0.0
      %5755 = vmatmul.mubr.f32.gmra.mrb[0].mxu0 %v5590
      %v5756 = vpop.f32.mrb[0].mxu0
      %v5757 = vadd.f32 0.0, %v5756
      %v5758 = vpop.f32.mrb[0].mxu0
      %v5759 = vadd.f32 0.0, %v5758
      %5760 = vmatprep.mubr.f32.mxu0 0.0
      %5761 = vmatmul.mubr.f32.gmra.mrb[0].mxu0 %v5593
      %v5762 = vpop.f32.mrb[0].mxu0
      %v5763 = vadd.f32 0.0, %v5762
      %v5764 = vpop.f32.mrb[0].mxu0
      %v5765 = vadd.f32 0.0, %v5764
      %5766 = vmatprep.mubr.f32.mxu0 0.0
      %5767 = vmatmul.mubr.f32.gmra.mrb[0].mxu0 %v5596
      %v5768 = vpop.f32.mrb[0].mxu0
      %v5769 = vadd.f32 0.0, %v5768
      %v5770 = vpop.f32.mrb[0].mxu0
      %v5771 = vadd.f32 0.0, %v5770
      %5772 = vmatprep.mubr.f32.mxu0 0.0
      %5773 = vmatmul.mubr.f32.gmra.mrb[0].mxu0 %v5599
      %v5774 = vpop.f32.mrb[0].mxu0
      %v5775 = vadd.f32 0.0, %v5774
      %v5776 = vpop.f32.mrb[0].mxu0
      %v5777 = vadd.f32 0.0, %v5776
      %5778 = vdwg.mxu0
      %v5779 = vadd.f32 %v5549, %v5668
      %v5780 = vadd.f32 %v5550, %v5670
      %v5781 = vadd.f32 %v5551, %v5757
      %v5782 = vadd.f32 %v5552, %v5759
      %v5783 = vadd.f32 %v5553, %v5674
      %v5784 = vadd.f32 %v5554, %v5676
      %v5785 = vadd.f32 %v5555, %v5763
      %v5786 = vadd.f32 %v5556, %v5765
      %v5787 = vadd.f32 %v5557, %v5680
      %v5788 = vadd.f32 %v5558, %v5682
      %v5789 = vadd.f32 %v5559, %v5769
      %v5790 = vadd.f32 %v5560, %v5771
      %v5791 = vadd.f32 %v5561, %v5686
      %v5792 = vadd.f32 %v5562, %v5688
      %v5793 = vadd.f32 %v5563, %v5775
      %v5794 = vadd.f32 %v5564, %v5777
      %s5795 = scalar_lea.vmem %s1, 768
      %v5796 = vld [vmem:[%s5795] sm:$0xff]
      %v5797 = vld [vmem:[%s5795 + $0x8] sm:$0xff]
      %v5798 = vld [vmem:[%s5795 + $0x10] sm:$0xff]
      %v5799 = vld [vmem:[%s5795 + $0x18] sm:$0xff]
      %5800 = vrot.lane.b32.xlu0 %v3260, 86
      %v5801 = vpop.permute.xlu0 %5800
      %5802 = vrot.lane.b32.xlu0 %v3261, 86
      %v5803 = vpop.permute.xlu0 %5802
      %5804 = vrot.lane.b32.xlu0 %v3262, 86
      %v5805 = vpop.permute.xlu0 %5804
      %5806 = vrot.lane.b32.xlu0 %v3263, 86
      %v5807 = vpop.permute.xlu0 %5806
      %5808 = vrot.lane.b32.xlu0 %v3264, 86
      %v5809 = vpop.permute.xlu0 %5808
      %vm5810 = vcmask 703488
      %v5811 = vsel %vm5810, %v5801, %v5803
      %v5812 = vsel %vm5810, %v5803, %v5805
      %v5813 = vsel %vm5810, %v5805, %v5807
      %v5814 = vsel %vm5810, %v5807, %v5809
      %v5820 = vsel %vm344, %v5796, 0
      %v5823 = vsel %vm344, %v5797, 0
      %v5826 = vsel %vm344, %v5798, 0
      %v5829 = vsel %vm344, %v5799, 0
      %5831 = vmatprep.subr.mxu0 %v5812
      %5832 = vmatpush1.msra.mxu0 %v5811
      %5833 = vmatprep.subr.mxu0 0.0
      %5834 = vmatpush1.msra.mxu0 0.0
      %5835 = vmatprep.subr.mxu0 0.0
      %5836 = vmatpush1.msra.mxu0 0.0
      %5837 = vmatprep.subr.mxu0 0.0
      %5838 = vmatpush1.msra.mxu0 0.0
      %5839 = vmatprep.subr.mxu0 0.0
      %5840 = vmatpush1.msra.mxu0 0.0
      %5841 = vmatprep.subr.mxu0 0.0
      %5842 = vmatpush1.msra.mxu0 0.0
      %5843 = vmatprep.subr.mxu0 0.0
      %5844 = vmatpush1.msra.mxu0 0.0
      %5845 = vmatprep.subr.mxu0 0.0
      %5846 = vmatpush1.msra.mxu0 0.0
      %5847 = vmatprep.subr.mxu0 0.0
      %5848 = vmatpush1.msra.mxu0 0.0
      %5849 = vmatprep.subr.mxu0 0.0
      %5850 = vmatpush1.msra.mxu0 0.0
      %5851 = vmatprep.subr.mxu0 0.0
      %5852 = vmatpush1.msra.mxu0 0.0
      %5853 = vmatprep.subr.mxu0 0.0
      %5854 = vmatpush1.msra.mxu0 0.0
      %5855 = vmatprep.subr.mxu0 0.0
      %5856 = vmatpush1.msra.mxu0 0.0
      %5857 = vmatprep.subr.mxu0 0.0
      %5858 = vmatpush1.msra.mxu0 0.0
      %5859 = vmatprep.subr.mxu0 0.0
      %5860 = vmatpush1.msra.mxu0 0.0
      %5861 = vmatprep.subr.mxu0 0.0
      %5862 = vmatpush1.msra.mxu0 0.0
      %5863 = vmatprep.subr.mxu0 0.0
      %5864 = vmatpush1.msra.mxu0 0.0
      %5865 = vmatprep.subr.mxu0 0.0
      %5866 = vmatpush1.msra.mxu0 0.0
      %5867 = vmatprep.subr.mxu0 0.0
      %5868 = vmatpush1.msra.mxu0 0.0
      %5869 = vmatprep.subr.mxu0 0.0
      %5870 = vmatpush1.msra.mxu0 0.0
      %5871 = vmatprep.subr.mxu0 0.0
      %5872 = vmatpush1.msra.mxu0 0.0
      %5873 = vmatprep.subr.mxu0 0.0
      %5874 = vmatpush1.msra.mxu0 0.0
      %5875 = vmatprep.subr.mxu0 0.0
      %5876 = vmatpush1.msra.mxu0 0.0
      %5877 = vmatprep.subr.mxu0 0.0
      %5878 = vmatpush1.msra.mxu0 0.0
      %5879 = vmatprep.subr.mxu0 0.0
      %5880 = vmatpush1.msra.mxu0 0.0
      %5881 = vmatprep.subr.mxu0 0.0
      %5882 = vmatpush1.msra.mxu0 0.0
      %5883 = vmatprep.subr.mxu0 0.0
      %5884 = vmatpush1.msra.mxu0 0.0
      %5885 = vmatprep.subr.mxu0 0.0
      %5886 = vmatpush1.msra.mxu0 0.0
      %5887 = vmatprep.subr.mxu0 0.0
      %5888 = vmatpush1.msra.mxu0 0.0
      %5889 = vmatprep.subr.mxu0 0.0
      %5890 = vmatpush1.msra.mxu0 0.0
      %5891 = vmatprep.subr.mxu0 0.0
      %5892 = vmatpush1.msra.mxu0 0.0
      %5893 = vmatprep.subr.mxu0 0.0
      %5894 = vmatpush1.msra.mxu0 0.0
      %5895 = vmatprep.mubr.f32.mxu0 0.0
      %5896 = vmatmul.mubr.f32.gmra.mrb[0].mxu0 %v5820
      %v5897 = vpop.f32.mrb[0].mxu0
      %v5898 = vadd.f32 0.0, %v5897
      %v5899 = vpop.f32.mrb[0].mxu0
      %v5900 = vadd.f32 0.0, %v5899
      %5901 = vmatprep.mubr.f32.mxu0 0.0
      %5902 = vmatmul.mubr.f32.gmra.mrb[0].mxu0 %v5823
      %v5903 = vpop.f32.mrb[0].mxu0
      %v5904 = vadd.f32 0.0, %v5903
      %v5905 = vpop.f32.mrb[0].mxu0
      %v5906 = vadd.f32 0.0, %v5905
      %5907 = vmatprep.mubr.f32.mxu0 0.0
      %5908 = vmatmul.mubr.f32.gmra.mrb[0].mxu0 %v5826
      %v5909 = vpop.f32.mrb[0].mxu0
      %v5910 = vadd.f32 0.0, %v5909
      %v5911 = vpop.f32.mrb[0].mxu0
      %v5912 = vadd.f32 0.0, %v5911
      %5913 = vmatprep.mubr.f32.mxu0 0.0
      %5914 = vmatmul.mubr.f32.gmra.mrb[0].mxu0 %v5829
      %v5915 = vpop.f32.mrb[0].mxu0
      %v5916 = vadd.f32 0.0, %v5915
      %v5917 = vpop.f32.mrb[0].mxu0
      %v5918 = vadd.f32 0.0, %v5917
      %5919 = vdwg.mxu0
      %5920 = vmatprep.subr.mxu0 %v5814
      %5921 = vmatpush1.msra.mxu0 %v5813
      %5922 = vmatprep.subr.mxu0 0.0
      %5923 = vmatpush1.msra.mxu0 0.0
      %5924 = vmatprep.subr.mxu0 0.0
      %5925 = vmatpush1.msra.mxu0 0.0
      %5926 = vmatprep.subr.mxu0 0.0
      %5927 = vmatpush1.msra.mxu0 0.0
      %5928 = vmatprep.subr.mxu0 0.0
      %5929 = vmatpush1.msra.mxu0 0.0
      %5930 = vmatprep.subr.mxu0 0.0
      %5931 = vmatpush1.msra.mxu0 0.0
      %5932 = vmatprep.subr.mxu0 0.0
      %5933 = vmatpush1.msra.mxu0 0.0
      %5934 = vmatprep.subr.mxu0 0.0
      %5935 = vmatpush1.msra.mxu0 0.0
      %5936 = vmatprep.subr.mxu0 0.0
      %5937 = vmatpush1.msra.mxu0 0.0
      %5938 = vmatprep.subr.mxu0 0.0
      %5939 = vmatpush1.msra.mxu0 0.0
      %5940 = vmatprep.subr.mxu0 0.0
      %5941 = vmatpush1.msra.mxu0 0.0
      %5942 = vmatprep.subr.mxu0 0.0
      %5943 = vmatpush1.msra.mxu0 0.0
      %5944 = vmatprep.subr.mxu0 0.0
      %5945 = vmatpush1.msra.mxu0 0.0
      %5946 = vmatprep.subr.mxu0 0.0
      %5947 = vmatpush1.msra.mxu0 0.0
      %5948 = vmatprep.subr.mxu0 0.0
      %5949 = vmatpush1.msra.mxu0 0.0
      %5950 = vmatprep.subr.mxu0 0.0
      %5951 = vmatpush1.msra.mxu0 0.0
      %5952 = vmatprep.subr.mxu0 0.0
      %5953 = vmatpush1.msra.mxu0 0.0
      %5954 = vmatprep.subr.mxu0 0.0
      %5955 = vmatpush1.msra.mxu0 0.0
      %5956 = vmatprep.subr.mxu0 0.0
      %5957 = vmatpush1.msra.mxu0 0.0
      %5958 = vmatprep.subr.mxu0 0.0
      %5959 = vmatpush1.msra.mxu0 0.0
      %5960 = vmatprep.subr.mxu0 0.0
      %5961 = vmatpush1.msra.mxu0 0.0
      %5962 = vmatprep.subr.mxu0 0.0
      %5963 = vmatpush1.msra.mxu0 0.0
      %5964 = vmatprep.subr.mxu0 0.0
      %5965 = vmatpush1.msra.mxu0 0.0
      %5966 = vmatprep.subr.mxu0 0.0
      %5967 = vmatpush1.msra.mxu0 0.0
      %5968 = vmatprep.subr.mxu0 0.0
      %5969 = vmatpush1.msra.mxu0 0.0
      %5970 = vmatprep.subr.mxu0 0.0
      %5971 = vmatpush1.msra.mxu0 0.0
      %5972 = vmatprep.subr.mxu0 0.0
      %5973 = vmatpush1.msra.mxu0 0.0
      %5974 = vmatprep.subr.mxu0 0.0
      %5975 = vmatpush1.msra.mxu0 0.0
      %5976 = vmatprep.subr.mxu0 0.0
      %5977 = vmatpush1.msra.mxu0 0.0
      %5978 = vmatprep.subr.mxu0 0.0
      %5979 = vmatpush1.msra.mxu0 0.0
      %5980 = vmatprep.subr.mxu0 0.0
      %5981 = vmatpush1.msra.mxu0 0.0
      %5982 = vmatprep.subr.mxu0 0.0
      %5983 = vmatpush1.msra.mxu0 0.0
      %5984 = vmatprep.mubr.f32.mxu0 0.0
      %5985 = vmatmul.mubr.f32.gmra.mrb[0].mxu0 %v5820
      %v5986 = vpop.f32.mrb[0].mxu0
      %v5987 = vadd.f32 0.0, %v5986
      %v5988 = vpop.f32.mrb[0].mxu0
      %v5989 = vadd.f32 0.0, %v5988
      %5990 = vmatprep.mubr.f32.mxu0 0.0
      %5991 = vmatmul.mubr.f32.gmra.mrb[0].mxu0 %v5823
      %v5992 = vpop.f32.mrb[0].mxu0
      %v5993 = vadd.f32 0.0, %v5992
      %v5994 = vpop.f32.mrb[0].mxu0
      %v5995 = vadd.f32 0.0, %v5994
      %5996 = vmatprep.mubr.f32.mxu0 0.0
      %5997 = vmatmul.mubr.f32.gmra.mrb[0].mxu0 %v5826
      %v5998 = vpop.f32.mrb[0].mxu0
      %v5999 = vadd.f32 0.0, %v5998
      %v6000 = vpop.f32.mrb[0].mxu0
      %v6001 = vadd.f32 0.0, %v6000
      %6002 = vmatprep.mubr.f32.mxu0 0.0
      %6003 = vmatmul.mubr.f32.gmra.mrb[0].mxu0 %v5829
      %v6004 = vpop.f32.mrb[0].mxu0
      %v6005 = vadd.f32 0.0, %v6004
      %v6006 = vpop.f32.mrb[0].mxu0
      %v6007 = vadd.f32 0.0, %v6006
      %6008 = vdwg.mxu0
      %v6009 = vadd.f32 %v5779, %v5898
      %v6010 = vadd.f32 %v5780, %v5900
      %v6011 = vadd.f32 %v5781, %v5987
      %v6012 = vadd.f32 %v5782, %v5989
      %v6013 = vadd.f32 %v5783, %v5904
      %v6014 = vadd.f32 %v5784, %v5906
      %v6015 = vadd.f32 %v5785, %v5993
      %v6016 = vadd.f32 %v5786, %v5995
      %v6017 = vadd.f32 %v5787, %v5910
      %v6018 = vadd.f32 %v5788, %v5912
      %v6019 = vadd.f32 %v5789, %v5999
      %v6020 = vadd.f32 %v5790, %v6001
      %v6021 = vadd.f32 %v5791, %v5916
      %v6022 = vadd.f32 %v5792, %v5918
      %v6023 = vadd.f32 %v5793, %v6005
      %v6024 = vadd.f32 %v5794, %v6007
      %v6025 = vld [vmem:[%s4] sm:$0xff]
      %v6026 = vld [vmem:[%s4 + $0x8] sm:$0xff]
      %v6027 = vld [vmem:[%s4 + $0x10] sm:$0xff]
      %v6028 = vld [vmem:[%s4 + $0x18] sm:$0xff]
      %6030 = vset.pattern.permute.xlu0 0
      %6031 = vperm.xlu0 %6030, %v6025
      %v6032 = vpop.permute.xlu0 %6031
      %6035 = vset.pattern.permute.xlu0 0
      %6036 = vperm.xlu0 %6035, %v6026
      %v6037 = vpop.permute.xlu0 %6036
      %6040 = vset.pattern.permute.xlu0 0
      %6041 = vperm.xlu0 %6040, %v6027
      %v6042 = vpop.permute.xlu0 %6041
      %6045 = vset.pattern.permute.xlu0 0
      %6046 = vperm.xlu0 %6045, %v6028
      %v6047 = vpop.permute.xlu0 %6046
      %v6049 = vadd.f32 %v6009, %v6032
      %v6050 = vadd.f32 %v6010, %v6032
      %v6051 = vadd.f32 %v6011, %v6032
      %v6052 = vadd.f32 %v6012, %v6032
      %v6053 = vadd.f32 %v6013, %v6037
      %v6054 = vadd.f32 %v6014, %v6037
      %v6055 = vadd.f32 %v6015, %v6037
      %v6056 = vadd.f32 %v6016, %v6037
      %v6057 = vadd.f32 %v6017, %v6042
      %v6058 = vadd.f32 %v6018, %v6042
      %v6059 = vadd.f32 %v6019, %v6042
      %v6060 = vadd.f32 %v6020, %v6042
      %v6061 = vadd.f32 %v6021, %v6047
      %v6062 = vadd.f32 %v6022, %v6047
      %v6063 = vadd.f32 %v6023, %v6047
      %v6064 = vadd.f32 %v6024, %v6047
      %vm6065 = vcmp.gt.f32.partialorder %v6049, 0.0
      %vm6066 = vcmp.gt.f32.partialorder %v6050, 0.0
      %vm6067 = vcmp.gt.f32.partialorder %v6051, 0.0
      %vm6068 = vcmp.gt.f32.partialorder %v6052, 0.0
      %vm6069 = vcmp.gt.f32.partialorder %v6053, 0.0
      %vm6070 = vcmp.gt.f32.partialorder %v6054, 0.0
      %vm6071 = vcmp.gt.f32.partialorder %v6055, 0.0
      %vm6072 = vcmp.gt.f32.partialorder %v6056, 0.0
      %vm6073 = vcmp.gt.f32.partialorder %v6057, 0.0
      %vm6074 = vcmp.gt.f32.partialorder %v6058, 0.0
      %vm6075 = vcmp.gt.f32.partialorder %v6059, 0.0
      %vm6076 = vcmp.gt.f32.partialorder %v6060, 0.0
      %vm6077 = vcmp.gt.f32.partialorder %v6061, 0.0
      %vm6078 = vcmp.gt.f32.partialorder %v6062, 0.0
      %vm6079 = vcmp.gt.f32.partialorder %v6063, 0.0
      %vm6080 = vcmp.gt.f32.partialorder %v6064, 0.0
      %v6081 = vmin.f32 %v6049, 0.0
      %v6082 = vmin.f32 %v6050, 0.0
      %v6083 = vmin.f32 %v6051, 0.0
      %v6084 = vmin.f32 %v6052, 0.0
      %v6085 = vmin.f32 %v6053, 0.0
      %v6086 = vmin.f32 %v6054, 0.0
      %v6087 = vmin.f32 %v6055, 0.0
      %v6088 = vmin.f32 %v6056, 0.0
      %v6089 = vmin.f32 %v6057, 0.0
      %v6090 = vmin.f32 %v6058, 0.0
      %v6091 = vmin.f32 %v6059, 0.0
      %v6092 = vmin.f32 %v6060, 0.0
      %v6093 = vmin.f32 %v6061, 0.0
      %v6094 = vmin.f32 %v6062, 0.0
      %v6095 = vmin.f32 %v6063, 0.0
      %v6096 = vmin.f32 %v6064, 0.0
      %v6097 = vmul.f32 %v6081, 1.442695
      %v6098 = vpow.pop %v6097
      %v6099 = vmul.f32 %v6082, 1.442695
      %v6100 = vpow.pop %v6099
      %v6101 = vmul.f32 %v6083, 1.442695
      %v6102 = vpow.pop %v6101
      %v6103 = vmul.f32 %v6084, 1.442695
      %v6104 = vpow.pop %v6103
      %v6105 = vmul.f32 %v6085, 1.442695
      %v6106 = vpow.pop %v6105
      %v6107 = vmul.f32 %v6086, 1.442695
      %v6108 = vpow.pop %v6107
      %v6109 = vmul.f32 %v6087, 1.442695
      %v6110 = vpow.pop %v6109
      %v6111 = vmul.f32 %v6088, 1.442695
      %v6112 = vpow.pop %v6111
      %v6113 = vmul.f32 %v6089, 1.442695
      %v6114 = vpow.pop %v6113
      %v6115 = vmul.f32 %v6090, 1.442695
      %v6116 = vpow.pop %v6115
      %v6117 = vmul.f32 %v6091, 1.442695
      %v6118 = vpow.pop %v6117
      %v6119 = vmul.f32 %v6092, 1.442695
      %v6120 = vpow.pop %v6119
      %v6121 = vmul.f32 %v6093, 1.442695
      %v6122 = vpow.pop %v6121
      %v6123 = vmul.f32 %v6094, 1.442695
      %v6124 = vpow.pop %v6123
      %v6125 = vmul.f32 %v6095, 1.442695
      %v6126 = vpow.pop %v6125
      %v6127 = vmul.f32 %v6096, 1.442695
      %v6128 = vpow.pop %v6127
      %v6129 = vsub.f32 %v6098, 1.0
      %v6130 = vsub.f32 %v6100, 1.0
      %v6131 = vsub.f32 %v6102, 1.0
      %v6132 = vsub.f32 %v6104, 1.0
      %v6133 = vsub.f32 %v6106, 1.0
      %v6134 = vsub.f32 %v6108, 1.0
      %v6135 = vsub.f32 %v6110, 1.0
      %v6136 = vsub.f32 %v6112, 1.0
      %v6137 = vsub.f32 %v6114, 1.0
      %v6138 = vsub.f32 %v6116, 1.0
      %v6139 = vsub.f32 %v6118, 1.0
      %v6140 = vsub.f32 %v6120, 1.0
      %v6141 = vsub.f32 %v6122, 1.0
      %v6142 = vsub.f32 %v6124, 1.0
      %v6143 = vsub.f32 %v6126, 1.0
      %v6144 = vsub.f32 %v6128, 1.0
      %v6145 = vsel %vm6065, %v6049, %v6129
      %v6146 = vsel %vm6066, %v6050, %v6130
      %v6147 = vsel %vm6067, %v6051, %v6131
      %v6148 = vsel %vm6068, %v6052, %v6132
      %v6149 = vsel %vm6069, %v6053, %v6133
      %v6150 = vsel %vm6070, %v6054, %v6134
      %v6151 = vsel %vm6071, %v6055, %v6135
      %v6152 = vsel %vm6072, %v6056, %v6136
      %v6153 = vsel %vm6073, %v6057, %v6137
      %v6154 = vsel %vm6074, %v6058, %v6138
      %v6155 = vsel %vm6075, %v6059, %v6139
      %v6156 = vsel %vm6076, %v6060, %v6140
      %v6157 = vsel %vm6077, %v6061, %v6141
      %v6158 = vsel %vm6078, %v6062, %v6142
      %v6159 = vsel %vm6079, %v6063, %v6143
      %v6160 = vsel %vm6080, %v6064, %v6144
      %v6161 = vmul.f32 %v6145, %v281
      %v6162 = vmul.f32 %v6146, %v285
      %v6163 = vmul.f32 %v6147, %v289
      %v6164 = vmul.f32 %v6148, %v293
      %v6165 = vmul.f32 %v6149, %v281
      %v6166 = vmul.f32 %v6150, %v285
      %v6167 = vmul.f32 %v6151, %v289
      %v6168 = vmul.f32 %v6152, %v293
      %v6169 = vmul.f32 %v6153, %v281
      %v6170 = vmul.f32 %v6154, %v285
      %v6171 = vmul.f32 %v6155, %v289
      %v6172 = vmul.f32 %v6156, %v293
      %v6173 = vmul.f32 %v6157, %v281
      %v6174 = vmul.f32 %v6158, %v285
      %v6175 = vmul.f32 %v6159, %v289
      %v6176 = vmul.f32 %v6160, %v293
      %6177 = vst [vmem:[%s251] sm:$0xff] %v6161
      %6178 = vst [vmem:[%s251 + $0x8] sm:$0xff] %v6162
      %6179 = vst [vmem:[%s251 + $0x10] sm:$0xff] %v6163
      %6180 = vst [vmem:[%s251 + $0x18] sm:$0xff] %v6164
      %6181 = vst [vmem:[%s251 + $0x20] sm:$0xff] %v6165
      %6182 = vst [vmem:[%s251 + $0x28] sm:$0xff] %v6166
      %6183 = vst [vmem:[%s251 + $0x30] sm:$0xff] %v6167
      %6184 = vst [vmem:[%s251 + $0x38] sm:$0xff] %v6168
      %6185 = vst [vmem:[%s251 + $0x40] sm:$0xff] %v6169
      %6186 = vst [vmem:[%s251 + $0x48] sm:$0xff] %v6170
      %6187 = vst [vmem:[%s251 + $0x50] sm:$0xff] %v6171
      %6188 = vst [vmem:[%s251 + $0x58] sm:$0xff] %v6172
      %6189 = vst [vmem:[%s251 + $0x60] sm:$0xff] %v6173
      %6190 = vst [vmem:[%s251 + $0x68] sm:$0xff] %v6174
      %6191 = vst [vmem:[%s251 + $0x70] sm:$0xff] %v6175
      %6192 = vst [vmem:[%s251 + $0x78] sm:$0xff] %v6176
      %6193 = vst [vmem:[#allocation2 + $0x8] sm:$0xff] %v6161
      %6194 = vst [vmem:[#allocation2 + $0x10] sm:$0xff] %v6162
      %6195 = vst [vmem:[#allocation2 + $0x18] sm:$0xff] %v6163
      %6196 = vst [vmem:[#allocation2 + $0x20] sm:$0xff] %v6164
      %6197 = vst [vmem:[#allocation2 + $0x38] sm:$0xff] %v6165
      %6198 = vst [vmem:[#allocation2 + $0x40] sm:$0xff] %v6166
      %6199 = vst [vmem:[#allocation2 + $0x48] sm:$0xff] %v6167
      %6200 = vst [vmem:[#allocation2 + $0x50] sm:$0xff] %v6168
      %6201 = vst [vmem:[#allocation2 + $0x68] sm:$0xff] %v6169
      %6202 = vst [vmem:[#allocation2 + $0x70] sm:$0xff] %v6170
      %6203 = vst [vmem:[#allocation2 + $0x78] sm:$0xff] %v6171
      %6204 = vst [vmem:[#allocation2 + $0x80] sm:$0xff] %v6172
      %6205 = vst [vmem:[#allocation2 + $0x98] sm:$0xff] %v6173
      %6206 = vst [vmem:[#allocation2 + $0xa0] sm:$0xff] %v6174
      %6207 = vst [vmem:[#allocation2 + $0xa8] sm:$0xff] %v6175
      %6208 = vst [vmem:[#allocation2 + $0xb0] sm:$0xff] %v6176
      %v6209 = vld [vmem:[%s2] sm:$0xff]
      %v6210 = vld [vmem:[%s2 + $0x8] sm:$0xff]
      %v6211 = vld [vmem:[%s2 + $0x10] sm:$0xff]
      %v6212 = vld [vmem:[%s2 + $0x18] sm:$0xff]
      %v6213 = vld [vmem:[#allocation2] sm:$0xff]
      %v6214 = vld [vmem:[#allocation2 + $0x8] sm:$0xff]
      %v6215 = vld [vmem:[#allocation2 + $0x10] sm:$0xff]
      %v6216 = vld [vmem:[#allocation2 + $0x18] sm:$0xff]
      %v6217 = vld [vmem:[#allocation2 + $0x20] sm:$0xff]
      %v6218 = vld [vmem:[#allocation2 + $0x30] sm:$0xff]
      %v6219 = vld [vmem:[#allocation2 + $0x38] sm:$0xff]
      %v6220 = vld [vmem:[#allocation2 + $0x40] sm:$0xff]
      %v6221 = vld [vmem:[#allocation2 + $0x48] sm:$0xff]
      %v6222 = vld [vmem:[#allocation2 + $0x50] sm:$0xff]
      %v6223 = vld [vmem:[#allocation2 + $0x60] sm:$0xff]
      %v6224 = vld [vmem:[#allocation2 + $0x68] sm:$0xff]
      %v6225 = vld [vmem:[#allocation2 + $0x70] sm:$0xff]
      %v6226 = vld [vmem:[#allocation2 + $0x78] sm:$0xff]
      %v6227 = vld [vmem:[#allocation2 + $0x80] sm:$0xff]
      %v6228 = vld [vmem:[#allocation2 + $0x90] sm:$0xff]
      %v6229 = vld [vmem:[#allocation2 + $0x98] sm:$0xff]
      %v6230 = vld [vmem:[#allocation2 + $0xa0] sm:$0xff]
      %v6231 = vld [vmem:[#allocation2 + $0xa8] sm:$0xff]
      %v6232 = vld [vmem:[#allocation2 + $0xb0] sm:$0xff]
      %s6233 = scalar_lea.vmem %s2, 32
      %v6234 = vld [vmem:[%s6233] sm:$0xff]
      %v6235 = vld [vmem:[%s6233 + $0x8] sm:$0xff]
      %v6236 = vld [vmem:[%s6233 + $0x10] sm:$0xff]
      %v6237 = vld [vmem:[%s6233 + $0x18] sm:$0xff]
      %6258 = vrot.lane.b32.xlu0 %v6213, 20
      %v6259 = vpop.permute.xlu0 %6258
      %6260 = vrot.lane.b32.xlu0 %v6214, 20
      %v6261 = vpop.permute.xlu0 %6260
      %6262 = vrot.lane.b32.xlu0 %v6215, 20
      %v6263 = vpop.permute.xlu0 %6262
      %6264 = vrot.lane.b32.xlu0 %v6216, 20
      %v6265 = vpop.permute.xlu0 %6264
      %6266 = vrot.lane.b32.xlu0 %v6217, 20
      %v6267 = vpop.permute.xlu0 %6266
      %6268 = vrot.lane.b32.xlu0 %v6218, 20
      %v6269 = vpop.permute.xlu0 %6268
      %6270 = vrot.lane.b32.xlu0 %v6219, 20
      %v6271 = vpop.permute.xlu0 %6270
      %6272 = vrot.lane.b32.xlu0 %v6220, 20
      %v6273 = vpop.permute.xlu0 %6272
      %6274 = vrot.lane.b32.xlu0 %v6221, 20
      %v6275 = vpop.permute.xlu0 %6274
      %6276 = vrot.lane.b32.xlu0 %v6222, 20
      %v6277 = vpop.permute.xlu0 %6276
      %6278 = vrot.lane.b32.xlu0 %v6223, 20
      %v6279 = vpop.permute.xlu0 %6278
      %6280 = vrot.lane.b32.xlu0 %v6224, 20
      %v6281 = vpop.permute.xlu0 %6280
      %6282 = vrot.lane.b32.xlu0 %v6225, 20
      %v6283 = vpop.permute.xlu0 %6282
      %6284 = vrot.lane.b32.xlu0 %v6226, 20
      %v6285 = vpop.permute.xlu0 %6284
      %6286 = vrot.lane.b32.xlu0 %v6227, 20
      %v6287 = vpop.permute.xlu0 %6286
      %6288 = vrot.lane.b32.xlu0 %v6228, 20
      %v6289 = vpop.permute.xlu0 %6288
      %6290 = vrot.lane.b32.xlu0 %v6229, 20
      %v6291 = vpop.permute.xlu0 %6290
      %6292 = vrot.lane.b32.xlu0 %v6230, 20
      %v6293 = vpop.permute.xlu0 %6292
      %6294 = vrot.lane.b32.xlu0 %v6231, 20
      %v6295 = vpop.permute.xlu0 %6294
      %6296 = vrot.lane.b32.xlu0 %v6232, 20
      %v6297 = vpop.permute.xlu0 %6296
      %v6298 = vsel %vm1909, %v6259, %v6261
      %v6299 = vsel %vm1909, %v6261, %v6263
      %v6300 = vsel %vm1909, %v6263, %v6265
      %v6301 = vsel %vm1909, %v6265, %v6267
      %v6302 = vsel %vm1909, %v6269, %v6271
      %v6303 = vsel %vm1909, %v6271, %v6273
      %v6304 = vsel %vm1909, %v6273, %v6275
      %v6305 = vsel %vm1909, %v6275, %v6277
      %v6306 = vsel %vm1909, %v6279, %v6281
      %v6307 = vsel %vm1909, %v6281, %v6283
      %v6308 = vsel %vm1909, %v6283, %v6285
      %v6309 = vsel %vm1909, %v6285, %v6287
      %v6310 = vsel %vm1909, %v6289, %v6291
      %v6311 = vsel %vm1909, %v6291, %v6293
      %v6312 = vsel %vm1909, %v6293, %v6295
      %v6313 = vsel %vm1909, %v6295, %v6297
      %vm6330 = vcmask 261120
      %v6332 = vsel %vm6330, %v6234, 0
      %v6335 = vsel %vm6330, %v6235, 0
      %v6338 = vsel %vm6330, %v6236, 0
      %v6341 = vsel %vm6330, %v6237, 0
      %6343 = vmatprep.subr.mxu0 %v6299
      %6344 = vmatpush1.msra.mxu0 %v6298
      %6345 = vmatprep.subr.mxu0 %v6303
      %6346 = vmatpush1.msra.mxu0 %v6302
      %6347 = vmatprep.subr.mxu0 %v6307
      %6348 = vmatpush1.msra.mxu0 %v6306
      %6349 = vmatprep.subr.mxu0 %v6311
      %6350 = vmatpush1.msra.mxu0 %v6310
      %6351 = vmatprep.subr.mxu0 0.0
      %6352 = vmatpush1.msra.mxu0 0.0
      %6353 = vmatprep.subr.mxu0 0.0
      %6354 = vmatpush1.msra.mxu0 0.0
      %6355 = vmatprep.subr.mxu0 0.0
      %6356 = vmatpush1.msra.mxu0 0.0
      %6357 = vmatprep.subr.mxu0 0.0
      %6358 = vmatpush1.msra.mxu0 0.0
      %6359 = vmatprep.subr.mxu0 0.0
      %6360 = vmatpush1.msra.mxu0 0.0
      %6361 = vmatprep.subr.mxu0 0.0
      %6362 = vmatpush1.msra.mxu0 0.0
      %6363 = vmatprep.subr.mxu0 0.0
      %6364 = vmatpush1.msra.mxu0 0.0
      %6365 = vmatprep.subr.mxu0 0.0
      %6366 = vmatpush1.msra.mxu0 0.0
      %6367 = vmatprep.subr.mxu0 0.0
      %6368 = vmatpush1.msra.mxu0 0.0
      %6369 = vmatprep.subr.mxu0 0.0
      %6370 = vmatpush1.msra.mxu0 0.0
      %6371 = vmatprep.subr.mxu0 0.0
      %6372 = vmatpush1.msra.mxu0 0.0
      %6373 = vmatprep.subr.mxu0 0.0
      %6374 = vmatpush1.msra.mxu0 0.0
      %6375 = vmatprep.subr.mxu0 0.0
      %6376 = vmatpush1.msra.mxu0 0.0
      %6377 = vmatprep.subr.mxu0 0.0
      %6378 = vmatpush1.msra.mxu0 0.0
      %6379 = vmatprep.subr.mxu0 0.0
      %6380 = vmatpush1.msra.mxu0 0.0
      %6381 = vmatprep.subr.mxu0 0.0
      %6382 = vmatpush1.msra.mxu0 0.0
      %6383 = vmatprep.subr.mxu0 0.0
      %6384 = vmatpush1.msra.mxu0 0.0
      %6385 = vmatprep.subr.mxu0 0.0
      %6386 = vmatpush1.msra.mxu0 0.0
      %6387 = vmatprep.subr.mxu0 0.0
      %6388 = vmatpush1.msra.mxu0 0.0
      %6389 = vmatprep.subr.mxu0 0.0
      %6390 = vmatpush1.msra.mxu0 0.0
      %6391 = vmatprep.subr.mxu0 0.0
      %6392 = vmatpush1.msra.mxu0 0.0
      %6393 = vmatprep.subr.mxu0 0.0
      %6394 = vmatpush1.msra.mxu0 0.0
      %6395 = vmatprep.subr.mxu0 0.0
      %6396 = vmatpush1.msra.mxu0 0.0
      %6397 = vmatprep.subr.mxu0 0.0
      %6398 = vmatpush1.msra.mxu0 0.0
      %6399 = vmatprep.subr.mxu0 0.0
      %6400 = vmatpush1.msra.mxu0 0.0
      %6401 = vmatprep.subr.mxu0 0.0
      %6402 = vmatpush1.msra.mxu0 0.0
      %6403 = vmatprep.subr.mxu0 0.0
      %6404 = vmatpush1.msra.mxu0 0.0
      %6405 = vmatprep.subr.mxu0 0.0
      %6406 = vmatpush1.msra.mxu0 0.0
      %6407 = vmatprep.mubr.f32.mxu0 0.0
      %6408 = vmatmul.mubr.f32.gmra.mrb[0].mxu0 %v6332
      %v6409 = vpop.f32.mrb[0].mxu0
      %v6410 = vadd.f32 0.0, %v6409
      %v6411 = vpop.f32.mrb[0].mxu0
      %v6412 = vadd.f32 0.0, %v6411
      %6413 = vmatprep.mubr.f32.mxu0 0.0
      %6414 = vmatmul.mubr.f32.gmra.mrb[0].mxu0 %v6335
      %v6415 = vpop.f32.mrb[0].mxu0
      %v6416 = vadd.f32 0.0, %v6415
      %v6417 = vpop.f32.mrb[0].mxu0
      %v6418 = vadd.f32 0.0, %v6417
      %6419 = vmatprep.mubr.f32.mxu0 0.0
      %6420 = vmatmul.mubr.f32.gmra.mrb[0].mxu0 %v6338
      %v6421 = vpop.f32.mrb[0].mxu0
      %v6422 = vadd.f32 0.0, %v6421
      %v6423 = vpop.f32.mrb[0].mxu0
      %v6424 = vadd.f32 0.0, %v6423
      %6425 = vmatprep.mubr.f32.mxu0 0.0
      %6426 = vmatmul.mubr.f32.gmra.mrb[0].mxu0 %v6341
      %v6427 = vpop.f32.mrb[0].mxu0
      %v6428 = vadd.f32 0.0, %v6427
      %v6429 = vpop.f32.mrb[0].mxu0
      %v6430 = vadd.f32 0.0, %v6429
      %6431 = vdwg.mxu0
      %6432 = vmatprep.subr.mxu0 %v6301
      %6433 = vmatpush1.msra.mxu0 %v6300
      %6434 = vmatprep.subr.mxu0 %v6305
      %6435 = vmatpush1.msra.mxu0 %v6304
      %6436 = vmatprep.subr.mxu0 %v6309
      %6437 = vmatpush1.msra.mxu0 %v6308
      %6438 = vmatprep.subr.mxu0 %v6313
      %6439 = vmatpush1.msra.mxu0 %v6312
      %6440 = vmatprep.subr.mxu0 0.0
      %6441 = vmatpush1.msra.mxu0 0.0
      %6442 = vmatprep.subr.mxu0 0.0
      %6443 = vmatpush1.msra.mxu0 0.0
      %6444 = vmatprep.subr.mxu0 0.0
      %6445 = vmatpush1.msra.mxu0 0.0
      %6446 = vmatprep.subr.mxu0 0.0
      %6447 = vmatpush1.msra.mxu0 0.0
      %6448 = vmatprep.subr.mxu0 0.0
      %6449 = vmatpush1.msra.mxu0 0.0
      %6450 = vmatprep.subr.mxu0 0.0
      %6451 = vmatpush1.msra.mxu0 0.0
      %6452 = vmatprep.subr.mxu0 0.0
      %6453 = vmatpush1.msra.mxu0 0.0
      %6454 = vmatprep.subr.mxu0 0.0
      %6455 = vmatpush1.msra.mxu0 0.0
      %6456 = vmatprep.subr.mxu0 0.0
      %6457 = vmatpush1.msra.mxu0 0.0
      %6458 = vmatprep.subr.mxu0 0.0
      %6459 = vmatpush1.msra.mxu0 0.0
      %6460 = vmatprep.subr.mxu0 0.0
      %6461 = vmatpush1.msra.mxu0 0.0
      %6462 = vmatprep.subr.mxu0 0.0
      %6463 = vmatpush1.msra.mxu0 0.0
      %6464 = vmatprep.subr.mxu0 0.0
      %6465 = vmatpush1.msra.mxu0 0.0
      %6466 = vmatprep.subr.mxu0 0.0
      %6467 = vmatpush1.msra.mxu0 0.0
      %6468 = vmatprep.subr.mxu0 0.0
      %6469 = vmatpush1.msra.mxu0 0.0
      %6470 = vmatprep.subr.mxu0 0.0
      %6471 = vmatpush1.msra.mxu0 0.0
      %6472 = vmatprep.subr.mxu0 0.0
      %6473 = vmatpush1.msra.mxu0 0.0
      %6474 = vmatprep.subr.mxu0 0.0
      %6475 = vmatpush1.msra.mxu0 0.0
      %6476 = vmatprep.subr.mxu0 0.0
      %6477 = vmatpush1.msra.mxu0 0.0
      %6478 = vmatprep.subr.mxu0 0.0
      %6479 = vmatpush1.msra.mxu0 0.0
      %6480 = vmatprep.subr.mxu0 0.0
      %6481 = vmatpush1.msra.mxu0 0.0
      %6482 = vmatprep.subr.mxu0 0.0
      %6483 = vmatpush1.msra.mxu0 0.0
      %6484 = vmatprep.subr.mxu0 0.0
      %6485 = vmatpush1.msra.mxu0 0.0
      %6486 = vmatprep.subr.mxu0 0.0
      %6487 = vmatpush1.msra.mxu0 0.0
      %6488 = vmatprep.subr.mxu0 0.0
      %6489 = vmatpush1.msra.mxu0 0.0
      %6490 = vmatprep.subr.mxu0 0.0
      %6491 = vmatpush1.msra.mxu0 0.0
      %6492 = vmatprep.subr.mxu0 0.0
      %6493 = vmatpush1.msra.mxu0 0.0
      %6494 = vmatprep.subr.mxu0 0.0
      %6495 = vmatpush1.msra.mxu0 0.0
      %6496 = vmatprep.mubr.f32.mxu0 0.0
      %6497 = vmatmul.mubr.f32.gmra.mrb[0].mxu0 %v6332
      %v6498 = vpop.f32.mrb[0].mxu0
      %v6499 = vadd.f32 0.0, %v6498
      %v6500 = vpop.f32.mrb[0].mxu0
      %v6501 = vadd.f32 0.0, %v6500
      %6502 = vmatprep.mubr.f32.mxu0 0.0
      %6503 = vmatmul.mubr.f32.gmra.mrb[0].mxu0 %v6335
      %v6504 = vpop.f32.mrb[0].mxu0
      %v6505 = vadd.f32 0.0, %v6504
      %v6506 = vpop.f32.mrb[0].mxu0
      %v6507 = vadd.f32 0.0, %v6506
      %6508 = vmatprep.mubr.f32.mxu0 0.0
      %6509 = vmatmul.mubr.f32.gmra.mrb[0].mxu0 %v6338
      %v6510 = vpop.f32.mrb[0].mxu0
      %v6511 = vadd.f32 0.0, %v6510
      %v6512 = vpop.f32.mrb[0].mxu0
      %v6513 = vadd.f32 0.0, %v6512
      %6514 = vmatprep.mubr.f32.mxu0 0.0
      %6515 = vmatmul.mubr.f32.gmra.mrb[0].mxu0 %v6341
      %v6516 = vpop.f32.mrb[0].mxu0
      %v6517 = vadd.f32 0.0, %v6516
      %v6518 = vpop.f32.mrb[0].mxu0
      %v6519 = vadd.f32 0.0, %v6518
      %6520 = vdwg.mxu0
      %6521 = vrot.lane.b32.xlu0 %v6213, 21
      %v6522 = vpop.permute.xlu0 %6521
      %6523 = vrot.lane.b32.xlu0 %v6214, 21
      %v6524 = vpop.permute.xlu0 %6523
      %6525 = vrot.lane.b32.xlu0 %v6215, 21
      %v6526 = vpop.permute.xlu0 %6525
      %6527 = vrot.lane.b32.xlu0 %v6216, 21
      %v6528 = vpop.permute.xlu0 %6527
      %6529 = vrot.lane.b32.xlu0 %v6217, 21
      %v6530 = vpop.permute.xlu0 %6529
      %6531 = vrot.lane.b32.xlu0 %v6218, 21
      %v6532 = vpop.permute.xlu0 %6531
      %6533 = vrot.lane.b32.xlu0 %v6219, 21
      %v6534 = vpop.permute.xlu0 %6533
      %6535 = vrot.lane.b32.xlu0 %v6220, 21
      %v6536 = vpop.permute.xlu0 %6535
      %6537 = vrot.lane.b32.xlu0 %v6221, 21
      %v6538 = vpop.permute.xlu0 %6537
      %6539 = vrot.lane.b32.xlu0 %v6222, 21
      %v6540 = vpop.permute.xlu0 %6539
      %6541 = vrot.lane.b32.xlu0 %v6223, 21
      %v6542 = vpop.permute.xlu0 %6541
      %6543 = vrot.lane.b32.xlu0 %v6224, 21
      %v6544 = vpop.permute.xlu0 %6543
      %6545 = vrot.lane.b32.xlu0 %v6225, 21
      %v6546 = vpop.permute.xlu0 %6545
      %6547 = vrot.lane.b32.xlu0 %v6226, 21
      %v6548 = vpop.permute.xlu0 %6547
      %6549 = vrot.lane.b32.xlu0 %v6227, 21
      %v6550 = vpop.permute.xlu0 %6549
      %6551 = vrot.lane.b32.xlu0 %v6228, 21
      %v6552 = vpop.permute.xlu0 %6551
      %6553 = vrot.lane.b32.xlu0 %v6229, 21
      %v6554 = vpop.permute.xlu0 %6553
      %6555 = vrot.lane.b32.xlu0 %v6230, 21
      %v6556 = vpop.permute.xlu0 %6555
      %6557 = vrot.lane.b32.xlu0 %v6231, 21
      %v6558 = vpop.permute.xlu0 %6557
      %6559 = vrot.lane.b32.xlu0 %v6232, 21
      %v6560 = vpop.permute.xlu0 %6559
      %v6561 = vsel %vm1679, %v6522, %v6524
      %v6562 = vsel %vm1679, %v6524, %v6526
      %v6563 = vsel %vm1679, %v6526, %v6528
      %v6564 = vsel %vm1679, %v6528, %v6530
      %v6565 = vsel %vm1679, %v6532, %v6534
      %v6566 = vsel %vm1679, %v6534, %v6536
      %v6567 = vsel %vm1679, %v6536, %v6538
      %v6568 = vsel %vm1679, %v6538, %v6540
      %v6569 = vsel %vm1679, %v6542, %v6544
      %v6570 = vsel %vm1679, %v6544, %v6546
      %v6571 = vsel %vm1679, %v6546, %v6548
      %v6572 = vsel %vm1679, %v6548, %v6550
      %v6573 = vsel %vm1679, %v6552, %v6554
      %v6574 = vsel %vm1679, %v6554, %v6556
      %v6575 = vsel %vm1679, %v6556, %v6558
      %v6576 = vsel %vm1679, %v6558, %v6560
      %v6594 = vsel %vm6330, %v6209, 0
      %v6597 = vsel %vm6330, %v6210, 0
      %v6600 = vsel %vm6330, %v6211, 0
      %v6603 = vsel %vm6330, %v6212, 0
      %6605 = vmatprep.subr.mxu0 %v6562
      %6606 = vmatpush1.msra.mxu0 %v6561
      %6607 = vmatprep.subr.mxu0 %v6566
      %6608 = vmatpush1.msra.mxu0 %v6565
      %6609 = vmatprep.subr.mxu0 %v6570
      %6610 = vmatpush1.msra.mxu0 %v6569
      %6611 = vmatprep.subr.mxu0 %v6574
      %6612 = vmatpush1.msra.mxu0 %v6573
      %6613 = vmatprep.subr.mxu0 0.0
      %6614 = vmatpush1.msra.mxu0 0.0
      %6615 = vmatprep.subr.mxu0 0.0
      %6616 = vmatpush1.msra.mxu0 0.0
      %6617 = vmatprep.subr.mxu0 0.0
      %6618 = vmatpush1.msra.mxu0 0.0
      %6619 = vmatprep.subr.mxu0 0.0
      %6620 = vmatpush1.msra.mxu0 0.0
      %6621 = vmatprep.subr.mxu0 0.0
      %6622 = vmatpush1.msra.mxu0 0.0
      %6623 = vmatprep.subr.mxu0 0.0
      %6624 = vmatpush1.msra.mxu0 0.0
      %6625 = vmatprep.subr.mxu0 0.0
      %6626 = vmatpush1.msra.mxu0 0.0
      %6627 = vmatprep.subr.mxu0 0.0
      %6628 = vmatpush1.msra.mxu0 0.0
      %6629 = vmatprep.subr.mxu0 0.0
      %6630 = vmatpush1.msra.mxu0 0.0
      %6631 = vmatprep.subr.mxu0 0.0
      %6632 = vmatpush1.msra.mxu0 0.0
      %6633 = vmatprep.subr.mxu0 0.0
      %6634 = vmatpush1.msra.mxu0 0.0
      %6635 = vmatprep.subr.mxu0 0.0
      %6636 = vmatpush1.msra.mxu0 0.0
      %6637 = vmatprep.subr.mxu0 0.0
      %6638 = vmatpush1.msra.mxu0 0.0
      %6639 = vmatprep.subr.mxu0 0.0
      %6640 = vmatpush1.msra.mxu0 0.0
      %6641 = vmatprep.subr.mxu0 0.0
      %6642 = vmatpush1.msra.mxu0 0.0
      %6643 = vmatprep.subr.mxu0 0.0
      %6644 = vmatpush1.msra.mxu0 0.0
      %6645 = vmatprep.subr.mxu0 0.0
      %6646 = vmatpush1.msra.mxu0 0.0
      %6647 = vmatprep.subr.mxu0 0.0
      %6648 = vmatpush1.msra.mxu0 0.0
      %6649 = vmatprep.subr.mxu0 0.0
      %6650 = vmatpush1.msra.mxu0 0.0
      %6651 = vmatprep.subr.mxu0 0.0
      %6652 = vmatpush1.msra.mxu0 0.0
      %6653 = vmatprep.subr.mxu0 0.0
      %6654 = vmatpush1.msra.mxu0 0.0
      %6655 = vmatprep.subr.mxu0 0.0
      %6656 = vmatpush1.msra.mxu0 0.0
      %6657 = vmatprep.subr.mxu0 0.0
      %6658 = vmatpush1.msra.mxu0 0.0
      %6659 = vmatprep.subr.mxu0 0.0
      %6660 = vmatpush1.msra.mxu0 0.0
      %6661 = vmatprep.subr.mxu0 0.0
      %6662 = vmatpush1.msra.mxu0 0.0
      %6663 = vmatprep.subr.mxu0 0.0
      %6664 = vmatpush1.msra.mxu0 0.0
      %6665 = vmatprep.subr.mxu0 0.0
      %6666 = vmatpush1.msra.mxu0 0.0
      %6667 = vmatprep.subr.mxu0 0.0
      %6668 = vmatpush1.msra.mxu0 0.0
      %6669 = vmatprep.mubr.f32.mxu0 0.0
      %6670 = vmatmul.mubr.f32.gmra.mrb[0].mxu0 %v6594
      %v6671 = vpop.f32.mrb[0].mxu0
      %v6672 = vadd.f32 %v6410, %v6671
      %v6673 = vpop.f32.mrb[0].mxu0
      %v6674 = vadd.f32 %v6412, %v6673
      %6675 = vmatprep.mubr.f32.mxu0 0.0
      %6676 = vmatmul.mubr.f32.gmra.mrb[0].mxu0 %v6597
      %v6677 = vpop.f32.mrb[0].mxu0
      %v6678 = vadd.f32 %v6416, %v6677
      %v6679 = vpop.f32.mrb[0].mxu0
      %v6680 = vadd.f32 %v6418, %v6679
      %6681 = vmatprep.mubr.f32.mxu0 0.0
      %6682 = vmatmul.mubr.f32.gmra.mrb[0].mxu0 %v6600
      %v6683 = vpop.f32.mrb[0].mxu0
      %v6684 = vadd.f32 %v6422, %v6683
      %v6685 = vpop.f32.mrb[0].mxu0
      %v6686 = vadd.f32 %v6424, %v6685
      %6687 = vmatprep.mubr.f32.mxu0 0.0
      %6688 = vmatmul.mubr.f32.gmra.mrb[0].mxu0 %v6603
      %v6689 = vpop.f32.mrb[0].mxu0
      %v6690 = vadd.f32 %v6428, %v6689
      %v6691 = vpop.f32.mrb[0].mxu0
      %v6692 = vadd.f32 %v6430, %v6691
      %6693 = vdwg.mxu0
      %6694 = vmatprep.subr.mxu0 %v6564
      %6695 = vmatpush1.msra.mxu0 %v6563
      %6696 = vmatprep.subr.mxu0 %v6568
      %6697 = vmatpush1.msra.mxu0 %v6567
      %6698 = vmatprep.subr.mxu0 %v6572
      %6699 = vmatpush1.msra.mxu0 %v6571
      %6700 = vmatprep.subr.mxu0 %v6576
      %6701 = vmatpush1.msra.mxu0 %v6575
      %6702 = vmatprep.subr.mxu0 0.0
      %6703 = vmatpush1.msra.mxu0 0.0
      %6704 = vmatprep.subr.mxu0 0.0
      %6705 = vmatpush1.msra.mxu0 0.0
      %6706 = vmatprep.subr.mxu0 0.0
      %6707 = vmatpush1.msra.mxu0 0.0
      %6708 = vmatprep.subr.mxu0 0.0
      %6709 = vmatpush1.msra.mxu0 0.0
      %6710 = vmatprep.subr.mxu0 0.0
      %6711 = vmatpush1.msra.mxu0 0.0
      %6712 = vmatprep.subr.mxu0 0.0
      %6713 = vmatpush1.msra.mxu0 0.0
      %6714 = vmatprep.subr.mxu0 0.0
      %6715 = vmatpush1.msra.mxu0 0.0
      %6716 = vmatprep.subr.mxu0 0.0
      %6717 = vmatpush1.msra.mxu0 0.0
      %6718 = vmatprep.subr.mxu0 0.0
      %6719 = vmatpush1.msra.mxu0 0.0
      %6720 = vmatprep.subr.mxu0 0.0
      %6721 = vmatpush1.msra.mxu0 0.0
      %6722 = vmatprep.subr.mxu0 0.0
      %6723 = vmatpush1.msra.mxu0 0.0
      %6724 = vmatprep.subr.mxu0 0.0
      %6725 = vmatpush1.msra.mxu0 0.0
      %6726 = vmatprep.subr.mxu0 0.0
      %6727 = vmatpush1.msra.mxu0 0.0
      %6728 = vmatprep.subr.mxu0 0.0
      %6729 = vmatpush1.msra.mxu0 0.0
      %6730 = vmatprep.subr.mxu0 0.0
      %6731 = vmatpush1.msra.mxu0 0.0
      %6732 = vmatprep.subr.mxu0 0.0
      %6733 = vmatpush1.msra.mxu0 0.0
      %6734 = vmatprep.subr.mxu0 0.0
      %6735 = vmatpush1.msra.mxu0 0.0
      %6736 = vmatprep.subr.mxu0 0.0
      %6737 = vmatpush1.msra.mxu0 0.0
      %6738 = vmatprep.subr.mxu0 0.0
      %6739 = vmatpush1.msra.mxu0 0.0
      %6740 = vmatprep.subr.mxu0 0.0
      %6741 = vmatpush1.msra.mxu0 0.0
      %6742 = vmatprep.subr.mxu0 0.0
      %6743 = vmatpush1.msra.mxu0 0.0
      %6744 = vmatprep.subr.mxu0 0.0
      %6745 = vmatpush1.msra.mxu0 0.0
      %6746 = vmatprep.subr.mxu0 0.0
      %6747 = vmatpush1.msra.mxu0 0.0
      %6748 = vmatprep.subr.mxu0 0.0
      %6749 = vmatpush1.msra.mxu0 0.0
      %6750 = vmatprep.subr.mxu0 0.0
      %6751 = vmatpush1.msra.mxu0 0.0
      %6752 = vmatprep.subr.mxu0 0.0
      %6753 = vmatpush1.msra.mxu0 0.0
      %6754 = vmatprep.subr.mxu0 0.0
      %6755 = vmatpush1.msra.mxu0 0.0
      %6756 = vmatprep.subr.mxu0 0.0
      %6757 = vmatpush1.msra.mxu0 0.0
      %6758 = vmatprep.mubr.f32.mxu0 0.0
      %6759 = vmatmul.mubr.f32.gmra.mrb[0].mxu0 %v6594
      %v6760 = vpop.f32.mrb[0].mxu0
      %v6761 = vadd.f32 %v6499, %v6760
      %v6762 = vpop.f32.mrb[0].mxu0
      %v6763 = vadd.f32 %v6501, %v6762
      %6764 = vmatprep.mubr.f32.mxu0 0.0
      %6765 = vmatmul.mubr.f32.gmra.mrb[0].mxu0 %v6597
      %v6766 = vpop.f32.mrb[0].mxu0
      %v6767 = vadd.f32 %v6505, %v6766
      %v6768 = vpop.f32.mrb[0].mxu0
      %v6769 = vadd.f32 %v6507, %v6768
      %6770 = vmatprep.mubr.f32.mxu0 0.0
      %6771 = vmatmul.mubr.f32.gmra.mrb[0].mxu0 %v6600
      %v6772 = vpop.f32.mrb[0].mxu0
      %v6773 = vadd.f32 %v6511, %v6772
      %v6774 = vpop.f32.mrb[0].mxu0
      %v6775 = vadd.f32 %v6513, %v6774
      %6776 = vmatprep.mubr.f32.mxu0 0.0
      %6777 = vmatmul.mubr.f32.gmra.mrb[0].mxu0 %v6603
      %v6778 = vpop.f32.mrb[0].mxu0
      %v6779 = vadd.f32 %v6517, %v6778
      %v6780 = vpop.f32.mrb[0].mxu0
      %v6781 = vadd.f32 %v6519, %v6780
      %6782 = vdwg.mxu0
      %s6783 = scalar_lea.vmem %s2, 64
      %v6784 = vld [vmem:[%s6783] sm:$0xff]
      %v6785 = vld [vmem:[%s6783 + $0x8] sm:$0xff]
      %v6786 = vld [vmem:[%s6783 + $0x10] sm:$0xff]
      %v6787 = vld [vmem:[%s6783 + $0x18] sm:$0xff]
      %6788 = vrot.lane.b32.xlu0 %v6213, 19
      %v6789 = vpop.permute.xlu0 %6788
      %6790 = vrot.lane.b32.xlu0 %v6214, 19
      %v6791 = vpop.permute.xlu0 %6790
      %6792 = vrot.lane.b32.xlu0 %v6215, 19
      %v6793 = vpop.permute.xlu0 %6792
      %6794 = vrot.lane.b32.xlu0 %v6216, 19
      %v6795 = vpop.permute.xlu0 %6794
      %6796 = vrot.lane.b32.xlu0 %v6217, 19
      %v6797 = vpop.permute.xlu0 %6796
      %6798 = vrot.lane.b32.xlu0 %v6218, 19
      %v6799 = vpop.permute.xlu0 %6798
      %6800 = vrot.lane.b32.xlu0 %v6219, 19
      %v6801 = vpop.permute.xlu0 %6800
      %6802 = vrot.lane.b32.xlu0 %v6220, 19
      %v6803 = vpop.permute.xlu0 %6802
      %6804 = vrot.lane.b32.xlu0 %v6221, 19
      %v6805 = vpop.permute.xlu0 %6804
      %6806 = vrot.lane.b32.xlu0 %v6222, 19
      %v6807 = vpop.permute.xlu0 %6806
      %6808 = vrot.lane.b32.xlu0 %v6223, 19
      %v6809 = vpop.permute.xlu0 %6808
      %6810 = vrot.lane.b32.xlu0 %v6224, 19
      %v6811 = vpop.permute.xlu0 %6810
      %6812 = vrot.lane.b32.xlu0 %v6225, 19
      %v6813 = vpop.permute.xlu0 %6812
      %6814 = vrot.lane.b32.xlu0 %v6226, 19
      %v6815 = vpop.permute.xlu0 %6814
      %6816 = vrot.lane.b32.xlu0 %v6227, 19
      %v6817 = vpop.permute.xlu0 %6816
      %6818 = vrot.lane.b32.xlu0 %v6228, 19
      %v6819 = vpop.permute.xlu0 %6818
      %6820 = vrot.lane.b32.xlu0 %v6229, 19
      %v6821 = vpop.permute.xlu0 %6820
      %6822 = vrot.lane.b32.xlu0 %v6230, 19
      %v6823 = vpop.permute.xlu0 %6822
      %6824 = vrot.lane.b32.xlu0 %v6231, 19
      %v6825 = vpop.permute.xlu0 %6824
      %6826 = vrot.lane.b32.xlu0 %v6232, 19
      %v6827 = vpop.permute.xlu0 %6826
      %v6828 = vsel %vm2139, %v6789, %v6791
      %v6829 = vsel %vm2139, %v6791, %v6793
      %v6830 = vsel %vm2139, %v6793, %v6795
      %v6831 = vsel %vm2139, %v6795, %v6797
      %v6832 = vsel %vm2139, %v6799, %v6801
      %v6833 = vsel %vm2139, %v6801, %v6803
      %v6834 = vsel %vm2139, %v6803, %v6805
      %v6835 = vsel %vm2139, %v6805, %v6807
      %v6836 = vsel %vm2139, %v6809, %v6811
      %v6837 = vsel %vm2139, %v6811, %v6813
      %v6838 = vsel %vm2139, %v6813, %v6815
      %v6839 = vsel %vm2139, %v6815, %v6817
      %v6840 = vsel %vm2139, %v6819, %v6821
      %v6841 = vsel %vm2139, %v6821, %v6823
      %v6842 = vsel %vm2139, %v6823, %v6825
      %v6843 = vsel %vm2139, %v6825, %v6827
      %v6861 = vsel %vm6330, %v6784, 0
      %v6864 = vsel %vm6330, %v6785, 0
      %v6867 = vsel %vm6330, %v6786, 0
      %v6870 = vsel %vm6330, %v6787, 0
      %6872 = vmatprep.subr.mxu0 %v6829
      %6873 = vmatpush1.msra.mxu0 %v6828
      %6874 = vmatprep.subr.mxu0 %v6833
      %6875 = vmatpush1.msra.mxu0 %v6832
      %6876 = vmatprep.subr.mxu0 %v6837
      %6877 = vmatpush1.msra.mxu0 %v6836
      %6878 = vmatprep.subr.mxu0 %v6841
      %6879 = vmatpush1.msra.mxu0 %v6840
      %6880 = vmatprep.subr.mxu0 0.0
      %6881 = vmatpush1.msra.mxu0 0.0
      %6882 = vmatprep.subr.mxu0 0.0
      %6883 = vmatpush1.msra.mxu0 0.0
      %6884 = vmatprep.subr.mxu0 0.0
      %6885 = vmatpush1.msra.mxu0 0.0
      %6886 = vmatprep.subr.mxu0 0.0
      %6887 = vmatpush1.msra.mxu0 0.0
      %6888 = vmatprep.subr.mxu0 0.0
      %6889 = vmatpush1.msra.mxu0 0.0
      %6890 = vmatprep.subr.mxu0 0.0
      %6891 = vmatpush1.msra.mxu0 0.0
      %6892 = vmatprep.subr.mxu0 0.0
      %6893 = vmatpush1.msra.mxu0 0.0
      %6894 = vmatprep.subr.mxu0 0.0
      %6895 = vmatpush1.msra.mxu0 0.0
      %6896 = vmatprep.subr.mxu0 0.0
      %6897 = vmatpush1.msra.mxu0 0.0
      %6898 = vmatprep.subr.mxu0 0.0
      %6899 = vmatpush1.msra.mxu0 0.0
      %6900 = vmatprep.subr.mxu0 0.0
      %6901 = vmatpush1.msra.mxu0 0.0
      %6902 = vmatprep.subr.mxu0 0.0
      %6903 = vmatpush1.msra.mxu0 0.0
      %6904 = vmatprep.subr.mxu0 0.0
      %6905 = vmatpush1.msra.mxu0 0.0
      %6906 = vmatprep.subr.mxu0 0.0
      %6907 = vmatpush1.msra.mxu0 0.0
      %6908 = vmatprep.subr.mxu0 0.0
      %6909 = vmatpush1.msra.mxu0 0.0
      %6910 = vmatprep.subr.mxu0 0.0
      %6911 = vmatpush1.msra.mxu0 0.0
      %6912 = vmatprep.subr.mxu0 0.0
      %6913 = vmatpush1.msra.mxu0 0.0
      %6914 = vmatprep.subr.mxu0 0.0
      %6915 = vmatpush1.msra.mxu0 0.0
      %6916 = vmatprep.subr.mxu0 0.0
      %6917 = vmatpush1.msra.mxu0 0.0
      %6918 = vmatprep.subr.mxu0 0.0
      %6919 = vmatpush1.msra.mxu0 0.0
      %6920 = vmatprep.subr.mxu0 0.0
      %6921 = vmatpush1.msra.mxu0 0.0
      %6922 = vmatprep.subr.mxu0 0.0
      %6923 = vmatpush1.msra.mxu0 0.0
      %6924 = vmatprep.subr.mxu0 0.0
      %6925 = vmatpush1.msra.mxu0 0.0
      %6926 = vmatprep.subr.mxu0 0.0
      %6927 = vmatpush1.msra.mxu0 0.0
      %6928 = vmatprep.subr.mxu0 0.0
      %6929 = vmatpush1.msra.mxu0 0.0
      %6930 = vmatprep.subr.mxu0 0.0
      %6931 = vmatpush1.msra.mxu0 0.0
      %6932 = vmatprep.subr.mxu0 0.0
      %6933 = vmatpush1.msra.mxu0 0.0
      %6934 = vmatprep.subr.mxu0 0.0
      %6935 = vmatpush1.msra.mxu0 0.0
      %6936 = vmatprep.mubr.f32.mxu0 0.0
      %6937 = vmatmul.mubr.f32.gmra.mrb[0].mxu0 %v6861
      %v6938 = vpop.f32.mrb[0].mxu0
      %v6939 = vadd.f32 0.0, %v6938
      %v6940 = vpop.f32.mrb[0].mxu0
      %v6941 = vadd.f32 0.0, %v6940
      %6942 = vmatprep.mubr.f32.mxu0 0.0
      %6943 = vmatmul.mubr.f32.gmra.mrb[0].mxu0 %v6864
      %v6944 = vpop.f32.mrb[0].mxu0
      %v6945 = vadd.f32 0.0, %v6944
      %v6946 = vpop.f32.mrb[0].mxu0
      %v6947 = vadd.f32 0.0, %v6946
      %6948 = vmatprep.mubr.f32.mxu0 0.0
      %6949 = vmatmul.mubr.f32.gmra.mrb[0].mxu0 %v6867
      %v6950 = vpop.f32.mrb[0].mxu0
      %v6951 = vadd.f32 0.0, %v6950
      %v6952 = vpop.f32.mrb[0].mxu0
      %v6953 = vadd.f32 0.0, %v6952
      %6954 = vmatprep.mubr.f32.mxu0 0.0
      %6955 = vmatmul.mubr.f32.gmra.mrb[0].mxu0 %v6870
      %v6956 = vpop.f32.mrb[0].mxu0
      %v6957 = vadd.f32 0.0, %v6956
      %v6958 = vpop.f32.mrb[0].mxu0
      %v6959 = vadd.f32 0.0, %v6958
      %6960 = vdwg.mxu0
      %6961 = vmatprep.subr.mxu0 %v6831
      %6962 = vmatpush1.msra.mxu0 %v6830
      %6963 = vmatprep.subr.mxu0 %v6835
      %6964 = vmatpush1.msra.mxu0 %v6834
      %6965 = vmatprep.subr.mxu0 %v6839
      %6966 = vmatpush1.msra.mxu0 %v6838
      %6967 = vmatprep.subr.mxu0 %v6843
      %6968 = vmatpush1.msra.mxu0 %v6842
      %6969 = vmatprep.subr.mxu0 0.0
      %6970 = vmatpush1.msra.mxu0 0.0
      %6971 = vmatprep.subr.mxu0 0.0
      %6972 = vmatpush1.msra.mxu0 0.0
      %6973 = vmatprep.subr.mxu0 0.0
      %6974 = vmatpush1.msra.mxu0 0.0
      %6975 = vmatprep.subr.mxu0 0.0
      %6976 = vmatpush1.msra.mxu0 0.0
      %6977 = vmatprep.subr.mxu0 0.0
      %6978 = vmatpush1.msra.mxu0 0.0
      %6979 = vmatprep.subr.mxu0 0.0
      %6980 = vmatpush1.msra.mxu0 0.0
      %6981 = vmatprep.subr.mxu0 0.0
      %6982 = vmatpush1.msra.mxu0 0.0
      %6983 = vmatprep.subr.mxu0 0.0
      %6984 = vmatpush1.msra.mxu0 0.0
      %6985 = vmatprep.subr.mxu0 0.0
      %6986 = vmatpush1.msra.mxu0 0.0
      %6987 = vmatprep.subr.mxu0 0.0
      %6988 = vmatpush1.msra.mxu0 0.0
      %6989 = vmatprep.subr.mxu0 0.0
      %6990 = vmatpush1.msra.mxu0 0.0
      %6991 = vmatprep.subr.mxu0 0.0
      %6992 = vmatpush1.msra.mxu0 0.0
      %6993 = vmatprep.subr.mxu0 0.0
      %6994 = vmatpush1.msra.mxu0 0.0
      %6995 = vmatprep.subr.mxu0 0.0
      %6996 = vmatpush1.msra.mxu0 0.0
      %6997 = vmatprep.subr.mxu0 0.0
      %6998 = vmatpush1.msra.mxu0 0.0
      %6999 = vmatprep.subr.mxu0 0.0
      %7000 = vmatpush1.msra.mxu0 0.0
      %7001 = vmatprep.subr.mxu0 0.0
      %7002 = vmatpush1.msra.mxu0 0.0
      %7003 = vmatprep.subr.mxu0 0.0
      %7004 = vmatpush1.msra.mxu0 0.0
      %7005 = vmatprep.subr.mxu0 0.0
      %7006 = vmatpush1.msra.mxu0 0.0
      %7007 = vmatprep.subr.mxu0 0.0
      %7008 = vmatpush1.msra.mxu0 0.0
      %7009 = vmatprep.subr.mxu0 0.0
      %7010 = vmatpush1.msra.mxu0 0.0
      %7011 = vmatprep.subr.mxu0 0.0
      %7012 = vmatpush1.msra.mxu0 0.0
      %7013 = vmatprep.subr.mxu0 0.0
      %7014 = vmatpush1.msra.mxu0 0.0
      %7015 = vmatprep.subr.mxu0 0.0
      %7016 = vmatpush1.msra.mxu0 0.0
      %7017 = vmatprep.subr.mxu0 0.0
      %7018 = vmatpush1.msra.mxu0 0.0
      %7019 = vmatprep.subr.mxu0 0.0
      %7020 = vmatpush1.msra.mxu0 0.0
      %7021 = vmatprep.subr.mxu0 0.0
      %7022 = vmatpush1.msra.mxu0 0.0
      %7023 = vmatprep.subr.mxu0 0.0
      %7024 = vmatpush1.msra.mxu0 0.0
      %7025 = vmatprep.mubr.f32.mxu0 0.0
      %7026 = vmatmul.mubr.f32.gmra.mrb[0].mxu0 %v6861
      %v7027 = vpop.f32.mrb[0].mxu0
      %v7028 = vadd.f32 0.0, %v7027
      %v7029 = vpop.f32.mrb[0].mxu0
      %v7030 = vadd.f32 0.0, %v7029
      %7031 = vmatprep.mubr.f32.mxu0 0.0
      %7032 = vmatmul.mubr.f32.gmra.mrb[0].mxu0 %v6864
      %v7033 = vpop.f32.mrb[0].mxu0
      %v7034 = vadd.f32 0.0, %v7033
      %v7035 = vpop.f32.mrb[0].mxu0
      %v7036 = vadd.f32 0.0, %v7035
      %7037 = vmatprep.mubr.f32.mxu0 0.0
      %7038 = vmatmul.mubr.f32.gmra.mrb[0].mxu0 %v6867
      %v7039 = vpop.f32.mrb[0].mxu0
      %v7040 = vadd.f32 0.0, %v7039
      %v7041 = vpop.f32.mrb[0].mxu0
      %v7042 = vadd.f32 0.0, %v7041
      %7043 = vmatprep.mubr.f32.mxu0 0.0
      %7044 = vmatmul.mubr.f32.gmra.mrb[0].mxu0 %v6870
      %v7045 = vpop.f32.mrb[0].mxu0
      %v7046 = vadd.f32 0.0, %v7045
      %v7047 = vpop.f32.mrb[0].mxu0
      %v7048 = vadd.f32 0.0, %v7047
      %7049 = vdwg.mxu0
      %v7050 = vadd.f32 %v6672, %v6939
      %v7051 = vadd.f32 %v6674, %v6941
      %v7052 = vadd.f32 %v6761, %v7028
      %v7053 = vadd.f32 %v6763, %v7030
      %v7054 = vadd.f32 %v6678, %v6945
      %v7055 = vadd.f32 %v6680, %v6947
      %v7056 = vadd.f32 %v6767, %v7034
      %v7057 = vadd.f32 %v6769, %v7036
      %v7058 = vadd.f32 %v6684, %v6951
      %v7059 = vadd.f32 %v6686, %v6953
      %v7060 = vadd.f32 %v6773, %v7040
      %v7061 = vadd.f32 %v6775, %v7042
      %v7062 = vadd.f32 %v6690, %v6957
      %v7063 = vadd.f32 %v6692, %v6959
      %v7064 = vadd.f32 %v6779, %v7046
      %v7065 = vadd.f32 %v6781, %v7048
      %s7066 = scalar_lea.vmem %s2, 96
      %v7067 = vld [vmem:[%s7066] sm:$0xff]
      %v7068 = vld [vmem:[%s7066 + $0x8] sm:$0xff]
      %v7069 = vld [vmem:[%s7066 + $0x10] sm:$0xff]
      %v7070 = vld [vmem:[%s7066 + $0x18] sm:$0xff]
      %7071 = vrot.lane.b32.xlu0 %v6213, 1
      %v7072 = vpop.permute.xlu0 %7071
      %7073 = vrot.lane.b32.xlu0 %v6214, 1
      %v7074 = vpop.permute.xlu0 %7073
      %7075 = vrot.lane.b32.xlu0 %v6215, 1
      %v7076 = vpop.permute.xlu0 %7075
      %7077 = vrot.lane.b32.xlu0 %v6216, 1
      %v7078 = vpop.permute.xlu0 %7077
      %7079 = vrot.lane.b32.xlu0 %v6217, 1
      %v7080 = vpop.permute.xlu0 %7079
      %7081 = vrot.lane.b32.xlu0 %v6218, 1
      %v7082 = vpop.permute.xlu0 %7081
      %7083 = vrot.lane.b32.xlu0 %v6219, 1
      %v7084 = vpop.permute.xlu0 %7083
      %7085 = vrot.lane.b32.xlu0 %v6220, 1
      %v7086 = vpop.permute.xlu0 %7085
      %7087 = vrot.lane.b32.xlu0 %v6221, 1
      %v7088 = vpop.permute.xlu0 %7087
      %7089 = vrot.lane.b32.xlu0 %v6222, 1
      %v7090 = vpop.permute.xlu0 %7089
      %7091 = vrot.lane.b32.xlu0 %v6223, 1
      %v7092 = vpop.permute.xlu0 %7091
      %7093 = vrot.lane.b32.xlu0 %v6224, 1
      %v7094 = vpop.permute.xlu0 %7093
      %7095 = vrot.lane.b32.xlu0 %v6225, 1
      %v7096 = vpop.permute.xlu0 %7095
      %7097 = vrot.lane.b32.xlu0 %v6226, 1
      %v7098 = vpop.permute.xlu0 %7097
      %7099 = vrot.lane.b32.xlu0 %v6227, 1
      %v7100 = vpop.permute.xlu0 %7099
      %7101 = vrot.lane.b32.xlu0 %v6228, 1
      %v7102 = vpop.permute.xlu0 %7101
      %7103 = vrot.lane.b32.xlu0 %v6229, 1
      %v7104 = vpop.permute.xlu0 %7103
      %7105 = vrot.lane.b32.xlu0 %v6230, 1
      %v7106 = vpop.permute.xlu0 %7105
      %7107 = vrot.lane.b32.xlu0 %v6231, 1
      %v7108 = vpop.permute.xlu0 %7107
      %7109 = vrot.lane.b32.xlu0 %v6232, 1
      %v7110 = vpop.permute.xlu0 %7109
      %v7111 = vsel %vm2829, %v7072, %v7074
      %v7112 = vsel %vm2829, %v7074, %v7076
      %v7113 = vsel %vm2829, %v7076, %v7078
      %v7114 = vsel %vm2829, %v7078, %v7080
      %v7115 = vsel %vm2829, %v7082, %v7084
      %v7116 = vsel %vm2829, %v7084, %v7086
      %v7117 = vsel %vm2829, %v7086, %v7088
      %v7118 = vsel %vm2829, %v7088, %v7090
      %v7119 = vsel %vm2829, %v7092, %v7094
      %v7120 = vsel %vm2829, %v7094, %v7096
      %v7121 = vsel %vm2829, %v7096, %v7098
      %v7122 = vsel %vm2829, %v7098, %v7100
      %v7123 = vsel %vm2829, %v7102, %v7104
      %v7124 = vsel %vm2829, %v7104, %v7106
      %v7125 = vsel %vm2829, %v7106, %v7108
      %v7126 = vsel %vm2829, %v7108, %v7110
      %v7144 = vsel %vm6330, %v7067, 0
      %v7147 = vsel %vm6330, %v7068, 0
      %v7150 = vsel %vm6330, %v7069, 0
      %v7153 = vsel %vm6330, %v7070, 0
      %7155 = vmatprep.subr.mxu0 %v7112
      %7156 = vmatpush1.msra.mxu0 %v7111
      %7157 = vmatprep.subr.mxu0 %v7116
      %7158 = vmatpush1.msra.mxu0 %v7115
      %7159 = vmatprep.subr.mxu0 %v7120
      %7160 = vmatpush1.msra.mxu0 %v7119
      %7161 = vmatprep.subr.mxu0 %v7124
      %7162 = vmatpush1.msra.mxu0 %v7123
      %7163 = vmatprep.subr.mxu0 0.0
      %7164 = vmatpush1.msra.mxu0 0.0
      %7165 = vmatprep.subr.mxu0 0.0
      %7166 = vmatpush1.msra.mxu0 0.0
      %7167 = vmatprep.subr.mxu0 0.0
      %7168 = vmatpush1.msra.mxu0 0.0
      %7169 = vmatprep.subr.mxu0 0.0
      %7170 = vmatpush1.msra.mxu0 0.0
      %7171 = vmatprep.subr.mxu0 0.0
      %7172 = vmatpush1.msra.mxu0 0.0
      %7173 = vmatprep.subr.mxu0 0.0
      %7174 = vmatpush1.msra.mxu0 0.0
      %7175 = vmatprep.subr.mxu0 0.0
      %7176 = vmatpush1.msra.mxu0 0.0
      %7177 = vmatprep.subr.mxu0 0.0
      %7178 = vmatpush1.msra.mxu0 0.0
      %7179 = vmatprep.subr.mxu0 0.0
      %7180 = vmatpush1.msra.mxu0 0.0
      %7181 = vmatprep.subr.mxu0 0.0
      %7182 = vmatpush1.msra.mxu0 0.0
      %7183 = vmatprep.subr.mxu0 0.0
      %7184 = vmatpush1.msra.mxu0 0.0
      %7185 = vmatprep.subr.mxu0 0.0
      %7186 = vmatpush1.msra.mxu0 0.0
      %7187 = vmatprep.subr.mxu0 0.0
      %7188 = vmatpush1.msra.mxu0 0.0
      %7189 = vmatprep.subr.mxu0 0.0
      %7190 = vmatpush1.msra.mxu0 0.0
      %7191 = vmatprep.subr.mxu0 0.0
      %7192 = vmatpush1.msra.mxu0 0.0
      %7193 = vmatprep.subr.mxu0 0.0
      %7194 = vmatpush1.msra.mxu0 0.0
      %7195 = vmatprep.subr.mxu0 0.0
      %7196 = vmatpush1.msra.mxu0 0.0
      %7197 = vmatprep.subr.mxu0 0.0
      %7198 = vmatpush1.msra.mxu0 0.0
      %7199 = vmatprep.subr.mxu0 0.0
      %7200 = vmatpush1.msra.mxu0 0.0
      %7201 = vmatprep.subr.mxu0 0.0
      %7202 = vmatpush1.msra.mxu0 0.0
      %7203 = vmatprep.subr.mxu0 0.0
      %7204 = vmatpush1.msra.mxu0 0.0
      %7205 = vmatprep.subr.mxu0 0.0
      %7206 = vmatpush1.msra.mxu0 0.0
      %7207 = vmatprep.subr.mxu0 0.0
      %7208 = vmatpush1.msra.mxu0 0.0
      %7209 = vmatprep.subr.mxu0 0.0
      %7210 = vmatpush1.msra.mxu0 0.0
      %7211 = vmatprep.subr.mxu0 0.0
      %7212 = vmatpush1.msra.mxu0 0.0
      %7213 = vmatprep.subr.mxu0 0.0
      %7214 = vmatpush1.msra.mxu0 0.0
      %7215 = vmatprep.subr.mxu0 0.0
      %7216 = vmatpush1.msra.mxu0 0.0
      %7217 = vmatprep.subr.mxu0 0.0
      %7218 = vmatpush1.msra.mxu0 0.0
      %7219 = vmatprep.mubr.f32.mxu0 0.0
      %7220 = vmatmul.mubr.f32.gmra.mrb[0].mxu0 %v7144
      %v7221 = vpop.f32.mrb[0].mxu0
      %v7222 = vadd.f32 0.0, %v7221
      %v7223 = vpop.f32.mrb[0].mxu0
      %v7224 = vadd.f32 0.0, %v7223
      %7225 = vmatprep.mubr.f32.mxu0 0.0
      %7226 = vmatmul.mubr.f32.gmra.mrb[0].mxu0 %v7147
      %v7227 = vpop.f32.mrb[0].mxu0
      %v7228 = vadd.f32 0.0, %v7227
      %v7229 = vpop.f32.mrb[0].mxu0
      %v7230 = vadd.f32 0.0, %v7229
      %7231 = vmatprep.mubr.f32.mxu0 0.0
      %7232 = vmatmul.mubr.f32.gmra.mrb[0].mxu0 %v7150
      %v7233 = vpop.f32.mrb[0].mxu0
      %v7234 = vadd.f32 0.0, %v7233
      %v7235 = vpop.f32.mrb[0].mxu0
      %v7236 = vadd.f32 0.0, %v7235
      %7237 = vmatprep.mubr.f32.mxu0 0.0
      %7238 = vmatmul.mubr.f32.gmra.mrb[0].mxu0 %v7153
      %v7239 = vpop.f32.mrb[0].mxu0
      %v7240 = vadd.f32 0.0, %v7239
      %v7241 = vpop.f32.mrb[0].mxu0
      %v7242 = vadd.f32 0.0, %v7241
      %7243 = vdwg.mxu0
      %7244 = vmatprep.subr.mxu0 %v7114
      %7245 = vmatpush1.msra.mxu0 %v7113
      %7246 = vmatprep.subr.mxu0 %v7118
      %7247 = vmatpush1.msra.mxu0 %v7117
      %7248 = vmatprep.subr.mxu0 %v7122
      %7249 = vmatpush1.msra.mxu0 %v7121
      %7250 = vmatprep.subr.mxu0 %v7126
      %7251 = vmatpush1.msra.mxu0 %v7125
      %7252 = vmatprep.subr.mxu0 0.0
      %7253 = vmatpush1.msra.mxu0 0.0
      %7254 = vmatprep.subr.mxu0 0.0
      %7255 = vmatpush1.msra.mxu0 0.0
      %7256 = vmatprep.subr.mxu0 0.0
      %7257 = vmatpush1.msra.mxu0 0.0
      %7258 = vmatprep.subr.mxu0 0.0
      %7259 = vmatpush1.msra.mxu0 0.0
      %7260 = vmatprep.subr.mxu0 0.0
      %7261 = vmatpush1.msra.mxu0 0.0
      %7262 = vmatprep.subr.mxu0 0.0
      %7263 = vmatpush1.msra.mxu0 0.0
      %7264 = vmatprep.subr.mxu0 0.0
      %7265 = vmatpush1.msra.mxu0 0.0
      %7266 = vmatprep.subr.mxu0 0.0
      %7267 = vmatpush1.msra.mxu0 0.0
      %7268 = vmatprep.subr.mxu0 0.0
      %7269 = vmatpush1.msra.mxu0 0.0
      %7270 = vmatprep.subr.mxu0 0.0
      %7271 = vmatpush1.msra.mxu0 0.0
      %7272 = vmatprep.subr.mxu0 0.0
      %7273 = vmatpush1.msra.mxu0 0.0
      %7274 = vmatprep.subr.mxu0 0.0
      %7275 = vmatpush1.msra.mxu0 0.0
      %7276 = vmatprep.subr.mxu0 0.0
      %7277 = vmatpush1.msra.mxu0 0.0
      %7278 = vmatprep.subr.mxu0 0.0
      %7279 = vmatpush1.msra.mxu0 0.0
      %7280 = vmatprep.subr.mxu0 0.0
      %7281 = vmatpush1.msra.mxu0 0.0
      %7282 = vmatprep.subr.mxu0 0.0
      %7283 = vmatpush1.msra.mxu0 0.0
      %7284 = vmatprep.subr.mxu0 0.0
      %7285 = vmatpush1.msra.mxu0 0.0
      %7286 = vmatprep.subr.mxu0 0.0
      %7287 = vmatpush1.msra.mxu0 0.0
      %7288 = vmatprep.subr.mxu0 0.0
      %7289 = vmatpush1.msra.mxu0 0.0
      %7290 = vmatprep.subr.mxu0 0.0
      %7291 = vmatpush1.msra.mxu0 0.0
      %7292 = vmatprep.subr.mxu0 0.0
      %7293 = vmatpush1.msra.mxu0 0.0
      %7294 = vmatprep.subr.mxu0 0.0
      %7295 = vmatpush1.msra.mxu0 0.0
      %7296 = vmatprep.subr.mxu0 0.0
      %7297 = vmatpush1.msra.mxu0 0.0
      %7298 = vmatprep.subr.mxu0 0.0
      %7299 = vmatpush1.msra.mxu0 0.0
      %7300 = vmatprep.subr.mxu0 0.0
      %7301 = vmatpush1.msra.mxu0 0.0
      %7302 = vmatprep.subr.mxu0 0.0
      %7303 = vmatpush1.msra.mxu0 0.0
      %7304 = vmatprep.subr.mxu0 0.0
      %7305 = vmatpush1.msra.mxu0 0.0
      %7306 = vmatprep.subr.mxu0 0.0
      %7307 = vmatpush1.msra.mxu0 0.0
      %7308 = vmatprep.mubr.f32.mxu0 0.0
      %7309 = vmatmul.mubr.f32.gmra.mrb[0].mxu0 %v7144
      %v7310 = vpop.f32.mrb[0].mxu0
      %v7311 = vadd.f32 0.0, %v7310
      %v7312 = vpop.f32.mrb[0].mxu0
      %v7313 = vadd.f32 0.0, %v7312
      %7314 = vmatprep.mubr.f32.mxu0 0.0
      %7315 = vmatmul.mubr.f32.gmra.mrb[0].mxu0 %v7147
      %v7316 = vpop.f32.mrb[0].mxu0
      %v7317 = vadd.f32 0.0, %v7316
      %v7318 = vpop.f32.mrb[0].mxu0
      %v7319 = vadd.f32 0.0, %v7318
      %7320 = vmatprep.mubr.f32.mxu0 0.0
      %7321 = vmatmul.mubr.f32.gmra.mrb[0].mxu0 %v7150
      %v7322 = vpop.f32.mrb[0].mxu0
      %v7323 = vadd.f32 0.0, %v7322
      %v7324 = vpop.f32.mrb[0].mxu0
      %v7325 = vadd.f32 0.0, %v7324
      %7326 = vmatprep.mubr.f32.mxu0 0.0
      %7327 = vmatmul.mubr.f32.gmra.mrb[0].mxu0 %v7153
      %v7328 = vpop.f32.mrb[0].mxu0
      %v7329 = vadd.f32 0.0, %v7328
      %v7330 = vpop.f32.mrb[0].mxu0
      %v7331 = vadd.f32 0.0, %v7330
      %7332 = vdwg.mxu0
      %v7333 = vadd.f32 %v7050, %v7222
      %v7334 = vadd.f32 %v7051, %v7224
      %v7335 = vadd.f32 %v7052, %v7311
      %v7336 = vadd.f32 %v7053, %v7313
      %v7337 = vadd.f32 %v7054, %v7228
      %v7338 = vadd.f32 %v7055, %v7230
      %v7339 = vadd.f32 %v7056, %v7317
      %v7340 = vadd.f32 %v7057, %v7319
      %v7341 = vadd.f32 %v7058, %v7234
      %v7342 = vadd.f32 %v7059, %v7236
      %v7343 = vadd.f32 %v7060, %v7323
      %v7344 = vadd.f32 %v7061, %v7325
      %v7345 = vadd.f32 %v7062, %v7240
      %v7346 = vadd.f32 %v7063, %v7242
      %v7347 = vadd.f32 %v7064, %v7329
      %v7348 = vadd.f32 %v7065, %v7331
      %s7349 = scalar_lea.vmem %s2, 128
      %v7350 = vld [vmem:[%s7349] sm:$0xff]
      %v7351 = vld [vmem:[%s7349 + $0x8] sm:$0xff]
      %v7352 = vld [vmem:[%s7349 + $0x10] sm:$0xff]
      %v7353 = vld [vmem:[%s7349 + $0x18] sm:$0xff]
      %v7355 = vsel %vm6330, %v7350, 0
      %v7358 = vsel %vm6330, %v7351, 0
      %v7361 = vsel %vm6330, %v7352, 0
      %v7364 = vsel %vm6330, %v7353, 0
      %7366 = vmatprep.subr.mxu0 %v6215
      %7367 = vmatpush1.msra.mxu0 %v6214
      %7368 = vmatprep.subr.mxu0 %v6220
      %7369 = vmatpush1.msra.mxu0 %v6219
      %7370 = vmatprep.subr.mxu0 %v6225
      %7371 = vmatpush1.msra.mxu0 %v6224
      %7372 = vmatprep.subr.mxu0 %v6230
      %7373 = vmatpush1.msra.mxu0 %v6229
      %7374 = vmatprep.subr.mxu0 0.0
      %7375 = vmatpush1.msra.mxu0 0.0
      %7376 = vmatprep.subr.mxu0 0.0
      %7377 = vmatpush1.msra.mxu0 0.0
      %7378 = vmatprep.subr.mxu0 0.0
      %7379 = vmatpush1.msra.mxu0 0.0
      %7380 = vmatprep.subr.mxu0 0.0
      %7381 = vmatpush1.msra.mxu0 0.0
      %7382 = vmatprep.subr.mxu0 0.0
      %7383 = vmatpush1.msra.mxu0 0.0
      %7384 = vmatprep.subr.mxu0 0.0
      %7385 = vmatpush1.msra.mxu0 0.0
      %7386 = vmatprep.subr.mxu0 0.0
      %7387 = vmatpush1.msra.mxu0 0.0
      %7388 = vmatprep.subr.mxu0 0.0
      %7389 = vmatpush1.msra.mxu0 0.0
      %7390 = vmatprep.subr.mxu0 0.0
      %7391 = vmatpush1.msra.mxu0 0.0
      %7392 = vmatprep.subr.mxu0 0.0
      %7393 = vmatpush1.msra.mxu0 0.0
      %7394 = vmatprep.subr.mxu0 0.0
      %7395 = vmatpush1.msra.mxu0 0.0
      %7396 = vmatprep.subr.mxu0 0.0
      %7397 = vmatpush1.msra.mxu0 0.0
      %7398 = vmatprep.subr.mxu0 0.0
      %7399 = vmatpush1.msra.mxu0 0.0
      %7400 = vmatprep.subr.mxu0 0.0
      %7401 = vmatpush1.msra.mxu0 0.0
      %7402 = vmatprep.subr.mxu0 0.0
      %7403 = vmatpush1.msra.mxu0 0.0
      %7404 = vmatprep.subr.mxu0 0.0
      %7405 = vmatpush1.msra.mxu0 0.0
      %7406 = vmatprep.subr.mxu0 0.0
      %7407 = vmatpush1.msra.mxu0 0.0
      %7408 = vmatprep.subr.mxu0 0.0
      %7409 = vmatpush1.msra.mxu0 0.0
      %7410 = vmatprep.subr.mxu0 0.0
      %7411 = vmatpush1.msra.mxu0 0.0
      %7412 = vmatprep.subr.mxu0 0.0
      %7413 = vmatpush1.msra.mxu0 0.0
      %7414 = vmatprep.subr.mxu0 0.0
      %7415 = vmatpush1.msra.mxu0 0.0
      %7416 = vmatprep.subr.mxu0 0.0
      %7417 = vmatpush1.msra.mxu0 0.0
      %7418 = vmatprep.subr.mxu0 0.0
      %7419 = vmatpush1.msra.mxu0 0.0
      %7420 = vmatprep.subr.mxu0 0.0
      %7421 = vmatpush1.msra.mxu0 0.0
      %7422 = vmatprep.subr.mxu0 0.0
      %7423 = vmatpush1.msra.mxu0 0.0
      %7424 = vmatprep.subr.mxu0 0.0
      %7425 = vmatpush1.msra.mxu0 0.0
      %7426 = vmatprep.subr.mxu0 0.0
      %7427 = vmatpush1.msra.mxu0 0.0
      %7428 = vmatprep.subr.mxu0 0.0
      %7429 = vmatpush1.msra.mxu0 0.0
      %7430 = vmatprep.mubr.f32.mxu0 0.0
      %7431 = vmatmul.mubr.f32.gmra.mrb[0].mxu0 %v7355
      %v7432 = vpop.f32.mrb[0].mxu0
      %v7433 = vadd.f32 0.0, %v7432
      %v7434 = vpop.f32.mrb[0].mxu0
      %v7435 = vadd.f32 0.0, %v7434
      %7436 = vmatprep.mubr.f32.mxu0 0.0
      %7437 = vmatmul.mubr.f32.gmra.mrb[0].mxu0 %v7358
      %v7438 = vpop.f32.mrb[0].mxu0
      %v7439 = vadd.f32 0.0, %v7438
      %v7440 = vpop.f32.mrb[0].mxu0
      %v7441 = vadd.f32 0.0, %v7440
      %7442 = vmatprep.mubr.f32.mxu0 0.0
      %7443 = vmatmul.mubr.f32.gmra.mrb[0].mxu0 %v7361
      %v7444 = vpop.f32.mrb[0].mxu0
      %v7445 = vadd.f32 0.0, %v7444
      %v7446 = vpop.f32.mrb[0].mxu0
      %v7447 = vadd.f32 0.0, %v7446
      %7448 = vmatprep.mubr.f32.mxu0 0.0
      %7449 = vmatmul.mubr.f32.gmra.mrb[0].mxu0 %v7364
      %v7450 = vpop.f32.mrb[0].mxu0
      %v7451 = vadd.f32 0.0, %v7450
      %v7452 = vpop.f32.mrb[0].mxu0
      %v7453 = vadd.f32 0.0, %v7452
      %7454 = vdwg.mxu0
      %7455 = vmatprep.subr.mxu0 %v6217
      %7456 = vmatpush1.msra.mxu0 %v6216
      %7457 = vmatprep.subr.mxu0 %v6222
      %7458 = vmatpush1.msra.mxu0 %v6221
      %7459 = vmatprep.subr.mxu0 %v6227
      %7460 = vmatpush1.msra.mxu0 %v6226
      %7461 = vmatprep.subr.mxu0 %v6232
      %7462 = vmatpush1.msra.mxu0 %v6231
      %7463 = vmatprep.subr.mxu0 0.0
      %7464 = vmatpush1.msra.mxu0 0.0
      %7465 = vmatprep.subr.mxu0 0.0
      %7466 = vmatpush1.msra.mxu0 0.0
      %7467 = vmatprep.subr.mxu0 0.0
      %7468 = vmatpush1.msra.mxu0 0.0
      %7469 = vmatprep.subr.mxu0 0.0
      %7470 = vmatpush1.msra.mxu0 0.0
      %7471 = vmatprep.subr.mxu0 0.0
      %7472 = vmatpush1.msra.mxu0 0.0
      %7473 = vmatprep.subr.mxu0 0.0
      %7474 = vmatpush1.msra.mxu0 0.0
      %7475 = vmatprep.subr.mxu0 0.0
      %7476 = vmatpush1.msra.mxu0 0.0
      %7477 = vmatprep.subr.mxu0 0.0
      %7478 = vmatpush1.msra.mxu0 0.0
      %7479 = vmatprep.subr.mxu0 0.0
      %7480 = vmatpush1.msra.mxu0 0.0
      %7481 = vmatprep.subr.mxu0 0.0
      %7482 = vmatpush1.msra.mxu0 0.0
      %7483 = vmatprep.subr.mxu0 0.0
      %7484 = vmatpush1.msra.mxu0 0.0
      %7485 = vmatprep.subr.mxu0 0.0
      %7486 = vmatpush1.msra.mxu0 0.0
      %7487 = vmatprep.subr.mxu0 0.0
      %7488 = vmatpush1.msra.mxu0 0.0
      %7489 = vmatprep.subr.mxu0 0.0
      %7490 = vmatpush1.msra.mxu0 0.0
      %7491 = vmatprep.subr.mxu0 0.0
      %7492 = vmatpush1.msra.mxu0 0.0
      %7493 = vmatprep.subr.mxu0 0.0
      %7494 = vmatpush1.msra.mxu0 0.0
      %7495 = vmatprep.subr.mxu0 0.0
      %7496 = vmatpush1.msra.mxu0 0.0
      %7497 = vmatprep.subr.mxu0 0.0
      %7498 = vmatpush1.msra.mxu0 0.0
      %7499 = vmatprep.subr.mxu0 0.0
      %7500 = vmatpush1.msra.mxu0 0.0
      %7501 = vmatprep.subr.mxu0 0.0
      %7502 = vmatpush1.msra.mxu0 0.0
      %7503 = vmatprep.subr.mxu0 0.0
      %7504 = vmatpush1.msra.mxu0 0.0
      %7505 = vmatprep.subr.mxu0 0.0
      %7506 = vmatpush1.msra.mxu0 0.0
      %7507 = vmatprep.subr.mxu0 0.0
      %7508 = vmatpush1.msra.mxu0 0.0
      %7509 = vmatprep.subr.mxu0 0.0
      %7510 = vmatpush1.msra.mxu0 0.0
      %7511 = vmatprep.subr.mxu0 0.0
      %7512 = vmatpush1.msra.mxu0 0.0
      %7513 = vmatprep.subr.mxu0 0.0
      %7514 = vmatpush1.msra.mxu0 0.0
      %7515 = vmatprep.subr.mxu0 0.0
      %7516 = vmatpush1.msra.mxu0 0.0
      %7517 = vmatprep.subr.mxu0 0.0
      %7518 = vmatpush1.msra.mxu0 0.0
      %7519 = vmatprep.mubr.f32.mxu0 0.0
      %7520 = vmatmul.mubr.f32.gmra.mrb[0].mxu0 %v7355
      %v7521 = vpop.f32.mrb[0].mxu0
      %v7522 = vadd.f32 0.0, %v7521
      %v7523 = vpop.f32.mrb[0].mxu0
      %v7524 = vadd.f32 0.0, %v7523
      %7525 = vmatprep.mubr.f32.mxu0 0.0
      %7526 = vmatmul.mubr.f32.gmra.mrb[0].mxu0 %v7358
      %v7527 = vpop.f32.mrb[0].mxu0
      %v7528 = vadd.f32 0.0, %v7527
      %v7529 = vpop.f32.mrb[0].mxu0
      %v7530 = vadd.f32 0.0, %v7529
      %7531 = vmatprep.mubr.f32.mxu0 0.0
      %7532 = vmatmul.mubr.f32.gmra.mrb[0].mxu0 %v7361
      %v7533 = vpop.f32.mrb[0].mxu0
      %v7534 = vadd.f32 0.0, %v7533
      %v7535 = vpop.f32.mrb[0].mxu0
      %v7536 = vadd.f32 0.0, %v7535
      %7537 = vmatprep.mubr.f32.mxu0 0.0
      %7538 = vmatmul.mubr.f32.gmra.mrb[0].mxu0 %v7364
      %v7539 = vpop.f32.mrb[0].mxu0
      %v7540 = vadd.f32 0.0, %v7539
      %v7541 = vpop.f32.mrb[0].mxu0
      %v7542 = vadd.f32 0.0, %v7541
      %7543 = vdwg.mxu0
      %v7544 = vadd.f32 %v7333, %v7433
      %v7545 = vadd.f32 %v7334, %v7435
      %v7546 = vadd.f32 %v7335, %v7522
      %v7547 = vadd.f32 %v7336, %v7524
      %v7548 = vadd.f32 %v7337, %v7439
      %v7549 = vadd.f32 %v7338, %v7441
      %v7550 = vadd.f32 %v7339, %v7528
      %v7551 = vadd.f32 %v7340, %v7530
      %v7552 = vadd.f32 %v7341, %v7445
      %v7553 = vadd.f32 %v7342, %v7447
      %v7554 = vadd.f32 %v7343, %v7534
      %v7555 = vadd.f32 %v7344, %v7536
      %v7556 = vadd.f32 %v7345, %v7451
      %v7557 = vadd.f32 %v7346, %v7453
      %v7558 = vadd.f32 %v7347, %v7540
      %v7559 = vadd.f32 %v7348, %v7542
      %s7560 = scalar_lea.vmem %s2, 160
      %v7561 = vld [vmem:[%s7560] sm:$0xff]
      %v7562 = vld [vmem:[%s7560 + $0x8] sm:$0xff]
      %v7563 = vld [vmem:[%s7560 + $0x10] sm:$0xff]
      %v7564 = vld [vmem:[%s7560 + $0x18] sm:$0xff]
      %v7565 = vld [vmem:[#allocation2 + $0x8] sm:$0xff]
      %v7566 = vld [vmem:[#allocation2 + $0x10] sm:$0xff]
      %v7567 = vld [vmem:[#allocation2 + $0x18] sm:$0xff]
      %v7568 = vld [vmem:[#allocation2 + $0x20] sm:$0xff]
      %v7569 = vld [vmem:[#allocation2 + $0x28] sm:$0xff]
      %v7570 = vld [vmem:[#allocation2 + $0x38] sm:$0xff]
      %v7571 = vld [vmem:[#allocation2 + $0x40] sm:$0xff]
      %v7572 = vld [vmem:[#allocation2 + $0x48] sm:$0xff]
      %v7573 = vld [vmem:[#allocation2 + $0x50] sm:$0xff]
      %v7574 = vld [vmem:[#allocation2 + $0x58] sm:$0xff]
      %v7575 = vld [vmem:[#allocation2 + $0x68] sm:$0xff]
      %v7576 = vld [vmem:[#allocation2 + $0x70] sm:$0xff]
      %v7577 = vld [vmem:[#allocation2 + $0x78] sm:$0xff]
      %v7578 = vld [vmem:[#allocation2 + $0x80] sm:$0xff]
      %v7579 = vld [vmem:[#allocation2 + $0x88] sm:$0xff]
      %v7580 = vld [vmem:[#allocation2 + $0x98] sm:$0xff]
      %v7581 = vld [vmem:[#allocation2 + $0xa0] sm:$0xff]
      %v7582 = vld [vmem:[#allocation2 + $0xa8] sm:$0xff]
      %v7583 = vld [vmem:[#allocation2 + $0xb0] sm:$0xff]
      %v7584 = vld [vmem:[#allocation2 + $0xb8] sm:$0xff]
      %7605 = vrot.lane.b32.xlu0 %v7565, 127
      %v7606 = vpop.permute.xlu0 %7605
      %7607 = vrot.lane.b32.xlu0 %v7566, 127
      %v7608 = vpop.permute.xlu0 %7607
      %7609 = vrot.lane.b32.xlu0 %v7567, 127
      %v7610 = vpop.permute.xlu0 %7609
      %7611 = vrot.lane.b32.xlu0 %v7568, 127
      %v7612 = vpop.permute.xlu0 %7611
      %7613 = vrot.lane.b32.xlu0 %v7569, 127
      %v7614 = vpop.permute.xlu0 %7613
      %7615 = vrot.lane.b32.xlu0 %v7570, 127
      %v7616 = vpop.permute.xlu0 %7615
      %7617 = vrot.lane.b32.xlu0 %v7571, 127
      %v7618 = vpop.permute.xlu0 %7617
      %7619 = vrot.lane.b32.xlu0 %v7572, 127
      %v7620 = vpop.permute.xlu0 %7619
      %7621 = vrot.lane.b32.xlu0 %v7573, 127
      %v7622 = vpop.permute.xlu0 %7621
      %7623 = vrot.lane.b32.xlu0 %v7574, 127
      %v7624 = vpop.permute.xlu0 %7623
      %7625 = vrot.lane.b32.xlu0 %v7575, 127
      %v7626 = vpop.permute.xlu0 %7625
      %7627 = vrot.lane.b32.xlu0 %v7576, 127
      %v7628 = vpop.permute.xlu0 %7627
      %7629 = vrot.lane.b32.xlu0 %v7577, 127
      %v7630 = vpop.permute.xlu0 %7629
      %7631 = vrot.lane.b32.xlu0 %v7578, 127
      %v7632 = vpop.permute.xlu0 %7631
      %7633 = vrot.lane.b32.xlu0 %v7579, 127
      %v7634 = vpop.permute.xlu0 %7633
      %7635 = vrot.lane.b32.xlu0 %v7580, 127
      %v7636 = vpop.permute.xlu0 %7635
      %7637 = vrot.lane.b32.xlu0 %v7581, 127
      %v7638 = vpop.permute.xlu0 %7637
      %7639 = vrot.lane.b32.xlu0 %v7582, 127
      %v7640 = vpop.permute.xlu0 %7639
      %7641 = vrot.lane.b32.xlu0 %v7583, 127
      %v7642 = vpop.permute.xlu0 %7641
      %7643 = vrot.lane.b32.xlu0 %v7584, 127
      %v7644 = vpop.permute.xlu0 %7643
      %v7645 = vsel %vm3280, %v7606, %v7608
      %v7646 = vsel %vm3280, %v7608, %v7610
      %v7647 = vsel %vm3280, %v7610, %v7612
      %v7648 = vsel %vm3280, %v7612, %v7614
      %v7649 = vsel %vm3280, %v7616, %v7618
      %v7650 = vsel %vm3280, %v7618, %v7620
      %v7651 = vsel %vm3280, %v7620, %v7622
      %v7652 = vsel %vm3280, %v7622, %v7624
      %v7653 = vsel %vm3280, %v7626, %v7628
      %v7654 = vsel %vm3280, %v7628, %v7630
      %v7655 = vsel %vm3280, %v7630, %v7632
      %v7656 = vsel %vm3280, %v7632, %v7634
      %v7657 = vsel %vm3280, %v7636, %v7638
      %v7658 = vsel %vm3280, %v7638, %v7640
      %v7659 = vsel %vm3280, %v7640, %v7642
      %v7660 = vsel %vm3280, %v7642, %v7644
      %v7678 = vsel %vm6330, %v7561, 0
      %v7681 = vsel %vm6330, %v7562, 0
      %v7684 = vsel %vm6330, %v7563, 0
      %v7687 = vsel %vm6330, %v7564, 0
      %7689 = vmatprep.subr.mxu0 %v7646
      %7690 = vmatpush1.msra.mxu0 %v7645
      %7691 = vmatprep.subr.mxu0 %v7650
      %7692 = vmatpush1.msra.mxu0 %v7649
      %7693 = vmatprep.subr.mxu0 %v7654
      %7694 = vmatpush1.msra.mxu0 %v7653
      %7695 = vmatprep.subr.mxu0 %v7658
      %7696 = vmatpush1.msra.mxu0 %v7657
      %7697 = vmatprep.subr.mxu0 0.0
      %7698 = vmatpush1.msra.mxu0 0.0
      %7699 = vmatprep.subr.mxu0 0.0
      %7700 = vmatpush1.msra.mxu0 0.0
      %7701 = vmatprep.subr.mxu0 0.0
      %7702 = vmatpush1.msra.mxu0 0.0
      %7703 = vmatprep.subr.mxu0 0.0
      %7704 = vmatpush1.msra.mxu0 0.0
      %7705 = vmatprep.subr.mxu0 0.0
      %7706 = vmatpush1.msra.mxu0 0.0
      %7707 = vmatprep.subr.mxu0 0.0
      %7708 = vmatpush1.msra.mxu0 0.0
      %7709 = vmatprep.subr.mxu0 0.0
      %7710 = vmatpush1.msra.mxu0 0.0
      %7711 = vmatprep.subr.mxu0 0.0
      %7712 = vmatpush1.msra.mxu0 0.0
      %7713 = vmatprep.subr.mxu0 0.0
      %7714 = vmatpush1.msra.mxu0 0.0
      %7715 = vmatprep.subr.mxu0 0.0
      %7716 = vmatpush1.msra.mxu0 0.0
      %7717 = vmatprep.subr.mxu0 0.0
      %7718 = vmatpush1.msra.mxu0 0.0
      %7719 = vmatprep.subr.mxu0 0.0
      %7720 = vmatpush1.msra.mxu0 0.0
      %7721 = vmatprep.subr.mxu0 0.0
      %7722 = vmatpush1.msra.mxu0 0.0
      %7723 = vmatprep.subr.mxu0 0.0
      %7724 = vmatpush1.msra.mxu0 0.0
      %7725 = vmatprep.subr.mxu0 0.0
      %7726 = vmatpush1.msra.mxu0 0.0
      %7727 = vmatprep.subr.mxu0 0.0
      %7728 = vmatpush1.msra.mxu0 0.0
      %7729 = vmatprep.subr.mxu0 0.0
      %7730 = vmatpush1.msra.mxu0 0.0
      %7731 = vmatprep.subr.mxu0 0.0
      %7732 = vmatpush1.msra.mxu0 0.0
      %7733 = vmatprep.subr.mxu0 0.0
      %7734 = vmatpush1.msra.mxu0 0.0
      %7735 = vmatprep.subr.mxu0 0.0
      %7736 = vmatpush1.msra.mxu0 0.0
      %7737 = vmatprep.subr.mxu0 0.0
      %7738 = vmatpush1.msra.mxu0 0.0
      %7739 = vmatprep.subr.mxu0 0.0
      %7740 = vmatpush1.msra.mxu0 0.0
      %7741 = vmatprep.subr.mxu0 0.0
      %7742 = vmatpush1.msra.mxu0 0.0
      %7743 = vmatprep.subr.mxu0 0.0
      %7744 = vmatpush1.msra.mxu0 0.0
      %7745 = vmatprep.subr.mxu0 0.0
      %7746 = vmatpush1.msra.mxu0 0.0
      %7747 = vmatprep.subr.mxu0 0.0
      %7748 = vmatpush1.msra.mxu0 0.0
      %7749 = vmatprep.subr.mxu0 0.0
      %7750 = vmatpush1.msra.mxu0 0.0
      %7751 = vmatprep.subr.mxu0 0.0
      %7752 = vmatpush1.msra.mxu0 0.0
      %7753 = vmatprep.mubr.f32.mxu0 0.0
      %7754 = vmatmul.mubr.f32.gmra.mrb[0].mxu0 %v7678
      %v7755 = vpop.f32.mrb[0].mxu0
      %v7756 = vadd.f32 0.0, %v7755
      %v7757 = vpop.f32.mrb[0].mxu0
      %v7758 = vadd.f32 0.0, %v7757
      %7759 = vmatprep.mubr.f32.mxu0 0.0
      %7760 = vmatmul.mubr.f32.gmra.mrb[0].mxu0 %v7681
      %v7761 = vpop.f32.mrb[0].mxu0
      %v7762 = vadd.f32 0.0, %v7761
      %v7763 = vpop.f32.mrb[0].mxu0
      %v7764 = vadd.f32 0.0, %v7763
      %7765 = vmatprep.mubr.f32.mxu0 0.0
      %7766 = vmatmul.mubr.f32.gmra.mrb[0].mxu0 %v7684
      %v7767 = vpop.f32.mrb[0].mxu0
      %v7768 = vadd.f32 0.0, %v7767
      %v7769 = vpop.f32.mrb[0].mxu0
      %v7770 = vadd.f32 0.0, %v7769
      %7771 = vmatprep.mubr.f32.mxu0 0.0
      %7772 = vmatmul.mubr.f32.gmra.mrb[0].mxu0 %v7687
      %v7773 = vpop.f32.mrb[0].mxu0
      %v7774 = vadd.f32 0.0, %v7773
      %v7775 = vpop.f32.mrb[0].mxu0
      %v7776 = vadd.f32 0.0, %v7775
      %7777 = vdwg.mxu0
      %7778 = vmatprep.subr.mxu0 %v7648
      %7779 = vmatpush1.msra.mxu0 %v7647
      %7780 = vmatprep.subr.mxu0 %v7652
      %7781 = vmatpush1.msra.mxu0 %v7651
      %7782 = vmatprep.subr.mxu0 %v7656
      %7783 = vmatpush1.msra.mxu0 %v7655
      %7784 = vmatprep.subr.mxu0 %v7660
      %7785 = vmatpush1.msra.mxu0 %v7659
      %7786 = vmatprep.subr.mxu0 0.0
      %7787 = vmatpush1.msra.mxu0 0.0
      %7788 = vmatprep.subr.mxu0 0.0
      %7789 = vmatpush1.msra.mxu0 0.0
      %7790 = vmatprep.subr.mxu0 0.0
      %7791 = vmatpush1.msra.mxu0 0.0
      %7792 = vmatprep.subr.mxu0 0.0
      %7793 = vmatpush1.msra.mxu0 0.0
      %7794 = vmatprep.subr.mxu0 0.0
      %7795 = vmatpush1.msra.mxu0 0.0
      %7796 = vmatprep.subr.mxu0 0.0
      %7797 = vmatpush1.msra.mxu0 0.0
      %7798 = vmatprep.subr.mxu0 0.0
      %7799 = vmatpush1.msra.mxu0 0.0
      %7800 = vmatprep.subr.mxu0 0.0
      %7801 = vmatpush1.msra.mxu0 0.0
      %7802 = vmatprep.subr.mxu0 0.0
      %7803 = vmatpush1.msra.mxu0 0.0
      %7804 = vmatprep.subr.mxu0 0.0
      %7805 = vmatpush1.msra.mxu0 0.0
      %7806 = vmatprep.subr.mxu0 0.0
      %7807 = vmatpush1.msra.mxu0 0.0
      %7808 = vmatprep.subr.mxu0 0.0
      %7809 = vmatpush1.msra.mxu0 0.0
      %7810 = vmatprep.subr.mxu0 0.0
      %7811 = vmatpush1.msra.mxu0 0.0
      %7812 = vmatprep.subr.mxu0 0.0
      %7813 = vmatpush1.msra.mxu0 0.0
      %7814 = vmatprep.subr.mxu0 0.0
      %7815 = vmatpush1.msra.mxu0 0.0
      %7816 = vmatprep.subr.mxu0 0.0
      %7817 = vmatpush1.msra.mxu0 0.0
      %7818 = vmatprep.subr.mxu0 0.0
      %7819 = vmatpush1.msra.mxu0 0.0
      %7820 = vmatprep.subr.mxu0 0.0
      %7821 = vmatpush1.msra.mxu0 0.0
      %7822 = vmatprep.subr.mxu0 0.0
      %7823 = vmatpush1.msra.mxu0 0.0
      %7824 = vmatprep.subr.mxu0 0.0
      %7825 = vmatpush1.msra.mxu0 0.0
      %7826 = vmatprep.subr.mxu0 0.0
      %7827 = vmatpush1.msra.mxu0 0.0
      %7828 = vmatprep.subr.mxu0 0.0
      %7829 = vmatpush1.msra.mxu0 0.0
      %7830 = vmatprep.subr.mxu0 0.0
      %7831 = vmatpush1.msra.mxu0 0.0
      %7832 = vmatprep.subr.mxu0 0.0
      %7833 = vmatpush1.msra.mxu0 0.0
      %7834 = vmatprep.subr.mxu0 0.0
      %7835 = vmatpush1.msra.mxu0 0.0
      %7836 = vmatprep.subr.mxu0 0.0
      %7837 = vmatpush1.msra.mxu0 0.0
      %7838 = vmatprep.subr.mxu0 0.0
      %7839 = vmatpush1.msra.mxu0 0.0
      %7840 = vmatprep.subr.mxu0 0.0
      %7841 = vmatpush1.msra.mxu0 0.0
      %7842 = vmatprep.mubr.f32.mxu0 0.0
      %7843 = vmatmul.mubr.f32.gmra.mrb[0].mxu0 %v7678
      %v7844 = vpop.f32.mrb[0].mxu0
      %v7845 = vadd.f32 0.0, %v7844
      %v7846 = vpop.f32.mrb[0].mxu0
      %v7847 = vadd.f32 0.0, %v7846
      %7848 = vmatprep.mubr.f32.mxu0 0.0
      %7849 = vmatmul.mubr.f32.gmra.mrb[0].mxu0 %v7681
      %v7850 = vpop.f32.mrb[0].mxu0
      %v7851 = vadd.f32 0.0, %v7850
      %v7852 = vpop.f32.mrb[0].mxu0
      %v7853 = vadd.f32 0.0, %v7852
      %7854 = vmatprep.mubr.f32.mxu0 0.0
      %7855 = vmatmul.mubr.f32.gmra.mrb[0].mxu0 %v7684
      %v7856 = vpop.f32.mrb[0].mxu0
      %v7857 = vadd.f32 0.0, %v7856
      %v7858 = vpop.f32.mrb[0].mxu0
      %v7859 = vadd.f32 0.0, %v7858
      %7860 = vmatprep.mubr.f32.mxu0 0.0
      %7861 = vmatmul.mubr.f32.gmra.mrb[0].mxu0 %v7687
      %v7862 = vpop.f32.mrb[0].mxu0
      %v7863 = vadd.f32 0.0, %v7862
      %v7864 = vpop.f32.mrb[0].mxu0
      %v7865 = vadd.f32 0.0, %v7864
      %7866 = vdwg.mxu0
      %v7867 = vadd.f32 %v7544, %v7756
      %v7868 = vadd.f32 %v7545, %v7758
      %v7869 = vadd.f32 %v7546, %v7845
      %v7870 = vadd.f32 %v7547, %v7847
      %v7871 = vadd.f32 %v7548, %v7762
      %v7872 = vadd.f32 %v7549, %v7764
      %v7873 = vadd.f32 %v7550, %v7851
      %v7874 = vadd.f32 %v7551, %v7853
      %v7875 = vadd.f32 %v7552, %v7768
      %v7876 = vadd.f32 %v7553, %v7770
      %v7877 = vadd.f32 %v7554, %v7857
      %v7878 = vadd.f32 %v7555, %v7859
      %v7879 = vadd.f32 %v7556, %v7774
      %v7880 = vadd.f32 %v7557, %v7776
      %v7881 = vadd.f32 %v7558, %v7863
      %v7882 = vadd.f32 %v7559, %v7865
      %s7883 = scalar_lea.vmem %s2, 192
      %v7884 = vld [vmem:[%s7883] sm:$0xff]
      %v7885 = vld [vmem:[%s7883 + $0x8] sm:$0xff]
      %v7886 = vld [vmem:[%s7883 + $0x10] sm:$0xff]
      %v7887 = vld [vmem:[%s7883 + $0x18] sm:$0xff]
      %7888 = vrot.lane.b32.xlu0 %v7565, 109
      %v7889 = vpop.permute.xlu0 %7888
      %7890 = vrot.lane.b32.xlu0 %v7566, 109
      %v7891 = vpop.permute.xlu0 %7890
      %7892 = vrot.lane.b32.xlu0 %v7567, 109
      %v7893 = vpop.permute.xlu0 %7892
      %7894 = vrot.lane.b32.xlu0 %v7568, 109
      %v7895 = vpop.permute.xlu0 %7894
      %7896 = vrot.lane.b32.xlu0 %v7569, 109
      %v7897 = vpop.permute.xlu0 %7896
      %7898 = vrot.lane.b32.xlu0 %v7570, 109
      %v7899 = vpop.permute.xlu0 %7898
      %7900 = vrot.lane.b32.xlu0 %v7571, 109
      %v7901 = vpop.permute.xlu0 %7900
      %7902 = vrot.lane.b32.xlu0 %v7572, 109
      %v7903 = vpop.permute.xlu0 %7902
      %7904 = vrot.lane.b32.xlu0 %v7573, 109
      %v7905 = vpop.permute.xlu0 %7904
      %7906 = vrot.lane.b32.xlu0 %v7574, 109
      %v7907 = vpop.permute.xlu0 %7906
      %7908 = vrot.lane.b32.xlu0 %v7575, 109
      %v7909 = vpop.permute.xlu0 %7908
      %7910 = vrot.lane.b32.xlu0 %v7576, 109
      %v7911 = vpop.permute.xlu0 %7910
      %7912 = vrot.lane.b32.xlu0 %v7577, 109
      %v7913 = vpop.permute.xlu0 %7912
      %7914 = vrot.lane.b32.xlu0 %v7578, 109
      %v7915 = vpop.permute.xlu0 %7914
      %7916 = vrot.lane.b32.xlu0 %v7579, 109
      %v7917 = vpop.permute.xlu0 %7916
      %7918 = vrot.lane.b32.xlu0 %v7580, 109
      %v7919 = vpop.permute.xlu0 %7918
      %7920 = vrot.lane.b32.xlu0 %v7581, 109
      %v7921 = vpop.permute.xlu0 %7920
      %7922 = vrot.lane.b32.xlu0 %v7582, 109
      %v7923 = vpop.permute.xlu0 %7922
      %7924 = vrot.lane.b32.xlu0 %v7583, 109
      %v7925 = vpop.permute.xlu0 %7924
      %7926 = vrot.lane.b32.xlu0 %v7584, 109
      %v7927 = vpop.permute.xlu0 %7926
      %v7928 = vsel %vm3970, %v7889, %v7891
      %v7929 = vsel %vm3970, %v7891, %v7893
      %v7930 = vsel %vm3970, %v7893, %v7895
      %v7931 = vsel %vm3970, %v7895, %v7897
      %v7932 = vsel %vm3970, %v7899, %v7901
      %v7933 = vsel %vm3970, %v7901, %v7903
      %v7934 = vsel %vm3970, %v7903, %v7905
      %v7935 = vsel %vm3970, %v7905, %v7907
      %v7936 = vsel %vm3970, %v7909, %v7911
      %v7937 = vsel %vm3970, %v7911, %v7913
      %v7938 = vsel %vm3970, %v7913, %v7915
      %v7939 = vsel %vm3970, %v7915, %v7917
      %v7940 = vsel %vm3970, %v7919, %v7921
      %v7941 = vsel %vm3970, %v7921, %v7923
      %v7942 = vsel %vm3970, %v7923, %v7925
      %v7943 = vsel %vm3970, %v7925, %v7927
      %v7961 = vsel %vm6330, %v7884, 0
      %v7964 = vsel %vm6330, %v7885, 0
      %v7967 = vsel %vm6330, %v7886, 0
      %v7970 = vsel %vm6330, %v7887, 0
      %7972 = vmatprep.subr.mxu0 %v7929
      %7973 = vmatpush1.msra.mxu0 %v7928
      %7974 = vmatprep.subr.mxu0 %v7933
      %7975 = vmatpush1.msra.mxu0 %v7932
      %7976 = vmatprep.subr.mxu0 %v7937
      %7977 = vmatpush1.msra.mxu0 %v7936
      %7978 = vmatprep.subr.mxu0 %v7941
      %7979 = vmatpush1.msra.mxu0 %v7940
      %7980 = vmatprep.subr.mxu0 0.0
      %7981 = vmatpush1.msra.mxu0 0.0
      %7982 = vmatprep.subr.mxu0 0.0
      %7983 = vmatpush1.msra.mxu0 0.0
      %7984 = vmatprep.subr.mxu0 0.0
      %7985 = vmatpush1.msra.mxu0 0.0
      %7986 = vmatprep.subr.mxu0 0.0
      %7987 = vmatpush1.msra.mxu0 0.0
      %7988 = vmatprep.subr.mxu0 0.0
      %7989 = vmatpush1.msra.mxu0 0.0
      %7990 = vmatprep.subr.mxu0 0.0
      %7991 = vmatpush1.msra.mxu0 0.0
      %7992 = vmatprep.subr.mxu0 0.0
      %7993 = vmatpush1.msra.mxu0 0.0
      %7994 = vmatprep.subr.mxu0 0.0
      %7995 = vmatpush1.msra.mxu0 0.0
      %7996 = vmatprep.subr.mxu0 0.0
      %7997 = vmatpush1.msra.mxu0 0.0
      %7998 = vmatprep.subr.mxu0 0.0
      %7999 = vmatpush1.msra.mxu0 0.0
      %8000 = vmatprep.subr.mxu0 0.0
      %8001 = vmatpush1.msra.mxu0 0.0
      %8002 = vmatprep.subr.mxu0 0.0
      %8003 = vmatpush1.msra.mxu0 0.0
      %8004 = vmatprep.subr.mxu0 0.0
      %8005 = vmatpush1.msra.mxu0 0.0
      %8006 = vmatprep.subr.mxu0 0.0
      %8007 = vmatpush1.msra.mxu0 0.0
      %8008 = vmatprep.subr.mxu0 0.0
      %8009 = vmatpush1.msra.mxu0 0.0
      %8010 = vmatprep.subr.mxu0 0.0
      %8011 = vmatpush1.msra.mxu0 0.0
      %8012 = vmatprep.subr.mxu0 0.0
      %8013 = vmatpush1.msra.mxu0 0.0
      %8014 = vmatprep.subr.mxu0 0.0
      %8015 = vmatpush1.msra.mxu0 0.0
      %8016 = vmatprep.subr.mxu0 0.0
      %8017 = vmatpush1.msra.mxu0 0.0
      %8018 = vmatprep.subr.mxu0 0.0
      %8019 = vmatpush1.msra.mxu0 0.0
      %8020 = vmatprep.subr.mxu0 0.0
      %8021 = vmatpush1.msra.mxu0 0.0
      %8022 = vmatprep.subr.mxu0 0.0
      %8023 = vmatpush1.msra.mxu0 0.0
      %8024 = vmatprep.subr.mxu0 0.0
      %8025 = vmatpush1.msra.mxu0 0.0
      %8026 = vmatprep.subr.mxu0 0.0
      %8027 = vmatpush1.msra.mxu0 0.0
      %8028 = vmatprep.subr.mxu0 0.0
      %8029 = vmatpush1.msra.mxu0 0.0
      %8030 = vmatprep.subr.mxu0 0.0
      %8031 = vmatpush1.msra.mxu0 0.0
      %8032 = vmatprep.subr.mxu0 0.0
      %8033 = vmatpush1.msra.mxu0 0.0
      %8034 = vmatprep.subr.mxu0 0.0
      %8035 = vmatpush1.msra.mxu0 0.0
      %8036 = vmatprep.mubr.f32.mxu0 0.0
      %8037 = vmatmul.mubr.f32.gmra.mrb[0].mxu0 %v7961
      %v8038 = vpop.f32.mrb[0].mxu0
      %v8039 = vadd.f32 0.0, %v8038
      %v8040 = vpop.f32.mrb[0].mxu0
      %v8041 = vadd.f32 0.0, %v8040
      %8042 = vmatprep.mubr.f32.mxu0 0.0
      %8043 = vmatmul.mubr.f32.gmra.mrb[0].mxu0 %v7964
      %v8044 = vpop.f32.mrb[0].mxu0
      %v8045 = vadd.f32 0.0, %v8044
      %v8046 = vpop.f32.mrb[0].mxu0
      %v8047 = vadd.f32 0.0, %v8046
      %8048 = vmatprep.mubr.f32.mxu0 0.0
      %8049 = vmatmul.mubr.f32.gmra.mrb[0].mxu0 %v7967
      %v8050 = vpop.f32.mrb[0].mxu0
      %v8051 = vadd.f32 0.0, %v8050
      %v8052 = vpop.f32.mrb[0].mxu0
      %v8053 = vadd.f32 0.0, %v8052
      %8054 = vmatprep.mubr.f32.mxu0 0.0
      %8055 = vmatmul.mubr.f32.gmra.mrb[0].mxu0 %v7970
      %v8056 = vpop.f32.mrb[0].mxu0
      %v8057 = vadd.f32 0.0, %v8056
      %v8058 = vpop.f32.mrb[0].mxu0
      %v8059 = vadd.f32 0.0, %v8058
      %8060 = vdwg.mxu0
      %8061 = vmatprep.subr.mxu0 %v7931
      %8062 = vmatpush1.msra.mxu0 %v7930
      %8063 = vmatprep.subr.mxu0 %v7935
      %8064 = vmatpush1.msra.mxu0 %v7934
      %8065 = vmatprep.subr.mxu0 %v7939
      %8066 = vmatpush1.msra.mxu0 %v7938
      %8067 = vmatprep.subr.mxu0 %v7943
      %8068 = vmatpush1.msra.mxu0 %v7942
      %8069 = vmatprep.subr.mxu0 0.0
      %8070 = vmatpush1.msra.mxu0 0.0
      %8071 = vmatprep.subr.mxu0 0.0
      %8072 = vmatpush1.msra.mxu0 0.0
      %8073 = vmatprep.subr.mxu0 0.0
      %8074 = vmatpush1.msra.mxu0 0.0
      %8075 = vmatprep.subr.mxu0 0.0
      %8076 = vmatpush1.msra.mxu0 0.0
      %8077 = vmatprep.subr.mxu0 0.0
      %8078 = vmatpush1.msra.mxu0 0.0
      %8079 = vmatprep.subr.mxu0 0.0
      %8080 = vmatpush1.msra.mxu0 0.0
      %8081 = vmatprep.subr.mxu0 0.0
      %8082 = vmatpush1.msra.mxu0 0.0
      %8083 = vmatprep.subr.mxu0 0.0
      %8084 = vmatpush1.msra.mxu0 0.0
      %8085 = vmatprep.subr.mxu0 0.0
      %8086 = vmatpush1.msra.mxu0 0.0
      %8087 = vmatprep.subr.mxu0 0.0
      %8088 = vmatpush1.msra.mxu0 0.0
      %8089 = vmatprep.subr.mxu0 0.0
      %8090 = vmatpush1.msra.mxu0 0.0
      %8091 = vmatprep.subr.mxu0 0.0
      %8092 = vmatpush1.msra.mxu0 0.0
      %8093 = vmatprep.subr.mxu0 0.0
      %8094 = vmatpush1.msra.mxu0 0.0
      %8095 = vmatprep.subr.mxu0 0.0
      %8096 = vmatpush1.msra.mxu0 0.0
      %8097 = vmatprep.subr.mxu0 0.0
      %8098 = vmatpush1.msra.mxu0 0.0
      %8099 = vmatprep.subr.mxu0 0.0
      %8100 = vmatpush1.msra.mxu0 0.0
      %8101 = vmatprep.subr.mxu0 0.0
      %8102 = vmatpush1.msra.mxu0 0.0
      %8103 = vmatprep.subr.mxu0 0.0
      %8104 = vmatpush1.msra.mxu0 0.0
      %8105 = vmatprep.subr.mxu0 0.0
      %8106 = vmatpush1.msra.mxu0 0.0
      %8107 = vmatprep.subr.mxu0 0.0
      %8108 = vmatpush1.msra.mxu0 0.0
      %8109 = vmatprep.subr.mxu0 0.0
      %8110 = vmatpush1.msra.mxu0 0.0
      %8111 = vmatprep.subr.mxu0 0.0
      %8112 = vmatpush1.msra.mxu0 0.0
      %8113 = vmatprep.subr.mxu0 0.0
      %8114 = vmatpush1.msra.mxu0 0.0
      %8115 = vmatprep.subr.mxu0 0.0
      %8116 = vmatpush1.msra.mxu0 0.0
      %8117 = vmatprep.subr.mxu0 0.0
      %8118 = vmatpush1.msra.mxu0 0.0
      %8119 = vmatprep.subr.mxu0 0.0
      %8120 = vmatpush1.msra.mxu0 0.0
      %8121 = vmatprep.subr.mxu0 0.0
      %8122 = vmatpush1.msra.mxu0 0.0
      %8123 = vmatprep.subr.mxu0 0.0
      %8124 = vmatpush1.msra.mxu0 0.0
      %8125 = vmatprep.mubr.f32.mxu0 0.0
      %8126 = vmatmul.mubr.f32.gmra.mrb[0].mxu0 %v7961
      %v8127 = vpop.f32.mrb[0].mxu0
      %v8128 = vadd.f32 0.0, %v8127
      %v8129 = vpop.f32.mrb[0].mxu0
      %v8130 = vadd.f32 0.0, %v8129
      %8131 = vmatprep.mubr.f32.mxu0 0.0
      %8132 = vmatmul.mubr.f32.gmra.mrb[0].mxu0 %v7964
      %v8133 = vpop.f32.mrb[0].mxu0
      %v8134 = vadd.f32 0.0, %v8133
      %v8135 = vpop.f32.mrb[0].mxu0
      %v8136 = vadd.f32 0.0, %v8135
      %8137 = vmatprep.mubr.f32.mxu0 0.0
      %8138 = vmatmul.mubr.f32.gmra.mrb[0].mxu0 %v7967
      %v8139 = vpop.f32.mrb[0].mxu0
      %v8140 = vadd.f32 0.0, %v8139
      %v8141 = vpop.f32.mrb[0].mxu0
      %v8142 = vadd.f32 0.0, %v8141
      %8143 = vmatprep.mubr.f32.mxu0 0.0
      %8144 = vmatmul.mubr.f32.gmra.mrb[0].mxu0 %v7970
      %v8145 = vpop.f32.mrb[0].mxu0
      %v8146 = vadd.f32 0.0, %v8145
      %v8147 = vpop.f32.mrb[0].mxu0
      %v8148 = vadd.f32 0.0, %v8147
      %8149 = vdwg.mxu0
      %v8150 = vadd.f32 %v7867, %v8039
      %v8151 = vadd.f32 %v7868, %v8041
      %v8152 = vadd.f32 %v7869, %v8128
      %v8153 = vadd.f32 %v7870, %v8130
      %v8154 = vadd.f32 %v7871, %v8045
      %v8155 = vadd.f32 %v7872, %v8047
      %v8156 = vadd.f32 %v7873, %v8134
      %v8157 = vadd.f32 %v7874, %v8136
      %v8158 = vadd.f32 %v7875, %v8051
      %v8159 = vadd.f32 %v7876, %v8053
      %v8160 = vadd.f32 %v7877, %v8140
      %v8161 = vadd.f32 %v7878, %v8142
      %v8162 = vadd.f32 %v7879, %v8057
      %v8163 = vadd.f32 %v7880, %v8059
      %v8164 = vadd.f32 %v7881, %v8146
      %v8165 = vadd.f32 %v7882, %v8148
      %s8166 = scalar_lea.vmem %s2, 224
      %v8167 = vld [vmem:[%s8166] sm:$0xff]
      %v8168 = vld [vmem:[%s8166 + $0x8] sm:$0xff]
      %v8169 = vld [vmem:[%s8166 + $0x10] sm:$0xff]
      %v8170 = vld [vmem:[%s8166 + $0x18] sm:$0xff]
      %8171 = vrot.lane.b32.xlu0 %v7565, 108
      %v8172 = vpop.permute.xlu0 %8171
      %8173 = vrot.lane.b32.xlu0 %v7566, 108
      %v8174 = vpop.permute.xlu0 %8173
      %8175 = vrot.lane.b32.xlu0 %v7567, 108
      %v8176 = vpop.permute.xlu0 %8175
      %8177 = vrot.lane.b32.xlu0 %v7568, 108
      %v8178 = vpop.permute.xlu0 %8177
      %8179 = vrot.lane.b32.xlu0 %v7569, 108
      %v8180 = vpop.permute.xlu0 %8179
      %8181 = vrot.lane.b32.xlu0 %v7570, 108
      %v8182 = vpop.permute.xlu0 %8181
      %8183 = vrot.lane.b32.xlu0 %v7571, 108
      %v8184 = vpop.permute.xlu0 %8183
      %8185 = vrot.lane.b32.xlu0 %v7572, 108
      %v8186 = vpop.permute.xlu0 %8185
      %8187 = vrot.lane.b32.xlu0 %v7573, 108
      %v8188 = vpop.permute.xlu0 %8187
      %8189 = vrot.lane.b32.xlu0 %v7574, 108
      %v8190 = vpop.permute.xlu0 %8189
      %8191 = vrot.lane.b32.xlu0 %v7575, 108
      %v8192 = vpop.permute.xlu0 %8191
      %8193 = vrot.lane.b32.xlu0 %v7576, 108
      %v8194 = vpop.permute.xlu0 %8193
      %8195 = vrot.lane.b32.xlu0 %v7577, 108
      %v8196 = vpop.permute.xlu0 %8195
      %8197 = vrot.lane.b32.xlu0 %v7578, 108
      %v8198 = vpop.permute.xlu0 %8197
      %8199 = vrot.lane.b32.xlu0 %v7579, 108
      %v8200 = vpop.permute.xlu0 %8199
      %8201 = vrot.lane.b32.xlu0 %v7580, 108
      %v8202 = vpop.permute.xlu0 %8201
      %8203 = vrot.lane.b32.xlu0 %v7581, 108
      %v8204 = vpop.permute.xlu0 %8203
      %8205 = vrot.lane.b32.xlu0 %v7582, 108
      %v8206 = vpop.permute.xlu0 %8205
      %8207 = vrot.lane.b32.xlu0 %v7583, 108
      %v8208 = vpop.permute.xlu0 %8207
      %8209 = vrot.lane.b32.xlu0 %v7584, 108
      %v8210 = vpop.permute.xlu0 %8209
      %v8211 = vsel %vm4200, %v8172, %v8174
      %v8212 = vsel %vm4200, %v8174, %v8176
      %v8213 = vsel %vm4200, %v8176, %v8178
      %v8214 = vsel %vm4200, %v8178, %v8180
      %v8215 = vsel %vm4200, %v8182, %v8184
      %v8216 = vsel %vm4200, %v8184, %v8186
      %v8217 = vsel %vm4200, %v8186, %v8188
      %v8218 = vsel %vm4200, %v8188, %v8190
      %v8219 = vsel %vm4200, %v8192, %v8194
      %v8220 = vsel %vm4200, %v8194, %v8196
      %v8221 = vsel %vm4200, %v8196, %v8198
      %v8222 = vsel %vm4200, %v8198, %v8200
      %v8223 = vsel %vm4200, %v8202, %v8204
      %v8224 = vsel %vm4200, %v8204, %v8206
      %v8225 = vsel %vm4200, %v8206, %v8208
      %v8226 = vsel %vm4200, %v8208, %v8210
      %v8244 = vsel %vm6330, %v8167, 0
      %v8247 = vsel %vm6330, %v8168, 0
      %v8250 = vsel %vm6330, %v8169, 0
      %v8253 = vsel %vm6330, %v8170, 0
      %8255 = vmatprep.subr.mxu0 %v8212
      %8256 = vmatpush1.msra.mxu0 %v8211
      %8257 = vmatprep.subr.mxu0 %v8216
      %8258 = vmatpush1.msra.mxu0 %v8215
      %8259 = vmatprep.subr.mxu0 %v8220
      %8260 = vmatpush1.msra.mxu0 %v8219
      %8261 = vmatprep.subr.mxu0 %v8224
      %8262 = vmatpush1.msra.mxu0 %v8223
      %8263 = vmatprep.subr.mxu0 0.0
      %8264 = vmatpush1.msra.mxu0 0.0
      %8265 = vmatprep.subr.mxu0 0.0
      %8266 = vmatpush1.msra.mxu0 0.0
      %8267 = vmatprep.subr.mxu0 0.0
      %8268 = vmatpush1.msra.mxu0 0.0
      %8269 = vmatprep.subr.mxu0 0.0
      %8270 = vmatpush1.msra.mxu0 0.0
      %8271 = vmatprep.subr.mxu0 0.0
      %8272 = vmatpush1.msra.mxu0 0.0
      %8273 = vmatprep.subr.mxu0 0.0
      %8274 = vmatpush1.msra.mxu0 0.0
      %8275 = vmatprep.subr.mxu0 0.0
      %8276 = vmatpush1.msra.mxu0 0.0
      %8277 = vmatprep.subr.mxu0 0.0
      %8278 = vmatpush1.msra.mxu0 0.0
      %8279 = vmatprep.subr.mxu0 0.0
      %8280 = vmatpush1.msra.mxu0 0.0
      %8281 = vmatprep.subr.mxu0 0.0
      %8282 = vmatpush1.msra.mxu0 0.0
      %8283 = vmatprep.subr.mxu0 0.0
      %8284 = vmatpush1.msra.mxu0 0.0
      %8285 = vmatprep.subr.mxu0 0.0
      %8286 = vmatpush1.msra.mxu0 0.0
      %8287 = vmatprep.subr.mxu0 0.0
      %8288 = vmatpush1.msra.mxu0 0.0
      %8289 = vmatprep.subr.mxu0 0.0
      %8290 = vmatpush1.msra.mxu0 0.0
      %8291 = vmatprep.subr.mxu0 0.0
      %8292 = vmatpush1.msra.mxu0 0.0
      %8293 = vmatprep.subr.mxu0 0.0
      %8294 = vmatpush1.msra.mxu0 0.0
      %8295 = vmatprep.subr.mxu0 0.0
      %8296 = vmatpush1.msra.mxu0 0.0
      %8297 = vmatprep.subr.mxu0 0.0
      %8298 = vmatpush1.msra.mxu0 0.0
      %8299 = vmatprep.subr.mxu0 0.0
      %8300 = vmatpush1.msra.mxu0 0.0
      %8301 = vmatprep.subr.mxu0 0.0
      %8302 = vmatpush1.msra.mxu0 0.0
      %8303 = vmatprep.subr.mxu0 0.0
      %8304 = vmatpush1.msra.mxu0 0.0
      %8305 = vmatprep.subr.mxu0 0.0
      %8306 = vmatpush1.msra.mxu0 0.0
      %8307 = vmatprep.subr.mxu0 0.0
      %8308 = vmatpush1.msra.mxu0 0.0
      %8309 = vmatprep.subr.mxu0 0.0
      %8310 = vmatpush1.msra.mxu0 0.0
      %8311 = vmatprep.subr.mxu0 0.0
      %8312 = vmatpush1.msra.mxu0 0.0
      %8313 = vmatprep.subr.mxu0 0.0
      %8314 = vmatpush1.msra.mxu0 0.0
      %8315 = vmatprep.subr.mxu0 0.0
      %8316 = vmatpush1.msra.mxu0 0.0
      %8317 = vmatprep.subr.mxu0 0.0
      %8318 = vmatpush1.msra.mxu0 0.0
      %8319 = vmatprep.mubr.f32.mxu0 0.0
      %8320 = vmatmul.mubr.f32.gmra.mrb[0].mxu0 %v8244
      %v8321 = vpop.f32.mrb[0].mxu0
      %v8322 = vadd.f32 0.0, %v8321
      %v8323 = vpop.f32.mrb[0].mxu0
      %v8324 = vadd.f32 0.0, %v8323
      %8325 = vmatprep.mubr.f32.mxu0 0.0
      %8326 = vmatmul.mubr.f32.gmra.mrb[0].mxu0 %v8247
      %v8327 = vpop.f32.mrb[0].mxu0
      %v8328 = vadd.f32 0.0, %v8327
      %v8329 = vpop.f32.mrb[0].mxu0
      %v8330 = vadd.f32 0.0, %v8329
      %8331 = vmatprep.mubr.f32.mxu0 0.0
      %8332 = vmatmul.mubr.f32.gmra.mrb[0].mxu0 %v8250
      %v8333 = vpop.f32.mrb[0].mxu0
      %v8334 = vadd.f32 0.0, %v8333
      %v8335 = vpop.f32.mrb[0].mxu0
      %v8336 = vadd.f32 0.0, %v8335
      %8337 = vmatprep.mubr.f32.mxu0 0.0
      %8338 = vmatmul.mubr.f32.gmra.mrb[0].mxu0 %v8253
      %v8339 = vpop.f32.mrb[0].mxu0
      %v8340 = vadd.f32 0.0, %v8339
      %v8341 = vpop.f32.mrb[0].mxu0
      %v8342 = vadd.f32 0.0, %v8341
      %8343 = vdwg.mxu0
      %8344 = vmatprep.subr.mxu0 %v8214
      %8345 = vmatpush1.msra.mxu0 %v8213
      %8346 = vmatprep.subr.mxu0 %v8218
      %8347 = vmatpush1.msra.mxu0 %v8217
      %8348 = vmatprep.subr.mxu0 %v8222
      %8349 = vmatpush1.msra.mxu0 %v8221
      %8350 = vmatprep.subr.mxu0 %v8226
      %8351 = vmatpush1.msra.mxu0 %v8225
      %8352 = vmatprep.subr.mxu0 0.0
      %8353 = vmatpush1.msra.mxu0 0.0
      %8354 = vmatprep.subr.mxu0 0.0
      %8355 = vmatpush1.msra.mxu0 0.0
      %8356 = vmatprep.subr.mxu0 0.0
      %8357 = vmatpush1.msra.mxu0 0.0
      %8358 = vmatprep.subr.mxu0 0.0
      %8359 = vmatpush1.msra.mxu0 0.0
      %8360 = vmatprep.subr.mxu0 0.0
      %8361 = vmatpush1.msra.mxu0 0.0
      %8362 = vmatprep.subr.mxu0 0.0
      %8363 = vmatpush1.msra.mxu0 0.0
      %8364 = vmatprep.subr.mxu0 0.0
      %8365 = vmatpush1.msra.mxu0 0.0
      %8366 = vmatprep.subr.mxu0 0.0
      %8367 = vmatpush1.msra.mxu0 0.0
      %8368 = vmatprep.subr.mxu0 0.0
      %8369 = vmatpush1.msra.mxu0 0.0
      %8370 = vmatprep.subr.mxu0 0.0
      %8371 = vmatpush1.msra.mxu0 0.0
      %8372 = vmatprep.subr.mxu0 0.0
      %8373 = vmatpush1.msra.mxu0 0.0
      %8374 = vmatprep.subr.mxu0 0.0
      %8375 = vmatpush1.msra.mxu0 0.0
      %8376 = vmatprep.subr.mxu0 0.0
      %8377 = vmatpush1.msra.mxu0 0.0
      %8378 = vmatprep.subr.mxu0 0.0
      %8379 = vmatpush1.msra.mxu0 0.0
      %8380 = vmatprep.subr.mxu0 0.0
      %8381 = vmatpush1.msra.mxu0 0.0
      %8382 = vmatprep.subr.mxu0 0.0
      %8383 = vmatpush1.msra.mxu0 0.0
      %8384 = vmatprep.subr.mxu0 0.0
      %8385 = vmatpush1.msra.mxu0 0.0
      %8386 = vmatprep.subr.mxu0 0.0
      %8387 = vmatpush1.msra.mxu0 0.0
      %8388 = vmatprep.subr.mxu0 0.0
      %8389 = vmatpush1.msra.mxu0 0.0
      %8390 = vmatprep.subr.mxu0 0.0
      %8391 = vmatpush1.msra.mxu0 0.0
      %8392 = vmatprep.subr.mxu0 0.0
      %8393 = vmatpush1.msra.mxu0 0.0
      %8394 = vmatprep.subr.mxu0 0.0
      %8395 = vmatpush1.msra.mxu0 0.0
      %8396 = vmatprep.subr.mxu0 0.0
      %8397 = vmatpush1.msra.mxu0 0.0
      %8398 = vmatprep.subr.mxu0 0.0
      %8399 = vmatpush1.msra.mxu0 0.0
      %8400 = vmatprep.subr.mxu0 0.0
      %8401 = vmatpush1.msra.mxu0 0.0
      %8402 = vmatprep.subr.mxu0 0.0
      %8403 = vmatpush1.msra.mxu0 0.0
      %8404 = vmatprep.subr.mxu0 0.0
      %8405 = vmatpush1.msra.mxu0 0.0
      %8406 = vmatprep.subr.mxu0 0.0
      %8407 = vmatpush1.msra.mxu0 0.0
      %8408 = vmatprep.mubr.f32.mxu0 0.0
      %8409 = vmatmul.mubr.f32.gmra.mrb[0].mxu0 %v8244
      %v8410 = vpop.f32.mrb[0].mxu0
      %v8411 = vadd.f32 0.0, %v8410
      %v8412 = vpop.f32.mrb[0].mxu0
      %v8413 = vadd.f32 0.0, %v8412
      %8414 = vmatprep.mubr.f32.mxu0 0.0
      %8415 = vmatmul.mubr.f32.gmra.mrb[0].mxu0 %v8247
      %v8416 = vpop.f32.mrb[0].mxu0
      %v8417 = vadd.f32 0.0, %v8416
      %v8418 = vpop.f32.mrb[0].mxu0
      %v8419 = vadd.f32 0.0, %v8418
      %8420 = vmatprep.mubr.f32.mxu0 0.0
      %8421 = vmatmul.mubr.f32.gmra.mrb[0].mxu0 %v8250
      %v8422 = vpop.f32.mrb[0].mxu0
      %v8423 = vadd.f32 0.0, %v8422
      %v8424 = vpop.f32.mrb[0].mxu0
      %v8425 = vadd.f32 0.0, %v8424
      %8426 = vmatprep.mubr.f32.mxu0 0.0
      %8427 = vmatmul.mubr.f32.gmra.mrb[0].mxu0 %v8253
      %v8428 = vpop.f32.mrb[0].mxu0
      %v8429 = vadd.f32 0.0, %v8428
      %v8430 = vpop.f32.mrb[0].mxu0
      %v8431 = vadd.f32 0.0, %v8430
      %8432 = vdwg.mxu0
      %v8433 = vadd.f32 %v8150, %v8322
      %v8434 = vadd.f32 %v8151, %v8324
      %v8435 = vadd.f32 %v8152, %v8411
      %v8436 = vadd.f32 %v8153, %v8413
      %v8437 = vadd.f32 %v8154, %v8328
      %v8438 = vadd.f32 %v8155, %v8330
      %v8439 = vadd.f32 %v8156, %v8417
      %v8440 = vadd.f32 %v8157, %v8419
      %v8441 = vadd.f32 %v8158, %v8334
      %v8442 = vadd.f32 %v8159, %v8336
      %v8443 = vadd.f32 %v8160, %v8423
      %v8444 = vadd.f32 %v8161, %v8425
      %v8445 = vadd.f32 %v8162, %v8340
      %v8446 = vadd.f32 %v8163, %v8342
      %v8447 = vadd.f32 %v8164, %v8429
      %v8448 = vadd.f32 %v8165, %v8431
      %s8449 = scalar_lea.vmem %s2, 256
      %v8450 = vld [vmem:[%s8449] sm:$0xff]
      %v8451 = vld [vmem:[%s8449 + $0x8] sm:$0xff]
      %v8452 = vld [vmem:[%s8449 + $0x10] sm:$0xff]
      %v8453 = vld [vmem:[%s8449 + $0x18] sm:$0xff]
      %8454 = vrot.lane.b32.xlu0 %v7565, 107
      %v8455 = vpop.permute.xlu0 %8454
      %8456 = vrot.lane.b32.xlu0 %v7566, 107
      %v8457 = vpop.permute.xlu0 %8456
      %8458 = vrot.lane.b32.xlu0 %v7567, 107
      %v8459 = vpop.permute.xlu0 %8458
      %8460 = vrot.lane.b32.xlu0 %v7568, 107
      %v8461 = vpop.permute.xlu0 %8460
      %8462 = vrot.lane.b32.xlu0 %v7569, 107
      %v8463 = vpop.permute.xlu0 %8462
      %8464 = vrot.lane.b32.xlu0 %v7570, 107
      %v8465 = vpop.permute.xlu0 %8464
      %8466 = vrot.lane.b32.xlu0 %v7571, 107
      %v8467 = vpop.permute.xlu0 %8466
      %8468 = vrot.lane.b32.xlu0 %v7572, 107
      %v8469 = vpop.permute.xlu0 %8468
      %8470 = vrot.lane.b32.xlu0 %v7573, 107
      %v8471 = vpop.permute.xlu0 %8470
      %8472 = vrot.lane.b32.xlu0 %v7574, 107
      %v8473 = vpop.permute.xlu0 %8472
      %8474 = vrot.lane.b32.xlu0 %v7575, 107
      %v8475 = vpop.permute.xlu0 %8474
      %8476 = vrot.lane.b32.xlu0 %v7576, 107
      %v8477 = vpop.permute.xlu0 %8476
      %8478 = vrot.lane.b32.xlu0 %v7577, 107
      %v8479 = vpop.permute.xlu0 %8478
      %8480 = vrot.lane.b32.xlu0 %v7578, 107
      %v8481 = vpop.permute.xlu0 %8480
      %8482 = vrot.lane.b32.xlu0 %v7579, 107
      %v8483 = vpop.permute.xlu0 %8482
      %8484 = vrot.lane.b32.xlu0 %v7580, 107
      %v8485 = vpop.permute.xlu0 %8484
      %8486 = vrot.lane.b32.xlu0 %v7581, 107
      %v8487 = vpop.permute.xlu0 %8486
      %8488 = vrot.lane.b32.xlu0 %v7582, 107
      %v8489 = vpop.permute.xlu0 %8488
      %8490 = vrot.lane.b32.xlu0 %v7583, 107
      %v8491 = vpop.permute.xlu0 %8490
      %8492 = vrot.lane.b32.xlu0 %v7584, 107
      %v8493 = vpop.permute.xlu0 %8492
      %v8494 = vsel %vm4430, %v8455, %v8457
      %v8495 = vsel %vm4430, %v8457, %v8459
      %v8496 = vsel %vm4430, %v8459, %v8461
      %v8497 = vsel %vm4430, %v8461, %v8463
      %v8498 = vsel %vm4430, %v8465, %v8467
      %v8499 = vsel %vm4430, %v8467, %v8469
      %v8500 = vsel %vm4430, %v8469, %v8471
      %v8501 = vsel %vm4430, %v8471, %v8473
      %v8502 = vsel %vm4430, %v8475, %v8477
      %v8503 = vsel %vm4430, %v8477, %v8479
      %v8504 = vsel %vm4430, %v8479, %v8481
      %v8505 = vsel %vm4430, %v8481, %v8483
      %v8506 = vsel %vm4430, %v8485, %v8487
      %v8507 = vsel %vm4430, %v8487, %v8489
      %v8508 = vsel %vm4430, %v8489, %v8491
      %v8509 = vsel %vm4430, %v8491, %v8493
      %v8527 = vsel %vm6330, %v8450, 0
      %v8530 = vsel %vm6330, %v8451, 0
      %v8533 = vsel %vm6330, %v8452, 0
      %v8536 = vsel %vm6330, %v8453, 0
      %8538 = vmatprep.subr.mxu0 %v8495
      %8539 = vmatpush1.msra.mxu0 %v8494
      %8540 = vmatprep.subr.mxu0 %v8499
      %8541 = vmatpush1.msra.mxu0 %v8498
      %8542 = vmatprep.subr.mxu0 %v8503
      %8543 = vmatpush1.msra.mxu0 %v8502
      %8544 = vmatprep.subr.mxu0 %v8507
      %8545 = vmatpush1.msra.mxu0 %v8506
      %8546 = vmatprep.subr.mxu0 0.0
      %8547 = vmatpush1.msra.mxu0 0.0
      %8548 = vmatprep.subr.mxu0 0.0
      %8549 = vmatpush1.msra.mxu0 0.0
      %8550 = vmatprep.subr.mxu0 0.0
      %8551 = vmatpush1.msra.mxu0 0.0
      %8552 = vmatprep.subr.mxu0 0.0
      %8553 = vmatpush1.msra.mxu0 0.0
      %8554 = vmatprep.subr.mxu0 0.0
      %8555 = vmatpush1.msra.mxu0 0.0
      %8556 = vmatprep.subr.mxu0 0.0
      %8557 = vmatpush1.msra.mxu0 0.0
      %8558 = vmatprep.subr.mxu0 0.0
      %8559 = vmatpush1.msra.mxu0 0.0
      %8560 = vmatprep.subr.mxu0 0.0
      %8561 = vmatpush1.msra.mxu0 0.0
      %8562 = vmatprep.subr.mxu0 0.0
      %8563 = vmatpush1.msra.mxu0 0.0
      %8564 = vmatprep.subr.mxu0 0.0
      %8565 = vmatpush1.msra.mxu0 0.0
      %8566 = vmatprep.subr.mxu0 0.0
      %8567 = vmatpush1.msra.mxu0 0.0
      %8568 = vmatprep.subr.mxu0 0.0
      %8569 = vmatpush1.msra.mxu0 0.0
      %8570 = vmatprep.subr.mxu0 0.0
      %8571 = vmatpush1.msra.mxu0 0.0
      %8572 = vmatprep.subr.mxu0 0.0
      %8573 = vmatpush1.msra.mxu0 0.0
      %8574 = vmatprep.subr.mxu0 0.0
      %8575 = vmatpush1.msra.mxu0 0.0
      %8576 = vmatprep.subr.mxu0 0.0
      %8577 = vmatpush1.msra.mxu0 0.0
      %8578 = vmatprep.subr.mxu0 0.0
      %8579 = vmatpush1.msra.mxu0 0.0
      %8580 = vmatprep.subr.mxu0 0.0
      %8581 = vmatpush1.msra.mxu0 0.0
      %8582 = vmatprep.subr.mxu0 0.0
      %8583 = vmatpush1.msra.mxu0 0.0
      %8584 = vmatprep.subr.mxu0 0.0
      %8585 = vmatpush1.msra.mxu0 0.0
      %8586 = vmatprep.subr.mxu0 0.0
      %8587 = vmatpush1.msra.mxu0 0.0
      %8588 = vmatprep.subr.mxu0 0.0
      %8589 = vmatpush1.msra.mxu0 0.0
      %8590 = vmatprep.subr.mxu0 0.0
      %8591 = vmatpush1.msra.mxu0 0.0
      %8592 = vmatprep.subr.mxu0 0.0
      %8593 = vmatpush1.msra.mxu0 0.0
      %8594 = vmatprep.subr.mxu0 0.0
      %8595 = vmatpush1.msra.mxu0 0.0
      %8596 = vmatprep.subr.mxu0 0.0
      %8597 = vmatpush1.msra.mxu0 0.0
      %8598 = vmatprep.subr.mxu0 0.0
      %8599 = vmatpush1.msra.mxu0 0.0
      %8600 = vmatprep.subr.mxu0 0.0
      %8601 = vmatpush1.msra.mxu0 0.0
      %8602 = vmatprep.mubr.f32.mxu0 0.0
      %8603 = vmatmul.mubr.f32.gmra.mrb[0].mxu0 %v8527
      %v8604 = vpop.f32.mrb[0].mxu0
      %v8605 = vadd.f32 0.0, %v8604
      %v8606 = vpop.f32.mrb[0].mxu0
      %v8607 = vadd.f32 0.0, %v8606
      %8608 = vmatprep.mubr.f32.mxu0 0.0
      %8609 = vmatmul.mubr.f32.gmra.mrb[0].mxu0 %v8530
      %v8610 = vpop.f32.mrb[0].mxu0
      %v8611 = vadd.f32 0.0, %v8610
      %v8612 = vpop.f32.mrb[0].mxu0
      %v8613 = vadd.f32 0.0, %v8612
      %8614 = vmatprep.mubr.f32.mxu0 0.0
      %8615 = vmatmul.mubr.f32.gmra.mrb[0].mxu0 %v8533
      %v8616 = vpop.f32.mrb[0].mxu0
      %v8617 = vadd.f32 0.0, %v8616
      %v8618 = vpop.f32.mrb[0].mxu0
      %v8619 = vadd.f32 0.0, %v8618
      %8620 = vmatprep.mubr.f32.mxu0 0.0
      %8621 = vmatmul.mubr.f32.gmra.mrb[0].mxu0 %v8536
      %v8622 = vpop.f32.mrb[0].mxu0
      %v8623 = vadd.f32 0.0, %v8622
      %v8624 = vpop.f32.mrb[0].mxu0
      %v8625 = vadd.f32 0.0, %v8624
      %8626 = vdwg.mxu0
      %8627 = vmatprep.subr.mxu0 %v8497
      %8628 = vmatpush1.msra.mxu0 %v8496
      %8629 = vmatprep.subr.mxu0 %v8501
      %8630 = vmatpush1.msra.mxu0 %v8500
      %8631 = vmatprep.subr.mxu0 %v8505
      %8632 = vmatpush1.msra.mxu0 %v8504
      %8633 = vmatprep.subr.mxu0 %v8509
      %8634 = vmatpush1.msra.mxu0 %v8508
      %8635 = vmatprep.subr.mxu0 0.0
      %8636 = vmatpush1.msra.mxu0 0.0
      %8637 = vmatprep.subr.mxu0 0.0
      %8638 = vmatpush1.msra.mxu0 0.0
      %8639 = vmatprep.subr.mxu0 0.0
      %8640 = vmatpush1.msra.mxu0 0.0
      %8641 = vmatprep.subr.mxu0 0.0
      %8642 = vmatpush1.msra.mxu0 0.0
      %8643 = vmatprep.subr.mxu0 0.0
      %8644 = vmatpush1.msra.mxu0 0.0
      %8645 = vmatprep.subr.mxu0 0.0
      %8646 = vmatpush1.msra.mxu0 0.0
      %8647 = vmatprep.subr.mxu0 0.0
      %8648 = vmatpush1.msra.mxu0 0.0
      %8649 = vmatprep.subr.mxu0 0.0
      %8650 = vmatpush1.msra.mxu0 0.0
      %8651 = vmatprep.subr.mxu0 0.0
      %8652 = vmatpush1.msra.mxu0 0.0
      %8653 = vmatprep.subr.mxu0 0.0
      %8654 = vmatpush1.msra.mxu0 0.0
      %8655 = vmatprep.subr.mxu0 0.0
      %8656 = vmatpush1.msra.mxu0 0.0
      %8657 = vmatprep.subr.mxu0 0.0
      %8658 = vmatpush1.msra.mxu0 0.0
      %8659 = vmatprep.subr.mxu0 0.0
      %8660 = vmatpush1.msra.mxu0 0.0
      %8661 = vmatprep.subr.mxu0 0.0
      %8662 = vmatpush1.msra.mxu0 0.0
      %8663 = vmatprep.subr.mxu0 0.0
      %8664 = vmatpush1.msra.mxu0 0.0
      %8665 = vmatprep.subr.mxu0 0.0
      %8666 = vmatpush1.msra.mxu0 0.0
      %8667 = vmatprep.subr.mxu0 0.0
      %8668 = vmatpush1.msra.mxu0 0.0
      %8669 = vmatprep.subr.mxu0 0.0
      %8670 = vmatpush1.msra.mxu0 0.0
      %8671 = vmatprep.subr.mxu0 0.0
      %8672 = vmatpush1.msra.mxu0 0.0
      %8673 = vmatprep.subr.mxu0 0.0
      %8674 = vmatpush1.msra.mxu0 0.0
      %8675 = vmatprep.subr.mxu0 0.0
      %8676 = vmatpush1.msra.mxu0 0.0
      %8677 = vmatprep.subr.mxu0 0.0
      %8678 = vmatpush1.msra.mxu0 0.0
      %8679 = vmatprep.subr.mxu0 0.0
      %8680 = vmatpush1.msra.mxu0 0.0
      %8681 = vmatprep.subr.mxu0 0.0
      %8682 = vmatpush1.msra.mxu0 0.0
      %8683 = vmatprep.subr.mxu0 0.0
      %8684 = vmatpush1.msra.mxu0 0.0
      %8685 = vmatprep.subr.mxu0 0.0
      %8686 = vmatpush1.msra.mxu0 0.0
      %8687 = vmatprep.subr.mxu0 0.0
      %8688 = vmatpush1.msra.mxu0 0.0
      %8689 = vmatprep.subr.mxu0 0.0
      %8690 = vmatpush1.msra.mxu0 0.0
      %8691 = vmatprep.mubr.f32.mxu0 0.0
      %8692 = vmatmul.mubr.f32.gmra.mrb[0].mxu0 %v8527
      %v8693 = vpop.f32.mrb[0].mxu0
      %v8694 = vadd.f32 0.0, %v8693
      %v8695 = vpop.f32.mrb[0].mxu0
      %v8696 = vadd.f32 0.0, %v8695
      %8697 = vmatprep.mubr.f32.mxu0 0.0
      %8698 = vmatmul.mubr.f32.gmra.mrb[0].mxu0 %v8530
      %v8699 = vpop.f32.mrb[0].mxu0
      %v8700 = vadd.f32 0.0, %v8699
      %v8701 = vpop.f32.mrb[0].mxu0
      %v8702 = vadd.f32 0.0, %v8701
      %8703 = vmatprep.mubr.f32.mxu0 0.0
      %8704 = vmatmul.mubr.f32.gmra.mrb[0].mxu0 %v8533
      %v8705 = vpop.f32.mrb[0].mxu0
      %v8706 = vadd.f32 0.0, %v8705
      %v8707 = vpop.f32.mrb[0].mxu0
      %v8708 = vadd.f32 0.0, %v8707
      %8709 = vmatprep.mubr.f32.mxu0 0.0
      %8710 = vmatmul.mubr.f32.gmra.mrb[0].mxu0 %v8536
      %v8711 = vpop.f32.mrb[0].mxu0
      %v8712 = vadd.f32 0.0, %v8711
      %v8713 = vpop.f32.mrb[0].mxu0
      %v8714 = vadd.f32 0.0, %v8713
      %8715 = vdwg.mxu0
      %v8716 = vadd.f32 %v8433, %v8605
      %v8717 = vadd.f32 %v8434, %v8607
      %v8718 = vadd.f32 %v8435, %v8694
      %v8719 = vadd.f32 %v8436, %v8696
      %v8720 = vadd.f32 %v8437, %v8611
      %v8721 = vadd.f32 %v8438, %v8613
      %v8722 = vadd.f32 %v8439, %v8700
      %v8723 = vadd.f32 %v8440, %v8702
      %v8724 = vadd.f32 %v8441, %v8617
      %v8725 = vadd.f32 %v8442, %v8619
      %v8726 = vadd.f32 %v8443, %v8706
      %v8727 = vadd.f32 %v8444, %v8708
      %v8728 = vadd.f32 %v8445, %v8623
      %v8729 = vadd.f32 %v8446, %v8625
      %v8730 = vadd.f32 %v8447, %v8712
      %v8731 = vadd.f32 %v8448, %v8714
      %s8732 = scalar_lea.vmem %s4, 32
      %v8733 = vld [vmem:[%s8732] sm:$0xff]
      %v8734 = vld [vmem:[%s8732 + $0x8] sm:$0xff]
      %v8735 = vld [vmem:[%s8732 + $0x10] sm:$0xff]
      %v8736 = vld [vmem:[%s8732 + $0x18] sm:$0xff]
      %8738 = vset.pattern.permute.xlu0 0
      %8739 = vperm.xlu0 %8738, %v8733
      %v8740 = vpop.permute.xlu0 %8739
      %8743 = vset.pattern.permute.xlu0 0
      %8744 = vperm.xlu0 %8743, %v8734
      %v8745 = vpop.permute.xlu0 %8744
      %8748 = vset.pattern.permute.xlu0 0
      %8749 = vperm.xlu0 %8748, %v8735
      %v8750 = vpop.permute.xlu0 %8749
      %8753 = vset.pattern.permute.xlu0 0
      %8754 = vperm.xlu0 %8753, %v8736
      %v8755 = vpop.permute.xlu0 %8754
      %v8757 = vadd.f32 %v8716, %v8740
      %v8758 = vadd.f32 %v8717, %v8740
      %v8759 = vadd.f32 %v8718, %v8740
      %v8760 = vadd.f32 %v8719, %v8740
      %v8761 = vadd.f32 %v8720, %v8745
      %v8762 = vadd.f32 %v8721, %v8745
      %v8763 = vadd.f32 %v8722, %v8745
      %v8764 = vadd.f32 %v8723, %v8745
      %v8765 = vadd.f32 %v8724, %v8750
      %v8766 = vadd.f32 %v8725, %v8750
      %v8767 = vadd.f32 %v8726, %v8750
      %v8768 = vadd.f32 %v8727, %v8750
      %v8769 = vadd.f32 %v8728, %v8755
      %v8770 = vadd.f32 %v8729, %v8755
      %v8771 = vadd.f32 %v8730, %v8755
      %v8772 = vadd.f32 %v8731, %v8755
      %vm8773 = vcmp.gt.f32.partialorder %v8757, 0.0
      %vm8774 = vcmp.gt.f32.partialorder %v8758, 0.0
      %vm8775 = vcmp.gt.f32.partialorder %v8759, 0.0
      %vm8776 = vcmp.gt.f32.partialorder %v8760, 0.0
      %vm8777 = vcmp.gt.f32.partialorder %v8761, 0.0
      %vm8778 = vcmp.gt.f32.partialorder %v8762, 0.0
      %vm8779 = vcmp.gt.f32.partialorder %v8763, 0.0
      %vm8780 = vcmp.gt.f32.partialorder %v8764, 0.0
      %vm8781 = vcmp.gt.f32.partialorder %v8765, 0.0
      %vm8782 = vcmp.gt.f32.partialorder %v8766, 0.0
      %vm8783 = vcmp.gt.f32.partialorder %v8767, 0.0
      %vm8784 = vcmp.gt.f32.partialorder %v8768, 0.0
      %vm8785 = vcmp.gt.f32.partialorder %v8769, 0.0
      %vm8786 = vcmp.gt.f32.partialorder %v8770, 0.0
      %vm8787 = vcmp.gt.f32.partialorder %v8771, 0.0
      %vm8788 = vcmp.gt.f32.partialorder %v8772, 0.0
      %v8789 = vmin.f32 %v8757, 0.0
      %v8790 = vmin.f32 %v8758, 0.0
      %v8791 = vmin.f32 %v8759, 0.0
      %v8792 = vmin.f32 %v8760, 0.0
      %v8793 = vmin.f32 %v8761, 0.0
      %v8794 = vmin.f32 %v8762, 0.0
      %v8795 = vmin.f32 %v8763, 0.0
      %v8796 = vmin.f32 %v8764, 0.0
      %v8797 = vmin.f32 %v8765, 0.0
      %v8798 = vmin.f32 %v8766, 0.0
      %v8799 = vmin.f32 %v8767, 0.0
      %v8800 = vmin.f32 %v8768, 0.0
      %v8801 = vmin.f32 %v8769, 0.0
      %v8802 = vmin.f32 %v8770, 0.0
      %v8803 = vmin.f32 %v8771, 0.0
      %v8804 = vmin.f32 %v8772, 0.0
      %v8805 = vmul.f32 %v8789, 1.442695
      %v8806 = vpow.pop %v8805
      %v8807 = vmul.f32 %v8790, 1.442695
      %v8808 = vpow.pop %v8807
      %v8809 = vmul.f32 %v8791, 1.442695
      %v8810 = vpow.pop %v8809
      %v8811 = vmul.f32 %v8792, 1.442695
      %v8812 = vpow.pop %v8811
      %v8813 = vmul.f32 %v8793, 1.442695
      %v8814 = vpow.pop %v8813
      %v8815 = vmul.f32 %v8794, 1.442695
      %v8816 = vpow.pop %v8815
      %v8817 = vmul.f32 %v8795, 1.442695
      %v8818 = vpow.pop %v8817
      %v8819 = vmul.f32 %v8796, 1.442695
      %v8820 = vpow.pop %v8819
      %v8821 = vmul.f32 %v8797, 1.442695
      %v8822 = vpow.pop %v8821
      %v8823 = vmul.f32 %v8798, 1.442695
      %v8824 = vpow.pop %v8823
      %v8825 = vmul.f32 %v8799, 1.442695
      %v8826 = vpow.pop %v8825
      %v8827 = vmul.f32 %v8800, 1.442695
      %v8828 = vpow.pop %v8827
      %v8829 = vmul.f32 %v8801, 1.442695
      %v8830 = vpow.pop %v8829
      %v8831 = vmul.f32 %v8802, 1.442695
      %v8832 = vpow.pop %v8831
      %v8833 = vmul.f32 %v8803, 1.442695
      %v8834 = vpow.pop %v8833
      %v8835 = vmul.f32 %v8804, 1.442695
      %v8836 = vpow.pop %v8835
      %v8837 = vsub.f32 %v8806, 1.0
      %v8838 = vsub.f32 %v8808, 1.0
      %v8839 = vsub.f32 %v8810, 1.0
      %v8840 = vsub.f32 %v8812, 1.0
      %v8841 = vsub.f32 %v8814, 1.0
      %v8842 = vsub.f32 %v8816, 1.0
      %v8843 = vsub.f32 %v8818, 1.0
      %v8844 = vsub.f32 %v8820, 1.0
      %v8845 = vsub.f32 %v8822, 1.0
      %v8846 = vsub.f32 %v8824, 1.0
      %v8847 = vsub.f32 %v8826, 1.0
      %v8848 = vsub.f32 %v8828, 1.0
      %v8849 = vsub.f32 %v8830, 1.0
      %v8850 = vsub.f32 %v8832, 1.0
      %v8851 = vsub.f32 %v8834, 1.0
      %v8852 = vsub.f32 %v8836, 1.0
      %v8853 = vsel %vm8773, %v8757, %v8837
      %v8854 = vsel %vm8774, %v8758, %v8838
      %v8855 = vsel %vm8775, %v8759, %v8839
      %v8856 = vsel %vm8776, %v8760, %v8840
      %v8857 = vsel %vm8777, %v8761, %v8841
      %v8858 = vsel %vm8778, %v8762, %v8842
      %v8859 = vsel %vm8779, %v8763, %v8843
      %v8860 = vsel %vm8780, %v8764, %v8844
      %v8861 = vsel %vm8781, %v8765, %v8845
      %v8862 = vsel %vm8782, %v8766, %v8846
      %v8863 = vsel %vm8783, %v8767, %v8847
      %v8864 = vsel %vm8784, %v8768, %v8848
      %v8865 = vsel %vm8785, %v8769, %v8849
      %v8866 = vsel %vm8786, %v8770, %v8850
      %v8867 = vsel %vm8787, %v8771, %v8851
      %v8868 = vsel %vm8788, %v8772, %v8852
      %v8869 = vmul.f32 %v8853, %v281
      %v8870 = vmul.f32 %v8854, %v285
      %v8871 = vmul.f32 %v8855, %v289
      %v8872 = vmul.f32 %v8856, %v293
      %v8873 = vmul.f32 %v8857, %v281
      %v8874 = vmul.f32 %v8858, %v285
      %v8875 = vmul.f32 %v8859, %v289
      %v8876 = vmul.f32 %v8860, %v293
      %v8877 = vmul.f32 %v8861, %v281
      %v8878 = vmul.f32 %v8862, %v285
      %v8879 = vmul.f32 %v8863, %v289
      %v8880 = vmul.f32 %v8864, %v293
      %v8881 = vmul.f32 %v8865, %v281
      %v8882 = vmul.f32 %v8866, %v285
      %v8883 = vmul.f32 %v8867, %v289
      %v8884 = vmul.f32 %v8868, %v293
      %8885 = vst [vmem:[%s251 + $0x80] sm:$0xff] %v8869
      %8886 = vst [vmem:[%s251 + $0x88] sm:$0xff] %v8870
      %8887 = vst [vmem:[%s251 + $0x90] sm:$0xff] %v8871
      %8888 = vst [vmem:[%s251 + $0x98] sm:$0xff] %v8872
      %8889 = vst [vmem:[%s251 + $0xa0] sm:$0xff] %v8873
      %8890 = vst [vmem:[%s251 + $0xa8] sm:$0xff] %v8874
      %8891 = vst [vmem:[%s251 + $0xb0] sm:$0xff] %v8875
      %8892 = vst [vmem:[%s251 + $0xb8] sm:$0xff] %v8876
      %8893 = vst [vmem:[%s251 + $0xc0] sm:$0xff] %v8877
      %8894 = vst [vmem:[%s251 + $0xc8] sm:$0xff] %v8878
      %8895 = vst [vmem:[%s251 + $0xd0] sm:$0xff] %v8879
      %8896 = vst [vmem:[%s251 + $0xd8] sm:$0xff] %v8880
      %8897 = vst [vmem:[%s251 + $0xe0] sm:$0xff] %v8881
      %8898 = vst [vmem:[%s251 + $0xe8] sm:$0xff] %v8882
      %8899 = vst [vmem:[%s251 + $0xf0] sm:$0xff] %v8883
      %8900 = vst [vmem:[%s251 + $0xf8] sm:$0xff] %v8884
      %8901 = vst [vmem:[#allocation2 + $0x8] sm:$0xff] %v8869
      %8902 = vst [vmem:[#allocation2 + $0x10] sm:$0xff] %v8870
      %8903 = vst [vmem:[#allocation2 + $0x18] sm:$0xff] %v8871
      %8904 = vst [vmem:[#allocation2 + $0x20] sm:$0xff] %v8872
      %8905 = vst [vmem:[#allocation2 + $0x38] sm:$0xff] %v8873
      %8906 = vst [vmem:[#allocation2 + $0x40] sm:$0xff] %v8874
      %8907 = vst [vmem:[#allocation2 + $0x48] sm:$0xff] %v8875
      %8908 = vst [vmem:[#allocation2 + $0x50] sm:$0xff] %v8876
      %8909 = vst [vmem:[#allocation2 + $0x68] sm:$0xff] %v8877
      %8910 = vst [vmem:[#allocation2 + $0x70] sm:$0xff] %v8878
      %8911 = vst [vmem:[#allocation2 + $0x78] sm:$0xff] %v8879
      %8912 = vst [vmem:[#allocation2 + $0x80] sm:$0xff] %v8880
      %8913 = vst [vmem:[#allocation2 + $0x98] sm:$0xff] %v8881
      %8914 = vst [vmem:[#allocation2 + $0xa0] sm:$0xff] %v8882
      %8915 = vst [vmem:[#allocation2 + $0xa8] sm:$0xff] %v8883
      %8916 = vst [vmem:[#allocation2 + $0xb0] sm:$0xff] %v8884
      %v8917 = vld [vmem:[%s3] sm:$0xff]
      %v8918 = vld [vmem:[%s3 + $0x8] sm:$0xff]
      %v8919 = vld [vmem:[%s3 + $0x10] sm:$0xff]
      %v8920 = vld [vmem:[%s3 + $0x18] sm:$0xff]
      %v8921 = vld [vmem:[#allocation2] sm:$0xff]
      %v8922 = vld [vmem:[#allocation2 + $0x8] sm:$0xff]
      %v8923 = vld [vmem:[#allocation2 + $0x10] sm:$0xff]
      %v8924 = vld [vmem:[#allocation2 + $0x18] sm:$0xff]
      %v8925 = vld [vmem:[#allocation2 + $0x20] sm:$0xff]
      %v8926 = vld [vmem:[#allocation2 + $0x30] sm:$0xff]
      %v8927 = vld [vmem:[#allocation2 + $0x38] sm:$0xff]
      %v8928 = vld [vmem:[#allocation2 + $0x40] sm:$0xff]
      %v8929 = vld [vmem:[#allocation2 + $0x48] sm:$0xff]
      %v8930 = vld [vmem:[#allocation2 + $0x50] sm:$0xff]
      %v8931 = vld [vmem:[#allocation2 + $0x60] sm:$0xff]
      %v8932 = vld [vmem:[#allocation2 + $0x68] sm:$0xff]
      %v8933 = vld [vmem:[#allocation2 + $0x70] sm:$0xff]
      %v8934 = vld [vmem:[#allocation2 + $0x78] sm:$0xff]
      %v8935 = vld [vmem:[#allocation2 + $0x80] sm:$0xff]
      %v8936 = vld [vmem:[#allocation2 + $0x90] sm:$0xff]
      %v8937 = vld [vmem:[#allocation2 + $0x98] sm:$0xff]
      %v8938 = vld [vmem:[#allocation2 + $0xa0] sm:$0xff]
      %v8939 = vld [vmem:[#allocation2 + $0xa8] sm:$0xff]
      %v8940 = vld [vmem:[#allocation2 + $0xb0] sm:$0xff]
      %s8941 = scalar_lea.vmem %s3, 32
      %v8942 = vld [vmem:[%s8941] sm:$0xff]
      %v8943 = vld [vmem:[%s8941 + $0x8] sm:$0xff]
      %v8944 = vld [vmem:[%s8941 + $0x10] sm:$0xff]
      %v8945 = vld [vmem:[%s8941 + $0x18] sm:$0xff]
      %8966 = vrot.lane.b32.xlu0 %v8921, 20
      %v8967 = vpop.permute.xlu0 %8966
      %8968 = vrot.lane.b32.xlu0 %v8922, 20
      %v8969 = vpop.permute.xlu0 %8968
      %8970 = vrot.lane.b32.xlu0 %v8923, 20
      %v8971 = vpop.permute.xlu0 %8970
      %8972 = vrot.lane.b32.xlu0 %v8924, 20
      %v8973 = vpop.permute.xlu0 %8972
      %8974 = vrot.lane.b32.xlu0 %v8925, 20
      %v8975 = vpop.permute.xlu0 %8974
      %8976 = vrot.lane.b32.xlu0 %v8926, 20
      %v8977 = vpop.permute.xlu0 %8976
      %8978 = vrot.lane.b32.xlu0 %v8927, 20
      %v8979 = vpop.permute.xlu0 %8978
      %8980 = vrot.lane.b32.xlu0 %v8928, 20
      %v8981 = vpop.permute.xlu0 %8980
      %8982 = vrot.lane.b32.xlu0 %v8929, 20
      %v8983 = vpop.permute.xlu0 %8982
      %8984 = vrot.lane.b32.xlu0 %v8930, 20
      %v8985 = vpop.permute.xlu0 %8984
      %8986 = vrot.lane.b32.xlu0 %v8931, 20
      %v8987 = vpop.permute.xlu0 %8986
      %8988 = vrot.lane.b32.xlu0 %v8932, 20
      %v8989 = vpop.permute.xlu0 %8988
      %8990 = vrot.lane.b32.xlu0 %v8933, 20
      %v8991 = vpop.permute.xlu0 %8990
      %8992 = vrot.lane.b32.xlu0 %v8934, 20
      %v8993 = vpop.permute.xlu0 %8992
      %8994 = vrot.lane.b32.xlu0 %v8935, 20
      %v8995 = vpop.permute.xlu0 %8994
      %8996 = vrot.lane.b32.xlu0 %v8936, 20
      %v8997 = vpop.permute.xlu0 %8996
      %8998 = vrot.lane.b32.xlu0 %v8937, 20
      %v8999 = vpop.permute.xlu0 %8998
      %9000 = vrot.lane.b32.xlu0 %v8938, 20
      %v9001 = vpop.permute.xlu0 %9000
      %9002 = vrot.lane.b32.xlu0 %v8939, 20
      %v9003 = vpop.permute.xlu0 %9002
      %9004 = vrot.lane.b32.xlu0 %v8940, 20
      %v9005 = vpop.permute.xlu0 %9004
      %v9006 = vsel %vm1909, %v8967, %v8969
      %v9007 = vsel %vm1909, %v8969, %v8971
      %v9008 = vsel %vm1909, %v8971, %v8973
      %v9009 = vsel %vm1909, %v8973, %v8975
      %v9010 = vsel %vm1909, %v8977, %v8979
      %v9011 = vsel %vm1909, %v8979, %v8981
      %v9012 = vsel %vm1909, %v8981, %v8983
      %v9013 = vsel %vm1909, %v8983, %v8985
      %v9014 = vsel %vm1909, %v8987, %v8989
      %v9015 = vsel %vm1909, %v8989, %v8991
      %v9016 = vsel %vm1909, %v8991, %v8993
      %v9017 = vsel %vm1909, %v8993, %v8995
      %v9018 = vsel %vm1909, %v8997, %v8999
      %v9019 = vsel %vm1909, %v8999, %v9001
      %v9020 = vsel %vm1909, %v9001, %v9003
      %v9021 = vsel %vm1909, %v9003, %v9005
      %v9039 = vsel %vm6330, %v8942, 0
      %v9042 = vsel %vm6330, %v8943, 0
      %v9045 = vsel %vm6330, %v8944, 0
      %v9048 = vsel %vm6330, %v8945, 0
      %9050 = vmatprep.subr.mxu0 %v9007
      %9051 = vmatpush1.msra.mxu0 %v9006
      %9052 = vmatprep.subr.mxu0 %v9011
      %9053 = vmatpush1.msra.mxu0 %v9010
      %9054 = vmatprep.subr.mxu0 %v9015
      %9055 = vmatpush1.msra.mxu0 %v9014
      %9056 = vmatprep.subr.mxu0 %v9019
      %9057 = vmatpush1.msra.mxu0 %v9018
      %9058 = vmatprep.subr.mxu0 0.0
      %9059 = vmatpush1.msra.mxu0 0.0
      %9060 = vmatprep.subr.mxu0 0.0
      %9061 = vmatpush1.msra.mxu0 0.0
      %9062 = vmatprep.subr.mxu0 0.0
      %9063 = vmatpush1.msra.mxu0 0.0
      %9064 = vmatprep.subr.mxu0 0.0
      %9065 = vmatpush1.msra.mxu0 0.0
      %9066 = vmatprep.subr.mxu0 0.0
      %9067 = vmatpush1.msra.mxu0 0.0
      %9068 = vmatprep.subr.mxu0 0.0
      %9069 = vmatpush1.msra.mxu0 0.0
      %9070 = vmatprep.subr.mxu0 0.0
      %9071 = vmatpush1.msra.mxu0 0.0
      %9072 = vmatprep.subr.mxu0 0.0
      %9073 = vmatpush1.msra.mxu0 0.0
      %9074 = vmatprep.subr.mxu0 0.0
      %9075 = vmatpush1.msra.mxu0 0.0
      %9076 = vmatprep.subr.mxu0 0.0
      %9077 = vmatpush1.msra.mxu0 0.0
      %9078 = vmatprep.subr.mxu0 0.0
      %9079 = vmatpush1.msra.mxu0 0.0
      %9080 = vmatprep.subr.mxu0 0.0
      %9081 = vmatpush1.msra.mxu0 0.0
      %9082 = vmatprep.subr.mxu0 0.0
      %9083 = vmatpush1.msra.mxu0 0.0
      %9084 = vmatprep.subr.mxu0 0.0
      %9085 = vmatpush1.msra.mxu0 0.0
      %9086 = vmatprep.subr.mxu0 0.0
      %9087 = vmatpush1.msra.mxu0 0.0
      %9088 = vmatprep.subr.mxu0 0.0
      %9089 = vmatpush1.msra.mxu0 0.0
      %9090 = vmatprep.subr.mxu0 0.0
      %9091 = vmatpush1.msra.mxu0 0.0
      %9092 = vmatprep.subr.mxu0 0.0
      %9093 = vmatpush1.msra.mxu0 0.0
      %9094 = vmatprep.subr.mxu0 0.0
      %9095 = vmatpush1.msra.mxu0 0.0
      %9096 = vmatprep.subr.mxu0 0.0
      %9097 = vmatpush1.msra.mxu0 0.0
      %9098 = vmatprep.subr.mxu0 0.0
      %9099 = vmatpush1.msra.mxu0 0.0
      %9100 = vmatprep.subr.mxu0 0.0
      %9101 = vmatpush1.msra.mxu0 0.0
      %9102 = vmatprep.subr.mxu0 0.0
      %9103 = vmatpush1.msra.mxu0 0.0
      %9104 = vmatprep.subr.mxu0 0.0
      %9105 = vmatpush1.msra.mxu0 0.0
      %9106 = vmatprep.subr.mxu0 0.0
      %9107 = vmatpush1.msra.mxu0 0.0
      %9108 = vmatprep.subr.mxu0 0.0
      %9109 = vmatpush1.msra.mxu0 0.0
      %9110 = vmatprep.subr.mxu0 0.0
      %9111 = vmatpush1.msra.mxu0 0.0
      %9112 = vmatprep.subr.mxu0 0.0
      %9113 = vmatpush1.msra.mxu0 0.0
      %9114 = vmatprep.mubr.f32.mxu0 0.0
      %9115 = vmatmul.mubr.f32.gmra.mrb[0].mxu0 %v9039
      %v9116 = vpop.f32.mrb[0].mxu0
      %v9117 = vadd.f32 0.0, %v9116
      %v9118 = vpop.f32.mrb[0].mxu0
      %v9119 = vadd.f32 0.0, %v9118
      %9120 = vmatprep.mubr.f32.mxu0 0.0
      %9121 = vmatmul.mubr.f32.gmra.mrb[0].mxu0 %v9042
      %v9122 = vpop.f32.mrb[0].mxu0
      %v9123 = vadd.f32 0.0, %v9122
      %v9124 = vpop.f32.mrb[0].mxu0
      %v9125 = vadd.f32 0.0, %v9124
      %9126 = vmatprep.mubr.f32.mxu0 0.0
      %9127 = vmatmul.mubr.f32.gmra.mrb[0].mxu0 %v9045
      %v9128 = vpop.f32.mrb[0].mxu0
      %v9129 = vadd.f32 0.0, %v9128
      %v9130 = vpop.f32.mrb[0].mxu0
      %v9131 = vadd.f32 0.0, %v9130
      %9132 = vmatprep.mubr.f32.mxu0 0.0
      %9133 = vmatmul.mubr.f32.gmra.mrb[0].mxu0 %v9048
      %v9134 = vpop.f32.mrb[0].mxu0
      %v9135 = vadd.f32 0.0, %v9134
      %v9136 = vpop.f32.mrb[0].mxu0
      %v9137 = vadd.f32 0.0, %v9136
      %9138 = vdwg.mxu0
      %9139 = vmatprep.subr.mxu0 %v9009
      %9140 = vmatpush1.msra.mxu0 %v9008
      %9141 = vmatprep.subr.mxu0 %v9013
      %9142 = vmatpush1.msra.mxu0 %v9012
      %9143 = vmatprep.subr.mxu0 %v9017
      %9144 = vmatpush1.msra.mxu0 %v9016
      %9145 = vmatprep.subr.mxu0 %v9021
      %9146 = vmatpush1.msra.mxu0 %v9020
      %9147 = vmatprep.subr.mxu0 0.0
      %9148 = vmatpush1.msra.mxu0 0.0
      %9149 = vmatprep.subr.mxu0 0.0
      %9150 = vmatpush1.msra.mxu0 0.0
      %9151 = vmatprep.subr.mxu0 0.0
      %9152 = vmatpush1.msra.mxu0 0.0
      %9153 = vmatprep.subr.mxu0 0.0
      %9154 = vmatpush1.msra.mxu0 0.0
      %9155 = vmatprep.subr.mxu0 0.0
      %9156 = vmatpush1.msra.mxu0 0.0
      %9157 = vmatprep.subr.mxu0 0.0
      %9158 = vmatpush1.msra.mxu0 0.0
      %9159 = vmatprep.subr.mxu0 0.0
      %9160 = vmatpush1.msra.mxu0 0.0
      %9161 = vmatprep.subr.mxu0 0.0
      %9162 = vmatpush1.msra.mxu0 0.0
      %9163 = vmatprep.subr.mxu0 0.0
      %9164 = vmatpush1.msra.mxu0 0.0
      %9165 = vmatprep.subr.mxu0 0.0
      %9166 = vmatpush1.msra.mxu0 0.0
      %9167 = vmatprep.subr.mxu0 0.0
      %9168 = vmatpush1.msra.mxu0 0.0
      %9169 = vmatprep.subr.mxu0 0.0
      %9170 = vmatpush1.msra.mxu0 0.0
      %9171 = vmatprep.subr.mxu0 0.0
      %9172 = vmatpush1.msra.mxu0 0.0
      %9173 = vmatprep.subr.mxu0 0.0
      %9174 = vmatpush1.msra.mxu0 0.0
      %9175 = vmatprep.subr.mxu0 0.0
      %9176 = vmatpush1.msra.mxu0 0.0
      %9177 = vmatprep.subr.mxu0 0.0
      %9178 = vmatpush1.msra.mxu0 0.0
      %9179 = vmatprep.subr.mxu0 0.0
      %9180 = vmatpush1.msra.mxu0 0.0
      %9181 = vmatprep.subr.mxu0 0.0
      %9182 = vmatpush1.msra.mxu0 0.0
      %9183 = vmatprep.subr.mxu0 0.0
      %9184 = vmatpush1.msra.mxu0 0.0
      %9185 = vmatprep.subr.mxu0 0.0
      %9186 = vmatpush1.msra.mxu0 0.0
      %9187 = vmatprep.subr.mxu0 0.0
      %9188 = vmatpush1.msra.mxu0 0.0
      %9189 = vmatprep.subr.mxu0 0.0
      %9190 = vmatpush1.msra.mxu0 0.0
      %9191 = vmatprep.subr.mxu0 0.0
      %9192 = vmatpush1.msra.mxu0 0.0
      %9193 = vmatprep.subr.mxu0 0.0
      %9194 = vmatpush1.msra.mxu0 0.0
      %9195 = vmatprep.subr.mxu0 0.0
      %9196 = vmatpush1.msra.mxu0 0.0
      %9197 = vmatprep.subr.mxu0 0.0
      %9198 = vmatpush1.msra.mxu0 0.0
      %9199 = vmatprep.subr.mxu0 0.0
      %9200 = vmatpush1.msra.mxu0 0.0
      %9201 = vmatprep.subr.mxu0 0.0
      %9202 = vmatpush1.msra.mxu0 0.0
      %9203 = vmatprep.mubr.f32.mxu0 0.0
      %9204 = vmatmul.mubr.f32.gmra.mrb[0].mxu0 %v9039
      %v9205 = vpop.f32.mrb[0].mxu0
      %v9206 = vadd.f32 0.0, %v9205
      %v9207 = vpop.f32.mrb[0].mxu0
      %v9208 = vadd.f32 0.0, %v9207
      %9209 = vmatprep.mubr.f32.mxu0 0.0
      %9210 = vmatmul.mubr.f32.gmra.mrb[0].mxu0 %v9042
      %v9211 = vpop.f32.mrb[0].mxu0
      %v9212 = vadd.f32 0.0, %v9211
      %v9213 = vpop.f32.mrb[0].mxu0
      %v9214 = vadd.f32 0.0, %v9213
      %9215 = vmatprep.mubr.f32.mxu0 0.0
      %9216 = vmatmul.mubr.f32.gmra.mrb[0].mxu0 %v9045
      %v9217 = vpop.f32.mrb[0].mxu0
      %v9218 = vadd.f32 0.0, %v9217
      %v9219 = vpop.f32.mrb[0].mxu0
      %v9220 = vadd.f32 0.0, %v9219
      %9221 = vmatprep.mubr.f32.mxu0 0.0
      %9222 = vmatmul.mubr.f32.gmra.mrb[0].mxu0 %v9048
      %v9223 = vpop.f32.mrb[0].mxu0
      %v9224 = vadd.f32 0.0, %v9223
      %v9225 = vpop.f32.mrb[0].mxu0
      %v9226 = vadd.f32 0.0, %v9225
      %9227 = vdwg.mxu0
      %9228 = vrot.lane.b32.xlu0 %v8921, 21
      %v9229 = vpop.permute.xlu0 %9228
      %9230 = vrot.lane.b32.xlu0 %v8922, 21
      %v9231 = vpop.permute.xlu0 %9230
      %9232 = vrot.lane.b32.xlu0 %v8923, 21
      %v9233 = vpop.permute.xlu0 %9232
      %9234 = vrot.lane.b32.xlu0 %v8924, 21
      %v9235 = vpop.permute.xlu0 %9234
      %9236 = vrot.lane.b32.xlu0 %v8925, 21
      %v9237 = vpop.permute.xlu0 %9236
      %9238 = vrot.lane.b32.xlu0 %v8926, 21
      %v9239 = vpop.permute.xlu0 %9238
      %9240 = vrot.lane.b32.xlu0 %v8927, 21
      %v9241 = vpop.permute.xlu0 %9240
      %9242 = vrot.lane.b32.xlu0 %v8928, 21
      %v9243 = vpop.permute.xlu0 %9242
      %9244 = vrot.lane.b32.xlu0 %v8929, 21
      %v9245 = vpop.permute.xlu0 %9244
      %9246 = vrot.lane.b32.xlu0 %v8930, 21
      %v9247 = vpop.permute.xlu0 %9246
      %9248 = vrot.lane.b32.xlu0 %v8931, 21
      %v9249 = vpop.permute.xlu0 %9248
      %9250 = vrot.lane.b32.xlu0 %v8932, 21
      %v9251 = vpop.permute.xlu0 %9250
      %9252 = vrot.lane.b32.xlu0 %v8933, 21
      %v9253 = vpop.permute.xlu0 %9252
      %9254 = vrot.lane.b32.xlu0 %v8934, 21
      %v9255 = vpop.permute.xlu0 %9254
      %9256 = vrot.lane.b32.xlu0 %v8935, 21
      %v9257 = vpop.permute.xlu0 %9256
      %9258 = vrot.lane.b32.xlu0 %v8936, 21
      %v9259 = vpop.permute.xlu0 %9258
      %9260 = vrot.lane.b32.xlu0 %v8937, 21
      %v9261 = vpop.permute.xlu0 %9260
      %9262 = vrot.lane.b32.xlu0 %v8938, 21
      %v9263 = vpop.permute.xlu0 %9262
      %9264 = vrot.lane.b32.xlu0 %v8939, 21
      %v9265 = vpop.permute.xlu0 %9264
      %9266 = vrot.lane.b32.xlu0 %v8940, 21
      %v9267 = vpop.permute.xlu0 %9266
      %v9268 = vsel %vm1679, %v9229, %v9231
      %v9269 = vsel %vm1679, %v9231, %v9233
      %v9270 = vsel %vm1679, %v9233, %v9235
      %v9271 = vsel %vm1679, %v9235, %v9237
      %v9272 = vsel %vm1679, %v9239, %v9241
      %v9273 = vsel %vm1679, %v9241, %v9243
      %v9274 = vsel %vm1679, %v9243, %v9245
      %v9275 = vsel %vm1679, %v9245, %v9247
      %v9276 = vsel %vm1679, %v9249, %v9251
      %v9277 = vsel %vm1679, %v9251, %v9253
      %v9278 = vsel %vm1679, %v9253, %v9255
      %v9279 = vsel %vm1679, %v9255, %v9257
      %v9280 = vsel %vm1679, %v9259, %v9261
      %v9281 = vsel %vm1679, %v9261, %v9263
      %v9282 = vsel %vm1679, %v9263, %v9265
      %v9283 = vsel %vm1679, %v9265, %v9267
      %v9301 = vsel %vm6330, %v8917, 0
      %v9304 = vsel %vm6330, %v8918, 0
      %v9307 = vsel %vm6330, %v8919, 0
      %v9310 = vsel %vm6330, %v8920, 0
      %9312 = vmatprep.subr.mxu0 %v9269
      %9313 = vmatpush1.msra.mxu0 %v9268
      %9314 = vmatprep.subr.mxu0 %v9273
      %9315 = vmatpush1.msra.mxu0 %v9272
      %9316 = vmatprep.subr.mxu0 %v9277
      %9317 = vmatpush1.msra.mxu0 %v9276
      %9318 = vmatprep.subr.mxu0 %v9281
      %9319 = vmatpush1.msra.mxu0 %v9280
      %9320 = vmatprep.subr.mxu0 0.0
      %9321 = vmatpush1.msra.mxu0 0.0
      %9322 = vmatprep.subr.mxu0 0.0
      %9323 = vmatpush1.msra.mxu0 0.0
      %9324 = vmatprep.subr.mxu0 0.0
      %9325 = vmatpush1.msra.mxu0 0.0
      %9326 = vmatprep.subr.mxu0 0.0
      %9327 = vmatpush1.msra.mxu0 0.0
      %9328 = vmatprep.subr.mxu0 0.0
      %9329 = vmatpush1.msra.mxu0 0.0
      %9330 = vmatprep.subr.mxu0 0.0
      %9331 = vmatpush1.msra.mxu0 0.0
      %9332 = vmatprep.subr.mxu0 0.0
      %9333 = vmatpush1.msra.mxu0 0.0
      %9334 = vmatprep.subr.mxu0 0.0
      %9335 = vmatpush1.msra.mxu0 0.0
      %9336 = vmatprep.subr.mxu0 0.0
      %9337 = vmatpush1.msra.mxu0 0.0
      %9338 = vmatprep.subr.mxu0 0.0
      %9339 = vmatpush1.msra.mxu0 0.0
      %9340 = vmatprep.subr.mxu0 0.0
      %9341 = vmatpush1.msra.mxu0 0.0
      %9342 = vmatprep.subr.mxu0 0.0
      %9343 = vmatpush1.msra.mxu0 0.0
      %9344 = vmatprep.subr.mxu0 0.0
      %9345 = vmatpush1.msra.mxu0 0.0
      %9346 = vmatprep.subr.mxu0 0.0
      %9347 = vmatpush1.msra.mxu0 0.0
      %9348 = vmatprep.subr.mxu0 0.0
      %9349 = vmatpush1.msra.mxu0 0.0
      %9350 = vmatprep.subr.mxu0 0.0
      %9351 = vmatpush1.msra.mxu0 0.0
      %9352 = vmatprep.subr.mxu0 0.0
      %9353 = vmatpush1.msra.mxu0 0.0
      %9354 = vmatprep.subr.mxu0 0.0
      %9355 = vmatpush1.msra.mxu0 0.0
      %9356 = vmatprep.subr.mxu0 0.0
      %9357 = vmatpush1.msra.mxu0 0.0
      %9358 = vmatprep.subr.mxu0 0.0
      %9359 = vmatpush1.msra.mxu0 0.0
      %9360 = vmatprep.subr.mxu0 0.0
      %9361 = vmatpush1.msra.mxu0 0.0
      %9362 = vmatprep.subr.mxu0 0.0
      %9363 = vmatpush1.msra.mxu0 0.0
      %9364 = vmatprep.subr.mxu0 0.0
      %9365 = vmatpush1.msra.mxu0 0.0
      %9366 = vmatprep.subr.mxu0 0.0
      %9367 = vmatpush1.msra.mxu0 0.0
      %9368 = vmatprep.subr.mxu0 0.0
      %9369 = vmatpush1.msra.mxu0 0.0
      %9370 = vmatprep.subr.mxu0 0.0
      %9371 = vmatpush1.msra.mxu0 0.0
      %9372 = vmatprep.subr.mxu0 0.0
      %9373 = vmatpush1.msra.mxu0 0.0
      %9374 = vmatprep.subr.mxu0 0.0
      %9375 = vmatpush1.msra.mxu0 0.0
      %9376 = vmatprep.mubr.f32.mxu0 0.0
      %9377 = vmatmul.mubr.f32.gmra.mrb[0].mxu0 %v9301
      %v9378 = vpop.f32.mrb[0].mxu0
      %v9379 = vadd.f32 %v9117, %v9378
      %v9380 = vpop.f32.mrb[0].mxu0
      %v9381 = vadd.f32 %v9119, %v9380
      %9382 = vmatprep.mubr.f32.mxu0 0.0
      %9383 = vmatmul.mubr.f32.gmra.mrb[0].mxu0 %v9304
      %v9384 = vpop.f32.mrb[0].mxu0
      %v9385 = vadd.f32 %v9123, %v9384
      %v9386 = vpop.f32.mrb[0].mxu0
      %v9387 = vadd.f32 %v9125, %v9386
      %9388 = vmatprep.mubr.f32.mxu0 0.0
      %9389 = vmatmul.mubr.f32.gmra.mrb[0].mxu0 %v9307
      %v9390 = vpop.f32.mrb[0].mxu0
      %v9391 = vadd.f32 %v9129, %v9390
      %v9392 = vpop.f32.mrb[0].mxu0
      %v9393 = vadd.f32 %v9131, %v9392
      %9394 = vmatprep.mubr.f32.mxu0 0.0
      %9395 = vmatmul.mubr.f32.gmra.mrb[0].mxu0 %v9310
      %v9396 = vpop.f32.mrb[0].mxu0
      %v9397 = vadd.f32 %v9135, %v9396
      %v9398 = vpop.f32.mrb[0].mxu0
      %v9399 = vadd.f32 %v9137, %v9398
      %9400 = vdwg.mxu0
      %9401 = vmatprep.subr.mxu0 %v9271
      %9402 = vmatpush1.msra.mxu0 %v9270
      %9403 = vmatprep.subr.mxu0 %v9275
      %9404 = vmatpush1.msra.mxu0 %v9274
      %9405 = vmatprep.subr.mxu0 %v9279
      %9406 = vmatpush1.msra.mxu0 %v9278
      %9407 = vmatprep.subr.mxu0 %v9283
      %9408 = vmatpush1.msra.mxu0 %v9282
      %9409 = vmatprep.subr.mxu0 0.0
      %9410 = vmatpush1.msra.mxu0 0.0
      %9411 = vmatprep.subr.mxu0 0.0
      %9412 = vmatpush1.msra.mxu0 0.0
      %9413 = vmatprep.subr.mxu0 0.0
      %9414 = vmatpush1.msra.mxu0 0.0
      %9415 = vmatprep.subr.mxu0 0.0
      %9416 = vmatpush1.msra.mxu0 0.0
      %9417 = vmatprep.subr.mxu0 0.0
      %9418 = vmatpush1.msra.mxu0 0.0
      %9419 = vmatprep.subr.mxu0 0.0
      %9420 = vmatpush1.msra.mxu0 0.0
      %9421 = vmatprep.subr.mxu0 0.0
      %9422 = vmatpush1.msra.mxu0 0.0
      %9423 = vmatprep.subr.mxu0 0.0
      %9424 = vmatpush1.msra.mxu0 0.0
      %9425 = vmatprep.subr.mxu0 0.0
      %9426 = vmatpush1.msra.mxu0 0.0
      %9427 = vmatprep.subr.mxu0 0.0
      %9428 = vmatpush1.msra.mxu0 0.0
      %9429 = vmatprep.subr.mxu0 0.0
      %9430 = vmatpush1.msra.mxu0 0.0
      %9431 = vmatprep.subr.mxu0 0.0
      %9432 = vmatpush1.msra.mxu0 0.0
      %9433 = vmatprep.subr.mxu0 0.0
      %9434 = vmatpush1.msra.mxu0 0.0
      %9435 = vmatprep.subr.mxu0 0.0
      %9436 = vmatpush1.msra.mxu0 0.0
      %9437 = vmatprep.subr.mxu0 0.0
      %9438 = vmatpush1.msra.mxu0 0.0
      %9439 = vmatprep.subr.mxu0 0.0
      %9440 = vmatpush1.msra.mxu0 0.0
      %9441 = vmatprep.subr.mxu0 0.0
      %9442 = vmatpush1.msra.mxu0 0.0
      %9443 = vmatprep.subr.mxu0 0.0
      %9444 = vmatpush1.msra.mxu0 0.0
      %9445 = vmatprep.subr.mxu0 0.0
      %9446 = vmatpush1.msra.mxu0 0.0
      %9447 = vmatprep.subr.mxu0 0.0
      %9448 = vmatpush1.msra.mxu0 0.0
      %9449 = vmatprep.subr.mxu0 0.0
      %9450 = vmatpush1.msra.mxu0 0.0
      %9451 = vmatprep.subr.mxu0 0.0
      %9452 = vmatpush1.msra.mxu0 0.0
      %9453 = vmatprep.subr.mxu0 0.0
      %9454 = vmatpush1.msra.mxu0 0.0
      %9455 = vmatprep.subr.mxu0 0.0
      %9456 = vmatpush1.msra.mxu0 0.0
      %9457 = vmatprep.subr.mxu0 0.0
      %9458 = vmatpush1.msra.mxu0 0.0
      %9459 = vmatprep.subr.mxu0 0.0
      %9460 = vmatpush1.msra.mxu0 0.0
      %9461 = vmatprep.subr.mxu0 0.0
      %9462 = vmatpush1.msra.mxu0 0.0
      %9463 = vmatprep.subr.mxu0 0.0
      %9464 = vmatpush1.msra.mxu0 0.0
      %9465 = vmatprep.mubr.f32.mxu0 0.0
      %9466 = vmatmul.mubr.f32.gmra.mrb[0].mxu0 %v9301
      %v9467 = vpop.f32.mrb[0].mxu0
      %v9468 = vadd.f32 %v9206, %v9467
      %v9469 = vpop.f32.mrb[0].mxu0
      %v9470 = vadd.f32 %v9208, %v9469
      %9471 = vmatprep.mubr.f32.mxu0 0.0
      %9472 = vmatmul.mubr.f32.gmra.mrb[0].mxu0 %v9304
      %v9473 = vpop.f32.mrb[0].mxu0
      %v9474 = vadd.f32 %v9212, %v9473
      %v9475 = vpop.f32.mrb[0].mxu0
      %v9476 = vadd.f32 %v9214, %v9475
      %9477 = vmatprep.mubr.f32.mxu0 0.0
      %9478 = vmatmul.mubr.f32.gmra.mrb[0].mxu0 %v9307
      %v9479 = vpop.f32.mrb[0].mxu0
      %v9480 = vadd.f32 %v9218, %v9479
      %v9481 = vpop.f32.mrb[0].mxu0
      %v9482 = vadd.f32 %v9220, %v9481
      %9483 = vmatprep.mubr.f32.mxu0 0.0
      %9484 = vmatmul.mubr.f32.gmra.mrb[0].mxu0 %v9310
      %v9485 = vpop.f32.mrb[0].mxu0
      %v9486 = vadd.f32 %v9224, %v9485
      %v9487 = vpop.f32.mrb[0].mxu0
      %v9488 = vadd.f32 %v9226, %v9487
      %9489 = vdwg.mxu0
      %s9490 = scalar_lea.vmem %s3, 64
      %v9491 = vld [vmem:[%s9490] sm:$0xff]
      %v9492 = vld [vmem:[%s9490 + $0x8] sm:$0xff]
      %v9493 = vld [vmem:[%s9490 + $0x10] sm:$0xff]
      %v9494 = vld [vmem:[%s9490 + $0x18] sm:$0xff]
      %9495 = vrot.lane.b32.xlu0 %v8921, 19
      %v9496 = vpop.permute.xlu0 %9495
      %9497 = vrot.lane.b32.xlu0 %v8922, 19
      %v9498 = vpop.permute.xlu0 %9497
      %9499 = vrot.lane.b32.xlu0 %v8923, 19
      %v9500 = vpop.permute.xlu0 %9499
      %9501 = vrot.lane.b32.xlu0 %v8924, 19
      %v9502 = vpop.permute.xlu0 %9501
      %9503 = vrot.lane.b32.xlu0 %v8925, 19
      %v9504 = vpop.permute.xlu0 %9503
      %9505 = vrot.lane.b32.xlu0 %v8926, 19
      %v9506 = vpop.permute.xlu0 %9505
      %9507 = vrot.lane.b32.xlu0 %v8927, 19
      %v9508 = vpop.permute.xlu0 %9507
      %9509 = vrot.lane.b32.xlu0 %v8928, 19
      %v9510 = vpop.permute.xlu0 %9509
      %9511 = vrot.lane.b32.xlu0 %v8929, 19
      %v9512 = vpop.permute.xlu0 %9511
      %9513 = vrot.lane.b32.xlu0 %v8930, 19
      %v9514 = vpop.permute.xlu0 %9513
      %9515 = vrot.lane.b32.xlu0 %v8931, 19
      %v9516 = vpop.permute.xlu0 %9515
      %9517 = vrot.lane.b32.xlu0 %v8932, 19
      %v9518 = vpop.permute.xlu0 %9517
      %9519 = vrot.lane.b32.xlu0 %v8933, 19
      %v9520 = vpop.permute.xlu0 %9519
      %9521 = vrot.lane.b32.xlu0 %v8934, 19
      %v9522 = vpop.permute.xlu0 %9521
      %9523 = vrot.lane.b32.xlu0 %v8935, 19
      %v9524 = vpop.permute.xlu0 %9523
      %9525 = vrot.lane.b32.xlu0 %v8936, 19
      %v9526 = vpop.permute.xlu0 %9525
      %9527 = vrot.lane.b32.xlu0 %v8937, 19
      %v9528 = vpop.permute.xlu0 %9527
      %9529 = vrot.lane.b32.xlu0 %v8938, 19
      %v9530 = vpop.permute.xlu0 %9529
      %9531 = vrot.lane.b32.xlu0 %v8939, 19
      %v9532 = vpop.permute.xlu0 %9531
      %9533 = vrot.lane.b32.xlu0 %v8940, 19
      %v9534 = vpop.permute.xlu0 %9533
      %v9535 = vsel %vm2139, %v9496, %v9498
      %v9536 = vsel %vm2139, %v9498, %v9500
      %v9537 = vsel %vm2139, %v9500, %v9502
      %v9538 = vsel %vm2139, %v9502, %v9504
      %v9539 = vsel %vm2139, %v9506, %v9508
      %v9540 = vsel %vm2139, %v9508, %v9510
      %v9541 = vsel %vm2139, %v9510, %v9512
      %v9542 = vsel %vm2139, %v9512, %v9514
      %v9543 = vsel %vm2139, %v9516, %v9518
      %v9544 = vsel %vm2139, %v9518, %v9520
      %v9545 = vsel %vm2139, %v9520, %v9522
      %v9546 = vsel %vm2139, %v9522, %v9524
      %v9547 = vsel %vm2139, %v9526, %v9528
      %v9548 = vsel %vm2139, %v9528, %v9530
      %v9549 = vsel %vm2139, %v9530, %v9532
      %v9550 = vsel %vm2139, %v9532, %v9534
      %v9568 = vsel %vm6330, %v9491, 0
      %v9571 = vsel %vm6330, %v9492, 0
      %v9574 = vsel %vm6330, %v9493, 0
      %v9577 = vsel %vm6330, %v9494, 0
      %9579 = vmatprep.subr.mxu0 %v9536
      %9580 = vmatpush1.msra.mxu0 %v9535
      %9581 = vmatprep.subr.mxu0 %v9540
      %9582 = vmatpush1.msra.mxu0 %v9539
      %9583 = vmatprep.subr.mxu0 %v9544
      %9584 = vmatpush1.msra.mxu0 %v9543
      %9585 = vmatprep.subr.mxu0 %v9548
      %9586 = vmatpush1.msra.mxu0 %v9547
      %9587 = vmatprep.subr.mxu0 0.0
      %9588 = vmatpush1.msra.mxu0 0.0
      %9589 = vmatprep.subr.mxu0 0.0
      %9590 = vmatpush1.msra.mxu0 0.0
      %9591 = vmatprep.subr.mxu0 0.0
      %9592 = vmatpush1.msra.mxu0 0.0
      %9593 = vmatprep.subr.mxu0 0.0
      %9594 = vmatpush1.msra.mxu0 0.0
      %9595 = vmatprep.subr.mxu0 0.0
      %9596 = vmatpush1.msra.mxu0 0.0
      %9597 = vmatprep.subr.mxu0 0.0
      %9598 = vmatpush1.msra.mxu0 0.0
      %9599 = vmatprep.subr.mxu0 0.0
      %9600 = vmatpush1.msra.mxu0 0.0
      %9601 = vmatprep.subr.mxu0 0.0
      %9602 = vmatpush1.msra.mxu0 0.0
      %9603 = vmatprep.subr.mxu0 0.0
      %9604 = vmatpush1.msra.mxu0 0.0
      %9605 = vmatprep.subr.mxu0 0.0
      %9606 = vmatpush1.msra.mxu0 0.0
      %9607 = vmatprep.subr.mxu0 0.0
      %9608 = vmatpush1.msra.mxu0 0.0
      %9609 = vmatprep.subr.mxu0 0.0
      %9610 = vmatpush1.msra.mxu0 0.0
      %9611 = vmatprep.subr.mxu0 0.0
      %9612 = vmatpush1.msra.mxu0 0.0
      %9613 = vmatprep.subr.mxu0 0.0
      %9614 = vmatpush1.msra.mxu0 0.0
      %9615 = vmatprep.subr.mxu0 0.0
      %9616 = vmatpush1.msra.mxu0 0.0
      %9617 = vmatprep.subr.mxu0 0.0
      %9618 = vmatpush1.msra.mxu0 0.0
      %9619 = vmatprep.subr.mxu0 0.0
      %9620 = vmatpush1.msra.mxu0 0.0
      %9621 = vmatprep.subr.mxu0 0.0
      %9622 = vmatpush1.msra.mxu0 0.0
      %9623 = vmatprep.subr.mxu0 0.0
      %9624 = vmatpush1.msra.mxu0 0.0
      %9625 = vmatprep.subr.mxu0 0.0
      %9626 = vmatpush1.msra.mxu0 0.0
      %9627 = vmatprep.subr.mxu0 0.0
      %9628 = vmatpush1.msra.mxu0 0.0
      %9629 = vmatprep.subr.mxu0 0.0
      %9630 = vmatpush1.msra.mxu0 0.0
      %9631 = vmatprep.subr.mxu0 0.0
      %9632 = vmatpush1.msra.mxu0 0.0
      %9633 = vmatprep.subr.mxu0 0.0
      %9634 = vmatpush1.msra.mxu0 0.0
      %9635 = vmatprep.subr.mxu0 0.0
      %9636 = vmatpush1.msra.mxu0 0.0
      %9637 = vmatprep.subr.mxu0 0.0
      %9638 = vmatpush1.msra.mxu0 0.0
      %9639 = vmatprep.subr.mxu0 0.0
      %9640 = vmatpush1.msra.mxu0 0.0
      %9641 = vmatprep.subr.mxu0 0.0
      %9642 = vmatpush1.msra.mxu0 0.0
      %9643 = vmatprep.mubr.f32.mxu0 0.0
      %9644 = vmatmul.mubr.f32.gmra.mrb[0].mxu0 %v9568
      %v9645 = vpop.f32.mrb[0].mxu0
      %v9646 = vadd.f32 0.0, %v9645
      %v9647 = vpop.f32.mrb[0].mxu0
      %v9648 = vadd.f32 0.0, %v9647
      %9649 = vmatprep.mubr.f32.mxu0 0.0
      %9650 = vmatmul.mubr.f32.gmra.mrb[0].mxu0 %v9571
      %v9651 = vpop.f32.mrb[0].mxu0
      %v9652 = vadd.f32 0.0, %v9651
      %v9653 = vpop.f32.mrb[0].mxu0
      %v9654 = vadd.f32 0.0, %v9653
      %9655 = vmatprep.mubr.f32.mxu0 0.0
      %9656 = vmatmul.mubr.f32.gmra.mrb[0].mxu0 %v9574
      %v9657 = vpop.f32.mrb[0].mxu0
      %v9658 = vadd.f32 0.0, %v9657
      %v9659 = vpop.f32.mrb[0].mxu0
      %v9660 = vadd.f32 0.0, %v9659
      %9661 = vmatprep.mubr.f32.mxu0 0.0
      %9662 = vmatmul.mubr.f32.gmra.mrb[0].mxu0 %v9577
      %v9663 = vpop.f32.mrb[0].mxu0
      %v9664 = vadd.f32 0.0, %v9663
      %v9665 = vpop.f32.mrb[0].mxu0
      %v9666 = vadd.f32 0.0, %v9665
      %9667 = vdwg.mxu0
      %9668 = vmatprep.subr.mxu0 %v9538
      %9669 = vmatpush1.msra.mxu0 %v9537
      %9670 = vmatprep.subr.mxu0 %v9542
      %9671 = vmatpush1.msra.mxu0 %v9541
      %9672 = vmatprep.subr.mxu0 %v9546
      %9673 = vmatpush1.msra.mxu0 %v9545
      %9674 = vmatprep.subr.mxu0 %v9550
      %9675 = vmatpush1.msra.mxu0 %v9549
      %9676 = vmatprep.subr.mxu0 0.0
      %9677 = vmatpush1.msra.mxu0 0.0
      %9678 = vmatprep.subr.mxu0 0.0
      %9679 = vmatpush1.msra.mxu0 0.0
      %9680 = vmatprep.subr.mxu0 0.0
      %9681 = vmatpush1.msra.mxu0 0.0
      %9682 = vmatprep.subr.mxu0 0.0
      %9683 = vmatpush1.msra.mxu0 0.0
      %9684 = vmatprep.subr.mxu0 0.0
      %9685 = vmatpush1.msra.mxu0 0.0
      %9686 = vmatprep.subr.mxu0 0.0
      %9687 = vmatpush1.msra.mxu0 0.0
      %9688 = vmatprep.subr.mxu0 0.0
      %9689 = vmatpush1.msra.mxu0 0.0
      %9690 = vmatprep.subr.mxu0 0.0
      %9691 = vmatpush1.msra.mxu0 0.0
      %9692 = vmatprep.subr.mxu0 0.0
      %9693 = vmatpush1.msra.mxu0 0.0
      %9694 = vmatprep.subr.mxu0 0.0
      %9695 = vmatpush1.msra.mxu0 0.0
      %9696 = vmatprep.subr.mxu0 0.0
      %9697 = vmatpush1.msra.mxu0 0.0
      %9698 = vmatprep.subr.mxu0 0.0
      %9699 = vmatpush1.msra.mxu0 0.0
      %9700 = vmatprep.subr.mxu0 0.0
      %9701 = vmatpush1.msra.mxu0 0.0
      %9702 = vmatprep.subr.mxu0 0.0
      %9703 = vmatpush1.msra.mxu0 0.0
      %9704 = vmatprep.subr.mxu0 0.0
      %9705 = vmatpush1.msra.mxu0 0.0
      %9706 = vmatprep.subr.mxu0 0.0
      %9707 = vmatpush1.msra.mxu0 0.0
      %9708 = vmatprep.subr.mxu0 0.0
      %9709 = vmatpush1.msra.mxu0 0.0
      %9710 = vmatprep.subr.mxu0 0.0
      %9711 = vmatpush1.msra.mxu0 0.0
      %9712 = vmatprep.subr.mxu0 0.0
      %9713 = vmatpush1.msra.mxu0 0.0
      %9714 = vmatprep.subr.mxu0 0.0
      %9715 = vmatpush1.msra.mxu0 0.0
      %9716 = vmatprep.subr.mxu0 0.0
      %9717 = vmatpush1.msra.mxu0 0.0
      %9718 = vmatprep.subr.mxu0 0.0
      %9719 = vmatpush1.msra.mxu0 0.0
      %9720 = vmatprep.subr.mxu0 0.0
      %9721 = vmatpush1.msra.mxu0 0.0
      %9722 = vmatprep.subr.mxu0 0.0
      %9723 = vmatpush1.msra.mxu0 0.0
      %9724 = vmatprep.subr.mxu0 0.0
      %9725 = vmatpush1.msra.mxu0 0.0
      %9726 = vmatprep.subr.mxu0 0.0
      %9727 = vmatpush1.msra.mxu0 0.0
      %9728 = vmatprep.subr.mxu0 0.0
      %9729 = vmatpush1.msra.mxu0 0.0
      %9730 = vmatprep.subr.mxu0 0.0
      %9731 = vmatpush1.msra.mxu0 0.0
      %9732 = vmatprep.mubr.f32.mxu0 0.0
      %9733 = vmatmul.mubr.f32.gmra.mrb[0].mxu0 %v9568
      %v9734 = vpop.f32.mrb[0].mxu0
      %v9735 = vadd.f32 0.0, %v9734
      %v9736 = vpop.f32.mrb[0].mxu0
      %v9737 = vadd.f32 0.0, %v9736
      %9738 = vmatprep.mubr.f32.mxu0 0.0
      %9739 = vmatmul.mubr.f32.gmra.mrb[0].mxu0 %v9571
      %v9740 = vpop.f32.mrb[0].mxu0
      %v9741 = vadd.f32 0.0, %v9740
      %v9742 = vpop.f32.mrb[0].mxu0
      %v9743 = vadd.f32 0.0, %v9742
      %9744 = vmatprep.mubr.f32.mxu0 0.0
      %9745 = vmatmul.mubr.f32.gmra.mrb[0].mxu0 %v9574
      %v9746 = vpop.f32.mrb[0].mxu0
      %v9747 = vadd.f32 0.0, %v9746
      %v9748 = vpop.f32.mrb[0].mxu0
      %v9749 = vadd.f32 0.0, %v9748
      %9750 = vmatprep.mubr.f32.mxu0 0.0
      %9751 = vmatmul.mubr.f32.gmra.mrb[0].mxu0 %v9577
      %v9752 = vpop.f32.mrb[0].mxu0
      %v9753 = vadd.f32 0.0, %v9752
      %v9754 = vpop.f32.mrb[0].mxu0
      %v9755 = vadd.f32 0.0, %v9754
      %9756 = vdwg.mxu0
      %v9757 = vadd.f32 %v9379, %v9646
      %v9758 = vadd.f32 %v9381, %v9648
      %v9759 = vadd.f32 %v9468, %v9735
      %v9760 = vadd.f32 %v9470, %v9737
      %v9761 = vadd.f32 %v9385, %v9652
      %v9762 = vadd.f32 %v9387, %v9654
      %v9763 = vadd.f32 %v9474, %v9741
      %v9764 = vadd.f32 %v9476, %v9743
      %v9765 = vadd.f32 %v9391, %v9658
      %v9766 = vadd.f32 %v9393, %v9660
      %v9767 = vadd.f32 %v9480, %v9747
      %v9768 = vadd.f32 %v9482, %v9749
      %v9769 = vadd.f32 %v9397, %v9664
      %v9770 = vadd.f32 %v9399, %v9666
      %v9771 = vadd.f32 %v9486, %v9753
      %v9772 = vadd.f32 %v9488, %v9755
      %s9773 = scalar_lea.vmem %s3, 96
      %v9774 = vld [vmem:[%s9773] sm:$0xff]
      %v9775 = vld [vmem:[%s9773 + $0x8] sm:$0xff]
      %v9776 = vld [vmem:[%s9773 + $0x10] sm:$0xff]
      %v9777 = vld [vmem:[%s9773 + $0x18] sm:$0xff]
      %9778 = vrot.lane.b32.xlu0 %v8921, 1
      %v9779 = vpop.permute.xlu0 %9778
      %9780 = vrot.lane.b32.xlu0 %v8922, 1
      %v9781 = vpop.permute.xlu0 %9780
      %9782 = vrot.lane.b32.xlu0 %v8923, 1
      %v9783 = vpop.permute.xlu0 %9782
      %9784 = vrot.lane.b32.xlu0 %v8924, 1
      %v9785 = vpop.permute.xlu0 %9784
      %9786 = vrot.lane.b32.xlu0 %v8925, 1
      %v9787 = vpop.permute.xlu0 %9786
      %9788 = vrot.lane.b32.xlu0 %v8926, 1
      %v9789 = vpop.permute.xlu0 %9788
      %9790 = vrot.lane.b32.xlu0 %v8927, 1
      %v9791 = vpop.permute.xlu0 %9790
      %9792 = vrot.lane.b32.xlu0 %v8928, 1
      %v9793 = vpop.permute.xlu0 %9792
      %9794 = vrot.lane.b32.xlu0 %v8929, 1
      %v9795 = vpop.permute.xlu0 %9794
      %9796 = vrot.lane.b32.xlu0 %v8930, 1
      %v9797 = vpop.permute.xlu0 %9796
      %9798 = vrot.lane.b32.xlu0 %v8931, 1
      %v9799 = vpop.permute.xlu0 %9798
      %9800 = vrot.lane.b32.xlu0 %v8932, 1
      %v9801 = vpop.permute.xlu0 %9800
      %9802 = vrot.lane.b32.xlu0 %v8933, 1
      %v9803 = vpop.permute.xlu0 %9802
      %9804 = vrot.lane.b32.xlu0 %v8934, 1
      %v9805 = vpop.permute.xlu0 %9804
      %9806 = vrot.lane.b32.xlu0 %v8935, 1
      %v9807 = vpop.permute.xlu0 %9806
      %9808 = vrot.lane.b32.xlu0 %v8936, 1
      %v9809 = vpop.permute.xlu0 %9808
      %9810 = vrot.lane.b32.xlu0 %v8937, 1
      %v9811 = vpop.permute.xlu0 %9810
      %9812 = vrot.lane.b32.xlu0 %v8938, 1
      %v9813 = vpop.permute.xlu0 %9812
      %9814 = vrot.lane.b32.xlu0 %v8939, 1
      %v9815 = vpop.permute.xlu0 %9814
      %9816 = vrot.lane.b32.xlu0 %v8940, 1
      %v9817 = vpop.permute.xlu0 %9816
      %v9818 = vsel %vm2829, %v9779, %v9781
      %v9819 = vsel %vm2829, %v9781, %v9783
      %v9820 = vsel %vm2829, %v9783, %v9785
      %v9821 = vsel %vm2829, %v9785, %v9787
      %v9822 = vsel %vm2829, %v9789, %v9791
      %v9823 = vsel %vm2829, %v9791, %v9793
      %v9824 = vsel %vm2829, %v9793, %v9795
      %v9825 = vsel %vm2829, %v9795, %v9797
      %v9826 = vsel %vm2829, %v9799, %v9801
      %v9827 = vsel %vm2829, %v9801, %v9803
      %v9828 = vsel %vm2829, %v9803, %v9805
      %v9829 = vsel %vm2829, %v9805, %v9807
      %v9830 = vsel %vm2829, %v9809, %v9811
      %v9831 = vsel %vm2829, %v9811, %v9813
      %v9832 = vsel %vm2829, %v9813, %v9815
      %v9833 = vsel %vm2829, %v9815, %v9817
      %v9851 = vsel %vm6330, %v9774, 0
      %v9854 = vsel %vm6330, %v9775, 0
      %v9857 = vsel %vm6330, %v9776, 0
      %v9860 = vsel %vm6330, %v9777, 0
      %9862 = vmatprep.subr.mxu0 %v9819
      %9863 = vmatpush1.msra.mxu0 %v9818
      %9864 = vmatprep.subr.mxu0 %v9823
      %9865 = vmatpush1.msra.mxu0 %v9822
      %9866 = vmatprep.subr.mxu0 %v9827
      %9867 = vmatpush1.msra.mxu0 %v9826
      %9868 = vmatprep.subr.mxu0 %v9831
      %9869 = vmatpush1.msra.mxu0 %v9830
      %9870 = vmatprep.subr.mxu0 0.0
      %9871 = vmatpush1.msra.mxu0 0.0
      %9872 = vmatprep.subr.mxu0 0.0
      %9873 = vmatpush1.msra.mxu0 0.0
      %9874 = vmatprep.subr.mxu0 0.0
      %9875 = vmatpush1.msra.mxu0 0.0
      %9876 = vmatprep.subr.mxu0 0.0
      %9877 = vmatpush1.msra.mxu0 0.0
      %9878 = vmatprep.subr.mxu0 0.0
      %9879 = vmatpush1.msra.mxu0 0.0
      %9880 = vmatprep.subr.mxu0 0.0
      %9881 = vmatpush1.msra.mxu0 0.0
      %9882 = vmatprep.subr.mxu0 0.0
      %9883 = vmatpush1.msra.mxu0 0.0
      %9884 = vmatprep.subr.mxu0 0.0
      %9885 = vmatpush1.msra.mxu0 0.0
      %9886 = vmatprep.subr.mxu0 0.0
      %9887 = vmatpush1.msra.mxu0 0.0
      %9888 = vmatprep.subr.mxu0 0.0
      %9889 = vmatpush1.msra.mxu0 0.0
      %9890 = vmatprep.subr.mxu0 0.0
      %9891 = vmatpush1.msra.mxu0 0.0
      %9892 = vmatprep.subr.mxu0 0.0
      %9893 = vmatpush1.msra.mxu0 0.0
      %9894 = vmatprep.subr.mxu0 0.0
      %9895 = vmatpush1.msra.mxu0 0.0
      %9896 = vmatprep.subr.mxu0 0.0
      %9897 = vmatpush1.msra.mxu0 0.0
      %9898 = vmatprep.subr.mxu0 0.0
      %9899 = vmatpush1.msra.mxu0 0.0
      %9900 = vmatprep.subr.mxu0 0.0
      %9901 = vmatpush1.msra.mxu0 0.0
      %9902 = vmatprep.subr.mxu0 0.0
      %9903 = vmatpush1.msra.mxu0 0.0
      %9904 = vmatprep.subr.mxu0 0.0
      %9905 = vmatpush1.msra.mxu0 0.0
      %9906 = vmatprep.subr.mxu0 0.0
      %9907 = vmatpush1.msra.mxu0 0.0
      %9908 = vmatprep.subr.mxu0 0.0
      %9909 = vmatpush1.msra.mxu0 0.0
      %9910 = vmatprep.subr.mxu0 0.0
      %9911 = vmatpush1.msra.mxu0 0.0
      %9912 = vmatprep.subr.mxu0 0.0
      %9913 = vmatpush1.msra.mxu0 0.0
      %9914 = vmatprep.subr.mxu0 0.0
      %9915 = vmatpush1.msra.mxu0 0.0
      %9916 = vmatprep.subr.mxu0 0.0
      %9917 = vmatpush1.msra.mxu0 0.0
      %9918 = vmatprep.subr.mxu0 0.0
      %9919 = vmatpush1.msra.mxu0 0.0
      %9920 = vmatprep.subr.mxu0 0.0
      %9921 = vmatpush1.msra.mxu0 0.0
      %9922 = vmatprep.subr.mxu0 0.0
      %9923 = vmatpush1.msra.mxu0 0.0
      %9924 = vmatprep.subr.mxu0 0.0
      %9925 = vmatpush1.msra.mxu0 0.0
      %9926 = vmatprep.mubr.f32.mxu0 0.0
      %9927 = vmatmul.mubr.f32.gmra.mrb[0].mxu0 %v9851
      %v9928 = vpop.f32.mrb[0].mxu0
      %v9929 = vadd.f32 0.0, %v9928
      %v9930 = vpop.f32.mrb[0].mxu0
      %v9931 = vadd.f32 0.0, %v9930
      %9932 = vmatprep.mubr.f32.mxu0 0.0
      %9933 = vmatmul.mubr.f32.gmra.mrb[0].mxu0 %v9854
      %v9934 = vpop.f32.mrb[0].mxu0
      %v9935 = vadd.f32 0.0, %v9934
      %v9936 = vpop.f32.mrb[0].mxu0
      %v9937 = vadd.f32 0.0, %v9936
      %9938 = vmatprep.mubr.f32.mxu0 0.0
      %9939 = vmatmul.mubr.f32.gmra.mrb[0].mxu0 %v9857
      %v9940 = vpop.f32.mrb[0].mxu0
      %v9941 = vadd.f32 0.0, %v9940
      %v9942 = vpop.f32.mrb[0].mxu0
      %v9943 = vadd.f32 0.0, %v9942
      %9944 = vmatprep.mubr.f32.mxu0 0.0
      %9945 = vmatmul.mubr.f32.gmra.mrb[0].mxu0 %v9860
      %v9946 = vpop.f32.mrb[0].mxu0
      %v9947 = vadd.f32 0.0, %v9946
      %v9948 = vpop.f32.mrb[0].mxu0
      %v9949 = vadd.f32 0.0, %v9948
      %9950 = vdwg.mxu0
      %9951 = vmatprep.subr.mxu0 %v9821
      %9952 = vmatpush1.msra.mxu0 %v9820
      %9953 = vmatprep.subr.mxu0 %v9825
      %9954 = vmatpush1.msra.mxu0 %v9824
      %9955 = vmatprep.subr.mxu0 %v9829
      %9956 = vmatpush1.msra.mxu0 %v9828
      %9957 = vmatprep.subr.mxu0 %v9833
      %9958 = vmatpush1.msra.mxu0 %v9832
      %9959 = vmatprep.subr.mxu0 0.0
      %9960 = vmatpush1.msra.mxu0 0.0
      %9961 = vmatprep.subr.mxu0 0.0
      %9962 = vmatpush1.msra.mxu0 0.0
      %9963 = vmatprep.subr.mxu0 0.0
      %9964 = vmatpush1.msra.mxu0 0.0
      %9965 = vmatprep.subr.mxu0 0.0
      %9966 = vmatpush1.msra.mxu0 0.0
      %9967 = vmatprep.subr.mxu0 0.0
      %9968 = vmatpush1.msra.mxu0 0.0
      %9969 = vmatprep.subr.mxu0 0.0
      %9970 = vmatpush1.msra.mxu0 0.0
      %9971 = vmatprep.subr.mxu0 0.0
      %9972 = vmatpush1.msra.mxu0 0.0
      %9973 = vmatprep.subr.mxu0 0.0
      %9974 = vmatpush1.msra.mxu0 0.0
      %9975 = vmatprep.subr.mxu0 0.0
      %9976 = vmatpush1.msra.mxu0 0.0
      %9977 = vmatprep.subr.mxu0 0.0
      %9978 = vmatpush1.msra.mxu0 0.0
      %9979 = vmatprep.subr.mxu0 0.0
      %9980 = vmatpush1.msra.mxu0 0.0
      %9981 = vmatprep.subr.mxu0 0.0
      %9982 = vmatpush1.msra.mxu0 0.0
      %9983 = vmatprep.subr.mxu0 0.0
      %9984 = vmatpush1.msra.mxu0 0.0
      %9985 = vmatprep.subr.mxu0 0.0
      %9986 = vmatpush1.msra.mxu0 0.0
      %9987 = vmatprep.subr.mxu0 0.0
      %9988 = vmatpush1.msra.mxu0 0.0
      %9989 = vmatprep.subr.mxu0 0.0
      %9990 = vmatpush1.msra.mxu0 0.0
      %9991 = vmatprep.subr.mxu0 0.0
      %9992 = vmatpush1.msra.mxu0 0.0
      %9993 = vmatprep.subr.mxu0 0.0
      %9994 = vmatpush1.msra.mxu0 0.0
      %9995 = vmatprep.subr.mxu0 0.0
      %9996 = vmatpush1.msra.mxu0 0.0
      %9997 = vmatprep.subr.mxu0 0.0
      %9998 = vmatpush1.msra.mxu0 0.0
      %9999 = vmatprep.subr.mxu0 0.0
      %10000 = vmatpush1.msra.mxu0 0.0
      %10001 = vmatprep.subr.mxu0 0.0
      %10002 = vmatpush1.msra.mxu0 0.0
      %10003 = vmatprep.subr.mxu0 0.0
      %10004 = vmatpush1.msra.mxu0 0.0
      %10005 = vmatprep.subr.mxu0 0.0
      %10006 = vmatpush1.msra.mxu0 0.0
      %10007 = vmatprep.subr.mxu0 0.0
      %10008 = vmatpush1.msra.mxu0 0.0
      %10009 = vmatprep.subr.mxu0 0.0
      %10010 = vmatpush1.msra.mxu0 0.0
      %10011 = vmatprep.subr.mxu0 0.0
      %10012 = vmatpush1.msra.mxu0 0.0
      %10013 = vmatprep.subr.mxu0 0.0
      %10014 = vmatpush1.msra.mxu0 0.0
      %10015 = vmatprep.mubr.f32.mxu0 0.0
      %10016 = vmatmul.mubr.f32.gmra.mrb[0].mxu0 %v9851
      %v10017 = vpop.f32.mrb[0].mxu0
      %v10018 = vadd.f32 0.0, %v10017
      %v10019 = vpop.f32.mrb[0].mxu0
      %v10020 = vadd.f32 0.0, %v10019
      %10021 = vmatprep.mubr.f32.mxu0 0.0
      %10022 = vmatmul.mubr.f32.gmra.mrb[0].mxu0 %v9854
      %v10023 = vpop.f32.mrb[0].mxu0
      %v10024 = vadd.f32 0.0, %v10023
      %v10025 = vpop.f32.mrb[0].mxu0
      %v10026 = vadd.f32 0.0, %v10025
      %10027 = vmatprep.mubr.f32.mxu0 0.0
      %10028 = vmatmul.mubr.f32.gmra.mrb[0].mxu0 %v9857
      %v10029 = vpop.f32.mrb[0].mxu0
      %v10030 = vadd.f32 0.0, %v10029
      %v10031 = vpop.f32.mrb[0].mxu0
      %v10032 = vadd.f32 0.0, %v10031
      %10033 = vmatprep.mubr.f32.mxu0 0.0
      %10034 = vmatmul.mubr.f32.gmra.mrb[0].mxu0 %v9860
      %v10035 = vpop.f32.mrb[0].mxu0
      %v10036 = vadd.f32 0.0, %v10035
      %v10037 = vpop.f32.mrb[0].mxu0
      %v10038 = vadd.f32 0.0, %v10037
      %10039 = vdwg.mxu0
      %v10040 = vadd.f32 %v9757, %v9929
      %v10041 = vadd.f32 %v9758, %v9931
      %v10042 = vadd.f32 %v9759, %v10018
      %v10043 = vadd.f32 %v9760, %v10020
      %v10044 = vadd.f32 %v9761, %v9935
      %v10045 = vadd.f32 %v9762, %v9937
      %v10046 = vadd.f32 %v9763, %v10024
      %v10047 = vadd.f32 %v9764, %v10026
      %v10048 = vadd.f32 %v9765, %v9941
      %v10049 = vadd.f32 %v9766, %v9943
      %v10050 = vadd.f32 %v9767, %v10030
      %v10051 = vadd.f32 %v9768, %v10032
      %v10052 = vadd.f32 %v9769, %v9947
      %v10053 = vadd.f32 %v9770, %v9949
      %v10054 = vadd.f32 %v9771, %v10036
      %v10055 = vadd.f32 %v9772, %v10038
      %s10056 = scalar_lea.vmem %s3, 128
      %v10057 = vld [vmem:[%s10056] sm:$0xff]
      %v10058 = vld [vmem:[%s10056 + $0x8] sm:$0xff]
      %v10059 = vld [vmem:[%s10056 + $0x10] sm:$0xff]
      %v10060 = vld [vmem:[%s10056 + $0x18] sm:$0xff]
      %v10062 = vsel %vm6330, %v10057, 0
      %v10065 = vsel %vm6330, %v10058, 0
      %v10068 = vsel %vm6330, %v10059, 0
      %v10071 = vsel %vm6330, %v10060, 0
      %10073 = vmatprep.subr.mxu0 %v8923
      %10074 = vmatpush1.msra.mxu0 %v8922
      %10075 = vmatprep.subr.mxu0 %v8928
      %10076 = vmatpush1.msra.mxu0 %v8927
      %10077 = vmatprep.subr.mxu0 %v8933
      %10078 = vmatpush1.msra.mxu0 %v8932
      %10079 = vmatprep.subr.mxu0 %v8938
      %10080 = vmatpush1.msra.mxu0 %v8937
      %10081 = vmatprep.subr.mxu0 0.0
      %10082 = vmatpush1.msra.mxu0 0.0
      %10083 = vmatprep.subr.mxu0 0.0
      %10084 = vmatpush1.msra.mxu0 0.0
      %10085 = vmatprep.subr.mxu0 0.0
      %10086 = vmatpush1.msra.mxu0 0.0
      %10087 = vmatprep.subr.mxu0 0.0
      %10088 = vmatpush1.msra.mxu0 0.0
      %10089 = vmatprep.subr.mxu0 0.0
      %10090 = vmatpush1.msra.mxu0 0.0
      %10091 = vmatprep.subr.mxu0 0.0
      %10092 = vmatpush1.msra.mxu0 0.0
      %10093 = vmatprep.subr.mxu0 0.0
      %10094 = vmatpush1.msra.mxu0 0.0
      %10095 = vmatprep.subr.mxu0 0.0
      %10096 = vmatpush1.msra.mxu0 0.0
      %10097 = vmatprep.subr.mxu0 0.0
      %10098 = vmatpush1.msra.mxu0 0.0
      %10099 = vmatprep.subr.mxu0 0.0
      %10100 = vmatpush1.msra.mxu0 0.0
      %10101 = vmatprep.subr.mxu0 0.0
      %10102 = vmatpush1.msra.mxu0 0.0
      %10103 = vmatprep.subr.mxu0 0.0
      %10104 = vmatpush1.msra.mxu0 0.0
      %10105 = vmatprep.subr.mxu0 0.0
      %10106 = vmatpush1.msra.mxu0 0.0
      %10107 = vmatprep.subr.mxu0 0.0
      %10108 = vmatpush1.msra.mxu0 0.0
      %10109 = vmatprep.subr.mxu0 0.0
      %10110 = vmatpush1.msra.mxu0 0.0
      %10111 = vmatprep.subr.mxu0 0.0
      %10112 = vmatpush1.msra.mxu0 0.0
      %10113 = vmatprep.subr.mxu0 0.0
      %10114 = vmatpush1.msra.mxu0 0.0
      %10115 = vmatprep.subr.mxu0 0.0
      %10116 = vmatpush1.msra.mxu0 0.0
      %10117 = vmatprep.subr.mxu0 0.0
      %10118 = vmatpush1.msra.mxu0 0.0
      %10119 = vmatprep.subr.mxu0 0.0
      %10120 = vmatpush1.msra.mxu0 0.0
      %10121 = vmatprep.subr.mxu0 0.0
      %10122 = vmatpush1.msra.mxu0 0.0
      %10123 = vmatprep.subr.mxu0 0.0
      %10124 = vmatpush1.msra.mxu0 0.0
      %10125 = vmatprep.subr.mxu0 0.0
      %10126 = vmatpush1.msra.mxu0 0.0
      %10127 = vmatprep.subr.mxu0 0.0
      %10128 = vmatpush1.msra.mxu0 0.0
      %10129 = vmatprep.subr.mxu0 0.0
      %10130 = vmatpush1.msra.mxu0 0.0
      %10131 = vmatprep.subr.mxu0 0.0
      %10132 = vmatpush1.msra.mxu0 0.0
      %10133 = vmatprep.subr.mxu0 0.0
      %10134 = vmatpush1.msra.mxu0 0.0
      %10135 = vmatprep.subr.mxu0 0.0
      %10136 = vmatpush1.msra.mxu0 0.0
      %10137 = vmatprep.mubr.f32.mxu0 0.0
      %10138 = vmatmul.mubr.f32.gmra.mrb[0].mxu0 %v10062
      %v10139 = vpop.f32.mrb[0].mxu0
      %v10140 = vadd.f32 0.0, %v10139
      %v10141 = vpop.f32.mrb[0].mxu0
      %v10142 = vadd.f32 0.0, %v10141
      %10143 = vmatprep.mubr.f32.mxu0 0.0
      %10144 = vmatmul.mubr.f32.gmra.mrb[0].mxu0 %v10065
      %v10145 = vpop.f32.mrb[0].mxu0
      %v10146 = vadd.f32 0.0, %v10145
      %v10147 = vpop.f32.mrb[0].mxu0
      %v10148 = vadd.f32 0.0, %v10147
      %10149 = vmatprep.mubr.f32.mxu0 0.0
      %10150 = vmatmul.mubr.f32.gmra.mrb[0].mxu0 %v10068
      %v10151 = vpop.f32.mrb[0].mxu0
      %v10152 = vadd.f32 0.0, %v10151
      %v10153 = vpop.f32.mrb[0].mxu0
      %v10154 = vadd.f32 0.0, %v10153
      %10155 = vmatprep.mubr.f32.mxu0 0.0
      %10156 = vmatmul.mubr.f32.gmra.mrb[0].mxu0 %v10071
      %v10157 = vpop.f32.mrb[0].mxu0
      %v10158 = vadd.f32 0.0, %v10157
      %v10159 = vpop.f32.mrb[0].mxu0
      %v10160 = vadd.f32 0.0, %v10159
      %10161 = vdwg.mxu0
      %10162 = vmatprep.subr.mxu0 %v8925
      %10163 = vmatpush1.msra.mxu0 %v8924
      %10164 = vmatprep.subr.mxu0 %v8930
      %10165 = vmatpush1.msra.mxu0 %v8929
      %10166 = vmatprep.subr.mxu0 %v8935
      %10167 = vmatpush1.msra.mxu0 %v8934
      %10168 = vmatprep.subr.mxu0 %v8940
      %10169 = vmatpush1.msra.mxu0 %v8939
      %10170 = vmatprep.subr.mxu0 0.0
      %10171 = vmatpush1.msra.mxu0 0.0
      %10172 = vmatprep.subr.mxu0 0.0
      %10173 = vmatpush1.msra.mxu0 0.0
      %10174 = vmatprep.subr.mxu0 0.0
      %10175 = vmatpush1.msra.mxu0 0.0
      %10176 = vmatprep.subr.mxu0 0.0
      %10177 = vmatpush1.msra.mxu0 0.0
      %10178 = vmatprep.subr.mxu0 0.0
      %10179 = vmatpush1.msra.mxu0 0.0
      %10180 = vmatprep.subr.mxu0 0.0
      %10181 = vmatpush1.msra.mxu0 0.0
      %10182 = vmatprep.subr.mxu0 0.0
      %10183 = vmatpush1.msra.mxu0 0.0
      %10184 = vmatprep.subr.mxu0 0.0
      %10185 = vmatpush1.msra.mxu0 0.0
      %10186 = vmatprep.subr.mxu0 0.0
      %10187 = vmatpush1.msra.mxu0 0.0
      %10188 = vmatprep.subr.mxu0 0.0
      %10189 = vmatpush1.msra.mxu0 0.0
      %10190 = vmatprep.subr.mxu0 0.0
      %10191 = vmatpush1.msra.mxu0 0.0
      %10192 = vmatprep.subr.mxu0 0.0
      %10193 = vmatpush1.msra.mxu0 0.0
      %10194 = vmatprep.subr.mxu0 0.0
      %10195 = vmatpush1.msra.mxu0 0.0
      %10196 = vmatprep.subr.mxu0 0.0
      %10197 = vmatpush1.msra.mxu0 0.0
      %10198 = vmatprep.subr.mxu0 0.0
      %10199 = vmatpush1.msra.mxu0 0.0
      %10200 = vmatprep.subr.mxu0 0.0
      %10201 = vmatpush1.msra.mxu0 0.0
      %10202 = vmatprep.subr.mxu0 0.0
      %10203 = vmatpush1.msra.mxu0 0.0
      %10204 = vmatprep.subr.mxu0 0.0
      %10205 = vmatpush1.msra.mxu0 0.0
      %10206 = vmatprep.subr.mxu0 0.0
      %10207 = vmatpush1.msra.mxu0 0.0
      %10208 = vmatprep.subr.mxu0 0.0
      %10209 = vmatpush1.msra.mxu0 0.0
      %10210 = vmatprep.subr.mxu0 0.0
      %10211 = vmatpush1.msra.mxu0 0.0
      %10212 = vmatprep.subr.mxu0 0.0
      %10213 = vmatpush1.msra.mxu0 0.0
      %10214 = vmatprep.subr.mxu0 0.0
      %10215 = vmatpush1.msra.mxu0 0.0
      %10216 = vmatprep.subr.mxu0 0.0
      %10217 = vmatpush1.msra.mxu0 0.0
      %10218 = vmatprep.subr.mxu0 0.0
      %10219 = vmatpush1.msra.mxu0 0.0
      %10220 = vmatprep.subr.mxu0 0.0
      %10221 = vmatpush1.msra.mxu0 0.0
      %10222 = vmatprep.subr.mxu0 0.0
      %10223 = vmatpush1.msra.mxu0 0.0
      %10224 = vmatprep.subr.mxu0 0.0
      %10225 = vmatpush1.msra.mxu0 0.0
      %10226 = vmatprep.mubr.f32.mxu0 0.0
      %10227 = vmatmul.mubr.f32.gmra.mrb[0].mxu0 %v10062
      %v10228 = vpop.f32.mrb[0].mxu0
      %v10229 = vadd.f32 0.0, %v10228
      %v10230 = vpop.f32.mrb[0].mxu0
      %v10231 = vadd.f32 0.0, %v10230
      %10232 = vmatprep.mubr.f32.mxu0 0.0
      %10233 = vmatmul.mubr.f32.gmra.mrb[0].mxu0 %v10065
      %v10234 = vpop.f32.mrb[0].mxu0
      %v10235 = vadd.f32 0.0, %v10234
      %v10236 = vpop.f32.mrb[0].mxu0
      %v10237 = vadd.f32 0.0, %v10236
      %10238 = vmatprep.mubr.f32.mxu0 0.0
      %10239 = vmatmul.mubr.f32.gmra.mrb[0].mxu0 %v10068
      %v10240 = vpop.f32.mrb[0].mxu0
      %v10241 = vadd.f32 0.0, %v10240
      %v10242 = vpop.f32.mrb[0].mxu0
      %v10243 = vadd.f32 0.0, %v10242
      %10244 = vmatprep.mubr.f32.mxu0 0.0
      %10245 = vmatmul.mubr.f32.gmra.mrb[0].mxu0 %v10071
      %v10246 = vpop.f32.mrb[0].mxu0
      %v10247 = vadd.f32 0.0, %v10246
      %v10248 = vpop.f32.mrb[0].mxu0
      %v10249 = vadd.f32 0.0, %v10248
      %10250 = vdwg.mxu0
      %v10251 = vadd.f32 %v10040, %v10140
      %v10252 = vadd.f32 %v10041, %v10142
      %v10253 = vadd.f32 %v10042, %v10229
      %v10254 = vadd.f32 %v10043, %v10231
      %v10255 = vadd.f32 %v10044, %v10146
      %v10256 = vadd.f32 %v10045, %v10148
      %v10257 = vadd.f32 %v10046, %v10235
      %v10258 = vadd.f32 %v10047, %v10237
      %v10259 = vadd.f32 %v10048, %v10152
      %v10260 = vadd.f32 %v10049, %v10154
      %v10261 = vadd.f32 %v10050, %v10241
      %v10262 = vadd.f32 %v10051, %v10243
      %v10263 = vadd.f32 %v10052, %v10158
      %v10264 = vadd.f32 %v10053, %v10160
      %v10265 = vadd.f32 %v10054, %v10247
      %v10266 = vadd.f32 %v10055, %v10249
      %s10267 = scalar_lea.vmem %s3, 160
      %v10268 = vld [vmem:[%s10267] sm:$0xff]
      %v10269 = vld [vmem:[%s10267 + $0x8] sm:$0xff]
      %v10270 = vld [vmem:[%s10267 + $0x10] sm:$0xff]
      %v10271 = vld [vmem:[%s10267 + $0x18] sm:$0xff]
      %v10272 = vld [vmem:[#allocation2 + $0x8] sm:$0xff]
      %v10273 = vld [vmem:[#allocation2 + $0x10] sm:$0xff]
      %v10274 = vld [vmem:[#allocation2 + $0x18] sm:$0xff]
      %v10275 = vld [vmem:[#allocation2 + $0x20] sm:$0xff]
      %v10276 = vld [vmem:[#allocation2 + $0x28] sm:$0xff]
      %v10277 = vld [vmem:[#allocation2 + $0x38] sm:$0xff]
      %v10278 = vld [vmem:[#allocation2 + $0x40] sm:$0xff]
      %v10279 = vld [vmem:[#allocation2 + $0x48] sm:$0xff]
      %v10280 = vld [vmem:[#allocation2 + $0x50] sm:$0xff]
      %v10281 = vld [vmem:[#allocation2 + $0x58] sm:$0xff]
      %v10282 = vld [vmem:[#allocation2 + $0x68] sm:$0xff]
      %v10283 = vld [vmem:[#allocation2 + $0x70] sm:$0xff]
      %v10284 = vld [vmem:[#allocation2 + $0x78] sm:$0xff]
      %v10285 = vld [vmem:[#allocation2 + $0x80] sm:$0xff]
      %v10286 = vld [vmem:[#allocation2 + $0x88] sm:$0xff]
      %v10287 = vld [vmem:[#allocation2 + $0x98] sm:$0xff]
      %v10288 = vld [vmem:[#allocation2 + $0xa0] sm:$0xff]
      %v10289 = vld [vmem:[#allocation2 + $0xa8] sm:$0xff]
      %v10290 = vld [vmem:[#allocation2 + $0xb0] sm:$0xff]
      %v10291 = vld [vmem:[#allocation2 + $0xb8] sm:$0xff]
      %10312 = vrot.lane.b32.xlu0 %v10272, 127
      %v10313 = vpop.permute.xlu0 %10312
      %10314 = vrot.lane.b32.xlu0 %v10273, 127
      %v10315 = vpop.permute.xlu0 %10314
      %10316 = vrot.lane.b32.xlu0 %v10274, 127
      %v10317 = vpop.permute.xlu0 %10316
      %10318 = vrot.lane.b32.xlu0 %v10275, 127
      %v10319 = vpop.permute.xlu0 %10318
      %10320 = vrot.lane.b32.xlu0 %v10276, 127
      %v10321 = vpop.permute.xlu0 %10320
      %10322 = vrot.lane.b32.xlu0 %v10277, 127
      %v10323 = vpop.permute.xlu0 %10322
      %10324 = vrot.lane.b32.xlu0 %v10278, 127
      %v10325 = vpop.permute.xlu0 %10324
      %10326 = vrot.lane.b32.xlu0 %v10279, 127
      %v10327 = vpop.permute.xlu0 %10326
      %10328 = vrot.lane.b32.xlu0 %v10280, 127
      %v10329 = vpop.permute.xlu0 %10328
      %10330 = vrot.lane.b32.xlu0 %v10281, 127
      %v10331 = vpop.permute.xlu0 %10330
      %10332 = vrot.lane.b32.xlu0 %v10282, 127
      %v10333 = vpop.permute.xlu0 %10332
      %10334 = vrot.lane.b32.xlu0 %v10283, 127
      %v10335 = vpop.permute.xlu0 %10334
      %10336 = vrot.lane.b32.xlu0 %v10284, 127
      %v10337 = vpop.permute.xlu0 %10336
      %10338 = vrot.lane.b32.xlu0 %v10285, 127
      %v10339 = vpop.permute.xlu0 %10338
      %10340 = vrot.lane.b32.xlu0 %v10286, 127
      %v10341 = vpop.permute.xlu0 %10340
      %10342 = vrot.lane.b32.xlu0 %v10287, 127
      %v10343 = vpop.permute.xlu0 %10342
      %10344 = vrot.lane.b32.xlu0 %v10288, 127
      %v10345 = vpop.permute.xlu0 %10344
      %10346 = vrot.lane.b32.xlu0 %v10289, 127
      %v10347 = vpop.permute.xlu0 %10346
      %10348 = vrot.lane.b32.xlu0 %v10290, 127
      %v10349 = vpop.permute.xlu0 %10348
      %10350 = vrot.lane.b32.xlu0 %v10291, 127
      %v10351 = vpop.permute.xlu0 %10350
      %v10352 = vsel %vm3280, %v10313, %v10315
      %v10353 = vsel %vm3280, %v10315, %v10317
      %v10354 = vsel %vm3280, %v10317, %v10319
      %v10355 = vsel %vm3280, %v10319, %v10321
      %v10356 = vsel %vm3280, %v10323, %v10325
      %v10357 = vsel %vm3280, %v10325, %v10327
      %v10358 = vsel %vm3280, %v10327, %v10329
      %v10359 = vsel %vm3280, %v10329, %v10331
      %v10360 = vsel %vm3280, %v10333, %v10335
      %v10361 = vsel %vm3280, %v10335, %v10337
      %v10362 = vsel %vm3280, %v10337, %v10339
      %v10363 = vsel %vm3280, %v10339, %v10341
      %v10364 = vsel %vm3280, %v10343, %v10345
      %v10365 = vsel %vm3280, %v10345, %v10347
      %v10366 = vsel %vm3280, %v10347, %v10349
      %v10367 = vsel %vm3280, %v10349, %v10351
      %v10385 = vsel %vm6330, %v10268, 0
      %v10388 = vsel %vm6330, %v10269, 0
      %v10391 = vsel %vm6330, %v10270, 0
      %v10394 = vsel %vm6330, %v10271, 0
      %10396 = vmatprep.subr.mxu0 %v10353
      %10397 = vmatpush1.msra.mxu0 %v10352
      %10398 = vmatprep.subr.mxu0 %v10357
      %10399 = vmatpush1.msra.mxu0 %v10356
      %10400 = vmatprep.subr.mxu0 %v10361
      %10401 = vmatpush1.msra.mxu0 %v10360
      %10402 = vmatprep.subr.mxu0 %v10365
      %10403 = vmatpush1.msra.mxu0 %v10364
      %10404 = vmatprep.subr.mxu0 0.0
      %10405 = vmatpush1.msra.mxu0 0.0
      %10406 = vmatprep.subr.mxu0 0.0
      %10407 = vmatpush1.msra.mxu0 0.0
      %10408 = vmatprep.subr.mxu0 0.0
      %10409 = vmatpush1.msra.mxu0 0.0
      %10410 = vmatprep.subr.mxu0 0.0
      %10411 = vmatpush1.msra.mxu0 0.0
      %10412 = vmatprep.subr.mxu0 0.0
      %10413 = vmatpush1.msra.mxu0 0.0
      %10414 = vmatprep.subr.mxu0 0.0
      %10415 = vmatpush1.msra.mxu0 0.0
      %10416 = vmatprep.subr.mxu0 0.0
      %10417 = vmatpush1.msra.mxu0 0.0
      %10418 = vmatprep.subr.mxu0 0.0
      %10419 = vmatpush1.msra.mxu0 0.0
      %10420 = vmatprep.subr.mxu0 0.0
      %10421 = vmatpush1.msra.mxu0 0.0
      %10422 = vmatprep.subr.mxu0 0.0
      %10423 = vmatpush1.msra.mxu0 0.0
      %10424 = vmatprep.subr.mxu0 0.0
      %10425 = vmatpush1.msra.mxu0 0.0
      %10426 = vmatprep.subr.mxu0 0.0
      %10427 = vmatpush1.msra.mxu0 0.0
      %10428 = vmatprep.subr.mxu0 0.0
      %10429 = vmatpush1.msra.mxu0 0.0
      %10430 = vmatprep.subr.mxu0 0.0
      %10431 = vmatpush1.msra.mxu0 0.0
      %10432 = vmatprep.subr.mxu0 0.0
      %10433 = vmatpush1.msra.mxu0 0.0
      %10434 = vmatprep.subr.mxu0 0.0
      %10435 = vmatpush1.msra.mxu0 0.0
      %10436 = vmatprep.subr.mxu0 0.0
      %10437 = vmatpush1.msra.mxu0 0.0
      %10438 = vmatprep.subr.mxu0 0.0
      %10439 = vmatpush1.msra.mxu0 0.0
      %10440 = vmatprep.subr.mxu0 0.0
      %10441 = vmatpush1.msra.mxu0 0.0
      %10442 = vmatprep.subr.mxu0 0.0
      %10443 = vmatpush1.msra.mxu0 0.0
      %10444 = vmatprep.subr.mxu0 0.0
      %10445 = vmatpush1.msra.mxu0 0.0
      %10446 = vmatprep.subr.mxu0 0.0
      %10447 = vmatpush1.msra.mxu0 0.0
      %10448 = vmatprep.subr.mxu0 0.0
      %10449 = vmatpush1.msra.mxu0 0.0
      %10450 = vmatprep.subr.mxu0 0.0
      %10451 = vmatpush1.msra.mxu0 0.0
      %10452 = vmatprep.subr.mxu0 0.0
      %10453 = vmatpush1.msra.mxu0 0.0
      %10454 = vmatprep.subr.mxu0 0.0
      %10455 = vmatpush1.msra.mxu0 0.0
      %10456 = vmatprep.subr.mxu0 0.0
      %10457 = vmatpush1.msra.mxu0 0.0
      %10458 = vmatprep.subr.mxu0 0.0
      %10459 = vmatpush1.msra.mxu0 0.0
      %10460 = vmatprep.mubr.f32.mxu0 0.0
      %10461 = vmatmul.mubr.f32.gmra.mrb[0].mxu0 %v10385
      %v10462 = vpop.f32.mrb[0].mxu0
      %v10463 = vadd.f32 0.0, %v10462
      %v10464 = vpop.f32.mrb[0].mxu0
      %v10465 = vadd.f32 0.0, %v10464
      %10466 = vmatprep.mubr.f32.mxu0 0.0
      %10467 = vmatmul.mubr.f32.gmra.mrb[0].mxu0 %v10388
      %v10468 = vpop.f32.mrb[0].mxu0
      %v10469 = vadd.f32 0.0, %v10468
      %v10470 = vpop.f32.mrb[0].mxu0
      %v10471 = vadd.f32 0.0, %v10470
      %10472 = vmatprep.mubr.f32.mxu0 0.0
      %10473 = vmatmul.mubr.f32.gmra.mrb[0].mxu0 %v10391
      %v10474 = vpop.f32.mrb[0].mxu0
      %v10475 = vadd.f32 0.0, %v10474
      %v10476 = vpop.f32.mrb[0].mxu0
      %v10477 = vadd.f32 0.0, %v10476
      %10478 = vmatprep.mubr.f32.mxu0 0.0
      %10479 = vmatmul.mubr.f32.gmra.mrb[0].mxu0 %v10394
      %v10480 = vpop.f32.mrb[0].mxu0
      %v10481 = vadd.f32 0.0, %v10480
      %v10482 = vpop.f32.mrb[0].mxu0
      %v10483 = vadd.f32 0.0, %v10482
      %10484 = vdwg.mxu0
      %10485 = vmatprep.subr.mxu0 %v10355
      %10486 = vmatpush1.msra.mxu0 %v10354
      %10487 = vmatprep.subr.mxu0 %v10359
      %10488 = vmatpush1.msra.mxu0 %v10358
      %10489 = vmatprep.subr.mxu0 %v10363
      %10490 = vmatpush1.msra.mxu0 %v10362
      %10491 = vmatprep.subr.mxu0 %v10367
      %10492 = vmatpush1.msra.mxu0 %v10366
      %10493 = vmatprep.subr.mxu0 0.0
      %10494 = vmatpush1.msra.mxu0 0.0
      %10495 = vmatprep.subr.mxu0 0.0
      %10496 = vmatpush1.msra.mxu0 0.0
      %10497 = vmatprep.subr.mxu0 0.0
      %10498 = vmatpush1.msra.mxu0 0.0
      %10499 = vmatprep.subr.mxu0 0.0
      %10500 = vmatpush1.msra.mxu0 0.0
      %10501 = vmatprep.subr.mxu0 0.0
      %10502 = vmatpush1.msra.mxu0 0.0
      %10503 = vmatprep.subr.mxu0 0.0
      %10504 = vmatpush1.msra.mxu0 0.0
      %10505 = vmatprep.subr.mxu0 0.0
      %10506 = vmatpush1.msra.mxu0 0.0
      %10507 = vmatprep.subr.mxu0 0.0
      %10508 = vmatpush1.msra.mxu0 0.0
      %10509 = vmatprep.subr.mxu0 0.0
      %10510 = vmatpush1.msra.mxu0 0.0
      %10511 = vmatprep.subr.mxu0 0.0
      %10512 = vmatpush1.msra.mxu0 0.0
      %10513 = vmatprep.subr.mxu0 0.0
      %10514 = vmatpush1.msra.mxu0 0.0
      %10515 = vmatprep.subr.mxu0 0.0
      %10516 = vmatpush1.msra.mxu0 0.0
      %10517 = vmatprep.subr.mxu0 0.0
      %10518 = vmatpush1.msra.mxu0 0.0
      %10519 = vmatprep.subr.mxu0 0.0
      %10520 = vmatpush1.msra.mxu0 0.0
      %10521 = vmatprep.subr.mxu0 0.0
      %10522 = vmatpush1.msra.mxu0 0.0
      %10523 = vmatprep.subr.mxu0 0.0
      %10524 = vmatpush1.msra.mxu0 0.0
      %10525 = vmatprep.subr.mxu0 0.0
      %10526 = vmatpush1.msra.mxu0 0.0
      %10527 = vmatprep.subr.mxu0 0.0
      %10528 = vmatpush1.msra.mxu0 0.0
      %10529 = vmatprep.subr.mxu0 0.0
      %10530 = vmatpush1.msra.mxu0 0.0
      %10531 = vmatprep.subr.mxu0 0.0
      %10532 = vmatpush1.msra.mxu0 0.0
      %10533 = vmatprep.subr.mxu0 0.0
      %10534 = vmatpush1.msra.mxu0 0.0
      %10535 = vmatprep.subr.mxu0 0.0
      %10536 = vmatpush1.msra.mxu0 0.0
      %10537 = vmatprep.subr.mxu0 0.0
      %10538 = vmatpush1.msra.mxu0 0.0
      %10539 = vmatprep.subr.mxu0 0.0
      %10540 = vmatpush1.msra.mxu0 0.0
      %10541 = vmatprep.subr.mxu0 0.0
      %10542 = vmatpush1.msra.mxu0 0.0
      %10543 = vmatprep.subr.mxu0 0.0
      %10544 = vmatpush1.msra.mxu0 0.0
      %10545 = vmatprep.subr.mxu0 0.0
      %10546 = vmatpush1.msra.mxu0 0.0
      %10547 = vmatprep.subr.mxu0 0.0
      %10548 = vmatpush1.msra.mxu0 0.0
      %10549 = vmatprep.mubr.f32.mxu0 0.0
      %10550 = vmatmul.mubr.f32.gmra.mrb[0].mxu0 %v10385
      %v10551 = vpop.f32.mrb[0].mxu0
      %v10552 = vadd.f32 0.0, %v10551
      %v10553 = vpop.f32.mrb[0].mxu0
      %v10554 = vadd.f32 0.0, %v10553
      %10555 = vmatprep.mubr.f32.mxu0 0.0
      %10556 = vmatmul.mubr.f32.gmra.mrb[0].mxu0 %v10388
      %v10557 = vpop.f32.mrb[0].mxu0
      %v10558 = vadd.f32 0.0, %v10557
      %v10559 = vpop.f32.mrb[0].mxu0
      %v10560 = vadd.f32 0.0, %v10559
      %10561 = vmatprep.mubr.f32.mxu0 0.0
      %10562 = vmatmul.mubr.f32.gmra.mrb[0].mxu0 %v10391
      %v10563 = vpop.f32.mrb[0].mxu0
      %v10564 = vadd.f32 0.0, %v10563
      %v10565 = vpop.f32.mrb[0].mxu0
      %v10566 = vadd.f32 0.0, %v10565
      %10567 = vmatprep.mubr.f32.mxu0 0.0
      %10568 = vmatmul.mubr.f32.gmra.mrb[0].mxu0 %v10394
      %v10569 = vpop.f32.mrb[0].mxu0
      %v10570 = vadd.f32 0.0, %v10569
      %v10571 = vpop.f32.mrb[0].mxu0
      %v10572 = vadd.f32 0.0, %v10571
      %10573 = vdwg.mxu0
      %v10574 = vadd.f32 %v10251, %v10463
      %v10575 = vadd.f32 %v10252, %v10465
      %v10576 = vadd.f32 %v10253, %v10552
      %v10577 = vadd.f32 %v10254, %v10554
      %v10578 = vadd.f32 %v10255, %v10469
      %v10579 = vadd.f32 %v10256, %v10471
      %v10580 = vadd.f32 %v10257, %v10558
      %v10581 = vadd.f32 %v10258, %v10560
      %v10582 = vadd.f32 %v10259, %v10475
      %v10583 = vadd.f32 %v10260, %v10477
      %v10584 = vadd.f32 %v10261, %v10564
      %v10585 = vadd.f32 %v10262, %v10566
      %v10586 = vadd.f32 %v10263, %v10481
      %v10587 = vadd.f32 %v10264, %v10483
      %v10588 = vadd.f32 %v10265, %v10570
      %v10589 = vadd.f32 %v10266, %v10572
      %s10590 = scalar_lea.vmem %s3, 192
      %v10591 = vld [vmem:[%s10590] sm:$0xff]
      %v10592 = vld [vmem:[%s10590 + $0x8] sm:$0xff]
      %v10593 = vld [vmem:[%s10590 + $0x10] sm:$0xff]
      %v10594 = vld [vmem:[%s10590 + $0x18] sm:$0xff]
      %10595 = vrot.lane.b32.xlu0 %v10272, 109
      %v10596 = vpop.permute.xlu0 %10595
      %10597 = vrot.lane.b32.xlu0 %v10273, 109
      %v10598 = vpop.permute.xlu0 %10597
      %10599 = vrot.lane.b32.xlu0 %v10274, 109
      %v10600 = vpop.permute.xlu0 %10599
      %10601 = vrot.lane.b32.xlu0 %v10275, 109
      %v10602 = vpop.permute.xlu0 %10601
      %10603 = vrot.lane.b32.xlu0 %v10276, 109
      %v10604 = vpop.permute.xlu0 %10603
      %10605 = vrot.lane.b32.xlu0 %v10277, 109
      %v10606 = vpop.permute.xlu0 %10605
      %10607 = vrot.lane.b32.xlu0 %v10278, 109
      %v10608 = vpop.permute.xlu0 %10607
      %10609 = vrot.lane.b32.xlu0 %v10279, 109
      %v10610 = vpop.permute.xlu0 %10609
      %10611 = vrot.lane.b32.xlu0 %v10280, 109
      %v10612 = vpop.permute.xlu0 %10611
      %10613 = vrot.lane.b32.xlu0 %v10281, 109
      %v10614 = vpop.permute.xlu0 %10613
      %10615 = vrot.lane.b32.xlu0 %v10282, 109
      %v10616 = vpop.permute.xlu0 %10615
      %10617 = vrot.lane.b32.xlu0 %v10283, 109
      %v10618 = vpop.permute.xlu0 %10617
      %10619 = vrot.lane.b32.xlu0 %v10284, 109
      %v10620 = vpop.permute.xlu0 %10619
      %10621 = vrot.lane.b32.xlu0 %v10285, 109
      %v10622 = vpop.permute.xlu0 %10621
      %10623 = vrot.lane.b32.xlu0 %v10286, 109
      %v10624 = vpop.permute.xlu0 %10623
      %10625 = vrot.lane.b32.xlu0 %v10287, 109
      %v10626 = vpop.permute.xlu0 %10625
      %10627 = vrot.lane.b32.xlu0 %v10288, 109
      %v10628 = vpop.permute.xlu0 %10627
      %10629 = vrot.lane.b32.xlu0 %v10289, 109
      %v10630 = vpop.permute.xlu0 %10629
      %10631 = vrot.lane.b32.xlu0 %v10290, 109
      %v10632 = vpop.permute.xlu0 %10631
      %10633 = vrot.lane.b32.xlu0 %v10291, 109
      %v10634 = vpop.permute.xlu0 %10633
      %v10635 = vsel %vm3970, %v10596, %v10598
      %v10636 = vsel %vm3970, %v10598, %v10600
      %v10637 = vsel %vm3970, %v10600, %v10602
      %v10638 = vsel %vm3970, %v10602, %v10604
      %v10639 = vsel %vm3970, %v10606, %v10608
      %v10640 = vsel %vm3970, %v10608, %v10610
      %v10641 = vsel %vm3970, %v10610, %v10612
      %v10642 = vsel %vm3970, %v10612, %v10614
      %v10643 = vsel %vm3970, %v10616, %v10618
      %v10644 = vsel %vm3970, %v10618, %v10620
      %v10645 = vsel %vm3970, %v10620, %v10622
      %v10646 = vsel %vm3970, %v10622, %v10624
      %v10647 = vsel %vm3970, %v10626, %v10628
      %v10648 = vsel %vm3970, %v10628, %v10630
      %v10649 = vsel %vm3970, %v10630, %v10632
      %v10650 = vsel %vm3970, %v10632, %v10634
      %v10668 = vsel %vm6330, %v10591, 0
      %v10671 = vsel %vm6330, %v10592, 0
      %v10674 = vsel %vm6330, %v10593, 0
      %v10677 = vsel %vm6330, %v10594, 0
      %10679 = vmatprep.subr.mxu0 %v10636
      %10680 = vmatpush1.msra.mxu0 %v10635
      %10681 = vmatprep.subr.mxu0 %v10640
      %10682 = vmatpush1.msra.mxu0 %v10639
      %10683 = vmatprep.subr.mxu0 %v10644
      %10684 = vmatpush1.msra.mxu0 %v10643
      %10685 = vmatprep.subr.mxu0 %v10648
      %10686 = vmatpush1.msra.mxu0 %v10647
      %10687 = vmatprep.subr.mxu0 0.0
      %10688 = vmatpush1.msra.mxu0 0.0
      %10689 = vmatprep.subr.mxu0 0.0
      %10690 = vmatpush1.msra.mxu0 0.0
      %10691 = vmatprep.subr.mxu0 0.0
      %10692 = vmatpush1.msra.mxu0 0.0
      %10693 = vmatprep.subr.mxu0 0.0
      %10694 = vmatpush1.msra.mxu0 0.0
      %10695 = vmatprep.subr.mxu0 0.0
      %10696 = vmatpush1.msra.mxu0 0.0
      %10697 = vmatprep.subr.mxu0 0.0
      %10698 = vmatpush1.msra.mxu0 0.0
      %10699 = vmatprep.subr.mxu0 0.0
      %10700 = vmatpush1.msra.mxu0 0.0
      %10701 = vmatprep.subr.mxu0 0.0
      %10702 = vmatpush1.msra.mxu0 0.0
      %10703 = vmatprep.subr.mxu0 0.0
      %10704 = vmatpush1.msra.mxu0 0.0
      %10705 = vmatprep.subr.mxu0 0.0
      %10706 = vmatpush1.msra.mxu0 0.0
      %10707 = vmatprep.subr.mxu0 0.0
      %10708 = vmatpush1.msra.mxu0 0.0
      %10709 = vmatprep.subr.mxu0 0.0
      %10710 = vmatpush1.msra.mxu0 0.0
      %10711 = vmatprep.subr.mxu0 0.0
      %10712 = vmatpush1.msra.mxu0 0.0
      %10713 = vmatprep.subr.mxu0 0.0
      %10714 = vmatpush1.msra.mxu0 0.0
      %10715 = vmatprep.subr.mxu0 0.0
      %10716 = vmatpush1.msra.mxu0 0.0
      %10717 = vmatprep.subr.mxu0 0.0
      %10718 = vmatpush1.msra.mxu0 0.0
      %10719 = vmatprep.subr.mxu0 0.0
      %10720 = vmatpush1.msra.mxu0 0.0
      %10721 = vmatprep.subr.mxu0 0.0
      %10722 = vmatpush1.msra.mxu0 0.0
      %10723 = vmatprep.subr.mxu0 0.0
      %10724 = vmatpush1.msra.mxu0 0.0
      %10725 = vmatprep.subr.mxu0 0.0
      %10726 = vmatpush1.msra.mxu0 0.0
      %10727 = vmatprep.subr.mxu0 0.0
      %10728 = vmatpush1.msra.mxu0 0.0
      %10729 = vmatprep.subr.mxu0 0.0
      %10730 = vmatpush1.msra.mxu0 0.0
      %10731 = vmatprep.subr.mxu0 0.0
      %10732 = vmatpush1.msra.mxu0 0.0
      %10733 = vmatprep.subr.mxu0 0.0
      %10734 = vmatpush1.msra.mxu0 0.0
      %10735 = vmatprep.subr.mxu0 0.0
      %10736 = vmatpush1.msra.mxu0 0.0
      %10737 = vmatprep.subr.mxu0 0.0
      %10738 = vmatpush1.msra.mxu0 0.0
      %10739 = vmatprep.subr.mxu0 0.0
      %10740 = vmatpush1.msra.mxu0 0.0
      %10741 = vmatprep.subr.mxu0 0.0
      %10742 = vmatpush1.msra.mxu0 0.0
      %10743 = vmatprep.mubr.f32.mxu0 0.0
      %10744 = vmatmul.mubr.f32.gmra.mrb[0].mxu0 %v10668
      %v10745 = vpop.f32.mrb[0].mxu0
      %v10746 = vadd.f32 0.0, %v10745
      %v10747 = vpop.f32.mrb[0].mxu0
      %v10748 = vadd.f32 0.0, %v10747
      %10749 = vmatprep.mubr.f32.mxu0 0.0
      %10750 = vmatmul.mubr.f32.gmra.mrb[0].mxu0 %v10671
      %v10751 = vpop.f32.mrb[0].mxu0
      %v10752 = vadd.f32 0.0, %v10751
      %v10753 = vpop.f32.mrb[0].mxu0
      %v10754 = vadd.f32 0.0, %v10753
      %10755 = vmatprep.mubr.f32.mxu0 0.0
      %10756 = vmatmul.mubr.f32.gmra.mrb[0].mxu0 %v10674
      %v10757 = vpop.f32.mrb[0].mxu0
      %v10758 = vadd.f32 0.0, %v10757
      %v10759 = vpop.f32.mrb[0].mxu0
      %v10760 = vadd.f32 0.0, %v10759
      %10761 = vmatprep.mubr.f32.mxu0 0.0
      %10762 = vmatmul.mubr.f32.gmra.mrb[0].mxu0 %v10677
      %v10763 = vpop.f32.mrb[0].mxu0
      %v10764 = vadd.f32 0.0, %v10763
      %v10765 = vpop.f32.mrb[0].mxu0
      %v10766 = vadd.f32 0.0, %v10765
      %10767 = vdwg.mxu0
      %10768 = vmatprep.subr.mxu0 %v10638
      %10769 = vmatpush1.msra.mxu0 %v10637
      %10770 = vmatprep.subr.mxu0 %v10642
      %10771 = vmatpush1.msra.mxu0 %v10641
      %10772 = vmatprep.subr.mxu0 %v10646
      %10773 = vmatpush1.msra.mxu0 %v10645
      %10774 = vmatprep.subr.mxu0 %v10650
      %10775 = vmatpush1.msra.mxu0 %v10649
      %10776 = vmatprep.subr.mxu0 0.0
      %10777 = vmatpush1.msra.mxu0 0.0
      %10778 = vmatprep.subr.mxu0 0.0
      %10779 = vmatpush1.msra.mxu0 0.0
      %10780 = vmatprep.subr.mxu0 0.0
      %10781 = vmatpush1.msra.mxu0 0.0
      %10782 = vmatprep.subr.mxu0 0.0
      %10783 = vmatpush1.msra.mxu0 0.0
      %10784 = vmatprep.subr.mxu0 0.0
      %10785 = vmatpush1.msra.mxu0 0.0
      %10786 = vmatprep.subr.mxu0 0.0
      %10787 = vmatpush1.msra.mxu0 0.0
      %10788 = vmatprep.subr.mxu0 0.0
      %10789 = vmatpush1.msra.mxu0 0.0
      %10790 = vmatprep.subr.mxu0 0.0
      %10791 = vmatpush1.msra.mxu0 0.0
      %10792 = vmatprep.subr.mxu0 0.0
      %10793 = vmatpush1.msra.mxu0 0.0
      %10794 = vmatprep.subr.mxu0 0.0
      %10795 = vmatpush1.msra.mxu0 0.0
      %10796 = vmatprep.subr.mxu0 0.0
      %10797 = vmatpush1.msra.mxu0 0.0
      %10798 = vmatprep.subr.mxu0 0.0
      %10799 = vmatpush1.msra.mxu0 0.0
      %10800 = vmatprep.subr.mxu0 0.0
      %10801 = vmatpush1.msra.mxu0 0.0
      %10802 = vmatprep.subr.mxu0 0.0
      %10803 = vmatpush1.msra.mxu0 0.0
      %10804 = vmatprep.subr.mxu0 0.0
      %10805 = vmatpush1.msra.mxu0 0.0
      %10806 = vmatprep.subr.mxu0 0.0
      %10807 = vmatpush1.msra.mxu0 0.0
      %10808 = vmatprep.subr.mxu0 0.0
      %10809 = vmatpush1.msra.mxu0 0.0
      %10810 = vmatprep.subr.mxu0 0.0
      %10811 = vmatpush1.msra.mxu0 0.0
      %10812 = vmatprep.subr.mxu0 0.0
      %10813 = vmatpush1.msra.mxu0 0.0
      %10814 = vmatprep.subr.mxu0 0.0
      %10815 = vmatpush1.msra.mxu0 0.0
      %10816 = vmatprep.subr.mxu0 0.0
      %10817 = vmatpush1.msra.mxu0 0.0
      %10818 = vmatprep.subr.mxu0 0.0
      %10819 = vmatpush1.msra.mxu0 0.0
      %10820 = vmatprep.subr.mxu0 0.0
      %10821 = vmatpush1.msra.mxu0 0.0
      %10822 = vmatprep.subr.mxu0 0.0
      %10823 = vmatpush1.msra.mxu0 0.0
      %10824 = vmatprep.subr.mxu0 0.0
      %10825 = vmatpush1.msra.mxu0 0.0
      %10826 = vmatprep.subr.mxu0 0.0
      %10827 = vmatpush1.msra.mxu0 0.0
      %10828 = vmatprep.subr.mxu0 0.0
      %10829 = vmatpush1.msra.mxu0 0.0
      %10830 = vmatprep.subr.mxu0 0.0
      %10831 = vmatpush1.msra.mxu0 0.0
      %10832 = vmatprep.mubr.f32.mxu0 0.0
      %10833 = vmatmul.mubr.f32.gmra.mrb[0].mxu0 %v10668
      %v10834 = vpop.f32.mrb[0].mxu0
      %v10835 = vadd.f32 0.0, %v10834
      %v10836 = vpop.f32.mrb[0].mxu0
      %v10837 = vadd.f32 0.0, %v10836
      %10838 = vmatprep.mubr.f32.mxu0 0.0
      %10839 = vmatmul.mubr.f32.gmra.mrb[0].mxu0 %v10671
      %v10840 = vpop.f32.mrb[0].mxu0
      %v10841 = vadd.f32 0.0, %v10840
      %v10842 = vpop.f32.mrb[0].mxu0
      %v10843 = vadd.f32 0.0, %v10842
      %10844 = vmatprep.mubr.f32.mxu0 0.0
      %10845 = vmatmul.mubr.f32.gmra.mrb[0].mxu0 %v10674
      %v10846 = vpop.f32.mrb[0].mxu0
      %v10847 = vadd.f32 0.0, %v10846
      %v10848 = vpop.f32.mrb[0].mxu0
      %v10849 = vadd.f32 0.0, %v10848
      %10850 = vmatprep.mubr.f32.mxu0 0.0
      %10851 = vmatmul.mubr.f32.gmra.mrb[0].mxu0 %v10677
      %v10852 = vpop.f32.mrb[0].mxu0
      %v10853 = vadd.f32 0.0, %v10852
      %v10854 = vpop.f32.mrb[0].mxu0
      %v10855 = vadd.f32 0.0, %v10854
      %10856 = vdwg.mxu0
      %v10857 = vadd.f32 %v10574, %v10746
      %v10858 = vadd.f32 %v10575, %v10748
      %v10859 = vadd.f32 %v10576, %v10835
      %v10860 = vadd.f32 %v10577, %v10837
      %v10861 = vadd.f32 %v10578, %v10752
      %v10862 = vadd.f32 %v10579, %v10754
      %v10863 = vadd.f32 %v10580, %v10841
      %v10864 = vadd.f32 %v10581, %v10843
      %v10865 = vadd.f32 %v10582, %v10758
      %v10866 = vadd.f32 %v10583, %v10760
      %v10867 = vadd.f32 %v10584, %v10847
      %v10868 = vadd.f32 %v10585, %v10849
      %v10869 = vadd.f32 %v10586, %v10764
      %v10870 = vadd.f32 %v10587, %v10766
      %v10871 = vadd.f32 %v10588, %v10853
      %v10872 = vadd.f32 %v10589, %v10855
      %s10873 = scalar_lea.vmem %s3, 224
      %v10874 = vld [vmem:[%s10873] sm:$0xff]
      %v10875 = vld [vmem:[%s10873 + $0x8] sm:$0xff]
      %v10876 = vld [vmem:[%s10873 + $0x10] sm:$0xff]
      %v10877 = vld [vmem:[%s10873 + $0x18] sm:$0xff]
      %10878 = vrot.lane.b32.xlu0 %v10272, 108
      %v10879 = vpop.permute.xlu0 %10878
      %10880 = vrot.lane.b32.xlu0 %v10273, 108
      %v10881 = vpop.permute.xlu0 %10880
      %10882 = vrot.lane.b32.xlu0 %v10274, 108
      %v10883 = vpop.permute.xlu0 %10882
      %10884 = vrot.lane.b32.xlu0 %v10275, 108
      %v10885 = vpop.permute.xlu0 %10884
      %10886 = vrot.lane.b32.xlu0 %v10276, 108
      %v10887 = vpop.permute.xlu0 %10886
      %10888 = vrot.lane.b32.xlu0 %v10277, 108
      %v10889 = vpop.permute.xlu0 %10888
      %10890 = vrot.lane.b32.xlu0 %v10278, 108
      %v10891 = vpop.permute.xlu0 %10890
      %10892 = vrot.lane.b32.xlu0 %v10279, 108
      %v10893 = vpop.permute.xlu0 %10892
      %10894 = vrot.lane.b32.xlu0 %v10280, 108
      %v10895 = vpop.permute.xlu0 %10894
      %10896 = vrot.lane.b32.xlu0 %v10281, 108
      %v10897 = vpop.permute.xlu0 %10896
      %10898 = vrot.lane.b32.xlu0 %v10282, 108
      %v10899 = vpop.permute.xlu0 %10898
      %10900 = vrot.lane.b32.xlu0 %v10283, 108
      %v10901 = vpop.permute.xlu0 %10900
      %10902 = vrot.lane.b32.xlu0 %v10284, 108
      %v10903 = vpop.permute.xlu0 %10902
      %10904 = vrot.lane.b32.xlu0 %v10285, 108
      %v10905 = vpop.permute.xlu0 %10904
      %10906 = vrot.lane.b32.xlu0 %v10286, 108
      %v10907 = vpop.permute.xlu0 %10906
      %10908 = vrot.lane.b32.xlu0 %v10287, 108
      %v10909 = vpop.permute.xlu0 %10908
      %10910 = vrot.lane.b32.xlu0 %v10288, 108
      %v10911 = vpop.permute.xlu0 %10910
      %10912 = vrot.lane.b32.xlu0 %v10289, 108
      %v10913 = vpop.permute.xlu0 %10912
      %10914 = vrot.lane.b32.xlu0 %v10290, 108
      %v10915 = vpop.permute.xlu0 %10914
      %10916 = vrot.lane.b32.xlu0 %v10291, 108
      %v10917 = vpop.permute.xlu0 %10916
      %v10918 = vsel %vm4200, %v10879, %v10881
      %v10919 = vsel %vm4200, %v10881, %v10883
      %v10920 = vsel %vm4200, %v10883, %v10885
      %v10921 = vsel %vm4200, %v10885, %v10887
      %v10922 = vsel %vm4200, %v10889, %v10891
      %v10923 = vsel %vm4200, %v10891, %v10893
      %v10924 = vsel %vm4200, %v10893, %v10895
      %v10925 = vsel %vm4200, %v10895, %v10897
      %v10926 = vsel %vm4200, %v10899, %v10901
      %v10927 = vsel %vm4200, %v10901, %v10903
      %v10928 = vsel %vm4200, %v10903, %v10905
      %v10929 = vsel %vm4200, %v10905, %v10907
      %v10930 = vsel %vm4200, %v10909, %v10911
      %v10931 = vsel %vm4200, %v10911, %v10913
      %v10932 = vsel %vm4200, %v10913, %v10915
      %v10933 = vsel %vm4200, %v10915, %v10917
      %v10951 = vsel %vm6330, %v10874, 0
      %v10954 = vsel %vm6330, %v10875, 0
      %v10957 = vsel %vm6330, %v10876, 0
      %v10960 = vsel %vm6330, %v10877, 0
      %10962 = vmatprep.subr.mxu0 %v10919
      %10963 = vmatpush1.msra.mxu0 %v10918
      %10964 = vmatprep.subr.mxu0 %v10923
      %10965 = vmatpush1.msra.mxu0 %v10922
      %10966 = vmatprep.subr.mxu0 %v10927
      %10967 = vmatpush1.msra.mxu0 %v10926
      %10968 = vmatprep.subr.mxu0 %v10931
      %10969 = vmatpush1.msra.mxu0 %v10930
      %10970 = vmatprep.subr.mxu0 0.0
      %10971 = vmatpush1.msra.mxu0 0.0
      %10972 = vmatprep.subr.mxu0 0.0
      %10973 = vmatpush1.msra.mxu0 0.0
      %10974 = vmatprep.subr.mxu0 0.0
      %10975 = vmatpush1.msra.mxu0 0.0
      %10976 = vmatprep.subr.mxu0 0.0
      %10977 = vmatpush1.msra.mxu0 0.0
      %10978 = vmatprep.subr.mxu0 0.0
      %10979 = vmatpush1.msra.mxu0 0.0
      %10980 = vmatprep.subr.mxu0 0.0
      %10981 = vmatpush1.msra.mxu0 0.0
      %10982 = vmatprep.subr.mxu0 0.0
      %10983 = vmatpush1.msra.mxu0 0.0
      %10984 = vmatprep.subr.mxu0 0.0
      %10985 = vmatpush1.msra.mxu0 0.0
      %10986 = vmatprep.subr.mxu0 0.0
      %10987 = vmatpush1.msra.mxu0 0.0
      %10988 = vmatprep.subr.mxu0 0.0
      %10989 = vmatpush1.msra.mxu0 0.0
      %10990 = vmatprep.subr.mxu0 0.0
      %10991 = vmatpush1.msra.mxu0 0.0
      %10992 = vmatprep.subr.mxu0 0.0
      %10993 = vmatpush1.msra.mxu0 0.0
      %10994 = vmatprep.subr.mxu0 0.0
      %10995 = vmatpush1.msra.mxu0 0.0
      %10996 = vmatprep.subr.mxu0 0.0
      %10997 = vmatpush1.msra.mxu0 0.0
      %10998 = vmatprep.subr.mxu0 0.0
      %10999 = vmatpush1.msra.mxu0 0.0
      %11000 = vmatprep.subr.mxu0 0.0
      %11001 = vmatpush1.msra.mxu0 0.0
      %11002 = vmatprep.subr.mxu0 0.0
      %11003 = vmatpush1.msra.mxu0 0.0
      %11004 = vmatprep.subr.mxu0 0.0
      %11005 = vmatpush1.msra.mxu0 0.0
      %11006 = vmatprep.subr.mxu0 0.0
      %11007 = vmatpush1.msra.mxu0 0.0
      %11008 = vmatprep.subr.mxu0 0.0
      %11009 = vmatpush1.msra.mxu0 0.0
      %11010 = vmatprep.subr.mxu0 0.0
      %11011 = vmatpush1.msra.mxu0 0.0
      %11012 = vmatprep.subr.mxu0 0.0
      %11013 = vmatpush1.msra.mxu0 0.0
      %11014 = vmatprep.subr.mxu0 0.0
      %11015 = vmatpush1.msra.mxu0 0.0
      %11016 = vmatprep.subr.mxu0 0.0
      %11017 = vmatpush1.msra.mxu0 0.0
      %11018 = vmatprep.subr.mxu0 0.0
      %11019 = vmatpush1.msra.mxu0 0.0
      %11020 = vmatprep.subr.mxu0 0.0
      %11021 = vmatpush1.msra.mxu0 0.0
      %11022 = vmatprep.subr.mxu0 0.0
      %11023 = vmatpush1.msra.mxu0 0.0
      %11024 = vmatprep.subr.mxu0 0.0
      %11025 = vmatpush1.msra.mxu0 0.0
      %11026 = vmatprep.mubr.f32.mxu0 0.0
      %11027 = vmatmul.mubr.f32.gmra.mrb[0].mxu0 %v10951
      %v11028 = vpop.f32.mrb[0].mxu0
      %v11029 = vadd.f32 0.0, %v11028
      %v11030 = vpop.f32.mrb[0].mxu0
      %v11031 = vadd.f32 0.0, %v11030
      %11032 = vmatprep.mubr.f32.mxu0 0.0
      %11033 = vmatmul.mubr.f32.gmra.mrb[0].mxu0 %v10954
      %v11034 = vpop.f32.mrb[0].mxu0
      %v11035 = vadd.f32 0.0, %v11034
      %v11036 = vpop.f32.mrb[0].mxu0
      %v11037 = vadd.f32 0.0, %v11036
      %11038 = vmatprep.mubr.f32.mxu0 0.0
      %11039 = vmatmul.mubr.f32.gmra.mrb[0].mxu0 %v10957
      %v11040 = vpop.f32.mrb[0].mxu0
      %v11041 = vadd.f32 0.0, %v11040
      %v11042 = vpop.f32.mrb[0].mxu0
      %v11043 = vadd.f32 0.0, %v11042
      %11044 = vmatprep.mubr.f32.mxu0 0.0
      %11045 = vmatmul.mubr.f32.gmra.mrb[0].mxu0 %v10960
      %v11046 = vpop.f32.mrb[0].mxu0
      %v11047 = vadd.f32 0.0, %v11046
      %v11048 = vpop.f32.mrb[0].mxu0
      %v11049 = vadd.f32 0.0, %v11048
      %11050 = vdwg.mxu0
      %11051 = vmatprep.subr.mxu0 %v10921
      %11052 = vmatpush1.msra.mxu0 %v10920
      %11053 = vmatprep.subr.mxu0 %v10925
      %11054 = vmatpush1.msra.mxu0 %v10924
      %11055 = vmatprep.subr.mxu0 %v10929
      %11056 = vmatpush1.msra.mxu0 %v10928
      %11057 = vmatprep.subr.mxu0 %v10933
      %11058 = vmatpush1.msra.mxu0 %v10932
      %11059 = vmatprep.subr.mxu0 0.0
      %11060 = vmatpush1.msra.mxu0 0.0
      %11061 = vmatprep.subr.mxu0 0.0
      %11062 = vmatpush1.msra.mxu0 0.0
      %11063 = vmatprep.subr.mxu0 0.0
      %11064 = vmatpush1.msra.mxu0 0.0
      %11065 = vmatprep.subr.mxu0 0.0
      %11066 = vmatpush1.msra.mxu0 0.0
      %11067 = vmatprep.subr.mxu0 0.0
      %11068 = vmatpush1.msra.mxu0 0.0
      %11069 = vmatprep.subr.mxu0 0.0
      %11070 = vmatpush1.msra.mxu0 0.0
      %11071 = vmatprep.subr.mxu0 0.0
      %11072 = vmatpush1.msra.mxu0 0.0
      %11073 = vmatprep.subr.mxu0 0.0
      %11074 = vmatpush1.msra.mxu0 0.0
      %11075 = vmatprep.subr.mxu0 0.0
      %11076 = vmatpush1.msra.mxu0 0.0
      %11077 = vmatprep.subr.mxu0 0.0
      %11078 = vmatpush1.msra.mxu0 0.0
      %11079 = vmatprep.subr.mxu0 0.0
      %11080 = vmatpush1.msra.mxu0 0.0
      %11081 = vmatprep.subr.mxu0 0.0
      %11082 = vmatpush1.msra.mxu0 0.0
      %11083 = vmatprep.subr.mxu0 0.0
      %11084 = vmatpush1.msra.mxu0 0.0
      %11085 = vmatprep.subr.mxu0 0.0
      %11086 = vmatpush1.msra.mxu0 0.0
      %11087 = vmatprep.subr.mxu0 0.0
      %11088 = vmatpush1.msra.mxu0 0.0
      %11089 = vmatprep.subr.mxu0 0.0
      %11090 = vmatpush1.msra.mxu0 0.0
      %11091 = vmatprep.subr.mxu0 0.0
      %11092 = vmatpush1.msra.mxu0 0.0
      %11093 = vmatprep.subr.mxu0 0.0
      %11094 = vmatpush1.msra.mxu0 0.0
      %11095 = vmatprep.subr.mxu0 0.0
      %11096 = vmatpush1.msra.mxu0 0.0
      %11097 = vmatprep.subr.mxu0 0.0
      %11098 = vmatpush1.msra.mxu0 0.0
      %11099 = vmatprep.subr.mxu0 0.0
      %11100 = vmatpush1.msra.mxu0 0.0
      %11101 = vmatprep.subr.mxu0 0.0
      %11102 = vmatpush1.msra.mxu0 0.0
      %11103 = vmatprep.subr.mxu0 0.0
      %11104 = vmatpush1.msra.mxu0 0.0
      %11105 = vmatprep.subr.mxu0 0.0
      %11106 = vmatpush1.msra.mxu0 0.0
      %11107 = vmatprep.subr.mxu0 0.0
      %11108 = vmatpush1.msra.mxu0 0.0
      %11109 = vmatprep.subr.mxu0 0.0
      %11110 = vmatpush1.msra.mxu0 0.0
      %11111 = vmatprep.subr.mxu0 0.0
      %11112 = vmatpush1.msra.mxu0 0.0
      %11113 = vmatprep.subr.mxu0 0.0
      %11114 = vmatpush1.msra.mxu0 0.0
      %11115 = vmatprep.mubr.f32.mxu0 0.0
      %11116 = vmatmul.mubr.f32.gmra.mrb[0].mxu0 %v10951
      %v11117 = vpop.f32.mrb[0].mxu0
      %v11118 = vadd.f32 0.0, %v11117
      %v11119 = vpop.f32.mrb[0].mxu0
      %v11120 = vadd.f32 0.0, %v11119
      %11121 = vmatprep.mubr.f32.mxu0 0.0
      %11122 = vmatmul.mubr.f32.gmra.mrb[0].mxu0 %v10954
      %v11123 = vpop.f32.mrb[0].mxu0
      %v11124 = vadd.f32 0.0, %v11123
      %v11125 = vpop.f32.mrb[0].mxu0
      %v11126 = vadd.f32 0.0, %v11125
      %11127 = vmatprep.mubr.f32.mxu0 0.0
      %11128 = vmatmul.mubr.f32.gmra.mrb[0].mxu0 %v10957
      %v11129 = vpop.f32.mrb[0].mxu0
      %v11130 = vadd.f32 0.0, %v11129
      %v11131 = vpop.f32.mrb[0].mxu0
      %v11132 = vadd.f32 0.0, %v11131
      %11133 = vmatprep.mubr.f32.mxu0 0.0
      %11134 = vmatmul.mubr.f32.gmra.mrb[0].mxu0 %v10960
      %v11135 = vpop.f32.mrb[0].mxu0
      %v11136 = vadd.f32 0.0, %v11135
      %v11137 = vpop.f32.mrb[0].mxu0
      %v11138 = vadd.f32 0.0, %v11137
      %11139 = vdwg.mxu0
      %v11140 = vadd.f32 %v10857, %v11029
      %v11141 = vadd.f32 %v10858, %v11031
      %v11142 = vadd.f32 %v10859, %v11118
      %v11143 = vadd.f32 %v10860, %v11120
      %v11144 = vadd.f32 %v10861, %v11035
      %v11145 = vadd.f32 %v10862, %v11037
      %v11146 = vadd.f32 %v10863, %v11124
      %v11147 = vadd.f32 %v10864, %v11126
      %v11148 = vadd.f32 %v10865, %v11041
      %v11149 = vadd.f32 %v10866, %v11043
      %v11150 = vadd.f32 %v10867, %v11130
      %v11151 = vadd.f32 %v10868, %v11132
      %v11152 = vadd.f32 %v10869, %v11047
      %v11153 = vadd.f32 %v10870, %v11049
      %v11154 = vadd.f32 %v10871, %v11136
      %v11155 = vadd.f32 %v10872, %v11138
      %s11156 = scalar_lea.vmem %s3, 256
      %v11157 = vld [vmem:[%s11156] sm:$0xff]
      %v11158 = vld [vmem:[%s11156 + $0x8] sm:$0xff]
      %v11159 = vld [vmem:[%s11156 + $0x10] sm:$0xff]
      %v11160 = vld [vmem:[%s11156 + $0x18] sm:$0xff]
      %11161 = vrot.lane.b32.xlu0 %v10272, 107
      %v11162 = vpop.permute.xlu0 %11161
      %11163 = vrot.lane.b32.xlu0 %v10273, 107
      %v11164 = vpop.permute.xlu0 %11163
      %11165 = vrot.lane.b32.xlu0 %v10274, 107
      %v11166 = vpop.permute.xlu0 %11165
      %11167 = vrot.lane.b32.xlu0 %v10275, 107
      %v11168 = vpop.permute.xlu0 %11167
      %11169 = vrot.lane.b32.xlu0 %v10276, 107
      %v11170 = vpop.permute.xlu0 %11169
      %11171 = vrot.lane.b32.xlu0 %v10277, 107
      %v11172 = vpop.permute.xlu0 %11171
      %11173 = vrot.lane.b32.xlu0 %v10278, 107
      %v11174 = vpop.permute.xlu0 %11173
      %11175 = vrot.lane.b32.xlu0 %v10279, 107
      %v11176 = vpop.permute.xlu0 %11175
      %11177 = vrot.lane.b32.xlu0 %v10280, 107
      %v11178 = vpop.permute.xlu0 %11177
      %11179 = vrot.lane.b32.xlu0 %v10281, 107
      %v11180 = vpop.permute.xlu0 %11179
      %11181 = vrot.lane.b32.xlu0 %v10282, 107
      %v11182 = vpop.permute.xlu0 %11181
      %11183 = vrot.lane.b32.xlu0 %v10283, 107
      %v11184 = vpop.permute.xlu0 %11183
      %11185 = vrot.lane.b32.xlu0 %v10284, 107
      %v11186 = vpop.permute.xlu0 %11185
      %11187 = vrot.lane.b32.xlu0 %v10285, 107
      %v11188 = vpop.permute.xlu0 %11187
      %11189 = vrot.lane.b32.xlu0 %v10286, 107
      %v11190 = vpop.permute.xlu0 %11189
      %11191 = vrot.lane.b32.xlu0 %v10287, 107
      %v11192 = vpop.permute.xlu0 %11191
      %11193 = vrot.lane.b32.xlu0 %v10288, 107
      %v11194 = vpop.permute.xlu0 %11193
      %11195 = vrot.lane.b32.xlu0 %v10289, 107
      %v11196 = vpop.permute.xlu0 %11195
      %11197 = vrot.lane.b32.xlu0 %v10290, 107
      %v11198 = vpop.permute.xlu0 %11197
      %11199 = vrot.lane.b32.xlu0 %v10291, 107
      %v11200 = vpop.permute.xlu0 %11199
      %v11201 = vsel %vm4430, %v11162, %v11164
      %v11202 = vsel %vm4430, %v11164, %v11166
      %v11203 = vsel %vm4430, %v11166, %v11168
      %v11204 = vsel %vm4430, %v11168, %v11170
      %v11205 = vsel %vm4430, %v11172, %v11174
      %v11206 = vsel %vm4430, %v11174, %v11176
      %v11207 = vsel %vm4430, %v11176, %v11178
      %v11208 = vsel %vm4430, %v11178, %v11180
      %v11209 = vsel %vm4430, %v11182, %v11184
      %v11210 = vsel %vm4430, %v11184, %v11186
      %v11211 = vsel %vm4430, %v11186, %v11188
      %v11212 = vsel %vm4430, %v11188, %v11190
      %v11213 = vsel %vm4430, %v11192, %v11194
      %v11214 = vsel %vm4430, %v11194, %v11196
      %v11215 = vsel %vm4430, %v11196, %v11198
      %v11216 = vsel %vm4430, %v11198, %v11200
      %v11234 = vsel %vm6330, %v11157, 0
      %v11237 = vsel %vm6330, %v11158, 0
      %v11240 = vsel %vm6330, %v11159, 0
      %v11243 = vsel %vm6330, %v11160, 0
      %11245 = vmatprep.subr.mxu0 %v11202
      %11246 = vmatpush1.msra.mxu0 %v11201
      %11247 = vmatprep.subr.mxu0 %v11206
      %11248 = vmatpush1.msra.mxu0 %v11205
      %11249 = vmatprep.subr.mxu0 %v11210
      %11250 = vmatpush1.msra.mxu0 %v11209
      %11251 = vmatprep.subr.mxu0 %v11214
      %11252 = vmatpush1.msra.mxu0 %v11213
      %11253 = vmatprep.subr.mxu0 0.0
      %11254 = vmatpush1.msra.mxu0 0.0
      %11255 = vmatprep.subr.mxu0 0.0
      %11256 = vmatpush1.msra.mxu0 0.0
      %11257 = vmatprep.subr.mxu0 0.0
      %11258 = vmatpush1.msra.mxu0 0.0
      %11259 = vmatprep.subr.mxu0 0.0
      %11260 = vmatpush1.msra.mxu0 0.0
      %11261 = vmatprep.subr.mxu0 0.0
      %11262 = vmatpush1.msra.mxu0 0.0
      %11263 = vmatprep.subr.mxu0 0.0
      %11264 = vmatpush1.msra.mxu0 0.0
      %11265 = vmatprep.subr.mxu0 0.0
      %11266 = vmatpush1.msra.mxu0 0.0
      %11267 = vmatprep.subr.mxu0 0.0
      %11268 = vmatpush1.msra.mxu0 0.0
      %11269 = vmatprep.subr.mxu0 0.0
      %11270 = vmatpush1.msra.mxu0 0.0
      %11271 = vmatprep.subr.mxu0 0.0
      %11272 = vmatpush1.msra.mxu0 0.0
      %11273 = vmatprep.subr.mxu0 0.0
      %11274 = vmatpush1.msra.mxu0 0.0
      %11275 = vmatprep.subr.mxu0 0.0
      %11276 = vmatpush1.msra.mxu0 0.0
      %11277 = vmatprep.subr.mxu0 0.0
      %11278 = vmatpush1.msra.mxu0 0.0
      %11279 = vmatprep.subr.mxu0 0.0
      %11280 = vmatpush1.msra.mxu0 0.0
      %11281 = vmatprep.subr.mxu0 0.0
      %11282 = vmatpush1.msra.mxu0 0.0
      %11283 = vmatprep.subr.mxu0 0.0
      %11284 = vmatpush1.msra.mxu0 0.0
      %11285 = vmatprep.subr.mxu0 0.0
      %11286 = vmatpush1.msra.mxu0 0.0
      %11287 = vmatprep.subr.mxu0 0.0
      %11288 = vmatpush1.msra.mxu0 0.0
      %11289 = vmatprep.subr.mxu0 0.0
      %11290 = vmatpush1.msra.mxu0 0.0
      %11291 = vmatprep.subr.mxu0 0.0
      %11292 = vmatpush1.msra.mxu0 0.0
      %11293 = vmatprep.subr.mxu0 0.0
      %11294 = vmatpush1.msra.mxu0 0.0
      %11295 = vmatprep.subr.mxu0 0.0
      %11296 = vmatpush1.msra.mxu0 0.0
      %11297 = vmatprep.subr.mxu0 0.0
      %11298 = vmatpush1.msra.mxu0 0.0
      %11299 = vmatprep.subr.mxu0 0.0
      %11300 = vmatpush1.msra.mxu0 0.0
      %11301 = vmatprep.subr.mxu0 0.0
      %11302 = vmatpush1.msra.mxu0 0.0
      %11303 = vmatprep.subr.mxu0 0.0
      %11304 = vmatpush1.msra.mxu0 0.0
      %11305 = vmatprep.subr.mxu0 0.0
      %11306 = vmatpush1.msra.mxu0 0.0
      %11307 = vmatprep.subr.mxu0 0.0
      %11308 = vmatpush1.msra.mxu0 0.0
      %11309 = vmatprep.mubr.f32.mxu0 0.0
      %11310 = vmatmul.mubr.f32.gmra.mrb[0].mxu0 %v11234
      %v11311 = vpop.f32.mrb[0].mxu0
      %v11312 = vadd.f32 0.0, %v11311
      %v11313 = vpop.f32.mrb[0].mxu0
      %v11314 = vadd.f32 0.0, %v11313
      %11315 = vmatprep.mubr.f32.mxu0 0.0
      %11316 = vmatmul.mubr.f32.gmra.mrb[0].mxu0 %v11237
      %v11317 = vpop.f32.mrb[0].mxu0
      %v11318 = vadd.f32 0.0, %v11317
      %v11319 = vpop.f32.mrb[0].mxu0
      %v11320 = vadd.f32 0.0, %v11319
      %11321 = vmatprep.mubr.f32.mxu0 0.0
      %11322 = vmatmul.mubr.f32.gmra.mrb[0].mxu0 %v11240
      %v11323 = vpop.f32.mrb[0].mxu0
      %v11324 = vadd.f32 0.0, %v11323
      %v11325 = vpop.f32.mrb[0].mxu0
      %v11326 = vadd.f32 0.0, %v11325
      %11327 = vmatprep.mubr.f32.mxu0 0.0
      %11328 = vmatmul.mubr.f32.gmra.mrb[0].mxu0 %v11243
      %v11329 = vpop.f32.mrb[0].mxu0
      %v11330 = vadd.f32 0.0, %v11329
      %v11331 = vpop.f32.mrb[0].mxu0
      %v11332 = vadd.f32 0.0, %v11331
      %11333 = vdwg.mxu0
      %11334 = vmatprep.subr.mxu0 %v11204
      %11335 = vmatpush1.msra.mxu0 %v11203
      %11336 = vmatprep.subr.mxu0 %v11208
      %11337 = vmatpush1.msra.mxu0 %v11207
      %11338 = vmatprep.subr.mxu0 %v11212
      %11339 = vmatpush1.msra.mxu0 %v11211
      %11340 = vmatprep.subr.mxu0 %v11216
      %11341 = vmatpush1.msra.mxu0 %v11215
      %11342 = vmatprep.subr.mxu0 0.0
      %11343 = vmatpush1.msra.mxu0 0.0
      %11344 = vmatprep.subr.mxu0 0.0
      %11345 = vmatpush1.msra.mxu0 0.0
      %11346 = vmatprep.subr.mxu0 0.0
      %11347 = vmatpush1.msra.mxu0 0.0
      %11348 = vmatprep.subr.mxu0 0.0
      %11349 = vmatpush1.msra.mxu0 0.0
      %11350 = vmatprep.subr.mxu0 0.0
      %11351 = vmatpush1.msra.mxu0 0.0
      %11352 = vmatprep.subr.mxu0 0.0
      %11353 = vmatpush1.msra.mxu0 0.0
      %11354 = vmatprep.subr.mxu0 0.0
      %11355 = vmatpush1.msra.mxu0 0.0
      %11356 = vmatprep.subr.mxu0 0.0
      %11357 = vmatpush1.msra.mxu0 0.0
      %11358 = vmatprep.subr.mxu0 0.0
      %11359 = vmatpush1.msra.mxu0 0.0
      %11360 = vmatprep.subr.mxu0 0.0
      %11361 = vmatpush1.msra.mxu0 0.0
      %11362 = vmatprep.subr.mxu0 0.0
      %11363 = vmatpush1.msra.mxu0 0.0
      %11364 = vmatprep.subr.mxu0 0.0
      %11365 = vmatpush1.msra.mxu0 0.0
      %11366 = vmatprep.subr.mxu0 0.0
      %11367 = vmatpush1.msra.mxu0 0.0
      %11368 = vmatprep.subr.mxu0 0.0
      %11369 = vmatpush1.msra.mxu0 0.0
      %11370 = vmatprep.subr.mxu0 0.0
      %11371 = vmatpush1.msra.mxu0 0.0
      %11372 = vmatprep.subr.mxu0 0.0
      %11373 = vmatpush1.msra.mxu0 0.0
      %11374 = vmatprep.subr.mxu0 0.0
      %11375 = vmatpush1.msra.mxu0 0.0
      %11376 = vmatprep.subr.mxu0 0.0
      %11377 = vmatpush1.msra.mxu0 0.0
      %11378 = vmatprep.subr.mxu0 0.0
      %11379 = vmatpush1.msra.mxu0 0.0
      %11380 = vmatprep.subr.mxu0 0.0
      %11381 = vmatpush1.msra.mxu0 0.0
      %11382 = vmatprep.subr.mxu0 0.0
      %11383 = vmatpush1.msra.mxu0 0.0
      %11384 = vmatprep.subr.mxu0 0.0
      %11385 = vmatpush1.msra.mxu0 0.0
      %11386 = vmatprep.subr.mxu0 0.0
      %11387 = vmatpush1.msra.mxu0 0.0
      %11388 = vmatprep.subr.mxu0 0.0
      %11389 = vmatpush1.msra.mxu0 0.0
      %11390 = vmatprep.subr.mxu0 0.0
      %11391 = vmatpush1.msra.mxu0 0.0
      %11392 = vmatprep.subr.mxu0 0.0
      %11393 = vmatpush1.msra.mxu0 0.0
      %11394 = vmatprep.subr.mxu0 0.0
      %11395 = vmatpush1.msra.mxu0 0.0
      %11396 = vmatprep.subr.mxu0 0.0
      %11397 = vmatpush1.msra.mxu0 0.0
      %11398 = vmatprep.mubr.f32.mxu0 0.0
      %11399 = vmatmul.mubr.f32.gmra.mrb[0].mxu0 %v11234
      %v11400 = vpop.f32.mrb[0].mxu0
      %v11401 = vadd.f32 0.0, %v11400
      %v11402 = vpop.f32.mrb[0].mxu0
      %v11403 = vadd.f32 0.0, %v11402
      %11404 = vmatprep.mubr.f32.mxu0 0.0
      %11405 = vmatmul.mubr.f32.gmra.mrb[0].mxu0 %v11237
      %v11406 = vpop.f32.mrb[0].mxu0
      %v11407 = vadd.f32 0.0, %v11406
      %v11408 = vpop.f32.mrb[0].mxu0
      %v11409 = vadd.f32 0.0, %v11408
      %11410 = vmatprep.mubr.f32.mxu0 0.0
      %11411 = vmatmul.mubr.f32.gmra.mrb[0].mxu0 %v11240
      %v11412 = vpop.f32.mrb[0].mxu0
      %v11413 = vadd.f32 0.0, %v11412
      %v11414 = vpop.f32.mrb[0].mxu0
      %v11415 = vadd.f32 0.0, %v11414
      %11416 = vmatprep.mubr.f32.mxu0 0.0
      %11417 = vmatmul.mubr.f32.gmra.mrb[0].mxu0 %v11243
      %v11418 = vpop.f32.mrb[0].mxu0
      %v11419 = vadd.f32 0.0, %v11418
      %v11420 = vpop.f32.mrb[0].mxu0
      %v11421 = vadd.f32 0.0, %v11420
      %11422 = vdwg.mxu0
      %v11423 = vadd.f32 %v11140, %v11312
      %v11424 = vadd.f32 %v11141, %v11314
      %v11425 = vadd.f32 %v11142, %v11401
      %v11426 = vadd.f32 %v11143, %v11403
      %v11427 = vadd.f32 %v11144, %v11318
      %v11428 = vadd.f32 %v11145, %v11320
      %v11429 = vadd.f32 %v11146, %v11407
      %v11430 = vadd.f32 %v11147, %v11409
      %v11431 = vadd.f32 %v11148, %v11324
      %v11432 = vadd.f32 %v11149, %v11326
      %v11433 = vadd.f32 %v11150, %v11413
      %v11434 = vadd.f32 %v11151, %v11415
      %v11435 = vadd.f32 %v11152, %v11330
      %v11436 = vadd.f32 %v11153, %v11332
      %v11437 = vadd.f32 %v11154, %v11419
      %v11438 = vadd.f32 %v11155, %v11421
      %s11439 = scalar_lea.vmem %s4, 64
      %v11440 = vld [vmem:[%s11439] sm:$0xff]
      %v11441 = vld [vmem:[%s11439 + $0x8] sm:$0xff]
      %v11442 = vld [vmem:[%s11439 + $0x10] sm:$0xff]
      %v11443 = vld [vmem:[%s11439 + $0x18] sm:$0xff]
      %11445 = vset.pattern.permute.xlu0 0
      %11446 = vperm.xlu0 %11445, %v11440
      %v11447 = vpop.permute.xlu0 %11446
      %11450 = vset.pattern.permute.xlu0 0
      %11451 = vperm.xlu0 %11450, %v11441
      %v11452 = vpop.permute.xlu0 %11451
      %11455 = vset.pattern.permute.xlu0 0
      %11456 = vperm.xlu0 %11455, %v11442
      %v11457 = vpop.permute.xlu0 %11456
      %11460 = vset.pattern.permute.xlu0 0
      %11461 = vperm.xlu0 %11460, %v11443
      %v11462 = vpop.permute.xlu0 %11461
      %v11464 = vadd.f32 %v11423, %v11447
      %v11465 = vadd.f32 %v11424, %v11447
      %v11466 = vadd.f32 %v11425, %v11447
      %v11467 = vadd.f32 %v11426, %v11447
      %v11468 = vadd.f32 %v11427, %v11452
      %v11469 = vadd.f32 %v11428, %v11452
      %v11470 = vadd.f32 %v11429, %v11452
      %v11471 = vadd.f32 %v11430, %v11452
      %v11472 = vadd.f32 %v11431, %v11457
      %v11473 = vadd.f32 %v11432, %v11457
      %v11474 = vadd.f32 %v11433, %v11457
      %v11475 = vadd.f32 %v11434, %v11457
      %v11476 = vadd.f32 %v11435, %v11462
      %v11477 = vadd.f32 %v11436, %v11462
      %v11478 = vadd.f32 %v11437, %v11462
      %v11479 = vadd.f32 %v11438, %v11462
      %vm11480 = vcmp.gt.f32.partialorder %v11464, 0.0
      %vm11481 = vcmp.gt.f32.partialorder %v11465, 0.0
      %vm11482 = vcmp.gt.f32.partialorder %v11466, 0.0
      %vm11483 = vcmp.gt.f32.partialorder %v11467, 0.0
      %vm11484 = vcmp.gt.f32.partialorder %v11468, 0.0
      %vm11485 = vcmp.gt.f32.partialorder %v11469, 0.0
      %vm11486 = vcmp.gt.f32.partialorder %v11470, 0.0
      %vm11487 = vcmp.gt.f32.partialorder %v11471, 0.0
      %vm11488 = vcmp.gt.f32.partialorder %v11472, 0.0
      %vm11489 = vcmp.gt.f32.partialorder %v11473, 0.0
      %vm11490 = vcmp.gt.f32.partialorder %v11474, 0.0
      %vm11491 = vcmp.gt.f32.partialorder %v11475, 0.0
      %vm11492 = vcmp.gt.f32.partialorder %v11476, 0.0
      %vm11493 = vcmp.gt.f32.partialorder %v11477, 0.0
      %vm11494 = vcmp.gt.f32.partialorder %v11478, 0.0
      %vm11495 = vcmp.gt.f32.partialorder %v11479, 0.0
      %v11496 = vmin.f32 %v11464, 0.0
      %v11497 = vmin.f32 %v11465, 0.0
      %v11498 = vmin.f32 %v11466, 0.0
      %v11499 = vmin.f32 %v11467, 0.0
      %v11500 = vmin.f32 %v11468, 0.0
      %v11501 = vmin.f32 %v11469, 0.0
      %v11502 = vmin.f32 %v11470, 0.0
      %v11503 = vmin.f32 %v11471, 0.0
      %v11504 = vmin.f32 %v11472, 0.0
      %v11505 = vmin.f32 %v11473, 0.0
      %v11506 = vmin.f32 %v11474, 0.0
      %v11507 = vmin.f32 %v11475, 0.0
      %v11508 = vmin.f32 %v11476, 0.0
      %v11509 = vmin.f32 %v11477, 0.0
      %v11510 = vmin.f32 %v11478, 0.0
      %v11511 = vmin.f32 %v11479, 0.0
      %v11512 = vmul.f32 %v11496, 1.442695
      %v11513 = vpow.pop %v11512
      %v11514 = vmul.f32 %v11497, 1.442695
      %v11515 = vpow.pop %v11514
      %v11516 = vmul.f32 %v11498, 1.442695
      %v11517 = vpow.pop %v11516
      %v11518 = vmul.f32 %v11499, 1.442695
      %v11519 = vpow.pop %v11518
      %v11520 = vmul.f32 %v11500, 1.442695
      %v11521 = vpow.pop %v11520
      %v11522 = vmul.f32 %v11501, 1.442695
      %v11523 = vpow.pop %v11522
      %v11524 = vmul.f32 %v11502, 1.442695
      %v11525 = vpow.pop %v11524
      %v11526 = vmul.f32 %v11503, 1.442695
      %v11527 = vpow.pop %v11526
      %v11528 = vmul.f32 %v11504, 1.442695
      %v11529 = vpow.pop %v11528
      %v11530 = vmul.f32 %v11505, 1.442695
      %v11531 = vpow.pop %v11530
      %v11532 = vmul.f32 %v11506, 1.442695
      %v11533 = vpow.pop %v11532
      %v11534 = vmul.f32 %v11507, 1.442695
      %v11535 = vpow.pop %v11534
      %v11536 = vmul.f32 %v11508, 1.442695
      %v11537 = vpow.pop %v11536
      %v11538 = vmul.f32 %v11509, 1.442695
      %v11539 = vpow.pop %v11538
      %v11540 = vmul.f32 %v11510, 1.442695
      %v11541 = vpow.pop %v11540
      %v11542 = vmul.f32 %v11511, 1.442695
      %v11543 = vpow.pop %v11542
      %v11544 = vsub.f32 %v11513, 1.0
      %v11545 = vsub.f32 %v11515, 1.0
      %v11546 = vsub.f32 %v11517, 1.0
      %v11547 = vsub.f32 %v11519, 1.0
      %v11548 = vsub.f32 %v11521, 1.0
      %v11549 = vsub.f32 %v11523, 1.0
      %v11550 = vsub.f32 %v11525, 1.0
      %v11551 = vsub.f32 %v11527, 1.0
      %v11552 = vsub.f32 %v11529, 1.0
      %v11553 = vsub.f32 %v11531, 1.0
      %v11554 = vsub.f32 %v11533, 1.0
      %v11555 = vsub.f32 %v11535, 1.0
      %v11556 = vsub.f32 %v11537, 1.0
      %v11557 = vsub.f32 %v11539, 1.0
      %v11558 = vsub.f32 %v11541, 1.0
      %v11559 = vsub.f32 %v11543, 1.0
      %v11560 = vsel %vm11480, %v11464, %v11544
      %v11561 = vsel %vm11481, %v11465, %v11545
      %v11562 = vsel %vm11482, %v11466, %v11546
      %v11563 = vsel %vm11483, %v11467, %v11547
      %v11564 = vsel %vm11484, %v11468, %v11548
      %v11565 = vsel %vm11485, %v11469, %v11549
      %v11566 = vsel %vm11486, %v11470, %v11550
      %v11567 = vsel %vm11487, %v11471, %v11551
      %v11568 = vsel %vm11488, %v11472, %v11552
      %v11569 = vsel %vm11489, %v11473, %v11553
      %v11570 = vsel %vm11490, %v11474, %v11554
      %v11571 = vsel %vm11491, %v11475, %v11555
      %v11572 = vsel %vm11492, %v11476, %v11556
      %v11573 = vsel %vm11493, %v11477, %v11557
      %v11574 = vsel %vm11494, %v11478, %v11558
      %v11575 = vsel %vm11495, %v11479, %v11559
      %11576 = vst [vmem:[%s251 + $0x100] sm:$0xff] %v11560
      %11577 = vst [vmem:[%s251 + $0x108] sm:$0xff] %v11561
      %11578 = vst [vmem:[%s251 + $0x110] sm:$0xff] %v11562
      %11579 = vst [vmem:[%s251 + $0x118] sm:$0xff] %v11563
      %11580 = vst [vmem:[%s251 + $0x120] sm:$0xff] %v11564
      %11581 = vst [vmem:[%s251 + $0x128] sm:$0xff] %v11565
      %11582 = vst [vmem:[%s251 + $0x130] sm:$0xff] %v11566
      %11583 = vst [vmem:[%s251 + $0x138] sm:$0xff] %v11567
      %11584 = vst [vmem:[%s251 + $0x140] sm:$0xff] %v11568
      %11585 = vst [vmem:[%s251 + $0x148] sm:$0xff] %v11569
      %11586 = vst [vmem:[%s251 + $0x150] sm:$0xff] %v11570
      %11587 = vst [vmem:[%s251 + $0x158] sm:$0xff] %v11571
      %11588 = vst [vmem:[%s251 + $0x160] sm:$0xff] %v11572
      %11589 = vst [vmem:[%s251 + $0x168] sm:$0xff] %v11573
      %11590 = vst [vmem:[%s251 + $0x170] sm:$0xff] %v11574
      %11591 = vst [vmem:[%s251 + $0x178] sm:$0xff] %v11575
      %p11592 = scmp.lt.s32.totalorder %s17, 1
      %s11593 = scalar_select %p11592, %s17, 1
      %s11594 = smul.addr %s11593, 48
      %s11595 = smul.addr %s11594, 8
      %s11596 = scalar_lea.vmem %s6, %s11595
      // Predicated region
      $region45: #{stacked2d_core_forward.1} parent=43 // pred_check
        %p11597 = pneg %p166
      $region46: #{stacked2d_core_forward.1} parent=43 // pred_check_branch
        %11599 = sbr.rel (%p11597) target = $region48
      $region47: #{stacked2d_core_forward.1} parent=43 // pred_region
        _
      $region48: #{stacked2d_core_forward.1} parent=43 // pred_fallthru
        _
    $region44: #{stacked2d_core_forward.1} parent=5 // pred_fallthru
      _
    %p11600 = scmp.le.s32.totalorder 2, %s12
    // Predicated region
    $region49: #{stacked2d_core_forward.1} parent=5 // pred_check
      %p11601 = pneg %p11600
    $region50: #{stacked2d_core_forward.1} parent=5 // pred_check_branch
      %11603 = sbr.rel (%p11601) target = $region52
    $region51: #{stacked2d_core_forward.1} parent=5 // pred_region
      %s11604 = ssub.s32 %s12, 2
      // Predicated region
      $region53: #{stacked2d_core_forward.1} parent=51 // pred_check
        %p11605 = pneg %p172
      $region54: #{stacked2d_core_forward.1} parent=51 // pred_check_branch
        %11607 = sbr.rel (%p11605) target = $region56
      $region55: #{stacked2d_core_forward.1} parent=51 // pred_region
        %p11608 = scmp.lt.s32.totalorder %s18, 1
        %s11609 = scalar_select %p11608, %s18, 1
        %s11610 = smul.addr %s11609, 48
        %s11611 = smul.addr %s11610, 8
        %s11612 = scalar_lea.vmem %s6, %s11611
      $region56: #{stacked2d_core_forward.1} parent=51 // pred_fallthru
        _
    $region52: #{stacked2d_core_forward.1} parent=5 // pred_fallthru
      _
  $region6: #{stacked2d_core_forward.1} parent=0 // loop_footer
    %s16 = sadd.s32 1, %s12
  $region7: #{stacked2d_core_forward.1} parent=0 // loop_footer_branch
    %11 = sbr.rel target = $region3
  $region8: #{stacked2d_core_forward.1} parent=0 // loop_exit
    _

</llo_original>
